<compile_context>
chip_gen: v5e
topology: v5e:2x2
jax: 0.10.0
libtpu: 0.0.40
codegen_flags: <defaults>
</compile_context>

<pallas_src>
import functools

import jax
import jax.numpy as jnp
import numpy as np
from jax import lax
from jax.experimental import pallas as pl
from jax.experimental.pallas import tpu as pltpu


# ----------------------------- Pallas kernel -----------------------------

def _dse_kernel(x_ref, masks_ref, w_conv_ref, b_conv_ref, small_ref,
                o_ref, im2col_ref, *, H, W):
    Cin = x_ref.shape[1]
    HW = x_ref.shape[2]                 # lane width = images_per_step * H * W
    F = small_ref.shape[0]

    x = x_ref[0].astype(jnp.float32)                     # (Cin, HW), lane-dense

    # packed small weights: [ w_in (F,Cin) | b_in (F,1) | w_out^T (F,Cin) | b_out pad ]
    w_in = small_ref[:, 0:Cin]                           # (F, Cin)
    b_in = small_ref[:, Cin:Cin + 1]                     # (F, 1)
    w_out_t = small_ref[:, Cin + 1:2 * Cin + 1]          # (F, Cin)
    b_out = small_ref[0:Cin, 2 * Cin + 1:2 * Cin + 2]    # (Cin, 1)

    # ---- 1x1 input conv: Cin is tiny (1) -> VPU broadcast MAC, no MXU ----
    x_first = w_in[:, 0:1] * x[0:1, :]
    for c in range(1, Cin):
        x_first = x_first + w_in[:, c:c + 1] * x[c:c + 1, :]
    x_first = x_first + b_in                             # (F, HW)

    def conv3x3(act, ci):
        # act: (F, HW). Each of the 9 shifted taps (lane roll on XLU + boundary
        # mask on VPU) is stored straight into the reused im2col scratch, then
        # the conv is ONE well-shaped (F, 9F) @ (9F, HW) MXU matmul.
        t = 0
        mi = 0
        for dy in (-1, 0, 1):
            for dx in (-1, 0, 1):
                d = dy * W + dx                           # flattened offset
                if d == 0:
                    shifted = act
                else:
                    shifted = pltpu.roll(act, shift=(-d) % HW, axis=1)
                if dy == 0 and dx == 0:
                    tap = shifted                          # mask is all-ones
                else:
                    # mask pre-broadcast to (F, HW) in the wrapper
                    tap = shifted * masks_ref[mi * F:(mi + 1) * F, :]
                    mi += 1
                im2col_ref[t * F:(t + 1) * F, :] = tap
                t += 1
        y = jnp.dot(w_conv_ref[ci * F:(ci + 1) * F, :], im2col_ref[...],
                    preferred_element_type=jnp.float32)
        return y + b_conv_ref[ci * F:(ci + 1) * F, :]

    def enh_block(act, ci):
        y = conv3x3(act, ci)
        y = jnp.maximum(y, 0.01 * y)                      # LeakyReLU(0.01)
        y = conv3x3(y, ci + 1)
        return y + act                                    # residual

    h = enh_block(x_first, 0)
    h = enh_block(h, 2)
    h = enh_block(h, 4)
    h = h + x_first                                       # long skip

    # ---- 1x1 output conv ----
    if Cin == 1:
        # M=1 matmul wastes the MXU; do a weighted sublane reduction instead.
        out = jnp.sum(w_out_t * h, axis=0, keepdims=True) + b_out   # (1, HW)
    else:
        out = lax.dot_general(w_out_t, h, (((0,), (0,)), ((), ())),
                              preferred_element_type=jnp.float32) + b_out

    o_ref[0] = (out + x).astype(o_ref.dtype)              # identity skip


# ----------------------------- wrapper -----------------------------

def _build_tap_masks(H, W, images_per_step, F):
    """(8*F, images_per_step*H*W) f32 masks for the 8 non-center taps.

    Masks are built per image and tiled along the lane axis so that, when
    several images share the lane axis, the roll wrap never leaks across
    image boundaries. Pre-broadcast over F so the kernel never re-emits a
    sublane broadcast.
    """
    hw = H * W
    idx = np.arange(hw)
    row = idx // W
    col = idx % W
    rows = []
    for dy in (-1, 0, 1):
        for dx in (-1, 0, 1):
            if dy == 0 and dx == 0:
                continue
            valid = ((row + dy >= 0) & (row + dy < H) &
                     (col + dx >= 0) & (col + dx < W))
            rows.append(valid.astype(np.float32))
    m = np.stack(rows, axis=0)                  # (8, hw)
    m = np.tile(m, (1, images_per_step))        # (8, B*hw), per-image boundaries
    m = np.repeat(m, F, axis=0)                 # (8F, B*hw)
    return jnp.asarray(m)


def _auto_images_per_step(N, Cin, H, W, F):
    """Fold images into the lane axis; keep the grid length even when possible
    (both v7x TensorCores busy), cap the fold so the working set stays small."""
    hw = H * W
    per_img_bytes = (9 * F + 8 * F + 4 * F + 4 * Cin) * hw * 4
    cap = max(1, (8 << 20) // per_img_bytes)
    best = 1
    for b in range(1, min(N, cap) + 1):
        if N % b == 0 and (N // b) % 2 == 0:
            best = b
    if best == 1:
        for b in range(1, min(N, cap) + 1):
            if N % b == 0:
                best = b
    return best


def dse_forward(x_nchw, kparams, images_per_step=None):
    """x_nchw: (N, Cin, H, W) float32; kparams: packed kernel-layout weights."""
    N, Cin, H, W = x_nchw.shape
    HW = H * W
    F = kparams["small"].shape[0]

    if images_per_step is None:
        images_per_step = _auto_images_per_step(N, Cin, H, W, F)
    B = images_per_step
    assert N % B == 0, "images_per_step must divide N"
    G = N // B
    HW_lane = B * HW

    # (N, Cin, H, W) -> (G, Cin, B*HW): channels-first, images folded into lanes
    x = x_nchw.reshape(G, B, Cin, HW).transpose(0, 2, 1, 3).reshape(G, Cin, HW_lane)
    masks = _build_tap_masks(H, W, B, F)                  # (8F, HW_lane)

    w_conv = kparams["w_conv"]                            # (6F, 9F)
    b_conv = kparams["b_conv"]                            # (6F, 1)
    small = kparams["small"]                              # (F, 2Cin+2)

    def full_spec(a):
        nd = a.ndim
        return pl.BlockSpec(a.shape, lambda n, _nd=nd: (0,) * _nd)

    in_specs = [pl.BlockSpec((1, Cin, HW_lane), lambda n: (n, 0, 0)),
                full_spec(masks), full_spec(w_conv), full_spec(b_conv),
                full_spec(small)]
    out_spec = pl.BlockSpec((1, Cin, HW_lane), lambda n: (n, 0, 0))

    # Advisory cost for XLA's scheduler (tiny, latency-bound kernel).
    flops_per_img = (2 * HW * Cin * F                # 1x1 input conv
                     + 6 * 2 * HW * (9 * F) * F      # six 3x3 convs (im2col)
                     + 2 * HW * F * Cin)             # 1x1 output conv
    weight_bytes = 4 * (int(np.prod(w_conv.shape)) + int(np.prod(b_conv.shape))
                        + int(np.prod(small.shape)))
    bytes_accessed = int(2 * N * Cin * HW * 4 + weight_bytes + int(masks.size) * 4)

    out = pl.pallas_call(
        functools.partial(_dse_kernel, H=H, W=W),
        out_shape=jax.ShapeDtypeStruct((G, Cin, HW_lane), jnp.float32),
        grid_spec=pltpu.PrefetchScalarGridSpec(
            num_scalar_prefetch=0,
            grid=(G,),
            in_specs=in_specs,
            out_specs=out_spec,
            scratch_shapes=[pltpu.VMEM((9 * F, HW_lane), jnp.float32)],
        ),
        compiler_params=pltpu.CompilerParams(
            dimension_semantics=("parallel",)),
        cost_estimate=pl.CostEstimate(
            flops=int(N * flops_per_img),
            transcendentals=0,
            bytes_accessed=bytes_accessed),
    )(x, masks, w_conv, b_conv, small)

    out = out.reshape(G, Cin, B, HW).transpose(0, 2, 1, 3).reshape(N, Cin, H, W)
    return out


# ----------------- parameter init + layout conversion + reference -----------------

def init_params(key, in_ch=1, num_filters=32):
    """Deterministic synthetic weights in PyTorch OIHW layout."""
    ks = jax.random.split(key, 16)
    F, C = num_filters, in_ch
    p = {}
    p["input_conv.w"] = jax.random.normal(ks[0], (F, C, 1, 1), jnp.float32) * 0.2
    p["input_conv.b"] = jax.random.normal(ks[1], (F,), jnp.float32) * 0.05
    for i, base in enumerate(["enh1", "enh2", "enh3"]):
        p[f"{base}.conv1.w"] = jax.random.normal(ks[2 + 4 * i], (F, F, 3, 3), jnp.float32) * 0.05
        p[f"{base}.conv1.b"] = jax.random.normal(ks[3 + 4 * i], (F,), jnp.float32) * 0.05
        p[f"{base}.conv2.w"] = jax.random.normal(ks[4 + 4 * i], (F, F, 3, 3), jnp.float32) * 0.05
        p[f"{base}.conv2.b"] = jax.random.normal(ks[5 + 4 * i], (F,), jnp.float32) * 0.05
    p["output_conv.w"] = jax.random.normal(ks[14], (C, F, 1, 1), jnp.float32) * 0.2
    p["output_conv.b"] = jax.random.normal(ks[15], (C,), jnp.float32) * 0.05
    return p


def to_kernel_params(p):
    """OIHW torch layout -> packed channels-first kernel slabs.

    3x3 weights become (F, 9F) im2col matrices with contraction index
    ((dy+1)*3 + (dx+1)) * F + cin, matching the in-kernel tap order; the six
    matrices are stacked into one (6F, 9F) slab, biases into (6F, 1); the
    1x1 weights/biases are packed into one (F, 2Cin+2) slab.
    """
    F = p["input_conv.w"].shape[0]
    Cin = p["input_conv.w"].shape[1]
    w_convs, b_convs = [], []
    for base in ["enh1", "enh2", "enh3"]:
        for j in (1, 2):
            w = p[f"{base}.conv{j}.w"]                   # (F, F, 3, 3) OIHW
            w_convs.append(jnp.transpose(w, (0, 2, 3, 1)).reshape(F, -1))   # (F, 9F)
            b_convs.append(p[f"{base}.conv{j}.b"][:, None])                 # (F, 1)
    kp = {}
    kp["w_conv"] = jnp.concatenate(w_convs, axis=0)      # (6F, 9F)
    kp["b_conv"] = jnp.concatenate(b_convs, axis=0)      # (6F, 1)

    w_in = p["input_conv.w"][:, :, 0, 0]                 # (F, Cin)
    b_in = p["input_conv.b"][:, None]                    # (F, 1)
    w_out_t = jnp.transpose(p["output_conv.w"][:, :, 0, 0])   # (F, Cin)
    b_out_col = jnp.zeros((F, 1), jnp.float32).at[0:Cin, 0].set(p["output_conv.b"])
    kp["small"] = jnp.concatenate([w_in, b_in, w_out_t, b_out_col], axis=1)  # (F, 2Cin+2)
    return kp


def _conv2d_nchw(x, w, b, padding):
    out = lax.conv_general_dilated(
        x, w, window_strides=(1, 1), padding=padding,
        dimension_numbers=("NCHW", "OIHW", "NCHW"))
    return out + b[None, :, None, None]


def dse_reference(x_nchw, p):
    """Pure-JAX reference mirroring the PyTorch forward."""
    def leaky(v):
        return jnp.where(v >= 0, v, 0.01 * v)

    def enh(v, base):
        y = _conv2d_nchw(v, p[f"{base}.conv1.w"], p[f"{base}.conv1.b"], "SAME")
        y = leaky(y)
        y = _conv2d_nchw(y, p[f"{base}.conv2.w"], p[f"{base}.conv2.b"], "SAME")
        return y + v

    identity = x_nchw
    x_first = _conv2d_nchw(x_nchw, p["input_conv.w"], p["input_conv.b"], "VALID")
    x = enh(x_first, "enh1")
    x = enh(x, "enh2")
    x = enh(x, "enh3")
    x = x + x_first
    x = _conv2d_nchw(x, p["output_conv.w"], p["output_conv.b"], "VALID")
    return x + identity


if __name__ == "__main__":
    key = jax.random.PRNGKey(0)
    k_x, k_x2, k_p = jax.random.split(key, 3)

    N, C, H, W = 2, 1, 16, 16          # PyTorch-style NCHW input shape
    num_filters = 32

    params_torch = init_params(k_p, in_ch=C, num_filters=num_filters)
    params_kernel = to_kernel_params(params_torch)

    # Main check: N=2 -> grid=(2,) (one image per TC on v7x), no lane folding.
    x_nchw = jax.random.normal(k_x, (N, C, H, W), jnp.float32)
    out = jax.block_until_ready(dse_forward(x_nchw, params_kernel))
    ref = jax.block_until_ready(dse_reference(x_nchw, params_torch))
    np.testing.assert_allclose(np.asarray(out), np.asarray(ref),
                               rtol=1e-4, atol=1e-4)

    # Second check: N=4 -> 2 images folded into the lane axis, grid=(2,).
    x4 = jax.random.normal(k_x2, (4, C, H, W), jnp.float32)
    out4 = jax.block_until_ready(dse_forward(x4, params_kernel))
    ref4 = jax.block_until_ready(dse_reference(x4, params_torch))
    np.testing.assert_allclose(np.asarray(out4), np.asarray(ref4),
                               rtol=1e-4, atol=1e-4)

    print("KERNEL_OK")
</pallas_src>

<mosaic_0001>
module attributes {stable_mosaic.version = 11 : i64} {
  func.func @_dse_kernel(%arg0: i32, %arg1: memref<1x1x512xf32, #tpu.memory_space<vmem>>, %arg2: memref<256x512xf32, #tpu.memory_space<vmem>>, %arg3: memref<192x288xf32, #tpu.memory_space<vmem>>, %arg4: memref<192x1xf32, #tpu.memory_space<vmem>>, %arg5: memref<32x4xf32, #tpu.memory_space<vmem>>, %arg6: memref<1x1x512xf32, #tpu.memory_space<vmem>>, %arg7: memref<288x512xf32, #tpu.memory_space<vmem>>) attributes {dimension_semantics = [#tpu.dimension_semantics<parallel>], iteration_bounds = array<i64: 1>, scalar_prefetch = 0 : i64, scratch_operands = 1 : i64, tpu.core_type = #tpu.core_type<tc>, window_params = [{transform_indices = @transform_0, window_bounds = array<i64: 1, 1, 512>}, {pipeline_mode = #tpu.pipeline_mode<synchronous>, transform_indices = @transform_1, window_bounds = array<i64: 256, 512>}, {pipeline_mode = #tpu.pipeline_mode<synchronous>, transform_indices = @transform_2, window_bounds = array<i64: 192, 288>}, {pipeline_mode = #tpu.pipeline_mode<synchronous>, transform_indices = @transform_3, window_bounds = array<i64: 192, 1>}, {pipeline_mode = #tpu.pipeline_mode<synchronous>, transform_indices = @transform_4, window_bounds = array<i64: 32, 4>}, {transform_indices = @transform_5, window_bounds = array<i64: 1, 1, 512>}]} {
    %c0 = arith.constant 0 : index
    %c0_0 = arith.constant 0 : index
    %c0_1 = arith.constant 0 : index
    %0 = vector.load %arg1[%c0, %c0_0, %c0_1] : memref<1x1x512xf32, #tpu.memory_space<vmem>>, vector<1x1x512xf32>
    %1 = vector.shape_cast %0 : vector<1x1x512xf32> to vector<1x512xf32>
    %c0_2 = arith.constant 0 : index
    %c0_3 = arith.constant 0 : index
    %2 = vector.load %arg5[%c0_2, %c0_3] : memref<32x4xf32, #tpu.memory_space<vmem>>, vector<32x1xf32>
    %c0_4 = arith.constant 0 : index
    %c1 = arith.constant 1 : index
    %3 = vector.load %arg5[%c0_4, %c1] : memref<32x4xf32, #tpu.memory_space<vmem>>, vector<32x1xf32>
    %c0_5 = arith.constant 0 : index
    %c2 = arith.constant 2 : index
    %4 = vector.load %arg5[%c0_5, %c2] : memref<32x4xf32, #tpu.memory_space<vmem>>, vector<32x1xf32>
    %c0_6 = arith.constant 0 : index
    %c3 = arith.constant 3 : index
    %5 = vector.load %arg5[%c0_6, %c3] : memref<32x4xf32, #tpu.memory_space<vmem>>, vector<1x1xf32>
    %6 = vector.broadcast %2 : vector<32x1xf32> to vector<32x512xf32>
    %7 = vector.broadcast %1 : vector<1x512xf32> to vector<32x512xf32>
    %8 = arith.mulf %6, %7 : vector<32x512xf32>
    %9 = vector.broadcast %3 : vector<32x1xf32> to vector<32x512xf32>
    %10 = arith.addf %8, %9 : vector<32x512xf32>
    %c17_i32 = arith.constant 17 : i32
    %11 = tpu.dynamic_rotate %10 by %c17_i32 dim 1 : vector<32x512xf32>, i32 -> vector<32x512xf32>
    %c0_7 = arith.constant 0 : index
    %c0_8 = arith.constant 0 : index
    %12 = vector.load %arg2[%c0_7, %c0_8] : memref<256x512xf32, #tpu.memory_space<vmem>>, vector<32x512xf32>
    %13 = arith.mulf %11, %12 : vector<32x512xf32>
    %c0_9 = arith.constant 0 : index
    %c0_10 = arith.constant 0 : index
    %14 = vector.load %arg7[%c0_9, %c0_10] : memref<288x512xf32, #tpu.memory_space<vmem>>, vector<32x512xf32>
    tpu.vector_store %arg7[%c0_9, %c0_10], %13 {strides = array<i32>} : memref<288x512xf32, #tpu.memory_space<vmem>>, vector<32x512xf32>,
    %c16_i32 = arith.constant 16 : i32
    %15 = tpu.dynamic_rotate %10 by %c16_i32 dim 1 : vector<32x512xf32>, i32 -> vector<32x512xf32>
    %c32 = arith.constant 32 : index
    %c0_11 = arith.constant 0 : index
    %16 = vector.load %arg2[%c32, %c0_11] : memref<256x512xf32, #tpu.memory_space<vmem>>, vector<32x512xf32>
    %17 = arith.mulf %15, %16 : vector<32x512xf32>
    %c32_12 = arith.constant 32 : index
    %c0_13 = arith.constant 0 : index
    %18 = vector.load %arg7[%c32_12, %c0_13] : memref<288x512xf32, #tpu.memory_space<vmem>>, vector<32x512xf32>
    tpu.vector_store %arg7[%c32_12, %c0_13], %17 {strides = array<i32>} : memref<288x512xf32, #tpu.memory_space<vmem>>, vector<32x512xf32>,
    %c15_i32 = arith.constant 15 : i32
    %19 = tpu.dynamic_rotate %10 by %c15_i32 dim 1 : vector<32x512xf32>, i32 -> vector<32x512xf32>
    %c64 = arith.constant 64 : index
    %c0_14 = arith.constant 0 : index
    %20 = vector.load %arg2[%c64, %c0_14] : memref<256x512xf32, #tpu.memory_space<vmem>>, vector<32x512xf32>
    %21 = arith.mulf %19, %20 : vector<32x512xf32>
    %c64_15 = arith.constant 64 : index
    %c0_16 = arith.constant 0 : index
    %22 = vector.load %arg7[%c64_15, %c0_16] : memref<288x512xf32, #tpu.memory_space<vmem>>, vector<32x512xf32>
    tpu.vector_store %arg7[%c64_15, %c0_16], %21 {strides = array<i32>} : memref<288x512xf32, #tpu.memory_space<vmem>>, vector<32x512xf32>,
    %c1_i32 = arith.constant 1 : i32
    %23 = tpu.dynamic_rotate %10 by %c1_i32 dim 1 : vector<32x512xf32>, i32 -> vector<32x512xf32>
    %c96 = arith.constant 96 : index
    %c0_17 = arith.constant 0 : index
    %24 = vector.load %arg2[%c96, %c0_17] : memref<256x512xf32, #tpu.memory_space<vmem>>, vector<32x512xf32>
    %25 = arith.mulf %23, %24 : vector<32x512xf32>
    %c96_18 = arith.constant 96 : index
    %c0_19 = arith.constant 0 : index
    %26 = vector.load %arg7[%c96_18, %c0_19] : memref<288x512xf32, #tpu.memory_space<vmem>>, vector<32x512xf32>
    tpu.vector_store %arg7[%c96_18, %c0_19], %25 {strides = array<i32>} : memref<288x512xf32, #tpu.memory_space<vmem>>, vector<32x512xf32>,
    %c128 = arith.constant 128 : index
    %c0_20 = arith.constant 0 : index
    %27 = vector.load %arg7[%c128, %c0_20] : memref<288x512xf32, #tpu.memory_space<vmem>>, vector<32x512xf32>
    tpu.vector_store %arg7[%c128, %c0_20], %10 {strides = array<i32>} : memref<288x512xf32, #tpu.memory_space<vmem>>, vector<32x512xf32>,
    %c511_i32 = arith.constant 511 : i32
    %28 = tpu.dynamic_rotate %10 by %c511_i32 dim 1 : vector<32x512xf32>, i32 -> vector<32x512xf32>
    %c128_21 = arith.constant 128 : index
    %c0_22 = arith.constant 0 : index
    %29 = vector.load %arg2[%c128_21, %c0_22] : memref<256x512xf32, #tpu.memory_space<vmem>>, vector<32x512xf32>
    %30 = arith.mulf %28, %29 : vector<32x512xf32>
    %c160 = arith.constant 160 : index
    %c0_23 = arith.constant 0 : index
    %31 = vector.load %arg7[%c160, %c0_23] : memref<288x512xf32, #tpu.memory_space<vmem>>, vector<32x512xf32>
    tpu.vector_store %arg7[%c160, %c0_23], %30 {strides = array<i32>} : memref<288x512xf32, #tpu.memory_space<vmem>>, vector<32x512xf32>,
    %c497_i32 = arith.constant 497 : i32
    %32 = tpu.dynamic_rotate %10 by %c497_i32 dim 1 : vector<32x512xf32>, i32 -> vector<32x512xf32>
    %c160_24 = arith.constant 160 : index
    %c0_25 = arith.constant 0 : index
    %33 = vector.load %arg2[%c160_24, %c0_25] : memref<256x512xf32, #tpu.memory_space<vmem>>, vector<32x512xf32>
    %34 = arith.mulf %32, %33 : vector<32x512xf32>
    %c192 = arith.constant 192 : index
    %c0_26 = arith.constant 0 : index
    %35 = vector.load %arg7[%c192, %c0_26] : memref<288x512xf32, #tpu.memory_space<vmem>>, vector<32x512xf32>
    tpu.vector_store %arg7[%c192, %c0_26], %34 {strides = array<i32>} : memref<288x512xf32, #tpu.memory_space<vmem>>, vector<32x512xf32>,
    %c496_i32 = arith.constant 496 : i32
    %36 = tpu.dynamic_rotate %10 by %c496_i32 dim 1 : vector<32x512xf32>, i32 -> vector<32x512xf32>
    %c192_27 = arith.constant 192 : index
    %c0_28 = arith.constant 0 : index
    %37 = vector.load %arg2[%c192_27, %c0_28] : memref<256x512xf32, #tpu.memory_space<vmem>>, vector<32x512xf32>
    %38 = arith.mulf %36, %37 : vector<32x512xf32>
    %c224 = arith.constant 224 : index
    %c0_29 = arith.constant 0 : index
    %39 = vector.load %arg7[%c224, %c0_29] : memref<288x512xf32, #tpu.memory_space<vmem>>, vector<32x512xf32>
    tpu.vector_store %arg7[%c224, %c0_29], %38 {strides = array<i32>} : memref<288x512xf32, #tpu.memory_space<vmem>>, vector<32x512xf32>,
    %c495_i32 = arith.constant 495 : i32
    %40 = tpu.dynamic_rotate %10 by %c495_i32 dim 1 : vector<32x512xf32>, i32 -> vector<32x512xf32>
    %c224_30 = arith.constant 224 : index
    %c0_31 = arith.constant 0 : index
    %41 = vector.load %arg2[%c224_30, %c0_31] : memref<256x512xf32, #tpu.memory_space<vmem>>, vector<32x512xf32>
    %42 = arith.mulf %40, %41 : vector<32x512xf32>
    %c256 = arith.constant 256 : index
    %c0_32 = arith.constant 0 : index
    %43 = vector.load %arg7[%c256, %c0_32] : memref<288x512xf32, #tpu.memory_space<vmem>>, vector<32x512xf32>
    tpu.vector_store %arg7[%c256, %c0_32], %42 {strides = array<i32>} : memref<288x512xf32, #tpu.memory_space<vmem>>, vector<32x512xf32>,
    %c0_33 = arith.constant 0 : index
    %c0_34 = arith.constant 0 : index
    %44 = vector.load %arg3[%c0_33, %c0_34] : memref<192x288xf32, #tpu.memory_space<vmem>>, vector<32x288xf32>
    %c0_35 = arith.constant 0 : index
    %c0_36 = arith.constant 0 : index
    %45 = vector.load %arg7[%c0_35, %c0_36] : memref<288x512xf32, #tpu.memory_space<vmem>>, vector<288x512xf32>
    %cst = arith.constant dense<0.000000e+00> : vector<32x512xf32>
    %46 = tpu.matmul %44, %45, %cst {dimension_numbers = #tpu.dot_dimension_numbers<[1], [0], [0], [1], [0, 0, 1, 1], [], []>} : vector<32x288xf32>, vector<288x512xf32>, vector<32x512xf32> -> vector<32x512xf32>
    %c0_37 = arith.constant 0 : index
    %c0_38 = arith.constant 0 : index
    %47 = vector.load %arg4[%c0_37, %c0_38] : memref<192x1xf32, #tpu.memory_space<vmem>>, vector<32x1xf32>
    %48 = vector.broadcast %47 : vector<32x1xf32> to vector<32x512xf32>
    %49 = arith.addf %46, %48 : vector<32x512xf32>
    %cst_39 = arith.constant 0.00999999977 : f32
    %50 = vector.broadcast %cst_39 : f32 to vector<32x512xf32>
    %51 = arith.mulf %50, %49 : vector<32x512xf32>
    %52 = arith.maximumf %49, %51 : vector<32x512xf32>
    %c17_i32_40 = arith.constant 17 : i32
    %53 = tpu.dynamic_rotate %52 by %c17_i32_40 dim 1 : vector<32x512xf32>, i32 -> vector<32x512xf32>
    %c0_41 = arith.constant 0 : index
    %c0_42 = arith.constant 0 : index
    %54 = vector.load %arg2[%c0_41, %c0_42] : memref<256x512xf32, #tpu.memory_space<vmem>>, vector<32x512xf32>
    %55 = arith.mulf %53, %54 : vector<32x512xf32>
    %c0_43 = arith.constant 0 : index
    %c0_44 = arith.constant 0 : index
    %56 = vector.load %arg7[%c0_43, %c0_44] : memref<288x512xf32, #tpu.memory_space<vmem>>, vector<32x512xf32>
    tpu.vector_store %arg7[%c0_43, %c0_44], %55 {strides = array<i32>} : memref<288x512xf32, #tpu.memory_space<vmem>>, vector<32x512xf32>,
    %c16_i32_45 = arith.constant 16 : i32
    %57 = tpu.dynamic_rotate %52 by %c16_i32_45 dim 1 : vector<32x512xf32>, i32 -> vector<32x512xf32>
    %c32_46 = arith.constant 32 : index
    %c0_47 = arith.constant 0 : index
    %58 = vector.load %arg2[%c32_46, %c0_47] : memref<256x512xf32, #tpu.memory_space<vmem>>, vector<32x512xf32>
    %59 = arith.mulf %57, %58 : vector<32x512xf32>
    %c32_48 = arith.constant 32 : index
    %c0_49 = arith.constant 0 : index
    %60 = vector.load %arg7[%c32_48, %c0_49] : memref<288x512xf32, #tpu.memory_space<vmem>>, vector<32x512xf32>
    tpu.vector_store %arg7[%c32_48, %c0_49], %59 {strides = array<i32>} : memref<288x512xf32, #tpu.memory_space<vmem>>, vector<32x512xf32>,
    %c15_i32_50 = arith.constant 15 : i32
    %61 = tpu.dynamic_rotate %52 by %c15_i32_50 dim 1 : vector<32x512xf32>, i32 -> vector<32x512xf32>
    %c64_51 = arith.constant 64 : index
    %c0_52 = arith.constant 0 : index
    %62 = vector.load %arg2[%c64_51, %c0_52] : memref<256x512xf32, #tpu.memory_space<vmem>>, vector<32x512xf32>
    %63 = arith.mulf %61, %62 : vector<32x512xf32>
    %c64_53 = arith.constant 64 : index
    %c0_54 = arith.constant 0 : index
    %64 = vector.load %arg7[%c64_53, %c0_54] : memref<288x512xf32, #tpu.memory_space<vmem>>, vector<32x512xf32>
    tpu.vector_store %arg7[%c64_53, %c0_54], %63 {strides = array<i32>} : memref<288x512xf32, #tpu.memory_space<vmem>>, vector<32x512xf32>,
    %c1_i32_55 = arith.constant 1 : i32
    %65 = tpu.dynamic_rotate %52 by %c1_i32_55 dim 1 : vector<32x512xf32>, i32 -> vector<32x512xf32>
    %c96_56 = arith.constant 96 : index
    %c0_57 = arith.constant 0 : index
    %66 = vector.load %arg2[%c96_56, %c0_57] : memref<256x512xf32, #tpu.memory_space<vmem>>, vector<32x512xf32>
    %67 = arith.mulf %65, %66 : vector<32x512xf32>
    %c96_58 = arith.constant 96 : index
    %c0_59 = arith.constant 0 : index
    %68 = vector.load %arg7[%c96_58, %c0_59] : memref<288x512xf32, #tpu.memory_space<vmem>>, vector<32x512xf32>
    tpu.vector_store %arg7[%c96_58, %c0_59], %67 {strides = array<i32>} : memref<288x512xf32, #tpu.memory_space<vmem>>, vector<32x512xf32>,
    %c128_60 = arith.constant 128 : index
    %c0_61 = arith.constant 0 : index
    %69 = vector.load %arg7[%c128_60, %c0_61] : memref<288x512xf32, #tpu.memory_space<vmem>>, vector<32x512xf32>
    tpu.vector_store %arg7[%c128_60, %c0_61], %52 {strides = array<i32>} : memref<288x512xf32, #tpu.memory_space<vmem>>, vector<32x512xf32>,
    %c511_i32_62 = arith.constant 511 : i32
    %70 = tpu.dynamic_rotate %52 by %c511_i32_62 dim 1 : vector<32x512xf32>, i32 -> vector<32x512xf32>
    %c128_63 = arith.constant 128 : index
    %c0_64 = arith.constant 0 : index
    %71 = vector.load %arg2[%c128_63, %c0_64] : memref<256x512xf32, #tpu.memory_space<vmem>>, vector<32x512xf32>
    %72 = arith.mulf %70, %71 : vector<32x512xf32>
    %c160_65 = arith.constant 160 : index
    %c0_66 = arith.constant 0 : index
    %73 = vector.load %arg7[%c160_65, %c0_66] : memref<288x512xf32, #tpu.memory_space<vmem>>, vector<32x512xf32>
    tpu.vector_store %arg7[%c160_65, %c0_66], %72 {strides = array<i32>} : memref<288x512xf32, #tpu.memory_space<vmem>>, vector<32x512xf32>,
    %c497_i32_67 = arith.constant 497 : i32
    %74 = tpu.dynamic_rotate %52 by %c497_i32_67 dim 1 : vector<32x512xf32>, i32 -> vector<32x512xf32>
    %c160_68 = arith.constant 160 : index
    %c0_69 = arith.constant 0 : index
    %75 = vector.load %arg2[%c160_68, %c0_69] : memref<256x512xf32, #tpu.memory_space<vmem>>, vector<32x512xf32>
    %76 = arith.mulf %74, %75 : vector<32x512xf32>
    %c192_70 = arith.constant 192 : index
    %c0_71 = arith.constant 0 : index
    %77 = vector.load %arg7[%c192_70, %c0_71] : memref<288x512xf32, #tpu.memory_space<vmem>>, vector<32x512xf32>
    tpu.vector_store %arg7[%c192_70, %c0_71], %76 {strides = array<i32>} : memref<288x512xf32, #tpu.memory_space<vmem>>, vector<32x512xf32>,
    %c496_i32_72 = arith.constant 496 : i32
    %78 = tpu.dynamic_rotate %52 by %c496_i32_72 dim 1 : vector<32x512xf32>, i32 -> vector<32x512xf32>
    %c192_73 = arith.constant 192 : index
    %c0_74 = arith.constant 0 : index
    %79 = vector.load %arg2[%c192_73, %c0_74] : memref<256x512xf32, #tpu.memory_space<vmem>>, vector<32x512xf32>
    %80 = arith.mulf %78, %79 : vector<32x512xf32>
    %c224_75 = arith.constant 224 : index
    %c0_76 = arith.constant 0 : index
    %81 = vector.load %arg7[%c224_75, %c0_76] : memref<288x512xf32, #tpu.memory_space<vmem>>, vector<32x512xf32>
    tpu.vector_store %arg7[%c224_75, %c0_76], %80 {strides = array<i32>} : memref<288x512xf32, #tpu.memory_space<vmem>>, vector<32x512xf32>,
    %c495_i32_77 = arith.constant 495 : i32
    %82 = tpu.dynamic_rotate %52 by %c495_i32_77 dim 1 : vector<32x512xf32>, i32 -> vector<32x512xf32>
    %c224_78 = arith.constant 224 : index
    %c0_79 = arith.constant 0 : index
    %83 = vector.load %arg2[%c224_78, %c0_79] : memref<256x512xf32, #tpu.memory_space<vmem>>, vector<32x512xf32>
    %84 = arith.mulf %82, %83 : vector<32x512xf32>
    %c256_80 = arith.constant 256 : index
    %c0_81 = arith.constant 0 : index
    %85 = vector.load %arg7[%c256_80, %c0_81] : memref<288x512xf32, #tpu.memory_space<vmem>>, vector<32x512xf32>
    tpu.vector_store %arg7[%c256_80, %c0_81], %84 {strides = array<i32>} : memref<288x512xf32, #tpu.memory_space<vmem>>, vector<32x512xf32>,
    %c32_82 = arith.constant 32 : index
    %c0_83 = arith.constant 0 : index
    %86 = vector.load %arg3[%c32_82, %c0_83] : memref<192x288xf32, #tpu.memory_space<vmem>>, vector<32x288xf32>
    %c0_84 = arith.constant 0 : index
    %c0_85 = arith.constant 0 : index
    %87 = vector.load %arg7[%c0_84, %c0_85] : memref<288x512xf32, #tpu.memory_space<vmem>>, vector<288x512xf32>
    %cst_86 = arith.constant dense<0.000000e+00> : vector<32x512xf32>
    %88 = tpu.matmul %86, %87, %cst_86 {dimension_numbers = #tpu.dot_dimension_numbers<[1], [0], [0], [1], [0, 0, 1, 1], [], []>} : vector<32x288xf32>, vector<288x512xf32>, vector<32x512xf32> -> vector<32x512xf32>
    %c32_87 = arith.constant 32 : index
    %c0_88 = arith.constant 0 : index
    %89 = vector.load %arg4[%c32_87, %c0_88] : memref<192x1xf32, #tpu.memory_space<vmem>>, vector<32x1xf32>
    %90 = vector.broadcast %89 : vector<32x1xf32> to vector<32x512xf32>
    %91 = arith.addf %88, %90 : vector<32x512xf32>
    %92 = arith.addf %91, %10 : vector<32x512xf32>
    %c17_i32_89 = arith.constant 17 : i32
    %93 = tpu.dynamic_rotate %92 by %c17_i32_89 dim 1 : vector<32x512xf32>, i32 -> vector<32x512xf32>
    %c0_90 = arith.constant 0 : index
    %c0_91 = arith.constant 0 : index
    %94 = vector.load %arg2[%c0_90, %c0_91] : memref<256x512xf32, #tpu.memory_space<vmem>>, vector<32x512xf32>
    %95 = arith.mulf %93, %94 : vector<32x512xf32>
    %c0_92 = arith.constant 0 : index
    %c0_93 = arith.constant 0 : index
    %96 = vector.load %arg7[%c0_92, %c0_93] : memref<288x512xf32, #tpu.memory_space<vmem>>, vector<32x512xf32>
    tpu.vector_store %arg7[%c0_92, %c0_93], %95 {strides = array<i32>} : memref<288x512xf32, #tpu.memory_space<vmem>>, vector<32x512xf32>,
    %c16_i32_94 = arith.constant 16 : i32
    %97 = tpu.dynamic_rotate %92 by %c16_i32_94 dim 1 : vector<32x512xf32>, i32 -> vector<32x512xf32>
    %c32_95 = arith.constant 32 : index
    %c0_96 = arith.constant 0 : index
    %98 = vector.load %arg2[%c32_95, %c0_96] : memref<256x512xf32, #tpu.memory_space<vmem>>, vector<32x512xf32>
    %99 = arith.mulf %97, %98 : vector<32x512xf32>
    %c32_97 = arith.constant 32 : index
    %c0_98 = arith.constant 0 : index
    %100 = vector.load %arg7[%c32_97, %c0_98] : memref<288x512xf32, #tpu.memory_space<vmem>>, vector<32x512xf32>
    tpu.vector_store %arg7[%c32_97, %c0_98], %99 {strides = array<i32>} : memref<288x512xf32, #tpu.memory_space<vmem>>, vector<32x512xf32>,
    %c15_i32_99 = arith.constant 15 : i32
    %101 = tpu.dynamic_rotate %92 by %c15_i32_99 dim 1 : vector<32x512xf32>, i32 -> vector<32x512xf32>
    %c64_100 = arith.constant 64 : index
    %c0_101 = arith.constant 0 : index
    %102 = vector.load %arg2[%c64_100, %c0_101] : memref<256x512xf32, #tpu.memory_space<vmem>>, vector<32x512xf32>
    %103 = arith.mulf %101, %102 : vector<32x512xf32>
    %c64_102 = arith.constant 64 : index
    %c0_103 = arith.constant 0 : index
    %104 = vector.load %arg7[%c64_102, %c0_103] : memref<288x512xf32, #tpu.memory_space<vmem>>, vector<32x512xf32>
    tpu.vector_store %arg7[%c64_102, %c0_103], %103 {strides = array<i32>} : memref<288x512xf32, #tpu.memory_space<vmem>>, vector<32x512xf32>,
    %c1_i32_104 = arith.constant 1 : i32
    %105 = tpu.dynamic_rotate %92 by %c1_i32_104 dim 1 : vector<32x512xf32>, i32 -> vector<32x512xf32>
    %c96_105 = arith.constant 96 : index
    %c0_106 = arith.constant 0 : index
    %106 = vector.load %arg2[%c96_105, %c0_106] : memref<256x512xf32, #tpu.memory_space<vmem>>, vector<32x512xf32>
    %107 = arith.mulf %105, %106 : vector<32x512xf32>
    %c96_107 = arith.constant 96 : index
    %c0_108 = arith.constant 0 : index
    %108 = vector.load %arg7[%c96_107, %c0_108] : memref<288x512xf32, #tpu.memory_space<vmem>>, vector<32x512xf32>
    tpu.vector_store %arg7[%c96_107, %c0_108], %107 {strides = array<i32>} : memref<288x512xf32, #tpu.memory_space<vmem>>, vector<32x512xf32>,
    %c128_109 = arith.constant 128 : index
    %c0_110 = arith.constant 0 : index
    %109 = vector.load %arg7[%c128_109, %c0_110] : memref<288x512xf32, #tpu.memory_space<vmem>>, vector<32x512xf32>
    tpu.vector_store %arg7[%c128_109, %c0_110], %92 {strides = array<i32>} : memref<288x512xf32, #tpu.memory_space<vmem>>, vector<32x512xf32>,
    %c511_i32_111 = arith.constant 511 : i32
    %110 = tpu.dynamic_rotate %92 by %c511_i32_111 dim 1 : vector<32x512xf32>, i32 -> vector<32x512xf32>
    %c128_112 = arith.constant 128 : index
    %c0_113 = arith.constant 0 : index
    %111 = vector.load %arg2[%c128_112, %c0_113] : memref<256x512xf32, #tpu.memory_space<vmem>>, vector<32x512xf32>
    %112 = arith.mulf %110, %111 : vector<32x512xf32>
    %c160_114 = arith.constant 160 : index
    %c0_115 = arith.constant 0 : index
    %113 = vector.load %arg7[%c160_114, %c0_115] : memref<288x512xf32, #tpu.memory_space<vmem>>, vector<32x512xf32>
    tpu.vector_store %arg7[%c160_114, %c0_115], %112 {strides = array<i32>} : memref<288x512xf32, #tpu.memory_space<vmem>>, vector<32x512xf32>,
    %c497_i32_116 = arith.constant 497 : i32
    %114 = tpu.dynamic_rotate %92 by %c497_i32_116 dim 1 : vector<32x512xf32>, i32 -> vector<32x512xf32>
    %c160_117 = arith.constant 160 : index
    %c0_118 = arith.constant 0 : index
    %115 = vector.load %arg2[%c160_117, %c0_118] : memref<256x512xf32, #tpu.memory_space<vmem>>, vector<32x512xf32>
    %116 = arith.mulf %114, %115 : vector<32x512xf32>
    %c192_119 = arith.constant 192 : index
    %c0_120 = arith.constant 0 : index
    %117 = vector.load %arg7[%c192_119, %c0_120] : memref<288x512xf32, #tpu.memory_space<vmem>>, vector<32x512xf32>
    tpu.vector_store %arg7[%c192_119, %c0_120], %116 {strides = array<i32>} : memref<288x512xf32, #tpu.memory_space<vmem>>, vector<32x512xf32>,
    %c496_i32_121 = arith.constant 496 : i32
    %118 = tpu.dynamic_rotate %92 by %c496_i32_121 dim 1 : vector<32x512xf32>, i32 -> vector<32x512xf32>
    %c192_122 = arith.constant 192 : index
    %c0_123 = arith.constant 0 : index
    %119 = vector.load %arg2[%c192_122, %c0_123] : memref<256x512xf32, #tpu.memory_space<vmem>>, vector<32x512xf32>
    %120 = arith.mulf %118, %119 : vector<32x512xf32>
    %c224_124 = arith.constant 224 : index
    %c0_125 = arith.constant 0 : index
    %121 = vector.load %arg7[%c224_124, %c0_125] : memref<288x512xf32, #tpu.memory_space<vmem>>, vector<32x512xf32>
    tpu.vector_store %arg7[%c224_124, %c0_125], %120 {strides = array<i32>} : memref<288x512xf32, #tpu.memory_space<vmem>>, vector<32x512xf32>,
    %c495_i32_126 = arith.constant 495 : i32
    %122 = tpu.dynamic_rotate %92 by %c495_i32_126 dim 1 : vector<32x512xf32>, i32 -> vector<32x512xf32>
    %c224_127 = arith.constant 224 : index
    %c0_128 = arith.constant 0 : index
    %123 = vector.load %arg2[%c224_127, %c0_128] : memref<256x512xf32, #tpu.memory_space<vmem>>, vector<32x512xf32>
    %124 = arith.mulf %122, %123 : vector<32x512xf32>
    %c256_129 = arith.constant 256 : index
    %c0_130 = arith.constant 0 : index
    %125 = vector.load %arg7[%c256_129, %c0_130] : memref<288x512xf32, #tpu.memory_space<vmem>>, vector<32x512xf32>
    tpu.vector_store %arg7[%c256_129, %c0_130], %124 {strides = array<i32>} : memref<288x512xf32, #tpu.memory_space<vmem>>, vector<32x512xf32>,
    %c64_131 = arith.constant 64 : index
    %c0_132 = arith.constant 0 : index
    %126 = vector.load %arg3[%c64_131, %c0_132] : memref<192x288xf32, #tpu.memory_space<vmem>>, vector<32x288xf32>
    %c0_133 = arith.constant 0 : index
    %c0_134 = arith.constant 0 : index
    %127 = vector.load %arg7[%c0_133, %c0_134] : memref<288x512xf32, #tpu.memory_space<vmem>>, vector<288x512xf32>
    %cst_135 = arith.constant dense<0.000000e+00> : vector<32x512xf32>
    %128 = tpu.matmul %126, %127, %cst_135 {dimension_numbers = #tpu.dot_dimension_numbers<[1], [0], [0], [1], [0, 0, 1, 1], [], []>} : vector<32x288xf32>, vector<288x512xf32>, vector<32x512xf32> -> vector<32x512xf32>
    %c64_136 = arith.constant 64 : index
    %c0_137 = arith.constant 0 : index
    %129 = vector.load %arg4[%c64_136, %c0_137] : memref<192x1xf32, #tpu.memory_space<vmem>>, vector<32x1xf32>
    %130 = vector.broadcast %129 : vector<32x1xf32> to vector<32x512xf32>
    %131 = arith.addf %128, %130 : vector<32x512xf32>
    %cst_138 = arith.constant 0.00999999977 : f32
    %132 = vector.broadcast %cst_138 : f32 to vector<32x512xf32>
    %133 = arith.mulf %132, %131 : vector<32x512xf32>
    %134 = arith.maximumf %131, %133 : vector<32x512xf32>
    %c17_i32_139 = arith.constant 17 : i32
    %135 = tpu.dynamic_rotate %134 by %c17_i32_139 dim 1 : vector<32x512xf32>, i32 -> vector<32x512xf32>
    %c0_140 = arith.constant 0 : index
    %c0_141 = arith.constant 0 : index
    %136 = vector.load %arg2[%c0_140, %c0_141] : memref<256x512xf32, #tpu.memory_space<vmem>>, vector<32x512xf32>
    %137 = arith.mulf %135, %136 : vector<32x512xf32>
    %c0_142 = arith.constant 0 : index
    %c0_143 = arith.constant 0 : index
    %138 = vector.load %arg7[%c0_142, %c0_143] : memref<288x512xf32, #tpu.memory_space<vmem>>, vector<32x512xf32>
    tpu.vector_store %arg7[%c0_142, %c0_143], %137 {strides = array<i32>} : memref<288x512xf32, #tpu.memory_space<vmem>>, vector<32x512xf32>,
    %c16_i32_144 = arith.constant 16 : i32
    %139 = tpu.dynamic_rotate %134 by %c16_i32_144 dim 1 : vector<32x512xf32>, i32 -> vector<32x512xf32>
    %c32_145 = arith.constant 32 : index
    %c0_146 = arith.constant 0 : index
    %140 = vector.load %arg2[%c32_145, %c0_146] : memref<256x512xf32, #tpu.memory_space<vmem>>, vector<32x512xf32>
    %141 = arith.mulf %139, %140 : vector<32x512xf32>
    %c32_147 = arith.constant 32 : index
    %c0_148 = arith.constant 0 : index
    %142 = vector.load %arg7[%c32_147, %c0_148] : memref<288x512xf32, #tpu.memory_space<vmem>>, vector<32x512xf32>
    tpu.vector_store %arg7[%c32_147, %c0_148], %141 {strides = array<i32>} : memref<288x512xf32, #tpu.memory_space<vmem>>, vector<32x512xf32>,
    %c15_i32_149 = arith.constant 15 : i32
    %143 = tpu.dynamic_rotate %134 by %c15_i32_149 dim 1 : vector<32x512xf32>, i32 -> vector<32x512xf32>
    %c64_150 = arith.constant 64 : index
    %c0_151 = arith.constant 0 : index
    %144 = vector.load %arg2[%c64_150, %c0_151] : memref<256x512xf32, #tpu.memory_space<vmem>>, vector<32x512xf32>
    %145 = arith.mulf %143, %144 : vector<32x512xf32>
    %c64_152 = arith.constant 64 : index
    %c0_153 = arith.constant 0 : index
    %146 = vector.load %arg7[%c64_152, %c0_153] : memref<288x512xf32, #tpu.memory_space<vmem>>, vector<32x512xf32>
    tpu.vector_store %arg7[%c64_152, %c0_153], %145 {strides = array<i32>} : memref<288x512xf32, #tpu.memory_space<vmem>>, vector<32x512xf32>,
    %c1_i32_154 = arith.constant 1 : i32
    %147 = tpu.dynamic_rotate %134 by %c1_i32_154 dim 1 : vector<32x512xf32>, i32 -> vector<32x512xf32>
    %c96_155 = arith.constant 96 : index
    %c0_156 = arith.constant 0 : index
    %148 = vector.load %arg2[%c96_155, %c0_156] : memref<256x512xf32, #tpu.memory_space<vmem>>, vector<32x512xf32>
    %149 = arith.mulf %147, %148 : vector<32x512xf32>
    %c96_157 = arith.constant 96 : index
    %c0_158 = arith.constant 0 : index
    %150 = vector.load %arg7[%c96_157, %c0_158] : memref<288x512xf32, #tpu.memory_space<vmem>>, vector<32x512xf32>
    tpu.vector_store %arg7[%c96_157, %c0_158], %149 {strides = array<i32>} : memref<288x512xf32, #tpu.memory_space<vmem>>, vector<32x512xf32>,
    %c128_159 = arith.constant 128 : index
    %c0_160 = arith.constant 0 : index
    %151 = vector.load %arg7[%c128_159, %c0_160] : memref<288x512xf32, #tpu.memory_space<vmem>>, vector<32x512xf32>
    tpu.vector_store %arg7[%c128_159, %c0_160], %134 {strides = array<i32>} : memref<288x512xf32, #tpu.memory_space<vmem>>, vector<32x512xf32>,
    %c511_i32_161 = arith.constant 511 : i32
    %152 = tpu.dynamic_rotate %134 by %c511_i32_161 dim 1 : vector<32x512xf32>, i32 -> vector<32x512xf32>
    %c128_162 = arith.constant 128 : index
    %c0_163 = arith.constant 0 : index
    %153 = vector.load %arg2[%c128_162, %c0_163] : memref<256x512xf32, #tpu.memory_space<vmem>>, vector<32x512xf32>
    %154 = arith.mulf %152, %153 : vector<32x512xf32>
    %c160_164 = arith.constant 160 : index
    %c0_165 = arith.constant 0 : index
    %155 = vector.load %arg7[%c160_164, %c0_165] : memref<288x512xf32, #tpu.memory_space<vmem>>, vector<32x512xf32>
    tpu.vector_store %arg7[%c160_164, %c0_165], %154 {strides = array<i32>} : memref<288x512xf32, #tpu.memory_space<vmem>>, vector<32x512xf32>,
    %c497_i32_166 = arith.constant 497 : i32
    %156 = tpu.dynamic_rotate %134 by %c497_i32_166 dim 1 : vector<32x512xf32>, i32 -> vector<32x512xf32>
    %c160_167 = arith.constant 160 : index
    %c0_168 = arith.constant 0 : index
    %157 = vector.load %arg2[%c160_167, %c0_168] : memref<256x512xf32, #tpu.memory_space<vmem>>, vector<32x512xf32>
    %158 = arith.mulf %156, %157 : vector<32x512xf32>
    %c192_169 = arith.constant 192 : index
    %c0_170 = arith.constant 0 : index
    %159 = vector.load %arg7[%c192_169, %c0_170] : memref<288x512xf32, #tpu.memory_space<vmem>>, vector<32x512xf32>
    tpu.vector_store %arg7[%c192_169, %c0_170], %158 {strides = array<i32>} : memref<288x512xf32, #tpu.memory_space<vmem>>, vector<32x512xf32>,
    %c496_i32_171 = arith.constant 496 : i32
    %160 = tpu.dynamic_rotate %134 by %c496_i32_171 dim 1 : vector<32x512xf32>, i32 -> vector<32x512xf32>
    %c192_172 = arith.constant 192 : index
    %c0_173 = arith.constant 0 : index
    %161 = vector.load %arg2[%c192_172, %c0_173] : memref<256x512xf32, #tpu.memory_space<vmem>>, vector<32x512xf32>
    %162 = arith.mulf %160, %161 : vector<32x512xf32>
    %c224_174 = arith.constant 224 : index
    %c0_175 = arith.constant 0 : index
    %163 = vector.load %arg7[%c224_174, %c0_175] : memref<288x512xf32, #tpu.memory_space<vmem>>, vector<32x512xf32>
    tpu.vector_store %arg7[%c224_174, %c0_175], %162 {strides = array<i32>} : memref<288x512xf32, #tpu.memory_space<vmem>>, vector<32x512xf32>,
    %c495_i32_176 = arith.constant 495 : i32
    %164 = tpu.dynamic_rotate %134 by %c495_i32_176 dim 1 : vector<32x512xf32>, i32 -> vector<32x512xf32>
    %c224_177 = arith.constant 224 : index
    %c0_178 = arith.constant 0 : index
    %165 = vector.load %arg2[%c224_177, %c0_178] : memref<256x512xf32, #tpu.memory_space<vmem>>, vector<32x512xf32>
    %166 = arith.mulf %164, %165 : vector<32x512xf32>
    %c256_179 = arith.constant 256 : index
    %c0_180 = arith.constant 0 : index
    %167 = vector.load %arg7[%c256_179, %c0_180] : memref<288x512xf32, #tpu.memory_space<vmem>>, vector<32x512xf32>
    tpu.vector_store %arg7[%c256_179, %c0_180], %166 {strides = array<i32>} : memref<288x512xf32, #tpu.memory_space<vmem>>, vector<32x512xf32>,
    %c96_181 = arith.constant 96 : index
    %c0_182 = arith.constant 0 : index
    %168 = vector.load %arg3[%c96_181, %c0_182] : memref<192x288xf32, #tpu.memory_space<vmem>>, vector<32x288xf32>
    %c0_183 = arith.constant 0 : index
    %c0_184 = arith.constant 0 : index
    %169 = vector.load %arg7[%c0_183, %c0_184] : memref<288x512xf32, #tpu.memory_space<vmem>>, vector<288x512xf32>
    %cst_185 = arith.constant dense<0.000000e+00> : vector<32x512xf32>
    %170 = tpu.matmul %168, %169, %cst_185 {dimension_numbers = #tpu.dot_dimension_numbers<[1], [0], [0], [1], [0, 0, 1, 1], [], []>} : vector<32x288xf32>, vector<288x512xf32>, vector<32x512xf32> -> vector<32x512xf32>
    %c96_186 = arith.constant 96 : index
    %c0_187 = arith.constant 0 : index
    %171 = vector.load %arg4[%c96_186, %c0_187] : memref<192x1xf32, #tpu.memory_space<vmem>>, vector<32x1xf32>
    %172 = vector.broadcast %171 : vector<32x1xf32> to vector<32x512xf32>
    %173 = arith.addf %170, %172 : vector<32x512xf32>
    %174 = arith.addf %173, %92 : vector<32x512xf32>
    %c17_i32_188 = arith.constant 17 : i32
    %175 = tpu.dynamic_rotate %174 by %c17_i32_188 dim 1 : vector<32x512xf32>, i32 -> vector<32x512xf32>
    %c0_189 = arith.constant 0 : index
    %c0_190 = arith.constant 0 : index
    %176 = vector.load %arg2[%c0_189, %c0_190] : memref<256x512xf32, #tpu.memory_space<vmem>>, vector<32x512xf32>
    %177 = arith.mulf %175, %176 : vector<32x512xf32>
    %c0_191 = arith.constant 0 : index
    %c0_192 = arith.constant 0 : index
    %178 = vector.load %arg7[%c0_191, %c0_192] : memref<288x512xf32, #tpu.memory_space<vmem>>, vector<32x512xf32>
    tpu.vector_store %arg7[%c0_191, %c0_192], %177 {strides = array<i32>} : memref<288x512xf32, #tpu.memory_space<vmem>>, vector<32x512xf32>,
    %c16_i32_193 = arith.constant 16 : i32
    %179 = tpu.dynamic_rotate %174 by %c16_i32_193 dim 1 : vector<32x512xf32>, i32 -> vector<32x512xf32>
    %c32_194 = arith.constant 32 : index
    %c0_195 = arith.constant 0 : index
    %180 = vector.load %arg2[%c32_194, %c0_195] : memref<256x512xf32, #tpu.memory_space<vmem>>, vector<32x512xf32>
    %181 = arith.mulf %179, %180 : vector<32x512xf32>
    %c32_196 = arith.constant 32 : index
    %c0_197 = arith.constant 0 : index
    %182 = vector.load %arg7[%c32_196, %c0_197] : memref<288x512xf32, #tpu.memory_space<vmem>>, vector<32x512xf32>
    tpu.vector_store %arg7[%c32_196, %c0_197], %181 {strides = array<i32>} : memref<288x512xf32, #tpu.memory_space<vmem>>, vector<32x512xf32>,
    %c15_i32_198 = arith.constant 15 : i32
    %183 = tpu.dynamic_rotate %174 by %c15_i32_198 dim 1 : vector<32x512xf32>, i32 -> vector<32x512xf32>
    %c64_199 = arith.constant 64 : index
    %c0_200 = arith.constant 0 : index
    %184 = vector.load %arg2[%c64_199, %c0_200] : memref<256x512xf32, #tpu.memory_space<vmem>>, vector<32x512xf32>
    %185 = arith.mulf %183, %184 : vector<32x512xf32>
    %c64_201 = arith.constant 64 : index
    %c0_202 = arith.constant 0 : index
    %186 = vector.load %arg7[%c64_201, %c0_202] : memref<288x512xf32, #tpu.memory_space<vmem>>, vector<32x512xf32>
    tpu.vector_store %arg7[%c64_201, %c0_202], %185 {strides = array<i32>} : memref<288x512xf32, #tpu.memory_space<vmem>>, vector<32x512xf32>,
    %c1_i32_203 = arith.constant 1 : i32
    %187 = tpu.dynamic_rotate %174 by %c1_i32_203 dim 1 : vector<32x512xf32>, i32 -> vector<32x512xf32>
    %c96_204 = arith.constant 96 : index
    %c0_205 = arith.constant 0 : index
    %188 = vector.load %arg2[%c96_204, %c0_205] : memref<256x512xf32, #tpu.memory_space<vmem>>, vector<32x512xf32>
    %189 = arith.mulf %187, %188 : vector<32x512xf32>
    %c96_206 = arith.constant 96 : index
    %c0_207 = arith.constant 0 : index
    %190 = vector.load %arg7[%c96_206, %c0_207] : memref<288x512xf32, #tpu.memory_space<vmem>>, vector<32x512xf32>
    tpu.vector_store %arg7[%c96_206, %c0_207], %189 {strides = array<i32>} : memref<288x512xf32, #tpu.memory_space<vmem>>, vector<32x512xf32>,
    %c128_208 = arith.constant 128 : index
    %c0_209 = arith.constant 0 : index
    %191 = vector.load %arg7[%c128_208, %c0_209] : memref<288x512xf32, #tpu.memory_space<vmem>>, vector<32x512xf32>
    tpu.vector_store %arg7[%c128_208, %c0_209], %174 {strides = array<i32>} : memref<288x512xf32, #tpu.memory_space<vmem>>, vector<32x512xf32>,
    %c511_i32_210 = arith.constant 511 : i32
    %192 = tpu.dynamic_rotate %174 by %c511_i32_210 dim 1 : vector<32x512xf32>, i32 -> vector<32x512xf32>
    %c128_211 = arith.constant 128 : index
    %c0_212 = arith.constant 0 : index
    %193 = vector.load %arg2[%c128_211, %c0_212] : memref<256x512xf32, #tpu.memory_space<vmem>>, vector<32x512xf32>
    %194 = arith.mulf %192, %193 : vector<32x512xf32>
    %c160_213 = arith.constant 160 : index
    %c0_214 = arith.constant 0 : index
    %195 = vector.load %arg7[%c160_213, %c0_214] : memref<288x512xf32, #tpu.memory_space<vmem>>, vector<32x512xf32>
    tpu.vector_store %arg7[%c160_213, %c0_214], %194 {strides = array<i32>} : memref<288x512xf32, #tpu.memory_space<vmem>>, vector<32x512xf32>,
    %c497_i32_215 = arith.constant 497 : i32
    %196 = tpu.dynamic_rotate %174 by %c497_i32_215 dim 1 : vector<32x512xf32>, i32 -> vector<32x512xf32>
    %c160_216 = arith.constant 160 : index
    %c0_217 = arith.constant 0 : index
    %197 = vector.load %arg2[%c160_216, %c0_217] : memref<256x512xf32, #tpu.memory_space<vmem>>, vector<32x512xf32>
    %198 = arith.mulf %196, %197 : vector<32x512xf32>
    %c192_218 = arith.constant 192 : index
    %c0_219 = arith.constant 0 : index
    %199 = vector.load %arg7[%c192_218, %c0_219] : memref<288x512xf32, #tpu.memory_space<vmem>>, vector<32x512xf32>
    tpu.vector_store %arg7[%c192_218, %c0_219], %198 {strides = array<i32>} : memref<288x512xf32, #tpu.memory_space<vmem>>, vector<32x512xf32>,
    %c496_i32_220 = arith.constant 496 : i32
    %200 = tpu.dynamic_rotate %174 by %c496_i32_220 dim 1 : vector<32x512xf32>, i32 -> vector<32x512xf32>
    %c192_221 = arith.constant 192 : index
    %c0_222 = arith.constant 0 : index
    %201 = vector.load %arg2[%c192_221, %c0_222] : memref<256x512xf32, #tpu.memory_space<vmem>>, vector<32x512xf32>
    %202 = arith.mulf %200, %201 : vector<32x512xf32>
    %c224_223 = arith.constant 224 : index
    %c0_224 = arith.constant 0 : index
    %203 = vector.load %arg7[%c224_223, %c0_224] : memref<288x512xf32, #tpu.memory_space<vmem>>, vector<32x512xf32>
    tpu.vector_store %arg7[%c224_223, %c0_224], %202 {strides = array<i32>} : memref<288x512xf32, #tpu.memory_space<vmem>>, vector<32x512xf32>,
    %c495_i32_225 = arith.constant 495 : i32
    %204 = tpu.dynamic_rotate %174 by %c495_i32_225 dim 1 : vector<32x512xf32>, i32 -> vector<32x512xf32>
    %c224_226 = arith.constant 224 : index
    %c0_227 = arith.constant 0 : index
    %205 = vector.load %arg2[%c224_226, %c0_227] : memref<256x512xf32, #tpu.memory_space<vmem>>, vector<32x512xf32>
    %206 = arith.mulf %204, %205 : vector<32x512xf32>
    %c256_228 = arith.constant 256 : index
    %c0_229 = arith.constant 0 : index
    %207 = vector.load %arg7[%c256_228, %c0_229] : memref<288x512xf32, #tpu.memory_space<vmem>>, vector<32x512xf32>
    tpu.vector_store %arg7[%c256_228, %c0_229], %206 {strides = array<i32>} : memref<288x512xf32, #tpu.memory_space<vmem>>, vector<32x512xf32>,
    %c128_230 = arith.constant 128 : index
    %c0_231 = arith.constant 0 : index
    %208 = vector.load %arg3[%c128_230, %c0_231] : memref<192x288xf32, #tpu.memory_space<vmem>>, vector<32x288xf32>
    %c0_232 = arith.constant 0 : index
    %c0_233 = arith.constant 0 : index
    %209 = vector.load %arg7[%c0_232, %c0_233] : memref<288x512xf32, #tpu.memory_space<vmem>>, vector<288x512xf32>
    %cst_234 = arith.constant dense<0.000000e+00> : vector<32x512xf32>
    %210 = tpu.matmul %208, %209, %cst_234 {dimension_numbers = #tpu.dot_dimension_numbers<[1], [0], [0], [1], [0, 0, 1, 1], [], []>} : vector<32x288xf32>, vector<288x512xf32>, vector<32x512xf32> -> vector<32x512xf32>
    %c128_235 = arith.constant 128 : index
    %c0_236 = arith.constant 0 : index
    %211 = vector.load %arg4[%c128_235, %c0_236] : memref<192x1xf32, #tpu.memory_space<vmem>>, vector<32x1xf32>
    %212 = vector.broadcast %211 : vector<32x1xf32> to vector<32x512xf32>
    %213 = arith.addf %210, %212 : vector<32x512xf32>
    %cst_237 = arith.constant 0.00999999977 : f32
    %214 = vector.broadcast %cst_237 : f32 to vector<32x512xf32>
    %215 = arith.mulf %214, %213 : vector<32x512xf32>
    %216 = arith.maximumf %213, %215 : vector<32x512xf32>
    %c17_i32_238 = arith.constant 17 : i32
    %217 = tpu.dynamic_rotate %216 by %c17_i32_238 dim 1 : vector<32x512xf32>, i32 -> vector<32x512xf32>
    %c0_239 = arith.constant 0 : index
    %c0_240 = arith.constant 0 : index
    %218 = vector.load %arg2[%c0_239, %c0_240] : memref<256x512xf32, #tpu.memory_space<vmem>>, vector<32x512xf32>
    %219 = arith.mulf %217, %218 : vector<32x512xf32>
    %c0_241 = arith.constant 0 : index
    %c0_242 = arith.constant 0 : index
    %220 = vector.load %arg7[%c0_241, %c0_242] : memref<288x512xf32, #tpu.memory_space<vmem>>, vector<32x512xf32>
    tpu.vector_store %arg7[%c0_241, %c0_242], %219 {strides = array<i32>} : memref<288x512xf32, #tpu.memory_space<vmem>>, vector<32x512xf32>,
    %c16_i32_243 = arith.constant 16 : i32
    %221 = tpu.dynamic_rotate %216 by %c16_i32_243 dim 1 : vector<32x512xf32>, i32 -> vector<32x512xf32>
    %c32_244 = arith.constant 32 : index
    %c0_245 = arith.constant 0 : index
    %222 = vector.load %arg2[%c32_244, %c0_245] : memref<256x512xf32, #tpu.memory_space<vmem>>, vector<32x512xf32>
    %223 = arith.mulf %221, %222 : vector<32x512xf32>
    %c32_246 = arith.constant 32 : index
    %c0_247 = arith.constant 0 : index
    %224 = vector.load %arg7[%c32_246, %c0_247] : memref<288x512xf32, #tpu.memory_space<vmem>>, vector<32x512xf32>
    tpu.vector_store %arg7[%c32_246, %c0_247], %223 {strides = array<i32>} : memref<288x512xf32, #tpu.memory_space<vmem>>, vector<32x512xf32>,
    %c15_i32_248 = arith.constant 15 : i32
    %225 = tpu.dynamic_rotate %216 by %c15_i32_248 dim 1 : vector<32x512xf32>, i32 -> vector<32x512xf32>
    %c64_249 = arith.constant 64 : index
    %c0_250 = arith.constant 0 : index
    %226 = vector.load %arg2[%c64_249, %c0_250] : memref<256x512xf32, #tpu.memory_space<vmem>>, vector<32x512xf32>
    %227 = arith.mulf %225, %226 : vector<32x512xf32>
    %c64_251 = arith.constant 64 : index
    %c0_252 = arith.constant 0 : index
    %228 = vector.load %arg7[%c64_251, %c0_252] : memref<288x512xf32, #tpu.memory_space<vmem>>, vector<32x512xf32>
    tpu.vector_store %arg7[%c64_251, %c0_252], %227 {strides = array<i32>} : memref<288x512xf32, #tpu.memory_space<vmem>>, vector<32x512xf32>,
    %c1_i32_253 = arith.constant 1 : i32
    %229 = tpu.dynamic_rotate %216 by %c1_i32_253 dim 1 : vector<32x512xf32>, i32 -> vector<32x512xf32>
    %c96_254 = arith.constant 96 : index
    %c0_255 = arith.constant 0 : index
    %230 = vector.load %arg2[%c96_254, %c0_255] : memref<256x512xf32, #tpu.memory_space<vmem>>, vector<32x512xf32>
    %231 = arith.mulf %229, %230 : vector<32x512xf32>
    %c96_256 = arith.constant 96 : index
    %c0_257 = arith.constant 0 : index
    %232 = vector.load %arg7[%c96_256, %c0_257] : memref<288x512xf32, #tpu.memory_space<vmem>>, vector<32x512xf32>
    tpu.vector_store %arg7[%c96_256, %c0_257], %231 {strides = array<i32>} : memref<288x512xf32, #tpu.memory_space<vmem>>, vector<32x512xf32>,
    %c128_258 = arith.constant 128 : index
    %c0_259 = arith.constant 0 : index
    %233 = vector.load %arg7[%c128_258, %c0_259] : memref<288x512xf32, #tpu.memory_space<vmem>>, vector<32x512xf32>
    tpu.vector_store %arg7[%c128_258, %c0_259], %216 {strides = array<i32>} : memref<288x512xf32, #tpu.memory_space<vmem>>, vector<32x512xf32>,
    %c511_i32_260 = arith.constant 511 : i32
    %234 = tpu.dynamic_rotate %216 by %c511_i32_260 dim 1 : vector<32x512xf32>, i32 -> vector<32x512xf32>
    %c128_261 = arith.constant 128 : index
    %c0_262 = arith.constant 0 : index
    %235 = vector.load %arg2[%c128_261, %c0_262] : memref<256x512xf32, #tpu.memory_space<vmem>>, vector<32x512xf32>
    %236 = arith.mulf %234, %235 : vector<32x512xf32>
    %c160_263 = arith.constant 160 : index
    %c0_264 = arith.constant 0 : index
    %237 = vector.load %arg7[%c160_263, %c0_264] : memref<288x512xf32, #tpu.memory_space<vmem>>, vector<32x512xf32>
    tpu.vector_store %arg7[%c160_263, %c0_264], %236 {strides = array<i32>} : memref<288x512xf32, #tpu.memory_space<vmem>>, vector<32x512xf32>,
    %c497_i32_265 = arith.constant 497 : i32
    %238 = tpu.dynamic_rotate %216 by %c497_i32_265 dim 1 : vector<32x512xf32>, i32 -> vector<32x512xf32>
    %c160_266 = arith.constant 160 : index
    %c0_267 = arith.constant 0 : index
    %239 = vector.load %arg2[%c160_266, %c0_267] : memref<256x512xf32, #tpu.memory_space<vmem>>, vector<32x512xf32>
    %240 = arith.mulf %238, %239 : vector<32x512xf32>
    %c192_268 = arith.constant 192 : index
    %c0_269 = arith.constant 0 : index
    %241 = vector.load %arg7[%c192_268, %c0_269] : memref<288x512xf32, #tpu.memory_space<vmem>>, vector<32x512xf32>
    tpu.vector_store %arg7[%c192_268, %c0_269], %240 {strides = array<i32>} : memref<288x512xf32, #tpu.memory_space<vmem>>, vector<32x512xf32>,
    %c496_i32_270 = arith.constant 496 : i32
    %242 = tpu.dynamic_rotate %216 by %c496_i32_270 dim 1 : vector<32x512xf32>, i32 -> vector<32x512xf32>
    %c192_271 = arith.constant 192 : index
    %c0_272 = arith.constant 0 : index
    %243 = vector.load %arg2[%c192_271, %c0_272] : memref<256x512xf32, #tpu.memory_space<vmem>>, vector<32x512xf32>
    %244 = arith.mulf %242, %243 : vector<32x512xf32>
    %c224_273 = arith.constant 224 : index
    %c0_274 = arith.constant 0 : index
    %245 = vector.load %arg7[%c224_273, %c0_274] : memref<288x512xf32, #tpu.memory_space<vmem>>, vector<32x512xf32>
    tpu.vector_store %arg7[%c224_273, %c0_274], %244 {strides = array<i32>} : memref<288x512xf32, #tpu.memory_space<vmem>>, vector<32x512xf32>,
    %c495_i32_275 = arith.constant 495 : i32
    %246 = tpu.dynamic_rotate %216 by %c495_i32_275 dim 1 : vector<32x512xf32>, i32 -> vector<32x512xf32>
    %c224_276 = arith.constant 224 : index
    %c0_277 = arith.constant 0 : index
    %247 = vector.load %arg2[%c224_276, %c0_277] : memref<256x512xf32, #tpu.memory_space<vmem>>, vector<32x512xf32>
    %248 = arith.mulf %246, %247 : vector<32x512xf32>
    %c256_278 = arith.constant 256 : index
    %c0_279 = arith.constant 0 : index
    %249 = vector.load %arg7[%c256_278, %c0_279] : memref<288x512xf32, #tpu.memory_space<vmem>>, vector<32x512xf32>
    tpu.vector_store %arg7[%c256_278, %c0_279], %248 {strides = array<i32>} : memref<288x512xf32, #tpu.memory_space<vmem>>, vector<32x512xf32>,
    %c160_280 = arith.constant 160 : index
    %c0_281 = arith.constant 0 : index
    %250 = vector.load %arg3[%c160_280, %c0_281] : memref<192x288xf32, #tpu.memory_space<vmem>>, vector<32x288xf32>
    %c0_282 = arith.constant 0 : index
    %c0_283 = arith.constant 0 : index
    %251 = vector.load %arg7[%c0_282, %c0_283] : memref<288x512xf32, #tpu.memory_space<vmem>>, vector<288x512xf32>
    %cst_284 = arith.constant dense<0.000000e+00> : vector<32x512xf32>
    %252 = tpu.matmul %250, %251, %cst_284 {dimension_numbers = #tpu.dot_dimension_numbers<[1], [0], [0], [1], [0, 0, 1, 1], [], []>} : vector<32x288xf32>, vector<288x512xf32>, vector<32x512xf32> -> vector<32x512xf32>
    %c160_285 = arith.constant 160 : index
    %c0_286 = arith.constant 0 : index
    %253 = vector.load %arg4[%c160_285, %c0_286] : memref<192x1xf32, #tpu.memory_space<vmem>>, vector<32x1xf32>
    %254 = vector.broadcast %253 : vector<32x1xf32> to vector<32x512xf32>
    %255 = arith.addf %252, %254 : vector<32x512xf32>
    %256 = arith.addf %255, %174 : vector<32x512xf32>
    %257 = arith.addf %256, %10 : vector<32x512xf32>
    %258 = vector.broadcast %4 : vector<32x1xf32> to vector<32x512xf32>
    %259 = arith.mulf %258, %257 : vector<32x512xf32>
    %cst_287 = arith.constant dense<0.000000e+00> : vector<512xf32>
    %260 = vector.multi_reduction <add>, %259, %cst_287 [0] : vector<32x512xf32> to vector<512xf32>
    %261 = vector.shape_cast %260 : vector<512xf32> to vector<1x512xf32>
    %262 = vector.broadcast %5 : vector<1x1xf32> to vector<1x512xf32>
    %263 = arith.addf %261, %262 : vector<1x512xf32>
    %264 = arith.addf %263, %1 : vector<1x512xf32>
    %c0_288 = arith.constant 0 : index
    %c0_289 = arith.constant 0 : index
    %c0_290 = arith.constant 0 : index
    %265 = vector.load %arg6[%c0_288, %c0_289, %c0_290] : memref<1x1x512xf32, #tpu.memory_space<vmem>>, vector<1x1x512xf32>
    %266 = vector.shape_cast %265 : vector<1x1x512xf32> to vector<1x512xf32>
    %267 = vector.shape_cast %264 : vector<1x512xf32> to vector<1x1x512xf32>
    tpu.vector_store %arg6[%c0_288, %c0_289, %c0_290], %267 {strides = array<i32>} : memref<1x1x512xf32, #tpu.memory_space<vmem>>, vector<1x1x512xf32>,
    return
  }
  func.func @transform_0(%arg0: i32) -> (i32, i32, i32) {
    %c0_i32 = arith.constant 0 : i32
    %c0_i32_0 = arith.constant 0 : i32
    %c0_i32_1 = arith.constant 0 : i32
    return %arg0, %c0_i32, %c0_i32_0 : i32, i32, i32
  }
  func.func @transform_1(%arg0: i32) -> (i32, i32) {
    %c0_i32 = arith.constant 0 : i32
    %c0_i32_0 = arith.constant 0 : i32
    %c0_i32_1 = arith.constant 0 : i32
    return %c0_i32, %c0_i32_0 : i32, i32
  }
  func.func @transform_2(%arg0: i32) -> (i32, i32) {
    %c0_i32 = arith.constant 0 : i32
    %c0_i32_0 = arith.constant 0 : i32
    %c0_i32_1 = arith.constant 0 : i32
    return %c0_i32, %c0_i32_0 : i32, i32
  }
  func.func @transform_3(%arg0: i32) -> (i32, i32) {
    %c0_i32 = arith.constant 0 : i32
    %c0_i32_0 = arith.constant 0 : i32
    %c0_i32_1 = arith.constant 0 : i32
    return %c0_i32, %c0_i32_0 : i32, i32
  }
  func.func @transform_4(%arg0: i32) -> (i32, i32) {
    %c0_i32 = arith.constant 0 : i32
    %c0_i32_0 = arith.constant 0 : i32
    %c0_i32_1 = arith.constant 0 : i32
    return %c0_i32, %c0_i32_0 : i32, i32
  }
  func.func @transform_5(%arg0: i32) -> (i32, i32, i32) {
    %c0_i32 = arith.constant 0 : i32
    %c0_i32_0 = arith.constant 0 : i32
    %c0_i32_1 = arith.constant 0 : i32
    return %arg0, %c0_i32, %c0_i32_0 : i32, i32, i32
  }
}

</mosaic_0001>

<llo_original>
// kernel: tpu_custom_call.1
$region0: #{tpu_custom_call.1}
  #allocation0 [shape = 'u32[]', space=smem, size = 0x4, offset = 0x4, fixed_abs, tag = 'smem constant byte address 0x4 - core index']
  #allocation1 [shape = 'u32[72,128]{1,0:T(1,128)}', space=vmem, size = 0x9000, scoped, tag = 'internal scratch']
  #allocation2 [shape = 'f32[288,512]{1,0:T(8,128)}', space=vmem, size = 0x90000, scoped, tag = 'scratch operand']
  %s0 = inlined_call_operand.vmem [shape: f32[1,1,512], index: 0, kind: input, shape index: {}]
  %s1 = inlined_call_operand.hbm [shape: f32[256,512], index: 1, kind: input, shape index: {}]
  %s2 = inlined_call_operand.hbm [shape: f32[192,288], index: 2, kind: input, shape index: {}]
  %s3 = inlined_call_operand.vmem [shape: f32[192,1], index: 3, kind: input, shape index: {}]
  %s4 = inlined_call_operand.vmem [shape: f32[32,4], index: 4, kind: input, shape index: {}]
  %s5 = inlined_call_operand.hbm [shape: f32[1,1,512], index: 5, kind: output, shape index: {}]
  %s6 = sld [smem:[#allocation0]]
  $region38: #{tpu_custom_call.1} parent=0
    _
  %s8 = ssub.s32 1, %s6
  %s9 = scalar_select 0, %s8, %s6
  $region1: #{tpu_custom_call.1} parent=0
    #allocation3 [shape = 'u8[524288]{0}', space=vmem, size = 0x80000, scoped, tag = 'input window, operand 1, single buffered']
    #allocation4 [shape = 's32[1]{0}', space=sflag, size = 0x4, scoped, tag = 'scoped memory for tpu_custom_call.1']
    #allocation5 [shape = 's32[1]{0}', space=sflag, size = 0x4, scoped, tag = 'scoped memory for tpu_custom_call.1']
    #allocation6 [shape = 'u8[294912]{0}', space=vmem, size = 0x48000, scoped, tag = 'input window, operand 2, single buffered']
    #allocation7 [shape = 's32[1]{0}', space=sflag, size = 0x4, scoped, tag = 'scoped memory for tpu_custom_call.1']
    #allocation8 [shape = 'u8[2048]{0}', space=vmem, size = 0x800, scoped, tag = 'output window, operand 0, single buffered']
    %10 = vsyncpa [#allocation4], 0
    %11 = vsyncpa [#allocation7], 0
    %12 = vsyncpa [#allocation5], 0
    // Predicated region
    $region2: #{tpu_custom_call.1} parent=1 // pred_check
      _
    $region3: #{tpu_custom_call.1} parent=1 // pred_check_branch
      %14 = sbr.rel (0) target = $region5
    $region4: #{tpu_custom_call.1} parent=1 // pred_region
      _
    $region5: #{tpu_custom_call.1} parent=1 // pred_fallthru
      _
    // Predicated region
    $region6: #{tpu_custom_call.1} parent=1 // pred_check
      _
    $region7: #{tpu_custom_call.1} parent=1 // pred_check_branch
      %16 = sbr.rel (0) target = $region9
    $region8: #{tpu_custom_call.1} parent=1 // pred_region
      %18 = vsyncadd [#allocation4], 0
      %s19 = sshll.u32 %s1, 4
      %s20 = int_to_ptr.hbm [resolvable:$true] %s19
      %s21 = sshll.u32 [#allocation3], 4
      %s22 = int_to_ptr.vmem [resolvable:$true] %s21
      %27 = dma.hbm_to_vmem [thread:$0]  %s20, 16384, %s22, [#allocation4], 512, 512, 32
    $region9: #{tpu_custom_call.1} parent=1 // pred_fallthru
      _
    // Predicated region
    $region10: #{tpu_custom_call.1} parent=1 // pred_check
      _
    $region11: #{tpu_custom_call.1} parent=1 // pred_check_branch
      %29 = sbr.rel (0) target = $region13
    $region12: #{tpu_custom_call.1} parent=1 // pred_region
      %31 = vsyncadd [#allocation7], 0
      %s32 = sshll.u32 %s2, 4
      %s33 = int_to_ptr.hbm [resolvable:$true] %s32
      %s34 = sshll.u32 [#allocation6], 4
      %s35 = int_to_ptr.vmem [resolvable:$true] %s34
      %40 = dma.hbm_to_vmem [thread:$0]  %s33, 9216, %s35, [#allocation7], 384, 384, 24
    $region13: #{tpu_custom_call.1} parent=1 // pred_fallthru
      _
    // Predicated region
    $region14: #{tpu_custom_call.1} parent=1 // pred_check
      _
    $region15: #{tpu_custom_call.1} parent=1 // pred_check_branch
      %42 = sbr.rel (0) target = $region17
    $region16: #{tpu_custom_call.1} parent=1 // pred_region
      _
    $region17: #{tpu_custom_call.1} parent=1 // pred_fallthru
      _
    // Predicated region
    $region18: #{tpu_custom_call.1} parent=1 // pred_check
      _
    $region19: #{tpu_custom_call.1} parent=1 // pred_check_branch
      %44 = sbr.rel (0) target = $region21
    $region20: #{tpu_custom_call.1} parent=1 // pred_region
      _
    $region21: #{tpu_custom_call.1} parent=1 // pred_fallthru
      _
    // Predicated region
    $region22: #{tpu_custom_call.1} parent=1 // pred_check
      _
    $region23: #{tpu_custom_call.1} parent=1 // pred_check_branch
      %46 = sbr.rel (0) target = $region25
    $region24: #{tpu_custom_call.1} parent=1 // pred_region
      %48 = dma.done [#allocation4], 16384
    $region25: #{tpu_custom_call.1} parent=1 // pred_fallthru
      _
    // Predicated region
    $region26: #{tpu_custom_call.1} parent=1 // pred_check
      _
    $region27: #{tpu_custom_call.1} parent=1 // pred_check_branch
      %50 = sbr.rel (0) target = $region29
    $region28: #{tpu_custom_call.1} parent=1 // pred_region
      %52 = dma.done [#allocation7], 9216
    $region29: #{tpu_custom_call.1} parent=1 // pred_fallthru
      _
    %v53 = vld [vmem:[%s0] sm:$0xf]
    %v54 = vld [vmem:[%s4] sm:$0xff]
    %v55 = vld [vmem:[%s4 + $0x8] sm:$0xff]
    %v56 = vld [vmem:[%s4 + $0x10] sm:$0xff]
    %v57 = vld [vmem:[%s4 + $0x18] sm:$0xff]
    %v58 = vld [vmem:[%s4] sm:$0x1]
    %60 = vset.pattern.permute.xlu0 0
    %61 = vperm.xlu0 %60, %v54
    %v62 = vpop.permute.xlu0 %61
    %65 = vset.pattern.permute.xlu0 0
    %66 = vperm.xlu0 %65, %v55
    %v67 = vpop.permute.xlu0 %66
    %70 = vset.pattern.permute.xlu0 0
    %71 = vperm.xlu0 %70, %v56
    %v72 = vpop.permute.xlu0 %71
    %75 = vset.pattern.permute.xlu0 0
    %76 = vperm.xlu0 %75, %v57
    %v77 = vpop.permute.xlu0 %76
    %v80 = vperm.slane %v53, 0
    %v81 = vperm.slane %v53, 1
    %v82 = vperm.slane %v53, 2
    %v83 = vperm.slane %v53, 3
    %v88 = vmul.f32 %v62, %v80
    %v89 = vmul.f32 %v62, %v81
    %v90 = vmul.f32 %v62, %v82
    %v91 = vmul.f32 %v62, %v83
    %v92 = vmul.f32 %v67, %v80
    %v93 = vmul.f32 %v67, %v81
    %v94 = vmul.f32 %v67, %v82
    %v95 = vmul.f32 %v67, %v83
    %v96 = vmul.f32 %v72, %v80
    %v97 = vmul.f32 %v72, %v81
    %v98 = vmul.f32 %v72, %v82
    %v99 = vmul.f32 %v72, %v83
    %v100 = vmul.f32 %v77, %v80
    %v101 = vmul.f32 %v77, %v81
    %v102 = vmul.f32 %v77, %v82
    %v103 = vmul.f32 %v77, %v83
    %104 = vset.pattern.permute.xlu0 1
    %105 = vperm.xlu0 %104, %v54
    %v106 = vpop.permute.xlu0 %105
    %108 = vset.pattern.permute.xlu0 1
    %109 = vperm.xlu0 %108, %v55
    %v110 = vpop.permute.xlu0 %109
    %112 = vset.pattern.permute.xlu0 1
    %113 = vperm.xlu0 %112, %v56
    %v114 = vpop.permute.xlu0 %113
    %116 = vset.pattern.permute.xlu0 1
    %117 = vperm.xlu0 %116, %v57
    %v118 = vpop.permute.xlu0 %117
    %v120 = vadd.f32 %v88, %v106
    %v121 = vadd.f32 %v89, %v106
    %v122 = vadd.f32 %v90, %v106
    %v123 = vadd.f32 %v91, %v106
    %v124 = vadd.f32 %v92, %v110
    %v125 = vadd.f32 %v93, %v110
    %v126 = vadd.f32 %v94, %v110
    %v127 = vadd.f32 %v95, %v110
    %v128 = vadd.f32 %v96, %v114
    %v129 = vadd.f32 %v97, %v114
    %v130 = vadd.f32 %v98, %v114
    %v131 = vadd.f32 %v99, %v114
    %v132 = vadd.f32 %v100, %v118
    %v133 = vadd.f32 %v101, %v118
    %v134 = vadd.f32 %v102, %v118
    %v135 = vadd.f32 %v103, %v118
    %136 = vrot.lane.b32.xlu0 %v120, 17
    %v137 = vpop.permute.xlu0 %136
    %138 = vrot.lane.b32.xlu0 %v124, 17
    %v139 = vpop.permute.xlu0 %138
    %140 = vrot.lane.b32.xlu0 %v128, 17
    %v141 = vpop.permute.xlu0 %140
    %142 = vrot.lane.b32.xlu0 %v132, 17
    %v143 = vpop.permute.xlu0 %142
    %144 = vrot.lane.b32.xlu0 %v121, 17
    %v145 = vpop.permute.xlu0 %144
    %146 = vrot.lane.b32.xlu0 %v125, 17
    %v147 = vpop.permute.xlu0 %146
    %148 = vrot.lane.b32.xlu0 %v129, 17
    %v149 = vpop.permute.xlu0 %148
    %150 = vrot.lane.b32.xlu0 %v133, 17
    %v151 = vpop.permute.xlu0 %150
    %152 = vrot.lane.b32.xlu0 %v122, 17
    %v153 = vpop.permute.xlu0 %152
    %154 = vrot.lane.b32.xlu0 %v126, 17
    %v155 = vpop.permute.xlu0 %154
    %156 = vrot.lane.b32.xlu0 %v130, 17
    %v157 = vpop.permute.xlu0 %156
    %158 = vrot.lane.b32.xlu0 %v134, 17
    %v159 = vpop.permute.xlu0 %158
    %160 = vrot.lane.b32.xlu0 %v123, 17
    %v161 = vpop.permute.xlu0 %160
    %162 = vrot.lane.b32.xlu0 %v127, 17
    %v163 = vpop.permute.xlu0 %162
    %164 = vrot.lane.b32.xlu0 %v131, 17
    %v165 = vpop.permute.xlu0 %164
    %166 = vrot.lane.b32.xlu0 %v135, 17
    %v167 = vpop.permute.xlu0 %166
    %v168 = vlaneseq
    %v169 = vand.u32 %v168, 127
    %vm170 = vcmp.lt.s32.totalorder %v169, 17
    %v171 = vsel %vm170, %v153, %v161
    %v172 = vsel %vm170, %v155, %v163
    %v173 = vsel %vm170, %v157, %v165
    %v174 = vsel %vm170, %v159, %v167
    %v175 = vsel %vm170, %v145, %v153
    %v176 = vsel %vm170, %v147, %v155
    %v177 = vsel %vm170, %v149, %v157
    %v178 = vsel %vm170, %v151, %v159
    %v179 = vsel %vm170, %v137, %v145
    %v180 = vsel %vm170, %v139, %v147
    %v181 = vsel %vm170, %v141, %v149
    %v182 = vsel %vm170, %v143, %v151
    %v183 = vsel %vm170, %v161, %v137
    %v184 = vsel %vm170, %v163, %v139
    %v185 = vsel %vm170, %v165, %v141
    %v186 = vsel %vm170, %v167, %v143
    %v187 = vld [vmem:[#allocation3] sm:$0xff]
    %v188 = vld [vmem:[#allocation3 + $0x8] sm:$0xff]
    %v189 = vld [vmem:[#allocation3 + $0x10] sm:$0xff]
    %v190 = vld [vmem:[#allocation3 + $0x18] sm:$0xff]
    %v191 = vld [vmem:[#allocation3 + $0x20] sm:$0xff]
    %v192 = vld [vmem:[#allocation3 + $0x28] sm:$0xff]
    %v193 = vld [vmem:[#allocation3 + $0x30] sm:$0xff]
    %v194 = vld [vmem:[#allocation3 + $0x38] sm:$0xff]
    %v195 = vld [vmem:[#allocation3 + $0x40] sm:$0xff]
    %v196 = vld [vmem:[#allocation3 + $0x48] sm:$0xff]
    %v197 = vld [vmem:[#allocation3 + $0x50] sm:$0xff]
    %v198 = vld [vmem:[#allocation3 + $0x58] sm:$0xff]
    %v199 = vld [vmem:[#allocation3 + $0x60] sm:$0xff]
    %v200 = vld [vmem:[#allocation3 + $0x68] sm:$0xff]
    %v201 = vld [vmem:[#allocation3 + $0x70] sm:$0xff]
    %v202 = vld [vmem:[#allocation3 + $0x78] sm:$0xff]
    %v203 = vmul.f32 %v183, %v187
    %v204 = vmul.f32 %v179, %v188
    %v205 = vmul.f32 %v175, %v189
    %v206 = vmul.f32 %v171, %v190
    %v207 = vmul.f32 %v184, %v191
    %v208 = vmul.f32 %v180, %v192
    %v209 = vmul.f32 %v176, %v193
    %v210 = vmul.f32 %v172, %v194
    %v211 = vmul.f32 %v185, %v195
    %v212 = vmul.f32 %v181, %v196
    %v213 = vmul.f32 %v177, %v197
    %v214 = vmul.f32 %v173, %v198
    %v215 = vmul.f32 %v186, %v199
    %v216 = vmul.f32 %v182, %v200
    %v217 = vmul.f32 %v178, %v201
    %v218 = vmul.f32 %v174, %v202
    %219 = vst [vmem:[#allocation2] sm:$0xff] %v203
    %220 = vst [vmem:[#allocation2 + $0x8] sm:$0xff] %v204
    %221 = vst [vmem:[#allocation2 + $0x10] sm:$0xff] %v205
    %222 = vst [vmem:[#allocation2 + $0x18] sm:$0xff] %v206
    %223 = vst [vmem:[#allocation2 + $0x20] sm:$0xff] %v207
    %224 = vst [vmem:[#allocation2 + $0x28] sm:$0xff] %v208
    %225 = vst [vmem:[#allocation2 + $0x30] sm:$0xff] %v209
    %226 = vst [vmem:[#allocation2 + $0x38] sm:$0xff] %v210
    %227 = vst [vmem:[#allocation2 + $0x40] sm:$0xff] %v211
    %228 = vst [vmem:[#allocation2 + $0x48] sm:$0xff] %v212
    %229 = vst [vmem:[#allocation2 + $0x50] sm:$0xff] %v213
    %230 = vst [vmem:[#allocation2 + $0x58] sm:$0xff] %v214
    %231 = vst [vmem:[#allocation2 + $0x60] sm:$0xff] %v215
    %232 = vst [vmem:[#allocation2 + $0x68] sm:$0xff] %v216
    %233 = vst [vmem:[#allocation2 + $0x70] sm:$0xff] %v217
    %234 = vst [vmem:[#allocation2 + $0x78] sm:$0xff] %v218
    %235 = vrot.lane.b32.xlu0 %v120, 16
    %v236 = vpop.permute.xlu0 %235
    %237 = vrot.lane.b32.xlu0 %v124, 16
    %v238 = vpop.permute.xlu0 %237
    %239 = vrot.lane.b32.xlu0 %v128, 16
    %v240 = vpop.permute.xlu0 %239
    %241 = vrot.lane.b32.xlu0 %v132, 16
    %v242 = vpop.permute.xlu0 %241
    %243 = vrot.lane.b32.xlu0 %v121, 16
    %v244 = vpop.permute.xlu0 %243
    %245 = vrot.lane.b32.xlu0 %v125, 16
    %v246 = vpop.permute.xlu0 %245
    %247 = vrot.lane.b32.xlu0 %v129, 16
    %v248 = vpop.permute.xlu0 %247
    %249 = vrot.lane.b32.xlu0 %v133, 16
    %v250 = vpop.permute.xlu0 %249
    %251 = vrot.lane.b32.xlu0 %v122, 16
    %v252 = vpop.permute.xlu0 %251
    %253 = vrot.lane.b32.xlu0 %v126, 16
    %v254 = vpop.permute.xlu0 %253
    %255 = vrot.lane.b32.xlu0 %v130, 16
    %v256 = vpop.permute.xlu0 %255
    %257 = vrot.lane.b32.xlu0 %v134, 16
    %v258 = vpop.permute.xlu0 %257
    %259 = vrot.lane.b32.xlu0 %v123, 16
    %v260 = vpop.permute.xlu0 %259
    %261 = vrot.lane.b32.xlu0 %v127, 16
    %v262 = vpop.permute.xlu0 %261
    %263 = vrot.lane.b32.xlu0 %v131, 16
    %v264 = vpop.permute.xlu0 %263
    %265 = vrot.lane.b32.xlu0 %v135, 16
    %v266 = vpop.permute.xlu0 %265
    %vm267 = vcmp.lt.s32.totalorder %v169, 16
    %v268 = vsel %vm267, %v252, %v260
    %v269 = vsel %vm267, %v254, %v262
    %v270 = vsel %vm267, %v256, %v264
    %v271 = vsel %vm267, %v258, %v266
    %v272 = vsel %vm267, %v244, %v252
    %v273 = vsel %vm267, %v246, %v254
    %v274 = vsel %vm267, %v248, %v256
    %v275 = vsel %vm267, %v250, %v258
    %v276 = vsel %vm267, %v236, %v244
    %v277 = vsel %vm267, %v238, %v246
    %v278 = vsel %vm267, %v240, %v248
    %v279 = vsel %vm267, %v242, %v250
    %v280 = vsel %vm267, %v260, %v236
    %v281 = vsel %vm267, %v262, %v238
    %v282 = vsel %vm267, %v264, %v240
    %v283 = vsel %vm267, %v266, %v242
    %v284 = vld [vmem:[#allocation3 + $0x80] sm:$0xff]
    %v285 = vld [vmem:[#allocation3 + $0x88] sm:$0xff]
    %v286 = vld [vmem:[#allocation3 + $0x90] sm:$0xff]
    %v287 = vld [vmem:[#allocation3 + $0x98] sm:$0xff]
    %v288 = vld [vmem:[#allocation3 + $0xa0] sm:$0xff]
    %v289 = vld [vmem:[#allocation3 + $0xa8] sm:$0xff]
    %v290 = vld [vmem:[#allocation3 + $0xb0] sm:$0xff]
    %v291 = vld [vmem:[#allocation3 + $0xb8] sm:$0xff]
    %v292 = vld [vmem:[#allocation3 + $0xc0] sm:$0xff]
    %v293 = vld [vmem:[#allocation3 + $0xc8] sm:$0xff]
    %v294 = vld [vmem:[#allocation3 + $0xd0] sm:$0xff]
    %v295 = vld [vmem:[#allocation3 + $0xd8] sm:$0xff]
    %v296 = vld [vmem:[#allocation3 + $0xe0] sm:$0xff]
    %v297 = vld [vmem:[#allocation3 + $0xe8] sm:$0xff]
    %v298 = vld [vmem:[#allocation3 + $0xf0] sm:$0xff]
    %v299 = vld [vmem:[#allocation3 + $0xf8] sm:$0xff]
    %v300 = vmul.f32 %v280, %v284
    %v301 = vmul.f32 %v276, %v285
    %v302 = vmul.f32 %v272, %v286
    %v303 = vmul.f32 %v268, %v287
    %v304 = vmul.f32 %v281, %v288
    %v305 = vmul.f32 %v277, %v289
    %v306 = vmul.f32 %v273, %v290
    %v307 = vmul.f32 %v269, %v291
    %v308 = vmul.f32 %v282, %v292
    %v309 = vmul.f32 %v278, %v293
    %v310 = vmul.f32 %v274, %v294
    %v311 = vmul.f32 %v270, %v295
    %v312 = vmul.f32 %v283, %v296
    %v313 = vmul.f32 %v279, %v297
    %v314 = vmul.f32 %v275, %v298
    %v315 = vmul.f32 %v271, %v299
    %316 = vst [vmem:[#allocation2 + $0x80] sm:$0xff] %v300
    %317 = vst [vmem:[#allocation2 + $0x88] sm:$0xff] %v301
    %318 = vst [vmem:[#allocation2 + $0x90] sm:$0xff] %v302
    %319 = vst [vmem:[#allocation2 + $0x98] sm:$0xff] %v303
    %320 = vst [vmem:[#allocation2 + $0xa0] sm:$0xff] %v304
    %321 = vst [vmem:[#allocation2 + $0xa8] sm:$0xff] %v305
    %322 = vst [vmem:[#allocation2 + $0xb0] sm:$0xff] %v306
    %323 = vst [vmem:[#allocation2 + $0xb8] sm:$0xff] %v307
    %324 = vst [vmem:[#allocation2 + $0xc0] sm:$0xff] %v308
    %325 = vst [vmem:[#allocation2 + $0xc8] sm:$0xff] %v309
    %326 = vst [vmem:[#allocation2 + $0xd0] sm:$0xff] %v310
    %327 = vst [vmem:[#allocation2 + $0xd8] sm:$0xff] %v311
    %328 = vst [vmem:[#allocation2 + $0xe0] sm:$0xff] %v312
    %329 = vst [vmem:[#allocation2 + $0xe8] sm:$0xff] %v313
    %330 = vst [vmem:[#allocation2 + $0xf0] sm:$0xff] %v314
    %331 = vst [vmem:[#allocation2 + $0xf8] sm:$0xff] %v315
    %332 = vrot.lane.b32.xlu0 %v120, 15
    %v333 = vpop.permute.xlu0 %332
    %334 = vrot.lane.b32.xlu0 %v124, 15
    %v335 = vpop.permute.xlu0 %334
    %336 = vrot.lane.b32.xlu0 %v128, 15
    %v337 = vpop.permute.xlu0 %336
    %338 = vrot.lane.b32.xlu0 %v132, 15
    %v339 = vpop.permute.xlu0 %338
    %340 = vrot.lane.b32.xlu0 %v121, 15
    %v341 = vpop.permute.xlu0 %340
    %342 = vrot.lane.b32.xlu0 %v125, 15
    %v343 = vpop.permute.xlu0 %342
    %344 = vrot.lane.b32.xlu0 %v129, 15
    %v345 = vpop.permute.xlu0 %344
    %346 = vrot.lane.b32.xlu0 %v133, 15
    %v347 = vpop.permute.xlu0 %346
    %348 = vrot.lane.b32.xlu0 %v122, 15
    %v349 = vpop.permute.xlu0 %348
    %350 = vrot.lane.b32.xlu0 %v126, 15
    %v351 = vpop.permute.xlu0 %350
    %352 = vrot.lane.b32.xlu0 %v130, 15
    %v353 = vpop.permute.xlu0 %352
    %354 = vrot.lane.b32.xlu0 %v134, 15
    %v355 = vpop.permute.xlu0 %354
    %356 = vrot.lane.b32.xlu0 %v123, 15
    %v357 = vpop.permute.xlu0 %356
    %358 = vrot.lane.b32.xlu0 %v127, 15
    %v359 = vpop.permute.xlu0 %358
    %360 = vrot.lane.b32.xlu0 %v131, 15
    %v361 = vpop.permute.xlu0 %360
    %362 = vrot.lane.b32.xlu0 %v135, 15
    %v363 = vpop.permute.xlu0 %362
    %vm364 = vcmp.lt.s32.totalorder %v169, 15
    %v365 = vsel %vm364, %v349, %v357
    %v366 = vsel %vm364, %v351, %v359
    %v367 = vsel %vm364, %v353, %v361
    %v368 = vsel %vm364, %v355, %v363
    %v369 = vsel %vm364, %v341, %v349
    %v370 = vsel %vm364, %v343, %v351
    %v371 = vsel %vm364, %v345, %v353
    %v372 = vsel %vm364, %v347, %v355
    %v373 = vsel %vm364, %v333, %v341
    %v374 = vsel %vm364, %v335, %v343
    %v375 = vsel %vm364, %v337, %v345
    %v376 = vsel %vm364, %v339, %v347
    %v377 = vsel %vm364, %v357, %v333
    %v378 = vsel %vm364, %v359, %v335
    %v379 = vsel %vm364, %v361, %v337
    %v380 = vsel %vm364, %v363, %v339
    %v381 = vld [vmem:[#allocation3 + $0x100] sm:$0xff]
    %v382 = vld [vmem:[#allocation3 + $0x108] sm:$0xff]
    %v383 = vld [vmem:[#allocation3 + $0x110] sm:$0xff]
    %v384 = vld [vmem:[#allocation3 + $0x118] sm:$0xff]
    %v385 = vld [vmem:[#allocation3 + $0x120] sm:$0xff]
    %v386 = vld [vmem:[#allocation3 + $0x128] sm:$0xff]
    %v387 = vld [vmem:[#allocation3 + $0x130] sm:$0xff]
    %v388 = vld [vmem:[#allocation3 + $0x138] sm:$0xff]
    %v389 = vld [vmem:[#allocation3 + $0x140] sm:$0xff]
    %v390 = vld [vmem:[#allocation3 + $0x148] sm:$0xff]
    %v391 = vld [vmem:[#allocation3 + $0x150] sm:$0xff]
    %v392 = vld [vmem:[#allocation3 + $0x158] sm:$0xff]
    %v393 = vld [vmem:[#allocation3 + $0x160] sm:$0xff]
    %v394 = vld [vmem:[#allocation3 + $0x168] sm:$0xff]
    %v395 = vld [vmem:[#allocation3 + $0x170] sm:$0xff]
    %v396 = vld [vmem:[#allocation3 + $0x178] sm:$0xff]
    %v397 = vmul.f32 %v377, %v381
    %v398 = vmul.f32 %v373, %v382
    %v399 = vmul.f32 %v369, %v383
    %v400 = vmul.f32 %v365, %v384
    %v401 = vmul.f32 %v378, %v385
    %v402 = vmul.f32 %v374, %v386
    %v403 = vmul.f32 %v370, %v387
    %v404 = vmul.f32 %v366, %v388
    %v405 = vmul.f32 %v379, %v389
    %v406 = vmul.f32 %v375, %v390
    %v407 = vmul.f32 %v371, %v391
    %v408 = vmul.f32 %v367, %v392
    %v409 = vmul.f32 %v380, %v393
    %v410 = vmul.f32 %v376, %v394
    %v411 = vmul.f32 %v372, %v395
    %v412 = vmul.f32 %v368, %v396
    %413 = vst [vmem:[#allocation2 + $0x100] sm:$0xff] %v397
    %414 = vst [vmem:[#allocation2 + $0x108] sm:$0xff] %v398
    %415 = vst [vmem:[#allocation2 + $0x110] sm:$0xff] %v399
    %416 = vst [vmem:[#allocation2 + $0x118] sm:$0xff] %v400
    %417 = vst [vmem:[#allocation2 + $0x120] sm:$0xff] %v401
    %418 = vst [vmem:[#allocation2 + $0x128] sm:$0xff] %v402
    %419 = vst [vmem:[#allocation2 + $0x130] sm:$0xff] %v403
    %420 = vst [vmem:[#allocation2 + $0x138] sm:$0xff] %v404
    %421 = vst [vmem:[#allocation2 + $0x140] sm:$0xff] %v405
    %422 = vst [vmem:[#allocation2 + $0x148] sm:$0xff] %v406
    %423 = vst [vmem:[#allocation2 + $0x150] sm:$0xff] %v407
    %424 = vst [vmem:[#allocation2 + $0x158] sm:$0xff] %v408
    %425 = vst [vmem:[#allocation2 + $0x160] sm:$0xff] %v409
    %426 = vst [vmem:[#allocation2 + $0x168] sm:$0xff] %v410
    %427 = vst [vmem:[#allocation2 + $0x170] sm:$0xff] %v411
    %428 = vst [vmem:[#allocation2 + $0x178] sm:$0xff] %v412
    %429 = vrot.lane.b32.xlu0 %v120, 1
    %v430 = vpop.permute.xlu0 %429
    %431 = vrot.lane.b32.xlu0 %v124, 1
    %v432 = vpop.permute.xlu0 %431
    %433 = vrot.lane.b32.xlu0 %v128, 1
    %v434 = vpop.permute.xlu0 %433
    %435 = vrot.lane.b32.xlu0 %v132, 1
    %v436 = vpop.permute.xlu0 %435
    %437 = vrot.lane.b32.xlu0 %v121, 1
    %v438 = vpop.permute.xlu0 %437
    %439 = vrot.lane.b32.xlu0 %v125, 1
    %v440 = vpop.permute.xlu0 %439
    %441 = vrot.lane.b32.xlu0 %v129, 1
    %v442 = vpop.permute.xlu0 %441
    %443 = vrot.lane.b32.xlu0 %v133, 1
    %v444 = vpop.permute.xlu0 %443
    %445 = vrot.lane.b32.xlu0 %v122, 1
    %v446 = vpop.permute.xlu0 %445
    %447 = vrot.lane.b32.xlu0 %v126, 1
    %v448 = vpop.permute.xlu0 %447
    %449 = vrot.lane.b32.xlu0 %v130, 1
    %v450 = vpop.permute.xlu0 %449
    %451 = vrot.lane.b32.xlu0 %v134, 1
    %v452 = vpop.permute.xlu0 %451
    %453 = vrot.lane.b32.xlu0 %v123, 1
    %v454 = vpop.permute.xlu0 %453
    %455 = vrot.lane.b32.xlu0 %v127, 1
    %v456 = vpop.permute.xlu0 %455
    %457 = vrot.lane.b32.xlu0 %v131, 1
    %v458 = vpop.permute.xlu0 %457
    %459 = vrot.lane.b32.xlu0 %v135, 1
    %v460 = vpop.permute.xlu0 %459
    %vm461 = vcmp.lt.s32.totalorder %v169, 1
    %v462 = vsel %vm461, %v446, %v454
    %v463 = vsel %vm461, %v448, %v456
    %v464 = vsel %vm461, %v450, %v458
    %v465 = vsel %vm461, %v452, %v460
    %v466 = vsel %vm461, %v438, %v446
    %v467 = vsel %vm461, %v440, %v448
    %v468 = vsel %vm461, %v442, %v450
    %v469 = vsel %vm461, %v444, %v452
    %v470 = vsel %vm461, %v430, %v438
    %v471 = vsel %vm461, %v432, %v440
    %v472 = vsel %vm461, %v434, %v442
    %v473 = vsel %vm461, %v436, %v444
    %v474 = vsel %vm461, %v454, %v430
    %v475 = vsel %vm461, %v456, %v432
    %v476 = vsel %vm461, %v458, %v434
    %v477 = vsel %vm461, %v460, %v436
    %v478 = vld [vmem:[#allocation3 + $0x180] sm:$0xff]
    %v479 = vld [vmem:[#allocation3 + $0x188] sm:$0xff]
    %v480 = vld [vmem:[#allocation3 + $0x190] sm:$0xff]
    %v481 = vld [vmem:[#allocation3 + $0x198] sm:$0xff]
    %v482 = vld [vmem:[#allocation3 + $0x1a0] sm:$0xff]
    %v483 = vld [vmem:[#allocation3 + $0x1a8] sm:$0xff]
    %v484 = vld [vmem:[#allocation3 + $0x1b0] sm:$0xff]
    %v485 = vld [vmem:[#allocation3 + $0x1b8] sm:$0xff]
    %v486 = vld [vmem:[#allocation3 + $0x1c0] sm:$0xff]
    %v487 = vld [vmem:[#allocation3 + $0x1c8] sm:$0xff]
    %v488 = vld [vmem:[#allocation3 + $0x1d0] sm:$0xff]
    %v489 = vld [vmem:[#allocation3 + $0x1d8] sm:$0xff]
    %v490 = vld [vmem:[#allocation3 + $0x1e0] sm:$0xff]
    %v491 = vld [vmem:[#allocation3 + $0x1e8] sm:$0xff]
    %v492 = vld [vmem:[#allocation3 + $0x1f0] sm:$0xff]
    %v493 = vld [vmem:[#allocation3 + $0x1f8] sm:$0xff]
    %v494 = vmul.f32 %v474, %v478
    %v495 = vmul.f32 %v470, %v479
    %v496 = vmul.f32 %v466, %v480
    %v497 = vmul.f32 %v462, %v481
    %v498 = vmul.f32 %v475, %v482
    %v499 = vmul.f32 %v471, %v483
    %v500 = vmul.f32 %v467, %v484
    %v501 = vmul.f32 %v463, %v485
    %v502 = vmul.f32 %v476, %v486
    %v503 = vmul.f32 %v472, %v487
    %v504 = vmul.f32 %v468, %v488
    %v505 = vmul.f32 %v464, %v489
    %v506 = vmul.f32 %v477, %v490
    %v507 = vmul.f32 %v473, %v491
    %v508 = vmul.f32 %v469, %v492
    %v509 = vmul.f32 %v465, %v493
    %510 = vst [vmem:[#allocation2 + $0x180] sm:$0xff] %v494
    %511 = vst [vmem:[#allocation2 + $0x188] sm:$0xff] %v495
    %512 = vst [vmem:[#allocation2 + $0x190] sm:$0xff] %v496
    %513 = vst [vmem:[#allocation2 + $0x198] sm:$0xff] %v497
    %514 = vst [vmem:[#allocation2 + $0x1a0] sm:$0xff] %v498
    %515 = vst [vmem:[#allocation2 + $0x1a8] sm:$0xff] %v499
    %516 = vst [vmem:[#allocation2 + $0x1b0] sm:$0xff] %v500
    %517 = vst [vmem:[#allocation2 + $0x1b8] sm:$0xff] %v501
    %518 = vst [vmem:[#allocation2 + $0x1c0] sm:$0xff] %v502
    %519 = vst [vmem:[#allocation2 + $0x1c8] sm:$0xff] %v503
    %520 = vst [vmem:[#allocation2 + $0x1d0] sm:$0xff] %v504
    %521 = vst [vmem:[#allocation2 + $0x1d8] sm:$0xff] %v505
    %522 = vst [vmem:[#allocation2 + $0x1e0] sm:$0xff] %v506
    %523 = vst [vmem:[#allocation2 + $0x1e8] sm:$0xff] %v507
    %524 = vst [vmem:[#allocation2 + $0x1f0] sm:$0xff] %v508
    %525 = vst [vmem:[#allocation2 + $0x1f8] sm:$0xff] %v509
    %526 = vst [vmem:[#allocation2 + $0x200] sm:$0xff] %v120
    %527 = vst [vmem:[#allocation2 + $0x208] sm:$0xff] %v121
    %528 = vst [vmem:[#allocation2 + $0x210] sm:$0xff] %v122
    %529 = vst [vmem:[#allocation2 + $0x218] sm:$0xff] %v123
    %530 = vst [vmem:[#allocation2 + $0x220] sm:$0xff] %v124
    %531 = vst [vmem:[#allocation2 + $0x228] sm:$0xff] %v125
    %532 = vst [vmem:[#allocation2 + $0x230] sm:$0xff] %v126
    %533 = vst [vmem:[#allocation2 + $0x238] sm:$0xff] %v127
    %534 = vst [vmem:[#allocation2 + $0x240] sm:$0xff] %v128
    %535 = vst [vmem:[#allocation2 + $0x248] sm:$0xff] %v129
    %536 = vst [vmem:[#allocation2 + $0x250] sm:$0xff] %v130
    %537 = vst [vmem:[#allocation2 + $0x258] sm:$0xff] %v131
    %538 = vst [vmem:[#allocation2 + $0x260] sm:$0xff] %v132
    %539 = vst [vmem:[#allocation2 + $0x268] sm:$0xff] %v133
    %540 = vst [vmem:[#allocation2 + $0x270] sm:$0xff] %v134
    %541 = vst [vmem:[#allocation2 + $0x278] sm:$0xff] %v135
    %542 = vrot.lane.b32.xlu0 %v120, 127
    %v543 = vpop.permute.xlu0 %542
    %544 = vrot.lane.b32.xlu0 %v124, 127
    %v545 = vpop.permute.xlu0 %544
    %546 = vrot.lane.b32.xlu0 %v128, 127
    %v547 = vpop.permute.xlu0 %546
    %548 = vrot.lane.b32.xlu0 %v132, 127
    %v549 = vpop.permute.xlu0 %548
    %550 = vrot.lane.b32.xlu0 %v121, 127
    %v551 = vpop.permute.xlu0 %550
    %552 = vrot.lane.b32.xlu0 %v125, 127
    %v553 = vpop.permute.xlu0 %552
    %554 = vrot.lane.b32.xlu0 %v129, 127
    %v555 = vpop.permute.xlu0 %554
    %556 = vrot.lane.b32.xlu0 %v133, 127
    %v557 = vpop.permute.xlu0 %556
    %558 = vrot.lane.b32.xlu0 %v122, 127
    %v559 = vpop.permute.xlu0 %558
    %560 = vrot.lane.b32.xlu0 %v126, 127
    %v561 = vpop.permute.xlu0 %560
    %562 = vrot.lane.b32.xlu0 %v130, 127
    %v563 = vpop.permute.xlu0 %562
    %564 = vrot.lane.b32.xlu0 %v134, 127
    %v565 = vpop.permute.xlu0 %564
    %566 = vrot.lane.b32.xlu0 %v123, 127
    %v567 = vpop.permute.xlu0 %566
    %568 = vrot.lane.b32.xlu0 %v127, 127
    %v569 = vpop.permute.xlu0 %568
    %570 = vrot.lane.b32.xlu0 %v131, 127
    %v571 = vpop.permute.xlu0 %570
    %572 = vrot.lane.b32.xlu0 %v135, 127
    %v573 = vpop.permute.xlu0 %572
    %vm574 = vcmp.lt.s32.totalorder %v169, 127
    %v575 = vsel %vm574, %v559, %v567
    %v576 = vsel %vm574, %v561, %v569
    %v577 = vsel %vm574, %v563, %v571
    %v578 = vsel %vm574, %v565, %v573
    %v579 = vsel %vm574, %v551, %v559
    %v580 = vsel %vm574, %v553, %v561
    %v581 = vsel %vm574, %v555, %v563
    %v582 = vsel %vm574, %v557, %v565
    %v583 = vsel %vm574, %v543, %v551
    %v584 = vsel %vm574, %v545, %v553
    %v585 = vsel %vm574, %v547, %v555
    %v586 = vsel %vm574, %v549, %v557
    %v587 = vsel %vm574, %v567, %v543
    %v588 = vsel %vm574, %v569, %v545
    %v589 = vsel %vm574, %v571, %v547
    %v590 = vsel %vm574, %v573, %v549
    %v591 = vld [vmem:[#allocation3 + $0x200] sm:$0xff]
    %v592 = vld [vmem:[#allocation3 + $0x208] sm:$0xff]
    %v593 = vld [vmem:[#allocation3 + $0x210] sm:$0xff]
    %v594 = vld [vmem:[#allocation3 + $0x218] sm:$0xff]
    %v595 = vld [vmem:[#allocation3 + $0x220] sm:$0xff]
    %v596 = vld [vmem:[#allocation3 + $0x228] sm:$0xff]
    %v597 = vld [vmem:[#allocation3 + $0x230] sm:$0xff]
    %v598 = vld [vmem:[#allocation3 + $0x238] sm:$0xff]
    %v599 = vld [vmem:[#allocation3 + $0x240] sm:$0xff]
    %v600 = vld [vmem:[#allocation3 + $0x248] sm:$0xff]
    %v601 = vld [vmem:[#allocation3 + $0x250] sm:$0xff]
    %v602 = vld [vmem:[#allocation3 + $0x258] sm:$0xff]
    %v603 = vld [vmem:[#allocation3 + $0x260] sm:$0xff]
    %v604 = vld [vmem:[#allocation3 + $0x268] sm:$0xff]
    %v605 = vld [vmem:[#allocation3 + $0x270] sm:$0xff]
    %v606 = vld [vmem:[#allocation3 + $0x278] sm:$0xff]
    %v607 = vmul.f32 %v583, %v591
    %v608 = vmul.f32 %v579, %v592
    %v609 = vmul.f32 %v575, %v593
    %v610 = vmul.f32 %v587, %v594
    %v611 = vmul.f32 %v584, %v595
    %v612 = vmul.f32 %v580, %v596
    %v613 = vmul.f32 %v576, %v597
    %v614 = vmul.f32 %v588, %v598
    %v615 = vmul.f32 %v585, %v599
    %v616 = vmul.f32 %v581, %v600
    %v617 = vmul.f32 %v577, %v601
    %v618 = vmul.f32 %v589, %v602
    %v619 = vmul.f32 %v586, %v603
    %v620 = vmul.f32 %v582, %v604
    %v621 = vmul.f32 %v578, %v605
    %v622 = vmul.f32 %v590, %v606
    %623 = vst [vmem:[#allocation2 + $0x280] sm:$0xff] %v607
    %624 = vst [vmem:[#allocation2 + $0x288] sm:$0xff] %v608
    %625 = vst [vmem:[#allocation2 + $0x290] sm:$0xff] %v609
    %626 = vst [vmem:[#allocation2 + $0x298] sm:$0xff] %v610
    %627 = vst [vmem:[#allocation2 + $0x2a0] sm:$0xff] %v611
    %628 = vst [vmem:[#allocation2 + $0x2a8] sm:$0xff] %v612
    %629 = vst [vmem:[#allocation2 + $0x2b0] sm:$0xff] %v613
    %630 = vst [vmem:[#allocation2 + $0x2b8] sm:$0xff] %v614
    %631 = vst [vmem:[#allocation2 + $0x2c0] sm:$0xff] %v615
    %632 = vst [vmem:[#allocation2 + $0x2c8] sm:$0xff] %v616
    %633 = vst [vmem:[#allocation2 + $0x2d0] sm:$0xff] %v617
    %634 = vst [vmem:[#allocation2 + $0x2d8] sm:$0xff] %v618
    %635 = vst [vmem:[#allocation2 + $0x2e0] sm:$0xff] %v619
    %636 = vst [vmem:[#allocation2 + $0x2e8] sm:$0xff] %v620
    %637 = vst [vmem:[#allocation2 + $0x2f0] sm:$0xff] %v621
    %638 = vst [vmem:[#allocation2 + $0x2f8] sm:$0xff] %v622
    %639 = vrot.lane.b32.xlu0 %v120, 113
    %v640 = vpop.permute.xlu0 %639
    %641 = vrot.lane.b32.xlu0 %v124, 113
    %v642 = vpop.permute.xlu0 %641
    %643 = vrot.lane.b32.xlu0 %v128, 113
    %v644 = vpop.permute.xlu0 %643
    %645 = vrot.lane.b32.xlu0 %v132, 113
    %v646 = vpop.permute.xlu0 %645
    %647 = vrot.lane.b32.xlu0 %v121, 113
    %v648 = vpop.permute.xlu0 %647
    %649 = vrot.lane.b32.xlu0 %v125, 113
    %v650 = vpop.permute.xlu0 %649
    %651 = vrot.lane.b32.xlu0 %v129, 113
    %v652 = vpop.permute.xlu0 %651
    %653 = vrot.lane.b32.xlu0 %v133, 113
    %v654 = vpop.permute.xlu0 %653
    %655 = vrot.lane.b32.xlu0 %v122, 113
    %v656 = vpop.permute.xlu0 %655
    %657 = vrot.lane.b32.xlu0 %v126, 113
    %v658 = vpop.permute.xlu0 %657
    %659 = vrot.lane.b32.xlu0 %v130, 113
    %v660 = vpop.permute.xlu0 %659
    %661 = vrot.lane.b32.xlu0 %v134, 113
    %v662 = vpop.permute.xlu0 %661
    %663 = vrot.lane.b32.xlu0 %v123, 113
    %v664 = vpop.permute.xlu0 %663
    %665 = vrot.lane.b32.xlu0 %v127, 113
    %v666 = vpop.permute.xlu0 %665
    %667 = vrot.lane.b32.xlu0 %v131, 113
    %v668 = vpop.permute.xlu0 %667
    %669 = vrot.lane.b32.xlu0 %v135, 113
    %v670 = vpop.permute.xlu0 %669
    %vm671 = vcmp.lt.s32.totalorder %v169, 113
    %v672 = vsel %vm671, %v656, %v664
    %v673 = vsel %vm671, %v658, %v666
    %v674 = vsel %vm671, %v660, %v668
    %v675 = vsel %vm671, %v662, %v670
    %v676 = vsel %vm671, %v648, %v656
    %v677 = vsel %vm671, %v650, %v658
    %v678 = vsel %vm671, %v652, %v660
    %v679 = vsel %vm671, %v654, %v662
    %v680 = vsel %vm671, %v640, %v648
    %v681 = vsel %vm671, %v642, %v650
    %v682 = vsel %vm671, %v644, %v652
    %v683 = vsel %vm671, %v646, %v654
    %v684 = vsel %vm671, %v664, %v640
    %v685 = vsel %vm671, %v666, %v642
    %v686 = vsel %vm671, %v668, %v644
    %v687 = vsel %vm671, %v670, %v646
    %v688 = vld [vmem:[#allocation3 + $0x280] sm:$0xff]
    %v689 = vld [vmem:[#allocation3 + $0x288] sm:$0xff]
    %v690 = vld [vmem:[#allocation3 + $0x290] sm:$0xff]
    %v691 = vld [vmem:[#allocation3 + $0x298] sm:$0xff]
    %v692 = vld [vmem:[#allocation3 + $0x2a0] sm:$0xff]
    %v693 = vld [vmem:[#allocation3 + $0x2a8] sm:$0xff]
    %v694 = vld [vmem:[#allocation3 + $0x2b0] sm:$0xff]
    %v695 = vld [vmem:[#allocation3 + $0x2b8] sm:$0xff]
    %v696 = vld [vmem:[#allocation3 + $0x2c0] sm:$0xff]
    %v697 = vld [vmem:[#allocation3 + $0x2c8] sm:$0xff]
    %v698 = vld [vmem:[#allocation3 + $0x2d0] sm:$0xff]
    %v699 = vld [vmem:[#allocation3 + $0x2d8] sm:$0xff]
    %v700 = vld [vmem:[#allocation3 + $0x2e0] sm:$0xff]
    %v701 = vld [vmem:[#allocation3 + $0x2e8] sm:$0xff]
    %v702 = vld [vmem:[#allocation3 + $0x2f0] sm:$0xff]
    %v703 = vld [vmem:[#allocation3 + $0x2f8] sm:$0xff]
    %v704 = vmul.f32 %v680, %v688
    %v705 = vmul.f32 %v676, %v689
    %v706 = vmul.f32 %v672, %v690
    %v707 = vmul.f32 %v684, %v691
    %v708 = vmul.f32 %v681, %v692
    %v709 = vmul.f32 %v677, %v693
    %v710 = vmul.f32 %v673, %v694
    %v711 = vmul.f32 %v685, %v695
    %v712 = vmul.f32 %v682, %v696
    %v713 = vmul.f32 %v678, %v697
    %v714 = vmul.f32 %v674, %v698
    %v715 = vmul.f32 %v686, %v699
    %v716 = vmul.f32 %v683, %v700
    %v717 = vmul.f32 %v679, %v701
    %v718 = vmul.f32 %v675, %v702
    %v719 = vmul.f32 %v687, %v703
    %720 = vst [vmem:[#allocation2 + $0x300] sm:$0xff] %v704
    %721 = vst [vmem:[#allocation2 + $0x308] sm:$0xff] %v705
    %722 = vst [vmem:[#allocation2 + $0x310] sm:$0xff] %v706
    %723 = vst [vmem:[#allocation2 + $0x318] sm:$0xff] %v707
    %724 = vst [vmem:[#allocation2 + $0x320] sm:$0xff] %v708
    %725 = vst [vmem:[#allocation2 + $0x328] sm:$0xff] %v709
    %726 = vst [vmem:[#allocation2 + $0x330] sm:$0xff] %v710
    %727 = vst [vmem:[#allocation2 + $0x338] sm:$0xff] %v711
    %728 = vst [vmem:[#allocation2 + $0x340] sm:$0xff] %v712
    %729 = vst [vmem:[#allocation2 + $0x348] sm:$0xff] %v713
    %730 = vst [vmem:[#allocation2 + $0x350] sm:$0xff] %v714
    %731 = vst [vmem:[#allocation2 + $0x358] sm:$0xff] %v715
    %732 = vst [vmem:[#allocation2 + $0x360] sm:$0xff] %v716
    %733 = vst [vmem:[#allocation2 + $0x368] sm:$0xff] %v717
    %734 = vst [vmem:[#allocation2 + $0x370] sm:$0xff] %v718
    %735 = vst [vmem:[#allocation2 + $0x378] sm:$0xff] %v719
    %736 = vrot.lane.b32.xlu0 %v120, 112
    %v737 = vpop.permute.xlu0 %736
    %738 = vrot.lane.b32.xlu0 %v124, 112
    %v739 = vpop.permute.xlu0 %738
    %740 = vrot.lane.b32.xlu0 %v128, 112
    %v741 = vpop.permute.xlu0 %740
    %742 = vrot.lane.b32.xlu0 %v132, 112
    %v743 = vpop.permute.xlu0 %742
    %744 = vrot.lane.b32.xlu0 %v121, 112
    %v745 = vpop.permute.xlu0 %744
    %746 = vrot.lane.b32.xlu0 %v125, 112
    %v747 = vpop.permute.xlu0 %746
    %748 = vrot.lane.b32.xlu0 %v129, 112
    %v749 = vpop.permute.xlu0 %748
    %750 = vrot.lane.b32.xlu0 %v133, 112
    %v751 = vpop.permute.xlu0 %750
    %752 = vrot.lane.b32.xlu0 %v122, 112
    %v753 = vpop.permute.xlu0 %752
    %754 = vrot.lane.b32.xlu0 %v126, 112
    %v755 = vpop.permute.xlu0 %754
    %756 = vrot.lane.b32.xlu0 %v130, 112
    %v757 = vpop.permute.xlu0 %756
    %758 = vrot.lane.b32.xlu0 %v134, 112
    %v759 = vpop.permute.xlu0 %758
    %760 = vrot.lane.b32.xlu0 %v123, 112
    %v761 = vpop.permute.xlu0 %760
    %762 = vrot.lane.b32.xlu0 %v127, 112
    %v763 = vpop.permute.xlu0 %762
    %764 = vrot.lane.b32.xlu0 %v131, 112
    %v765 = vpop.permute.xlu0 %764
    %766 = vrot.lane.b32.xlu0 %v135, 112
    %v767 = vpop.permute.xlu0 %766
    %vm768 = vcmp.lt.s32.totalorder %v169, 112
    %v769 = vsel %vm768, %v753, %v761
    %v770 = vsel %vm768, %v755, %v763
    %v771 = vsel %vm768, %v757, %v765
    %v772 = vsel %vm768, %v759, %v767
    %v773 = vsel %vm768, %v745, %v753
    %v774 = vsel %vm768, %v747, %v755
    %v775 = vsel %vm768, %v749, %v757
    %v776 = vsel %vm768, %v751, %v759
    %v777 = vsel %vm768, %v737, %v745
    %v778 = vsel %vm768, %v739, %v747
    %v779 = vsel %vm768, %v741, %v749
    %v780 = vsel %vm768, %v743, %v751
    %v781 = vsel %vm768, %v761, %v737
    %v782 = vsel %vm768, %v763, %v739
    %v783 = vsel %vm768, %v765, %v741
    %v784 = vsel %vm768, %v767, %v743
    %v785 = vld [vmem:[#allocation3 + $0x300] sm:$0xff]
    %v786 = vld [vmem:[#allocation3 + $0x308] sm:$0xff]
    %v787 = vld [vmem:[#allocation3 + $0x310] sm:$0xff]
    %v788 = vld [vmem:[#allocation3 + $0x318] sm:$0xff]
    %v789 = vld [vmem:[#allocation3 + $0x320] sm:$0xff]
    %v790 = vld [vmem:[#allocation3 + $0x328] sm:$0xff]
    %v791 = vld [vmem:[#allocation3 + $0x330] sm:$0xff]
    %v792 = vld [vmem:[#allocation3 + $0x338] sm:$0xff]
    %v793 = vld [vmem:[#allocation3 + $0x340] sm:$0xff]
    %v794 = vld [vmem:[#allocation3 + $0x348] sm:$0xff]
    %v795 = vld [vmem:[#allocation3 + $0x350] sm:$0xff]
    %v796 = vld [vmem:[#allocation3 + $0x358] sm:$0xff]
    %v797 = vld [vmem:[#allocation3 + $0x360] sm:$0xff]
    %v798 = vld [vmem:[#allocation3 + $0x368] sm:$0xff]
    %v799 = vld [vmem:[#allocation3 + $0x370] sm:$0xff]
    %v800 = vld [vmem:[#allocation3 + $0x378] sm:$0xff]
    %v801 = vmul.f32 %v777, %v785
    %v802 = vmul.f32 %v773, %v786
    %v803 = vmul.f32 %v769, %v787
    %v804 = vmul.f32 %v781, %v788
    %v805 = vmul.f32 %v778, %v789
    %v806 = vmul.f32 %v774, %v790
    %v807 = vmul.f32 %v770, %v791
    %v808 = vmul.f32 %v782, %v792
    %v809 = vmul.f32 %v779, %v793
    %v810 = vmul.f32 %v775, %v794
    %v811 = vmul.f32 %v771, %v795
    %v812 = vmul.f32 %v783, %v796
    %v813 = vmul.f32 %v780, %v797
    %v814 = vmul.f32 %v776, %v798
    %v815 = vmul.f32 %v772, %v799
    %v816 = vmul.f32 %v784, %v800
    %817 = vst [vmem:[#allocation2 + $0x380] sm:$0xff] %v801
    %818 = vst [vmem:[#allocation2 + $0x388] sm:$0xff] %v802
    %819 = vst [vmem:[#allocation2 + $0x390] sm:$0xff] %v803
    %820 = vst [vmem:[#allocation2 + $0x398] sm:$0xff] %v804
    %821 = vst [vmem:[#allocation2 + $0x3a0] sm:$0xff] %v805
    %822 = vst [vmem:[#allocation2 + $0x3a8] sm:$0xff] %v806
    %823 = vst [vmem:[#allocation2 + $0x3b0] sm:$0xff] %v807
    %824 = vst [vmem:[#allocation2 + $0x3b8] sm:$0xff] %v808
    %825 = vst [vmem:[#allocation2 + $0x3c0] sm:$0xff] %v809
    %826 = vst [vmem:[#allocation2 + $0x3c8] sm:$0xff] %v810
    %827 = vst [vmem:[#allocation2 + $0x3d0] sm:$0xff] %v811
    %828 = vst [vmem:[#allocation2 + $0x3d8] sm:$0xff] %v812
    %829 = vst [vmem:[#allocation2 + $0x3e0] sm:$0xff] %v813
    %830 = vst [vmem:[#allocation2 + $0x3e8] sm:$0xff] %v814
    %831 = vst [vmem:[#allocation2 + $0x3f0] sm:$0xff] %v815
    %832 = vst [vmem:[#allocation2 + $0x3f8] sm:$0xff] %v816
    %833 = vrot.lane.b32.xlu0 %v120, 111
    %v834 = vpop.permute.xlu0 %833
    %835 = vrot.lane.b32.xlu0 %v124, 111
    %v836 = vpop.permute.xlu0 %835
    %837 = vrot.lane.b32.xlu0 %v128, 111
    %v838 = vpop.permute.xlu0 %837
    %839 = vrot.lane.b32.xlu0 %v132, 111
    %v840 = vpop.permute.xlu0 %839
    %841 = vrot.lane.b32.xlu0 %v121, 111
    %v842 = vpop.permute.xlu0 %841
    %843 = vrot.lane.b32.xlu0 %v125, 111
    %v844 = vpop.permute.xlu0 %843
    %845 = vrot.lane.b32.xlu0 %v129, 111
    %v846 = vpop.permute.xlu0 %845
    %847 = vrot.lane.b32.xlu0 %v133, 111
    %v848 = vpop.permute.xlu0 %847
    %849 = vrot.lane.b32.xlu0 %v122, 111
    %v850 = vpop.permute.xlu0 %849
    %851 = vrot.lane.b32.xlu0 %v126, 111
    %v852 = vpop.permute.xlu0 %851
    %853 = vrot.lane.b32.xlu0 %v130, 111
    %v854 = vpop.permute.xlu0 %853
    %855 = vrot.lane.b32.xlu0 %v134, 111
    %v856 = vpop.permute.xlu0 %855
    %857 = vrot.lane.b32.xlu0 %v123, 111
    %v858 = vpop.permute.xlu0 %857
    %859 = vrot.lane.b32.xlu0 %v127, 111
    %v860 = vpop.permute.xlu0 %859
    %861 = vrot.lane.b32.xlu0 %v131, 111
    %v862 = vpop.permute.xlu0 %861
    %863 = vrot.lane.b32.xlu0 %v135, 111
    %v864 = vpop.permute.xlu0 %863
    %vm865 = vcmp.lt.s32.totalorder %v169, 111
    %v866 = vsel %vm865, %v850, %v858
    %v867 = vsel %vm865, %v852, %v860
    %v868 = vsel %vm865, %v854, %v862
    %v869 = vsel %vm865, %v856, %v864
    %v870 = vsel %vm865, %v842, %v850
    %v871 = vsel %vm865, %v844, %v852
    %v872 = vsel %vm865, %v846, %v854
    %v873 = vsel %vm865, %v848, %v856
    %v874 = vsel %vm865, %v834, %v842
    %v875 = vsel %vm865, %v836, %v844
    %v876 = vsel %vm865, %v838, %v846
    %v877 = vsel %vm865, %v840, %v848
    %v878 = vsel %vm865, %v858, %v834
    %v879 = vsel %vm865, %v860, %v836
    %v880 = vsel %vm865, %v862, %v838
    %v881 = vsel %vm865, %v864, %v840
    %v882 = vld [vmem:[#allocation3 + $0x380] sm:$0xff]
    %v883 = vld [vmem:[#allocation3 + $0x388] sm:$0xff]
    %v884 = vld [vmem:[#allocation3 + $0x390] sm:$0xff]
    %v885 = vld [vmem:[#allocation3 + $0x398] sm:$0xff]
    %v886 = vld [vmem:[#allocation3 + $0x3a0] sm:$0xff]
    %v887 = vld [vmem:[#allocation3 + $0x3a8] sm:$0xff]
    %v888 = vld [vmem:[#allocation3 + $0x3b0] sm:$0xff]
    %v889 = vld [vmem:[#allocation3 + $0x3b8] sm:$0xff]
    %v890 = vld [vmem:[#allocation3 + $0x3c0] sm:$0xff]
    %v891 = vld [vmem:[#allocation3 + $0x3c8] sm:$0xff]
    %v892 = vld [vmem:[#allocation3 + $0x3d0] sm:$0xff]
    %v893 = vld [vmem:[#allocation3 + $0x3d8] sm:$0xff]
    %v894 = vld [vmem:[#allocation3 + $0x3e0] sm:$0xff]
    %v895 = vld [vmem:[#allocation3 + $0x3e8] sm:$0xff]
    %v896 = vld [vmem:[#allocation3 + $0x3f0] sm:$0xff]
    %v897 = vld [vmem:[#allocation3 + $0x3f8] sm:$0xff]
    %v898 = vmul.f32 %v874, %v882
    %v899 = vmul.f32 %v870, %v883
    %v900 = vmul.f32 %v866, %v884
    %v901 = vmul.f32 %v878, %v885
    %v902 = vmul.f32 %v875, %v886
    %v903 = vmul.f32 %v871, %v887
    %v904 = vmul.f32 %v867, %v888
    %v905 = vmul.f32 %v879, %v889
    %v906 = vmul.f32 %v876, %v890
    %v907 = vmul.f32 %v872, %v891
    %v908 = vmul.f32 %v868, %v892
    %v909 = vmul.f32 %v880, %v893
    %v910 = vmul.f32 %v877, %v894
    %v911 = vmul.f32 %v873, %v895
    %v912 = vmul.f32 %v869, %v896
    %v913 = vmul.f32 %v881, %v897
    %914 = vst [vmem:[#allocation2 + $0x400] sm:$0xff] %v898
    %915 = vst [vmem:[#allocation2 + $0x408] sm:$0xff] %v899
    %916 = vst [vmem:[#allocation2 + $0x410] sm:$0xff] %v900
    %917 = vst [vmem:[#allocation2 + $0x418] sm:$0xff] %v901
    %918 = vst [vmem:[#allocation2 + $0x420] sm:$0xff] %v902
    %919 = vst [vmem:[#allocation2 + $0x428] sm:$0xff] %v903
    %920 = vst [vmem:[#allocation2 + $0x430] sm:$0xff] %v904
    %921 = vst [vmem:[#allocation2 + $0x438] sm:$0xff] %v905
    %922 = vst [vmem:[#allocation2 + $0x440] sm:$0xff] %v906
    %923 = vst [vmem:[#allocation2 + $0x448] sm:$0xff] %v907
    %924 = vst [vmem:[#allocation2 + $0x450] sm:$0xff] %v908
    %925 = vst [vmem:[#allocation2 + $0x458] sm:$0xff] %v909
    %926 = vst [vmem:[#allocation2 + $0x460] sm:$0xff] %v910
    %927 = vst [vmem:[#allocation2 + $0x468] sm:$0xff] %v911
    %928 = vst [vmem:[#allocation2 + $0x470] sm:$0xff] %v912
    %929 = vst [vmem:[#allocation2 + $0x478] sm:$0xff] %v913
    %v930 = vld [vmem:[#allocation6] sm:$0xff]
    %v931 = vld [vmem:[#allocation6 + $0x8] sm:$0xff]
    %v932 = vld [vmem:[#allocation6 + $0x10] sm:$0xff]
    %v933 = vld [vmem:[#allocation6 + $0x18] sm:$0xff]
    %v934 = vld [vmem:[#allocation6 + $0x20] sm:$0xff]
    %v935 = vld [vmem:[#allocation6 + $0x28] sm:$0xff]
    %v936 = vld [vmem:[#allocation6 + $0x30] sm:$0xff]
    %v937 = vld [vmem:[#allocation6 + $0x38] sm:$0xff]
    %v938 = vld [vmem:[#allocation6 + $0x40] sm:$0xff]
    %v939 = vld [vmem:[#allocation6 + $0x48] sm:$0xff]
    %v940 = vld [vmem:[#allocation6 + $0x50] sm:$0xff]
    %v941 = vld [vmem:[#allocation6 + $0x58] sm:$0xff]
    %v942 = vld [vmem:[#allocation2] sm:$0xff]
    %v943 = vld [vmem:[#allocation2 + $0x8] sm:$0xff]
    %v944 = vld [vmem:[#allocation2 + $0x10] sm:$0xff]
    %v945 = vld [vmem:[#allocation2 + $0x18] sm:$0xff]
    %v946 = vld [vmem:[#allocation2 + $0x20] sm:$0xff]
    %v947 = vld [vmem:[#allocation2 + $0x28] sm:$0xff]
    %v948 = vld [vmem:[#allocation2 + $0x30] sm:$0xff]
    %v949 = vld [vmem:[#allocation2 + $0x38] sm:$0xff]
    %v950 = vld [vmem:[#allocation2 + $0x40] sm:$0xff]
    %v951 = vld [vmem:[#allocation2 + $0x48] sm:$0xff]
    %v952 = vld [vmem:[#allocation2 + $0x50] sm:$0xff]
    %v953 = vld [vmem:[#allocation2 + $0x58] sm:$0xff]
    %v954 = vld [vmem:[#allocation2 + $0x60] sm:$0xff]
    %v955 = vld [vmem:[#allocation2 + $0x68] sm:$0xff]
    %v956 = vld [vmem:[#allocation2 + $0x70] sm:$0xff]
    %v957 = vld [vmem:[#allocation2 + $0x78] sm:$0xff]
    %v958 = vld [vmem:[#allocation2 + $0x80] sm:$0xff]
    %v959 = vld [vmem:[#allocation2 + $0x88] sm:$0xff]
    %v960 = vld [vmem:[#allocation2 + $0x90] sm:$0xff]
    %v961 = vld [vmem:[#allocation2 + $0x98] sm:$0xff]
    %v962 = vld [vmem:[#allocation2 + $0xa0] sm:$0xff]
    %v963 = vld [vmem:[#allocation2 + $0xa8] sm:$0xff]
    %v964 = vld [vmem:[#allocation2 + $0xb0] sm:$0xff]
    %v965 = vld [vmem:[#allocation2 + $0xb8] sm:$0xff]
    %v966 = vld [vmem:[#allocation2 + $0xc0] sm:$0xff]
    %v967 = vld [vmem:[#allocation2 + $0xc8] sm:$0xff]
    %v968 = vld [vmem:[#allocation2 + $0xd0] sm:$0xff]
    %v969 = vld [vmem:[#allocation2 + $0xd8] sm:$0xff]
    %v970 = vld [vmem:[#allocation2 + $0xe0] sm:$0xff]
    %v971 = vld [vmem:[#allocation2 + $0xe8] sm:$0xff]
    %v972 = vld [vmem:[#allocation2 + $0xf0] sm:$0xff]
    %v973 = vld [vmem:[#allocation2 + $0xf8] sm:$0xff]
    %v974 = vld [vmem:[#allocation2 + $0x100] sm:$0xff]
    %v975 = vld [vmem:[#allocation2 + $0x108] sm:$0xff]
    %v976 = vld [vmem:[#allocation2 + $0x110] sm:$0xff]
    %v977 = vld [vmem:[#allocation2 + $0x118] sm:$0xff]
    %v978 = vld [vmem:[#allocation2 + $0x120] sm:$0xff]
    %v979 = vld [vmem:[#allocation2 + $0x128] sm:$0xff]
    %v980 = vld [vmem:[#allocation2 + $0x130] sm:$0xff]
    %v981 = vld [vmem:[#allocation2 + $0x138] sm:$0xff]
    %v982 = vld [vmem:[#allocation2 + $0x140] sm:$0xff]
    %v983 = vld [vmem:[#allocation2 + $0x148] sm:$0xff]
    %v984 = vld [vmem:[#allocation2 + $0x150] sm:$0xff]
    %v985 = vld [vmem:[#allocation2 + $0x158] sm:$0xff]
    %v986 = vld [vmem:[#allocation2 + $0x160] sm:$0xff]
    %v987 = vld [vmem:[#allocation2 + $0x168] sm:$0xff]
    %v988 = vld [vmem:[#allocation2 + $0x170] sm:$0xff]
    %v989 = vld [vmem:[#allocation2 + $0x178] sm:$0xff]
    %v990 = vld [vmem:[#allocation2 + $0x180] sm:$0xff]
    %v991 = vld [vmem:[#allocation2 + $0x188] sm:$0xff]
    %v992 = vld [vmem:[#allocation2 + $0x190] sm:$0xff]
    %v993 = vld [vmem:[#allocation2 + $0x198] sm:$0xff]
    %v994 = vld [vmem:[#allocation2 + $0x1a0] sm:$0xff]
    %v995 = vld [vmem:[#allocation2 + $0x1a8] sm:$0xff]
    %v996 = vld [vmem:[#allocation2 + $0x1b0] sm:$0xff]
    %v997 = vld [vmem:[#allocation2 + $0x1b8] sm:$0xff]
    %v998 = vld [vmem:[#allocation2 + $0x1c0] sm:$0xff]
    %v999 = vld [vmem:[#allocation2 + $0x1c8] sm:$0xff]
    %v1000 = vld [vmem:[#allocation2 + $0x1d0] sm:$0xff]
    %v1001 = vld [vmem:[#allocation2 + $0x1d8] sm:$0xff]
    %v1002 = vld [vmem:[#allocation2 + $0x1e0] sm:$0xff]
    %v1003 = vld [vmem:[#allocation2 + $0x1e8] sm:$0xff]
    %v1004 = vld [vmem:[#allocation2 + $0x1f0] sm:$0xff]
    %v1005 = vld [vmem:[#allocation2 + $0x1f8] sm:$0xff]
    %v1006 = vld [vmem:[#allocation2 + $0x200] sm:$0xff]
    %v1007 = vld [vmem:[#allocation2 + $0x208] sm:$0xff]
    %v1008 = vld [vmem:[#allocation2 + $0x210] sm:$0xff]
    %v1009 = vld [vmem:[#allocation2 + $0x218] sm:$0xff]
    %v1010 = vld [vmem:[#allocation2 + $0x220] sm:$0xff]
    %v1011 = vld [vmem:[#allocation2 + $0x228] sm:$0xff]
    %v1012 = vld [vmem:[#allocation2 + $0x230] sm:$0xff]
    %v1013 = vld [vmem:[#allocation2 + $0x238] sm:$0xff]
    %v1014 = vld [vmem:[#allocation2 + $0x240] sm:$0xff]
    %v1015 = vld [vmem:[#allocation2 + $0x248] sm:$0xff]
    %v1016 = vld [vmem:[#allocation2 + $0x250] sm:$0xff]
    %v1017 = vld [vmem:[#allocation2 + $0x258] sm:$0xff]
    %v1018 = vld [vmem:[#allocation2 + $0x260] sm:$0xff]
    %v1019 = vld [vmem:[#allocation2 + $0x268] sm:$0xff]
    %v1020 = vld [vmem:[#allocation2 + $0x270] sm:$0xff]
    %v1021 = vld [vmem:[#allocation2 + $0x278] sm:$0xff]
    %v1022 = vld [vmem:[#allocation2 + $0x280] sm:$0xff]
    %v1023 = vld [vmem:[#allocation2 + $0x288] sm:$0xff]
    %v1024 = vld [vmem:[#allocation2 + $0x290] sm:$0xff]
    %v1025 = vld [vmem:[#allocation2 + $0x298] sm:$0xff]
    %v1026 = vld [vmem:[#allocation2 + $0x2a0] sm:$0xff]
    %v1027 = vld [vmem:[#allocation2 + $0x2a8] sm:$0xff]
    %v1028 = vld [vmem:[#allocation2 + $0x2b0] sm:$0xff]
    %v1029 = vld [vmem:[#allocation2 + $0x2b8] sm:$0xff]
    %v1030 = vld [vmem:[#allocation2 + $0x2c0] sm:$0xff]
    %v1031 = vld [vmem:[#allocation2 + $0x2c8] sm:$0xff]
    %v1032 = vld [vmem:[#allocation2 + $0x2d0] sm:$0xff]
    %v1033 = vld [vmem:[#allocation2 + $0x2d8] sm:$0xff]
    %v1034 = vld [vmem:[#allocation2 + $0x2e0] sm:$0xff]
    %v1035 = vld [vmem:[#allocation2 + $0x2e8] sm:$0xff]
    %v1036 = vld [vmem:[#allocation2 + $0x2f0] sm:$0xff]
    %v1037 = vld [vmem:[#allocation2 + $0x2f8] sm:$0xff]
    %v1038 = vld [vmem:[#allocation2 + $0x300] sm:$0xff]
    %v1039 = vld [vmem:[#allocation2 + $0x308] sm:$0xff]
    %v1040 = vld [vmem:[#allocation2 + $0x310] sm:$0xff]
    %v1041 = vld [vmem:[#allocation2 + $0x318] sm:$0xff]
    %v1042 = vld [vmem:[#allocation2 + $0x320] sm:$0xff]
    %v1043 = vld [vmem:[#allocation2 + $0x328] sm:$0xff]
    %v1044 = vld [vmem:[#allocation2 + $0x330] sm:$0xff]
    %v1045 = vld [vmem:[#allocation2 + $0x338] sm:$0xff]
    %v1046 = vld [vmem:[#allocation2 + $0x340] sm:$0xff]
    %v1047 = vld [vmem:[#allocation2 + $0x348] sm:$0xff]
    %v1048 = vld [vmem:[#allocation2 + $0x350] sm:$0xff]
    %v1049 = vld [vmem:[#allocation2 + $0x358] sm:$0xff]
    %v1050 = vld [vmem:[#allocation2 + $0x360] sm:$0xff]
    %v1051 = vld [vmem:[#allocation2 + $0x368] sm:$0xff]
    %v1052 = vld [vmem:[#allocation2 + $0x370] sm:$0xff]
    %v1053 = vld [vmem:[#allocation2 + $0x378] sm:$0xff]
    %v1054 = vld [vmem:[#allocation2 + $0x380] sm:$0xff]
    %v1055 = vld [vmem:[#allocation2 + $0x388] sm:$0xff]
    %v1056 = vld [vmem:[#allocation2 + $0x390] sm:$0xff]
    %v1057 = vld [vmem:[#allocation2 + $0x398] sm:$0xff]
    %v1058 = vld [vmem:[#allocation2 + $0x3a0] sm:$0xff]
    %v1059 = vld [vmem:[#allocation2 + $0x3a8] sm:$0xff]
    %v1060 = vld [vmem:[#allocation2 + $0x3b0] sm:$0xff]
    %v1061 = vld [vmem:[#allocation2 + $0x3b8] sm:$0xff]
    %v1062 = vld [vmem:[#allocation2 + $0x3c0] sm:$0xff]
    %v1063 = vld [vmem:[#allocation2 + $0x3c8] sm:$0xff]
    %v1064 = vld [vmem:[#allocation2 + $0x3d0] sm:$0xff]
    %v1065 = vld [vmem:[#allocation2 + $0x3d8] sm:$0xff]
    %v1066 = vld [vmem:[#allocation2 + $0x3e0] sm:$0xff]
    %v1067 = vld [vmem:[#allocation2 + $0x3e8] sm:$0xff]
    %v1068 = vld [vmem:[#allocation2 + $0x3f0] sm:$0xff]
    %v1069 = vld [vmem:[#allocation2 + $0x3f8] sm:$0xff]
    %v1070 = vld [vmem:[#allocation2 + $0x400] sm:$0xff]
    %v1071 = vld [vmem:[#allocation2 + $0x408] sm:$0xff]
    %v1072 = vld [vmem:[#allocation2 + $0x410] sm:$0xff]
    %v1073 = vld [vmem:[#allocation2 + $0x418] sm:$0xff]
    %v1074 = vld [vmem:[#allocation2 + $0x420] sm:$0xff]
    %v1075 = vld [vmem:[#allocation2 + $0x428] sm:$0xff]
    %v1076 = vld [vmem:[#allocation2 + $0x430] sm:$0xff]
    %v1077 = vld [vmem:[#allocation2 + $0x438] sm:$0xff]
    %v1078 = vld [vmem:[#allocation2 + $0x440] sm:$0xff]
    %v1079 = vld [vmem:[#allocation2 + $0x448] sm:$0xff]
    %v1080 = vld [vmem:[#allocation2 + $0x450] sm:$0xff]
    %v1081 = vld [vmem:[#allocation2 + $0x458] sm:$0xff]
    %v1082 = vld [vmem:[#allocation2 + $0x460] sm:$0xff]
    %v1083 = vld [vmem:[#allocation2 + $0x468] sm:$0xff]
    %v1084 = vld [vmem:[#allocation2 + $0x470] sm:$0xff]
    %v1085 = vld [vmem:[#allocation2 + $0x478] sm:$0xff]
    %v1086 = vld [vmem:[%s3] sm:$0xff]
    %v1087 = vld [vmem:[%s3 + $0x8] sm:$0xff]
    %v1088 = vld [vmem:[%s3 + $0x10] sm:$0xff]
    %v1089 = vld [vmem:[%s3 + $0x18] sm:$0xff]
    %1091 = vset.pattern.permute.xlu0 0
    %1092 = vperm.xlu0 %1091, %v1086
    %v1093 = vpop.permute.xlu0 %1092
    %1096 = vset.pattern.permute.xlu0 0
    %1097 = vperm.xlu0 %1096, %v1087
    %v1098 = vpop.permute.xlu0 %1097
    %1101 = vset.pattern.permute.xlu0 0
    %1102 = vperm.xlu0 %1101, %v1088
    %v1103 = vpop.permute.xlu0 %1102
    %1106 = vset.pattern.permute.xlu0 0
    %1107 = vperm.xlu0 %1106, %v1089
    %v1108 = vpop.permute.xlu0 %1107
    %vm1110 = vcmask 261120
    %v1112 = vsel %vm1110, %v932, 0
    %v1115 = vsel %vm1110, %v935, 0
    %v1118 = vsel %vm1110, %v938, 0
    %v1121 = vsel %vm1110, %v941, 0
    %1123 = vmatpush.msra.mxu0 %v1002
    %1124 = vmatpush.msra.mxu0 %v998
    %1125 = vmatpush.msra.mxu0 %v994
    %1126 = vmatpush.msra.mxu0 %v990
    %1127 = vmatpush.msra.mxu0 %v986
    %1128 = vmatpush.msra.mxu0 %v982
    %1129 = vmatpush.msra.mxu0 %v978
    %1130 = vmatpush.msra.mxu0 %v974
    %1131 = vmatpush.msra.mxu0 %v970
    %1132 = vmatpush.msra.mxu0 %v966
    %1133 = vmatpush.msra.mxu0 %v962
    %1134 = vmatpush.msra.mxu0 %v958
    %1135 = vmatpush.msra.mxu0 %v954
    %1136 = vmatpush.msra.mxu0 %v950
    %1137 = vmatpush.msra.mxu0 %v946
    %1138 = vmatpush.msra.mxu0 %v942
    %1139 = vmatmul.f32.gmra.mxu0 %v930
    %v1140 = vpop.f32.mrf.mxu0
    %v1141 = vadd.f32 %v1093, %v1140
    %1142 = vmatmul.f32.gmra.mxu0 %v933
    %v1143 = vpop.f32.mrf.mxu0
    %v1144 = vadd.f32 %v1098, %v1143
    %1145 = vmatmul.f32.gmra.mxu0 %v936
    %v1146 = vpop.f32.mrf.mxu0
    %v1147 = vadd.f32 %v1103, %v1146
    %1148 = vmatmul.f32.gmra.mxu0 %v939
    %v1149 = vpop.f32.mrf.mxu0
    %v1150 = vadd.f32 %v1108, %v1149
    %1151 = vdwg.mxu0
    %1152 = vmatpush.msra.mxu0 %v1066
    %1153 = vmatpush.msra.mxu0 %v1062
    %1154 = vmatpush.msra.mxu0 %v1058
    %1155 = vmatpush.msra.mxu0 %v1054
    %1156 = vmatpush.msra.mxu0 %v1050
    %1157 = vmatpush.msra.mxu0 %v1046
    %1158 = vmatpush.msra.mxu0 %v1042
    %1159 = vmatpush.msra.mxu0 %v1038
    %1160 = vmatpush.msra.mxu0 %v1034
    %1161 = vmatpush.msra.mxu0 %v1030
    %1162 = vmatpush.msra.mxu0 %v1026
    %1163 = vmatpush.msra.mxu0 %v1022
    %1164 = vmatpush.msra.mxu0 %v1018
    %1165 = vmatpush.msra.mxu0 %v1014
    %1166 = vmatpush.msra.mxu0 %v1010
    %1167 = vmatpush.msra.mxu0 %v1006
    %1168 = vmatmul.f32.gmra.mxu0 %v931
    %v1169 = vpop.f32.mrf.mxu0
    %v1170 = vadd.f32 %v1141, %v1169
    %1171 = vmatmul.f32.gmra.mxu0 %v934
    %v1172 = vpop.f32.mrf.mxu0
    %v1173 = vadd.f32 %v1144, %v1172
    %1174 = vmatmul.f32.gmra.mxu0 %v937
    %v1175 = vpop.f32.mrf.mxu0
    %v1176 = vadd.f32 %v1147, %v1175
    %1177 = vmatmul.f32.gmra.mxu0 %v940
    %v1178 = vpop.f32.mrf.mxu0
    %v1179 = vadd.f32 %v1150, %v1178
    %1180 = vdwg.mxu0
    %1181 = vmatpush.msra.mxu0 0.0
    %1182 = vmatpush.msra.mxu0 0.0
    %1183 = vmatpush.msra.mxu0 0.0
    %1184 = vmatpush.msra.mxu0 0.0
    %1185 = vmatpush.msra.mxu0 0.0
    %1186 = vmatpush.msra.mxu0 0.0
    %1187 = vmatpush.msra.mxu0 0.0
    %1188 = vmatpush.msra.mxu0 0.0
    %1189 = vmatpush.msra.mxu0 0.0
    %1190 = vmatpush.msra.mxu0 0.0
    %1191 = vmatpush.msra.mxu0 0.0
    %1192 = vmatpush.msra.mxu0 0.0
    %1193 = vmatpush.msra.mxu0 %v1082
    %1194 = vmatpush.msra.mxu0 %v1078
    %1195 = vmatpush.msra.mxu0 %v1074
    %1196 = vmatpush.msra.mxu0 %v1070
    %1197 = vmatmul.f32.gmra.mxu0 %v1112
    %v1198 = vpop.f32.mrf.mxu0
    %v1199 = vadd.f32 %v1170, %v1198
    %1200 = vmatmul.f32.gmra.mxu0 %v1115
    %v1201 = vpop.f32.mrf.mxu0
    %v1202 = vadd.f32 %v1173, %v1201
    %1203 = vmatmul.f32.gmra.mxu0 %v1118
    %v1204 = vpop.f32.mrf.mxu0
    %v1205 = vadd.f32 %v1176, %v1204
    %1206 = vmatmul.f32.gmra.mxu0 %v1121
    %v1207 = vpop.f32.mrf.mxu0
    %v1208 = vadd.f32 %v1179, %v1207
    %1209 = vdwg.mxu0
    %1210 = vmatpush.msra.mxu0 %v1003
    %1211 = vmatpush.msra.mxu0 %v999
    %1212 = vmatpush.msra.mxu0 %v995
    %1213 = vmatpush.msra.mxu0 %v991
    %1214 = vmatpush.msra.mxu0 %v987
    %1215 = vmatpush.msra.mxu0 %v983
    %1216 = vmatpush.msra.mxu0 %v979
    %1217 = vmatpush.msra.mxu0 %v975
    %1218 = vmatpush.msra.mxu0 %v971
    %1219 = vmatpush.msra.mxu0 %v967
    %1220 = vmatpush.msra.mxu0 %v963
    %1221 = vmatpush.msra.mxu0 %v959
    %1222 = vmatpush.msra.mxu0 %v955
    %1223 = vmatpush.msra.mxu0 %v951
    %1224 = vmatpush.msra.mxu0 %v947
    %1225 = vmatpush.msra.mxu0 %v943
    %1226 = vmatmul.f32.gmra.mxu0 %v930
    %v1227 = vpop.f32.mrf.mxu0
    %v1228 = vadd.f32 %v1093, %v1227
    %1229 = vmatmul.f32.gmra.mxu0 %v933
    %v1230 = vpop.f32.mrf.mxu0
    %v1231 = vadd.f32 %v1098, %v1230
    %1232 = vmatmul.f32.gmra.mxu0 %v936
    %v1233 = vpop.f32.mrf.mxu0
    %v1234 = vadd.f32 %v1103, %v1233
    %1235 = vmatmul.f32.gmra.mxu0 %v939
    %v1236 = vpop.f32.mrf.mxu0
    %v1237 = vadd.f32 %v1108, %v1236
    %1238 = vdwg.mxu0
    %1239 = vmatpush.msra.mxu0 %v1067
    %1240 = vmatpush.msra.mxu0 %v1063
    %1241 = vmatpush.msra.mxu0 %v1059
    %1242 = vmatpush.msra.mxu0 %v1055
    %1243 = vmatpush.msra.mxu0 %v1051
    %1244 = vmatpush.msra.mxu0 %v1047
    %1245 = vmatpush.msra.mxu0 %v1043
    %1246 = vmatpush.msra.mxu0 %v1039
    %1247 = vmatpush.msra.mxu0 %v1035
    %1248 = vmatpush.msra.mxu0 %v1031
    %1249 = vmatpush.msra.mxu0 %v1027
    %1250 = vmatpush.msra.mxu0 %v1023
    %1251 = vmatpush.msra.mxu0 %v1019
    %1252 = vmatpush.msra.mxu0 %v1015
    %1253 = vmatpush.msra.mxu0 %v1011
    %1254 = vmatpush.msra.mxu0 %v1007
    %1255 = vmatmul.f32.gmra.mxu0 %v931
    %v1256 = vpop.f32.mrf.mxu0
    %v1257 = vadd.f32 %v1228, %v1256
    %1258 = vmatmul.f32.gmra.mxu0 %v934
    %v1259 = vpop.f32.mrf.mxu0
    %v1260 = vadd.f32 %v1231, %v1259
    %1261 = vmatmul.f32.gmra.mxu0 %v937
    %v1262 = vpop.f32.mrf.mxu0
    %v1263 = vadd.f32 %v1234, %v1262
    %1264 = vmatmul.f32.gmra.mxu0 %v940
    %v1265 = vpop.f32.mrf.mxu0
    %v1266 = vadd.f32 %v1237, %v1265
    %1267 = vdwg.mxu0
    %1268 = vmatpush.msra.mxu0 0.0
    %1269 = vmatpush.msra.mxu0 0.0
    %1270 = vmatpush.msra.mxu0 0.0
    %1271 = vmatpush.msra.mxu0 0.0
    %1272 = vmatpush.msra.mxu0 0.0
    %1273 = vmatpush.msra.mxu0 0.0
    %1274 = vmatpush.msra.mxu0 0.0
    %1275 = vmatpush.msra.mxu0 0.0
    %1276 = vmatpush.msra.mxu0 0.0
    %1277 = vmatpush.msra.mxu0 0.0
    %1278 = vmatpush.msra.mxu0 0.0
    %1279 = vmatpush.msra.mxu0 0.0
    %1280 = vmatpush.msra.mxu0 %v1083
    %1281 = vmatpush.msra.mxu0 %v1079
    %1282 = vmatpush.msra.mxu0 %v1075
    %1283 = vmatpush.msra.mxu0 %v1071
    %1284 = vmatmul.f32.gmra.mxu0 %v1112
    %v1285 = vpop.f32.mrf.mxu0
    %v1286 = vadd.f32 %v1257, %v1285
    %1287 = vmatmul.f32.gmra.mxu0 %v1115
    %v1288 = vpop.f32.mrf.mxu0
    %v1289 = vadd.f32 %v1260, %v1288
    %1290 = vmatmul.f32.gmra.mxu0 %v1118
    %v1291 = vpop.f32.mrf.mxu0
    %v1292 = vadd.f32 %v1263, %v1291
    %1293 = vmatmul.f32.gmra.mxu0 %v1121
    %v1294 = vpop.f32.mrf.mxu0
    %v1295 = vadd.f32 %v1266, %v1294
    %1296 = vdwg.mxu0
    %1297 = vmatpush.msra.mxu0 %v1004
    %1298 = vmatpush.msra.mxu0 %v1000
    %1299 = vmatpush.msra.mxu0 %v996
    %1300 = vmatpush.msra.mxu0 %v992
    %1301 = vmatpush.msra.mxu0 %v988
    %1302 = vmatpush.msra.mxu0 %v984
    %1303 = vmatpush.msra.mxu0 %v980
    %1304 = vmatpush.msra.mxu0 %v976
    %1305 = vmatpush.msra.mxu0 %v972
    %1306 = vmatpush.msra.mxu0 %v968
    %1307 = vmatpush.msra.mxu0 %v964
    %1308 = vmatpush.msra.mxu0 %v960
    %1309 = vmatpush.msra.mxu0 %v956
    %1310 = vmatpush.msra.mxu0 %v952
    %1311 = vmatpush.msra.mxu0 %v948
    %1312 = vmatpush.msra.mxu0 %v944
    %1313 = vmatmul.f32.gmra.mxu0 %v930
    %v1314 = vpop.f32.mrf.mxu0
    %v1315 = vadd.f32 %v1093, %v1314
    %1316 = vmatmul.f32.gmra.mxu0 %v933
    %v1317 = vpop.f32.mrf.mxu0
    %v1318 = vadd.f32 %v1098, %v1317
    %1319 = vmatmul.f32.gmra.mxu0 %v936
    %v1320 = vpop.f32.mrf.mxu0
    %v1321 = vadd.f32 %v1103, %v1320
    %1322 = vmatmul.f32.gmra.mxu0 %v939
    %v1323 = vpop.f32.mrf.mxu0
    %v1324 = vadd.f32 %v1108, %v1323
    %1325 = vdwg.mxu0
    %1326 = vmatpush.msra.mxu0 %v1068
    %1327 = vmatpush.msra.mxu0 %v1064
    %1328 = vmatpush.msra.mxu0 %v1060
    %1329 = vmatpush.msra.mxu0 %v1056
    %1330 = vmatpush.msra.mxu0 %v1052
    %1331 = vmatpush.msra.mxu0 %v1048
    %1332 = vmatpush.msra.mxu0 %v1044
    %1333 = vmatpush.msra.mxu0 %v1040
    %1334 = vmatpush.msra.mxu0 %v1036
    %1335 = vmatpush.msra.mxu0 %v1032
    %1336 = vmatpush.msra.mxu0 %v1028
    %1337 = vmatpush.msra.mxu0 %v1024
    %1338 = vmatpush.msra.mxu0 %v1020
    %1339 = vmatpush.msra.mxu0 %v1016
    %1340 = vmatpush.msra.mxu0 %v1012
    %1341 = vmatpush.msra.mxu0 %v1008
    %1342 = vmatmul.f32.gmra.mxu0 %v931
    %v1343 = vpop.f32.mrf.mxu0
    %v1344 = vadd.f32 %v1315, %v1343
    %1345 = vmatmul.f32.gmra.mxu0 %v934
    %v1346 = vpop.f32.mrf.mxu0
    %v1347 = vadd.f32 %v1318, %v1346
    %1348 = vmatmul.f32.gmra.mxu0 %v937
    %v1349 = vpop.f32.mrf.mxu0
    %v1350 = vadd.f32 %v1321, %v1349
    %1351 = vmatmul.f32.gmra.mxu0 %v940
    %v1352 = vpop.f32.mrf.mxu0
    %v1353 = vadd.f32 %v1324, %v1352
    %1354 = vdwg.mxu0
    %1355 = vmatpush.msra.mxu0 0.0
    %1356 = vmatpush.msra.mxu0 0.0
    %1357 = vmatpush.msra.mxu0 0.0
    %1358 = vmatpush.msra.mxu0 0.0
    %1359 = vmatpush.msra.mxu0 0.0
    %1360 = vmatpush.msra.mxu0 0.0
    %1361 = vmatpush.msra.mxu0 0.0
    %1362 = vmatpush.msra.mxu0 0.0
    %1363 = vmatpush.msra.mxu0 0.0
    %1364 = vmatpush.msra.mxu0 0.0
    %1365 = vmatpush.msra.mxu0 0.0
    %1366 = vmatpush.msra.mxu0 0.0
    %1367 = vmatpush.msra.mxu0 %v1084
    %1368 = vmatpush.msra.mxu0 %v1080
    %1369 = vmatpush.msra.mxu0 %v1076
    %1370 = vmatpush.msra.mxu0 %v1072
    %1371 = vmatmul.f32.gmra.mxu0 %v1112
    %v1372 = vpop.f32.mrf.mxu0
    %v1373 = vadd.f32 %v1344, %v1372
    %1374 = vmatmul.f32.gmra.mxu0 %v1115
    %v1375 = vpop.f32.mrf.mxu0
    %v1376 = vadd.f32 %v1347, %v1375
    %1377 = vmatmul.f32.gmra.mxu0 %v1118
    %v1378 = vpop.f32.mrf.mxu0
    %v1379 = vadd.f32 %v1350, %v1378
    %1380 = vmatmul.f32.gmra.mxu0 %v1121
    %v1381 = vpop.f32.mrf.mxu0
    %v1382 = vadd.f32 %v1353, %v1381
    %1383 = vdwg.mxu0
    %1384 = vmatpush.msra.mxu0 %v1005
    %1385 = vmatpush.msra.mxu0 %v1001
    %1386 = vmatpush.msra.mxu0 %v997
    %1387 = vmatpush.msra.mxu0 %v993
    %1388 = vmatpush.msra.mxu0 %v989
    %1389 = vmatpush.msra.mxu0 %v985
    %1390 = vmatpush.msra.mxu0 %v981
    %1391 = vmatpush.msra.mxu0 %v977
    %1392 = vmatpush.msra.mxu0 %v973
    %1393 = vmatpush.msra.mxu0 %v969
    %1394 = vmatpush.msra.mxu0 %v965
    %1395 = vmatpush.msra.mxu0 %v961
    %1396 = vmatpush.msra.mxu0 %v957
    %1397 = vmatpush.msra.mxu0 %v953
    %1398 = vmatpush.msra.mxu0 %v949
    %1399 = vmatpush.msra.mxu0 %v945
    %1400 = vmatmul.f32.gmra.mxu0 %v930
    %v1401 = vpop.f32.mrf.mxu0
    %v1402 = vadd.f32 %v1093, %v1401
    %1403 = vmatmul.f32.gmra.mxu0 %v933
    %v1404 = vpop.f32.mrf.mxu0
    %v1405 = vadd.f32 %v1098, %v1404
    %1406 = vmatmul.f32.gmra.mxu0 %v936
    %v1407 = vpop.f32.mrf.mxu0
    %v1408 = vadd.f32 %v1103, %v1407
    %1409 = vmatmul.f32.gmra.mxu0 %v939
    %v1410 = vpop.f32.mrf.mxu0
    %v1411 = vadd.f32 %v1108, %v1410
    %1412 = vdwg.mxu0
    %1413 = vmatpush.msra.mxu0 %v1069
    %1414 = vmatpush.msra.mxu0 %v1065
    %1415 = vmatpush.msra.mxu0 %v1061
    %1416 = vmatpush.msra.mxu0 %v1057
    %1417 = vmatpush.msra.mxu0 %v1053
    %1418 = vmatpush.msra.mxu0 %v1049
    %1419 = vmatpush.msra.mxu0 %v1045
    %1420 = vmatpush.msra.mxu0 %v1041
    %1421 = vmatpush.msra.mxu0 %v1037
    %1422 = vmatpush.msra.mxu0 %v1033
    %1423 = vmatpush.msra.mxu0 %v1029
    %1424 = vmatpush.msra.mxu0 %v1025
    %1425 = vmatpush.msra.mxu0 %v1021
    %1426 = vmatpush.msra.mxu0 %v1017
    %1427 = vmatpush.msra.mxu0 %v1013
    %1428 = vmatpush.msra.mxu0 %v1009
    %1429 = vmatmul.f32.gmra.mxu0 %v931
    %v1430 = vpop.f32.mrf.mxu0
    %v1431 = vadd.f32 %v1402, %v1430
    %1432 = vmatmul.f32.gmra.mxu0 %v934
    %v1433 = vpop.f32.mrf.mxu0
    %v1434 = vadd.f32 %v1405, %v1433
    %1435 = vmatmul.f32.gmra.mxu0 %v937
    %v1436 = vpop.f32.mrf.mxu0
    %v1437 = vadd.f32 %v1408, %v1436
    %1438 = vmatmul.f32.gmra.mxu0 %v940
    %v1439 = vpop.f32.mrf.mxu0
    %v1440 = vadd.f32 %v1411, %v1439
    %1441 = vdwg.mxu0
    %1442 = vmatpush.msra.mxu0 0.0
    %1443 = vmatpush.msra.mxu0 0.0
    %1444 = vmatpush.msra.mxu0 0.0
    %1445 = vmatpush.msra.mxu0 0.0
    %1446 = vmatpush.msra.mxu0 0.0
    %1447 = vmatpush.msra.mxu0 0.0
    %1448 = vmatpush.msra.mxu0 0.0
    %1449 = vmatpush.msra.mxu0 0.0
    %1450 = vmatpush.msra.mxu0 0.0
    %1451 = vmatpush.msra.mxu0 0.0
    %1452 = vmatpush.msra.mxu0 0.0
    %1453 = vmatpush.msra.mxu0 0.0
    %1454 = vmatpush.msra.mxu0 %v1085
    %1455 = vmatpush.msra.mxu0 %v1081
    %1456 = vmatpush.msra.mxu0 %v1077
    %1457 = vmatpush.msra.mxu0 %v1073
    %1458 = vmatmul.f32.gmra.mxu0 %v1112
    %v1459 = vpop.f32.mrf.mxu0
    %v1460 = vadd.f32 %v1431, %v1459
    %1461 = vmatmul.f32.gmra.mxu0 %v1115
    %v1462 = vpop.f32.mrf.mxu0
    %v1463 = vadd.f32 %v1434, %v1462
    %1464 = vmatmul.f32.gmra.mxu0 %v1118
    %v1465 = vpop.f32.mrf.mxu0
    %v1466 = vadd.f32 %v1437, %v1465
    %1467 = vmatmul.f32.gmra.mxu0 %v1121
    %v1468 = vpop.f32.mrf.mxu0
    %v1469 = vadd.f32 %v1440, %v1468
    %1470 = vdwg.mxu0
    %v1471 = vmul.f32 %v1199, 0.01
    %v1472 = vmul.f32 %v1286, 0.01
    %v1473 = vmul.f32 %v1373, 0.01
    %v1474 = vmul.f32 %v1460, 0.01
    %v1475 = vmul.f32 %v1202, 0.01
    %v1476 = vmul.f32 %v1289, 0.01
    %v1477 = vmul.f32 %v1376, 0.01
    %v1478 = vmul.f32 %v1463, 0.01
    %v1479 = vmul.f32 %v1205, 0.01
    %v1480 = vmul.f32 %v1292, 0.01
    %v1481 = vmul.f32 %v1379, 0.01
    %v1482 = vmul.f32 %v1466, 0.01
    %v1483 = vmul.f32 %v1208, 0.01
    %v1484 = vmul.f32 %v1295, 0.01
    %v1485 = vmul.f32 %v1382, 0.01
    %v1486 = vmul.f32 %v1469, 0.01
    %v1487 = vmax.f32 %v1199, %v1471
    %v1488 = vmax.f32 %v1286, %v1472
    %v1489 = vmax.f32 %v1373, %v1473
    %v1490 = vmax.f32 %v1460, %v1474
    %v1491 = vmax.f32 %v1202, %v1475
    %v1492 = vmax.f32 %v1289, %v1476
    %v1493 = vmax.f32 %v1376, %v1477
    %v1494 = vmax.f32 %v1463, %v1478
    %v1495 = vmax.f32 %v1205, %v1479
    %v1496 = vmax.f32 %v1292, %v1480
    %v1497 = vmax.f32 %v1379, %v1481
    %v1498 = vmax.f32 %v1466, %v1482
    %v1499 = vmax.f32 %v1208, %v1483
    %v1500 = vmax.f32 %v1295, %v1484
    %v1501 = vmax.f32 %v1382, %v1485
    %v1502 = vmax.f32 %v1469, %v1486
    %1503 = vrot.lane.b32.xlu0 %v1487, 17
    %v1504 = vpop.permute.xlu0 %1503
    %1505 = vrot.lane.b32.xlu0 %v1491, 17
    %v1506 = vpop.permute.xlu0 %1505
    %1507 = vrot.lane.b32.xlu0 %v1495, 17
    %v1508 = vpop.permute.xlu0 %1507
    %1509 = vrot.lane.b32.xlu0 %v1499, 17
    %v1510 = vpop.permute.xlu0 %1509
    %1511 = vrot.lane.b32.xlu0 %v1488, 17
    %v1512 = vpop.permute.xlu0 %1511
    %1513 = vrot.lane.b32.xlu0 %v1492, 17
    %v1514 = vpop.permute.xlu0 %1513
    %1515 = vrot.lane.b32.xlu0 %v1496, 17
    %v1516 = vpop.permute.xlu0 %1515
    %1517 = vrot.lane.b32.xlu0 %v1500, 17
    %v1518 = vpop.permute.xlu0 %1517
    %1519 = vrot.lane.b32.xlu0 %v1489, 17
    %v1520 = vpop.permute.xlu0 %1519
    %1521 = vrot.lane.b32.xlu0 %v1493, 17
    %v1522 = vpop.permute.xlu0 %1521
    %1523 = vrot.lane.b32.xlu0 %v1497, 17
    %v1524 = vpop.permute.xlu0 %1523
    %1525 = vrot.lane.b32.xlu0 %v1501, 17
    %v1526 = vpop.permute.xlu0 %1525
    %1527 = vrot.lane.b32.xlu0 %v1490, 17
    %v1528 = vpop.permute.xlu0 %1527
    %1529 = vrot.lane.b32.xlu0 %v1494, 17
    %v1530 = vpop.permute.xlu0 %1529
    %1531 = vrot.lane.b32.xlu0 %v1498, 17
    %v1532 = vpop.permute.xlu0 %1531
    %1533 = vrot.lane.b32.xlu0 %v1502, 17
    %v1534 = vpop.permute.xlu0 %1533
    %v1535 = vsel %vm170, %v1520, %v1528
    %v1536 = vsel %vm170, %v1522, %v1530
    %v1537 = vsel %vm170, %v1524, %v1532
    %v1538 = vsel %vm170, %v1526, %v1534
    %v1539 = vsel %vm170, %v1512, %v1520
    %v1540 = vsel %vm170, %v1514, %v1522
    %v1541 = vsel %vm170, %v1516, %v1524
    %v1542 = vsel %vm170, %v1518, %v1526
    %v1543 = vsel %vm170, %v1504, %v1512
    %v1544 = vsel %vm170, %v1506, %v1514
    %v1545 = vsel %vm170, %v1508, %v1516
    %v1546 = vsel %vm170, %v1510, %v1518
    %v1547 = vsel %vm170, %v1528, %v1504
    %v1548 = vsel %vm170, %v1530, %v1506
    %v1549 = vsel %vm170, %v1532, %v1508
    %v1550 = vsel %vm170, %v1534, %v1510
    %v1551 = vld [vmem:[#allocation3] sm:$0xff]
    %v1552 = vld [vmem:[#allocation3 + $0x8] sm:$0xff]
    %v1553 = vld [vmem:[#allocation3 + $0x10] sm:$0xff]
    %v1554 = vld [vmem:[#allocation3 + $0x18] sm:$0xff]
    %v1555 = vld [vmem:[#allocation3 + $0x20] sm:$0xff]
    %v1556 = vld [vmem:[#allocation3 + $0x28] sm:$0xff]
    %v1557 = vld [vmem:[#allocation3 + $0x30] sm:$0xff]
    %v1558 = vld [vmem:[#allocation3 + $0x38] sm:$0xff]
    %v1559 = vld [vmem:[#allocation3 + $0x40] sm:$0xff]
    %v1560 = vld [vmem:[#allocation3 + $0x48] sm:$0xff]
    %v1561 = vld [vmem:[#allocation3 + $0x50] sm:$0xff]
    %v1562 = vld [vmem:[#allocation3 + $0x58] sm:$0xff]
    %v1563 = vld [vmem:[#allocation3 + $0x60] sm:$0xff]
    %v1564 = vld [vmem:[#allocation3 + $0x68] sm:$0xff]
    %v1565 = vld [vmem:[#allocation3 + $0x70] sm:$0xff]
    %v1566 = vld [vmem:[#allocation3 + $0x78] sm:$0xff]
    %v1567 = vmul.f32 %v1547, %v1551
    %v1568 = vmul.f32 %v1543, %v1552
    %v1569 = vmul.f32 %v1539, %v1553
    %v1570 = vmul.f32 %v1535, %v1554
    %v1571 = vmul.f32 %v1548, %v1555
    %v1572 = vmul.f32 %v1544, %v1556
    %v1573 = vmul.f32 %v1540, %v1557
    %v1574 = vmul.f32 %v1536, %v1558
    %v1575 = vmul.f32 %v1549, %v1559
    %v1576 = vmul.f32 %v1545, %v1560
    %v1577 = vmul.f32 %v1541, %v1561
    %v1578 = vmul.f32 %v1537, %v1562
    %v1579 = vmul.f32 %v1550, %v1563
    %v1580 = vmul.f32 %v1546, %v1564
    %v1581 = vmul.f32 %v1542, %v1565
    %v1582 = vmul.f32 %v1538, %v1566
    %1583 = vst [vmem:[#allocation2] sm:$0xff] %v1567
    %1584 = vst [vmem:[#allocation2 + $0x8] sm:$0xff] %v1568
    %1585 = vst [vmem:[#allocation2 + $0x10] sm:$0xff] %v1569
    %1586 = vst [vmem:[#allocation2 + $0x18] sm:$0xff] %v1570
    %1587 = vst [vmem:[#allocation2 + $0x20] sm:$0xff] %v1571
    %1588 = vst [vmem:[#allocation2 + $0x28] sm:$0xff] %v1572
    %1589 = vst [vmem:[#allocation2 + $0x30] sm:$0xff] %v1573
    %1590 = vst [vmem:[#allocation2 + $0x38] sm:$0xff] %v1574
    %1591 = vst [vmem:[#allocation2 + $0x40] sm:$0xff] %v1575
    %1592 = vst [vmem:[#allocation2 + $0x48] sm:$0xff] %v1576
    %1593 = vst [vmem:[#allocation2 + $0x50] sm:$0xff] %v1577
    %1594 = vst [vmem:[#allocation2 + $0x58] sm:$0xff] %v1578
    %1595 = vst [vmem:[#allocation2 + $0x60] sm:$0xff] %v1579
    %1596 = vst [vmem:[#allocation2 + $0x68] sm:$0xff] %v1580
    %1597 = vst [vmem:[#allocation2 + $0x70] sm:$0xff] %v1581
    %1598 = vst [vmem:[#allocation2 + $0x78] sm:$0xff] %v1582
    %1599 = vrot.lane.b32.xlu0 %v1487, 16
    %v1600 = vpop.permute.xlu0 %1599
    %1601 = vrot.lane.b32.xlu0 %v1491, 16
    %v1602 = vpop.permute.xlu0 %1601
    %1603 = vrot.lane.b32.xlu0 %v1495, 16
    %v1604 = vpop.permute.xlu0 %1603
    %1605 = vrot.lane.b32.xlu0 %v1499, 16
    %v1606 = vpop.permute.xlu0 %1605
    %1607 = vrot.lane.b32.xlu0 %v1488, 16
    %v1608 = vpop.permute.xlu0 %1607
    %1609 = vrot.lane.b32.xlu0 %v1492, 16
    %v1610 = vpop.permute.xlu0 %1609
    %1611 = vrot.lane.b32.xlu0 %v1496, 16
    %v1612 = vpop.permute.xlu0 %1611
    %1613 = vrot.lane.b32.xlu0 %v1500, 16
    %v1614 = vpop.permute.xlu0 %1613
    %1615 = vrot.lane.b32.xlu0 %v1489, 16
    %v1616 = vpop.permute.xlu0 %1615
    %1617 = vrot.lane.b32.xlu0 %v1493, 16
    %v1618 = vpop.permute.xlu0 %1617
    %1619 = vrot.lane.b32.xlu0 %v1497, 16
    %v1620 = vpop.permute.xlu0 %1619
    %1621 = vrot.lane.b32.xlu0 %v1501, 16
    %v1622 = vpop.permute.xlu0 %1621
    %1623 = vrot.lane.b32.xlu0 %v1490, 16
    %v1624 = vpop.permute.xlu0 %1623
    %1625 = vrot.lane.b32.xlu0 %v1494, 16
    %v1626 = vpop.permute.xlu0 %1625
    %1627 = vrot.lane.b32.xlu0 %v1498, 16
    %v1628 = vpop.permute.xlu0 %1627
    %1629 = vrot.lane.b32.xlu0 %v1502, 16
    %v1630 = vpop.permute.xlu0 %1629
    %v1631 = vsel %vm267, %v1616, %v1624
    %v1632 = vsel %vm267, %v1618, %v1626
    %v1633 = vsel %vm267, %v1620, %v1628
    %v1634 = vsel %vm267, %v1622, %v1630
    %v1635 = vsel %vm267, %v1608, %v1616
    %v1636 = vsel %vm267, %v1610, %v1618
    %v1637 = vsel %vm267, %v1612, %v1620
    %v1638 = vsel %vm267, %v1614, %v1622
    %v1639 = vsel %vm267, %v1600, %v1608
    %v1640 = vsel %vm267, %v1602, %v1610
    %v1641 = vsel %vm267, %v1604, %v1612
    %v1642 = vsel %vm267, %v1606, %v1614
    %v1643 = vsel %vm267, %v1624, %v1600
    %v1644 = vsel %vm267, %v1626, %v1602
    %v1645 = vsel %vm267, %v1628, %v1604
    %v1646 = vsel %vm267, %v1630, %v1606
    %v1647 = vld [vmem:[#allocation3 + $0x80] sm:$0xff]
    %v1648 = vld [vmem:[#allocation3 + $0x88] sm:$0xff]
    %v1649 = vld [vmem:[#allocation3 + $0x90] sm:$0xff]
    %v1650 = vld [vmem:[#allocation3 + $0x98] sm:$0xff]
    %v1651 = vld [vmem:[#allocation3 + $0xa0] sm:$0xff]
    %v1652 = vld [vmem:[#allocation3 + $0xa8] sm:$0xff]
    %v1653 = vld [vmem:[#allocation3 + $0xb0] sm:$0xff]
    %v1654 = vld [vmem:[#allocation3 + $0xb8] sm:$0xff]
    %v1655 = vld [vmem:[#allocation3 + $0xc0] sm:$0xff]
    %v1656 = vld [vmem:[#allocation3 + $0xc8] sm:$0xff]
    %v1657 = vld [vmem:[#allocation3 + $0xd0] sm:$0xff]
    %v1658 = vld [vmem:[#allocation3 + $0xd8] sm:$0xff]
    %v1659 = vld [vmem:[#allocation3 + $0xe0] sm:$0xff]
    %v1660 = vld [vmem:[#allocation3 + $0xe8] sm:$0xff]
    %v1661 = vld [vmem:[#allocation3 + $0xf0] sm:$0xff]
    %v1662 = vld [vmem:[#allocation3 + $0xf8] sm:$0xff]
    %v1663 = vmul.f32 %v1643, %v1647
    %v1664 = vmul.f32 %v1639, %v1648
    %v1665 = vmul.f32 %v1635, %v1649
    %v1666 = vmul.f32 %v1631, %v1650
    %v1667 = vmul.f32 %v1644, %v1651
    %v1668 = vmul.f32 %v1640, %v1652
    %v1669 = vmul.f32 %v1636, %v1653
    %v1670 = vmul.f32 %v1632, %v1654
    %v1671 = vmul.f32 %v1645, %v1655
    %v1672 = vmul.f32 %v1641, %v1656
    %v1673 = vmul.f32 %v1637, %v1657
    %v1674 = vmul.f32 %v1633, %v1658
    %v1675 = vmul.f32 %v1646, %v1659
    %v1676 = vmul.f32 %v1642, %v1660
    %v1677 = vmul.f32 %v1638, %v1661
    %v1678 = vmul.f32 %v1634, %v1662
    %1679 = vst [vmem:[#allocation2 + $0x80] sm:$0xff] %v1663
    %1680 = vst [vmem:[#allocation2 + $0x88] sm:$0xff] %v1664
    %1681 = vst [vmem:[#allocation2 + $0x90] sm:$0xff] %v1665
    %1682 = vst [vmem:[#allocation2 + $0x98] sm:$0xff] %v1666
    %1683 = vst [vmem:[#allocation2 + $0xa0] sm:$0xff] %v1667
    %1684 = vst [vmem:[#allocation2 + $0xa8] sm:$0xff] %v1668
    %1685 = vst [vmem:[#allocation2 + $0xb0] sm:$0xff] %v1669
    %1686 = vst [vmem:[#allocation2 + $0xb8] sm:$0xff] %v1670
    %1687 = vst [vmem:[#allocation2 + $0xc0] sm:$0xff] %v1671
    %1688 = vst [vmem:[#allocation2 + $0xc8] sm:$0xff] %v1672
    %1689 = vst [vmem:[#allocation2 + $0xd0] sm:$0xff] %v1673
    %1690 = vst [vmem:[#allocation2 + $0xd8] sm:$0xff] %v1674
    %1691 = vst [vmem:[#allocation2 + $0xe0] sm:$0xff] %v1675
    %1692 = vst [vmem:[#allocation2 + $0xe8] sm:$0xff] %v1676
    %1693 = vst [vmem:[#allocation2 + $0xf0] sm:$0xff] %v1677
    %1694 = vst [vmem:[#allocation2 + $0xf8] sm:$0xff] %v1678
    %1695 = vrot.lane.b32.xlu0 %v1487, 15
    %v1696 = vpop.permute.xlu0 %1695
    %1697 = vrot.lane.b32.xlu0 %v1491, 15
    %v1698 = vpop.permute.xlu0 %1697
    %1699 = vrot.lane.b32.xlu0 %v1495, 15
    %v1700 = vpop.permute.xlu0 %1699
    %1701 = vrot.lane.b32.xlu0 %v1499, 15
    %v1702 = vpop.permute.xlu0 %1701
    %1703 = vrot.lane.b32.xlu0 %v1488, 15
    %v1704 = vpop.permute.xlu0 %1703
    %1705 = vrot.lane.b32.xlu0 %v1492, 15
    %v1706 = vpop.permute.xlu0 %1705
    %1707 = vrot.lane.b32.xlu0 %v1496, 15
    %v1708 = vpop.permute.xlu0 %1707
    %1709 = vrot.lane.b32.xlu0 %v1500, 15
    %v1710 = vpop.permute.xlu0 %1709
    %1711 = vrot.lane.b32.xlu0 %v1489, 15
    %v1712 = vpop.permute.xlu0 %1711
    %1713 = vrot.lane.b32.xlu0 %v1493, 15
    %v1714 = vpop.permute.xlu0 %1713
    %1715 = vrot.lane.b32.xlu0 %v1497, 15
    %v1716 = vpop.permute.xlu0 %1715
    %1717 = vrot.lane.b32.xlu0 %v1501, 15
    %v1718 = vpop.permute.xlu0 %1717
    %1719 = vrot.lane.b32.xlu0 %v1490, 15
    %v1720 = vpop.permute.xlu0 %1719
    %1721 = vrot.lane.b32.xlu0 %v1494, 15
    %v1722 = vpop.permute.xlu0 %1721
    %1723 = vrot.lane.b32.xlu0 %v1498, 15
    %v1724 = vpop.permute.xlu0 %1723
    %1725 = vrot.lane.b32.xlu0 %v1502, 15
    %v1726 = vpop.permute.xlu0 %1725
    %v1727 = vsel %vm364, %v1712, %v1720
    %v1728 = vsel %vm364, %v1714, %v1722
    %v1729 = vsel %vm364, %v1716, %v1724
    %v1730 = vsel %vm364, %v1718, %v1726
    %v1731 = vsel %vm364, %v1704, %v1712
    %v1732 = vsel %vm364, %v1706, %v1714
    %v1733 = vsel %vm364, %v1708, %v1716
    %v1734 = vsel %vm364, %v1710, %v1718
    %v1735 = vsel %vm364, %v1696, %v1704
    %v1736 = vsel %vm364, %v1698, %v1706
    %v1737 = vsel %vm364, %v1700, %v1708
    %v1738 = vsel %vm364, %v1702, %v1710
    %v1739 = vsel %vm364, %v1720, %v1696
    %v1740 = vsel %vm364, %v1722, %v1698
    %v1741 = vsel %vm364, %v1724, %v1700
    %v1742 = vsel %vm364, %v1726, %v1702
    %v1743 = vld [vmem:[#allocation3 + $0x100] sm:$0xff]
    %v1744 = vld [vmem:[#allocation3 + $0x108] sm:$0xff]
    %v1745 = vld [vmem:[#allocation3 + $0x110] sm:$0xff]
    %v1746 = vld [vmem:[#allocation3 + $0x118] sm:$0xff]
    %v1747 = vld [vmem:[#allocation3 + $0x120] sm:$0xff]
    %v1748 = vld [vmem:[#allocation3 + $0x128] sm:$0xff]
    %v1749 = vld [vmem:[#allocation3 + $0x130] sm:$0xff]
    %v1750 = vld [vmem:[#allocation3 + $0x138] sm:$0xff]
    %v1751 = vld [vmem:[#allocation3 + $0x140] sm:$0xff]
    %v1752 = vld [vmem:[#allocation3 + $0x148] sm:$0xff]
    %v1753 = vld [vmem:[#allocation3 + $0x150] sm:$0xff]
    %v1754 = vld [vmem:[#allocation3 + $0x158] sm:$0xff]
    %v1755 = vld [vmem:[#allocation3 + $0x160] sm:$0xff]
    %v1756 = vld [vmem:[#allocation3 + $0x168] sm:$0xff]
    %v1757 = vld [vmem:[#allocation3 + $0x170] sm:$0xff]
    %v1758 = vld [vmem:[#allocation3 + $0x178] sm:$0xff]
    %v1759 = vmul.f32 %v1739, %v1743
    %v1760 = vmul.f32 %v1735, %v1744
    %v1761 = vmul.f32 %v1731, %v1745
    %v1762 = vmul.f32 %v1727, %v1746
    %v1763 = vmul.f32 %v1740, %v1747
    %v1764 = vmul.f32 %v1736, %v1748
    %v1765 = vmul.f32 %v1732, %v1749
    %v1766 = vmul.f32 %v1728, %v1750
    %v1767 = vmul.f32 %v1741, %v1751
    %v1768 = vmul.f32 %v1737, %v1752
    %v1769 = vmul.f32 %v1733, %v1753
    %v1770 = vmul.f32 %v1729, %v1754
    %v1771 = vmul.f32 %v1742, %v1755
    %v1772 = vmul.f32 %v1738, %v1756
    %v1773 = vmul.f32 %v1734, %v1757
    %v1774 = vmul.f32 %v1730, %v1758
    %1775 = vst [vmem:[#allocation2 + $0x100] sm:$0xff] %v1759
    %1776 = vst [vmem:[#allocation2 + $0x108] sm:$0xff] %v1760
    %1777 = vst [vmem:[#allocation2 + $0x110] sm:$0xff] %v1761
    %1778 = vst [vmem:[#allocation2 + $0x118] sm:$0xff] %v1762
    %1779 = vst [vmem:[#allocation2 + $0x120] sm:$0xff] %v1763
    %1780 = vst [vmem:[#allocation2 + $0x128] sm:$0xff] %v1764
    %1781 = vst [vmem:[#allocation2 + $0x130] sm:$0xff] %v1765
    %1782 = vst [vmem:[#allocation2 + $0x138] sm:$0xff] %v1766
    %1783 = vst [vmem:[#allocation2 + $0x140] sm:$0xff] %v1767
    %1784 = vst [vmem:[#allocation2 + $0x148] sm:$0xff] %v1768
    %1785 = vst [vmem:[#allocation2 + $0x150] sm:$0xff] %v1769
    %1786 = vst [vmem:[#allocation2 + $0x158] sm:$0xff] %v1770
    %1787 = vst [vmem:[#allocation2 + $0x160] sm:$0xff] %v1771
    %1788 = vst [vmem:[#allocation2 + $0x168] sm:$0xff] %v1772
    %1789 = vst [vmem:[#allocation2 + $0x170] sm:$0xff] %v1773
    %1790 = vst [vmem:[#allocation2 + $0x178] sm:$0xff] %v1774
    %1791 = vrot.lane.b32.xlu0 %v1487, 1
    %v1792 = vpop.permute.xlu0 %1791
    %1793 = vrot.lane.b32.xlu0 %v1491, 1
    %v1794 = vpop.permute.xlu0 %1793
    %1795 = vrot.lane.b32.xlu0 %v1495, 1
    %v1796 = vpop.permute.xlu0 %1795
    %1797 = vrot.lane.b32.xlu0 %v1499, 1
    %v1798 = vpop.permute.xlu0 %1797
    %1799 = vrot.lane.b32.xlu0 %v1488, 1
    %v1800 = vpop.permute.xlu0 %1799
    %1801 = vrot.lane.b32.xlu0 %v1492, 1
    %v1802 = vpop.permute.xlu0 %1801
    %1803 = vrot.lane.b32.xlu0 %v1496, 1
    %v1804 = vpop.permute.xlu0 %1803
    %1805 = vrot.lane.b32.xlu0 %v1500, 1
    %v1806 = vpop.permute.xlu0 %1805
    %1807 = vrot.lane.b32.xlu0 %v1489, 1
    %v1808 = vpop.permute.xlu0 %1807
    %1809 = vrot.lane.b32.xlu0 %v1493, 1
    %v1810 = vpop.permute.xlu0 %1809
    %1811 = vrot.lane.b32.xlu0 %v1497, 1
    %v1812 = vpop.permute.xlu0 %1811
    %1813 = vrot.lane.b32.xlu0 %v1501, 1
    %v1814 = vpop.permute.xlu0 %1813
    %1815 = vrot.lane.b32.xlu0 %v1490, 1
    %v1816 = vpop.permute.xlu0 %1815
    %1817 = vrot.lane.b32.xlu0 %v1494, 1
    %v1818 = vpop.permute.xlu0 %1817
    %1819 = vrot.lane.b32.xlu0 %v1498, 1
    %v1820 = vpop.permute.xlu0 %1819
    %1821 = vrot.lane.b32.xlu0 %v1502, 1
    %v1822 = vpop.permute.xlu0 %1821
    %v1823 = vsel %vm461, %v1808, %v1816
    %v1824 = vsel %vm461, %v1810, %v1818
    %v1825 = vsel %vm461, %v1812, %v1820
    %v1826 = vsel %vm461, %v1814, %v1822
    %v1827 = vsel %vm461, %v1800, %v1808
    %v1828 = vsel %vm461, %v1802, %v1810
    %v1829 = vsel %vm461, %v1804, %v1812
    %v1830 = vsel %vm461, %v1806, %v1814
    %v1831 = vsel %vm461, %v1792, %v1800
    %v1832 = vsel %vm461, %v1794, %v1802
    %v1833 = vsel %vm461, %v1796, %v1804
    %v1834 = vsel %vm461, %v1798, %v1806
    %v1835 = vsel %vm461, %v1816, %v1792
    %v1836 = vsel %vm461, %v1818, %v1794
    %v1837 = vsel %vm461, %v1820, %v1796
    %v1838 = vsel %vm461, %v1822, %v1798
    %v1839 = vld [vmem:[#allocation3 + $0x180] sm:$0xff]
    %v1840 = vld [vmem:[#allocation3 + $0x188] sm:$0xff]
    %v1841 = vld [vmem:[#allocation3 + $0x190] sm:$0xff]
    %v1842 = vld [vmem:[#allocation3 + $0x198] sm:$0xff]
    %v1843 = vld [vmem:[#allocation3 + $0x1a0] sm:$0xff]
    %v1844 = vld [vmem:[#allocation3 + $0x1a8] sm:$0xff]
    %v1845 = vld [vmem:[#allocation3 + $0x1b0] sm:$0xff]
    %v1846 = vld [vmem:[#allocation3 + $0x1b8] sm:$0xff]
    %v1847 = vld [vmem:[#allocation3 + $0x1c0] sm:$0xff]
    %v1848 = vld [vmem:[#allocation3 + $0x1c8] sm:$0xff]
    %v1849 = vld [vmem:[#allocation3 + $0x1d0] sm:$0xff]
    %v1850 = vld [vmem:[#allocation3 + $0x1d8] sm:$0xff]
    %v1851 = vld [vmem:[#allocation3 + $0x1e0] sm:$0xff]
    %v1852 = vld [vmem:[#allocation3 + $0x1e8] sm:$0xff]
    %v1853 = vld [vmem:[#allocation3 + $0x1f0] sm:$0xff]
    %v1854 = vld [vmem:[#allocation3 + $0x1f8] sm:$0xff]
    %v1855 = vmul.f32 %v1835, %v1839
    %v1856 = vmul.f32 %v1831, %v1840
    %v1857 = vmul.f32 %v1827, %v1841
    %v1858 = vmul.f32 %v1823, %v1842
    %v1859 = vmul.f32 %v1836, %v1843
    %v1860 = vmul.f32 %v1832, %v1844
    %v1861 = vmul.f32 %v1828, %v1845
    %v1862 = vmul.f32 %v1824, %v1846
    %v1863 = vmul.f32 %v1837, %v1847
    %v1864 = vmul.f32 %v1833, %v1848
    %v1865 = vmul.f32 %v1829, %v1849
    %v1866 = vmul.f32 %v1825, %v1850
    %v1867 = vmul.f32 %v1838, %v1851
    %v1868 = vmul.f32 %v1834, %v1852
    %v1869 = vmul.f32 %v1830, %v1853
    %v1870 = vmul.f32 %v1826, %v1854
    %1871 = vst [vmem:[#allocation2 + $0x180] sm:$0xff] %v1855
    %1872 = vst [vmem:[#allocation2 + $0x188] sm:$0xff] %v1856
    %1873 = vst [vmem:[#allocation2 + $0x190] sm:$0xff] %v1857
    %1874 = vst [vmem:[#allocation2 + $0x198] sm:$0xff] %v1858
    %1875 = vst [vmem:[#allocation2 + $0x1a0] sm:$0xff] %v1859
    %1876 = vst [vmem:[#allocation2 + $0x1a8] sm:$0xff] %v1860
    %1877 = vst [vmem:[#allocation2 + $0x1b0] sm:$0xff] %v1861
    %1878 = vst [vmem:[#allocation2 + $0x1b8] sm:$0xff] %v1862
    %1879 = vst [vmem:[#allocation2 + $0x1c0] sm:$0xff] %v1863
    %1880 = vst [vmem:[#allocation2 + $0x1c8] sm:$0xff] %v1864
    %1881 = vst [vmem:[#allocation2 + $0x1d0] sm:$0xff] %v1865
    %1882 = vst [vmem:[#allocation2 + $0x1d8] sm:$0xff] %v1866
    %1883 = vst [vmem:[#allocation2 + $0x1e0] sm:$0xff] %v1867
    %1884 = vst [vmem:[#allocation2 + $0x1e8] sm:$0xff] %v1868
    %1885 = vst [vmem:[#allocation2 + $0x1f0] sm:$0xff] %v1869
    %1886 = vst [vmem:[#allocation2 + $0x1f8] sm:$0xff] %v1870
    %1887 = vst [vmem:[#allocation2 + $0x200] sm:$0xff] %v1487
    %1888 = vst [vmem:[#allocation2 + $0x208] sm:$0xff] %v1488
    %1889 = vst [vmem:[#allocation2 + $0x210] sm:$0xff] %v1489
    %1890 = vst [vmem:[#allocation2 + $0x218] sm:$0xff] %v1490
    %1891 = vst [vmem:[#allocation2 + $0x220] sm:$0xff] %v1491
    %1892 = vst [vmem:[#allocation2 + $0x228] sm:$0xff] %v1492
    %1893 = vst [vmem:[#allocation2 + $0x230] sm:$0xff] %v1493
    %1894 = vst [vmem:[#allocation2 + $0x238] sm:$0xff] %v1494
    %1895 = vst [vmem:[#allocation2 + $0x240] sm:$0xff] %v1495
    %1896 = vst [vmem:[#allocation2 + $0x248] sm:$0xff] %v1496
    %1897 = vst [vmem:[#allocation2 + $0x250] sm:$0xff] %v1497
    %1898 = vst [vmem:[#allocation2 + $0x258] sm:$0xff] %v1498
    %1899 = vst [vmem:[#allocation2 + $0x260] sm:$0xff] %v1499
    %1900 = vst [vmem:[#allocation2 + $0x268] sm:$0xff] %v1500
    %1901 = vst [vmem:[#allocation2 + $0x270] sm:$0xff] %v1501
    %1902 = vst [vmem:[#allocation2 + $0x278] sm:$0xff] %v1502
    %1903 = vrot.lane.b32.xlu0 %v1487, 127
    %v1904 = vpop.permute.xlu0 %1903
    %1905 = vrot.lane.b32.xlu0 %v1491, 127
    %v1906 = vpop.permute.xlu0 %1905
    %1907 = vrot.lane.b32.xlu0 %v1495, 127
    %v1908 = vpop.permute.xlu0 %1907
    %1909 = vrot.lane.b32.xlu0 %v1499, 127
    %v1910 = vpop.permute.xlu0 %1909
    %1911 = vrot.lane.b32.xlu0 %v1488, 127
    %v1912 = vpop.permute.xlu0 %1911
    %1913 = vrot.lane.b32.xlu0 %v1492, 127
    %v1914 = vpop.permute.xlu0 %1913
    %1915 = vrot.lane.b32.xlu0 %v1496, 127
    %v1916 = vpop.permute.xlu0 %1915
    %1917 = vrot.lane.b32.xlu0 %v1500, 127
    %v1918 = vpop.permute.xlu0 %1917
    %1919 = vrot.lane.b32.xlu0 %v1489, 127
    %v1920 = vpop.permute.xlu0 %1919
    %1921 = vrot.lane.b32.xlu0 %v1493, 127
    %v1922 = vpop.permute.xlu0 %1921
    %1923 = vrot.lane.b32.xlu0 %v1497, 127
    %v1924 = vpop.permute.xlu0 %1923
    %1925 = vrot.lane.b32.xlu0 %v1501, 127
    %v1926 = vpop.permute.xlu0 %1925
    %1927 = vrot.lane.b32.xlu0 %v1490, 127
    %v1928 = vpop.permute.xlu0 %1927
    %1929 = vrot.lane.b32.xlu0 %v1494, 127
    %v1930 = vpop.permute.xlu0 %1929
    %1931 = vrot.lane.b32.xlu0 %v1498, 127
    %v1932 = vpop.permute.xlu0 %1931
    %1933 = vrot.lane.b32.xlu0 %v1502, 127
    %v1934 = vpop.permute.xlu0 %1933
    %v1935 = vsel %vm574, %v1920, %v1928
    %v1936 = vsel %vm574, %v1922, %v1930
    %v1937 = vsel %vm574, %v1924, %v1932
    %v1938 = vsel %vm574, %v1926, %v1934
    %v1939 = vsel %vm574, %v1912, %v1920
    %v1940 = vsel %vm574, %v1914, %v1922
    %v1941 = vsel %vm574, %v1916, %v1924
    %v1942 = vsel %vm574, %v1918, %v1926
    %v1943 = vsel %vm574, %v1904, %v1912
    %v1944 = vsel %vm574, %v1906, %v1914
    %v1945 = vsel %vm574, %v1908, %v1916
    %v1946 = vsel %vm574, %v1910, %v1918
    %v1947 = vsel %vm574, %v1928, %v1904
    %v1948 = vsel %vm574, %v1930, %v1906
    %v1949 = vsel %vm574, %v1932, %v1908
    %v1950 = vsel %vm574, %v1934, %v1910
    %v1951 = vld [vmem:[#allocation3 + $0x200] sm:$0xff]
    %v1952 = vld [vmem:[#allocation3 + $0x208] sm:$0xff]
    %v1953 = vld [vmem:[#allocation3 + $0x210] sm:$0xff]
    %v1954 = vld [vmem:[#allocation3 + $0x218] sm:$0xff]
    %v1955 = vld [vmem:[#allocation3 + $0x220] sm:$0xff]
    %v1956 = vld [vmem:[#allocation3 + $0x228] sm:$0xff]
    %v1957 = vld [vmem:[#allocation3 + $0x230] sm:$0xff]
    %v1958 = vld [vmem:[#allocation3 + $0x238] sm:$0xff]
    %v1959 = vld [vmem:[#allocation3 + $0x240] sm:$0xff]
    %v1960 = vld [vmem:[#allocation3 + $0x248] sm:$0xff]
    %v1961 = vld [vmem:[#allocation3 + $0x250] sm:$0xff]
    %v1962 = vld [vmem:[#allocation3 + $0x258] sm:$0xff]
    %v1963 = vld [vmem:[#allocation3 + $0x260] sm:$0xff]
    %v1964 = vld [vmem:[#allocation3 + $0x268] sm:$0xff]
    %v1965 = vld [vmem:[#allocation3 + $0x270] sm:$0xff]
    %v1966 = vld [vmem:[#allocation3 + $0x278] sm:$0xff]
    %v1967 = vmul.f32 %v1943, %v1951
    %v1968 = vmul.f32 %v1939, %v1952
    %v1969 = vmul.f32 %v1935, %v1953
    %v1970 = vmul.f32 %v1947, %v1954
    %v1971 = vmul.f32 %v1944, %v1955
    %v1972 = vmul.f32 %v1940, %v1956
    %v1973 = vmul.f32 %v1936, %v1957
    %v1974 = vmul.f32 %v1948, %v1958
    %v1975 = vmul.f32 %v1945, %v1959
    %v1976 = vmul.f32 %v1941, %v1960
    %v1977 = vmul.f32 %v1937, %v1961
    %v1978 = vmul.f32 %v1949, %v1962
    %v1979 = vmul.f32 %v1946, %v1963
    %v1980 = vmul.f32 %v1942, %v1964
    %v1981 = vmul.f32 %v1938, %v1965
    %v1982 = vmul.f32 %v1950, %v1966
    %1983 = vst [vmem:[#allocation2 + $0x280] sm:$0xff] %v1967
    %1984 = vst [vmem:[#allocation2 + $0x288] sm:$0xff] %v1968
    %1985 = vst [vmem:[#allocation2 + $0x290] sm:$0xff] %v1969
    %1986 = vst [vmem:[#allocation2 + $0x298] sm:$0xff] %v1970
    %1987 = vst [vmem:[#allocation2 + $0x2a0] sm:$0xff] %v1971
    %1988 = vst [vmem:[#allocation2 + $0x2a8] sm:$0xff] %v1972
    %1989 = vst [vmem:[#allocation2 + $0x2b0] sm:$0xff] %v1973
    %1990 = vst [vmem:[#allocation2 + $0x2b8] sm:$0xff] %v1974
    %1991 = vst [vmem:[#allocation2 + $0x2c0] sm:$0xff] %v1975
    %1992 = vst [vmem:[#allocation2 + $0x2c8] sm:$0xff] %v1976
    %1993 = vst [vmem:[#allocation2 + $0x2d0] sm:$0xff] %v1977
    %1994 = vst [vmem:[#allocation2 + $0x2d8] sm:$0xff] %v1978
    %1995 = vst [vmem:[#allocation2 + $0x2e0] sm:$0xff] %v1979
    %1996 = vst [vmem:[#allocation2 + $0x2e8] sm:$0xff] %v1980
    %1997 = vst [vmem:[#allocation2 + $0x2f0] sm:$0xff] %v1981
    %1998 = vst [vmem:[#allocation2 + $0x2f8] sm:$0xff] %v1982
    %1999 = vrot.lane.b32.xlu0 %v1487, 113
    %v2000 = vpop.permute.xlu0 %1999
    %2001 = vrot.lane.b32.xlu0 %v1491, 113
    %v2002 = vpop.permute.xlu0 %2001
    %2003 = vrot.lane.b32.xlu0 %v1495, 113
    %v2004 = vpop.permute.xlu0 %2003
    %2005 = vrot.lane.b32.xlu0 %v1499, 113
    %v2006 = vpop.permute.xlu0 %2005
    %2007 = vrot.lane.b32.xlu0 %v1488, 113
    %v2008 = vpop.permute.xlu0 %2007
    %2009 = vrot.lane.b32.xlu0 %v1492, 113
    %v2010 = vpop.permute.xlu0 %2009
    %2011 = vrot.lane.b32.xlu0 %v1496, 113
    %v2012 = vpop.permute.xlu0 %2011
    %2013 = vrot.lane.b32.xlu0 %v1500, 113
    %v2014 = vpop.permute.xlu0 %2013
    %2015 = vrot.lane.b32.xlu0 %v1489, 113
    %v2016 = vpop.permute.xlu0 %2015
    %2017 = vrot.lane.b32.xlu0 %v1493, 113
    %v2018 = vpop.permute.xlu0 %2017
    %2019 = vrot.lane.b32.xlu0 %v1497, 113
    %v2020 = vpop.permute.xlu0 %2019
    %2021 = vrot.lane.b32.xlu0 %v1501, 113
    %v2022 = vpop.permute.xlu0 %2021
    %2023 = vrot.lane.b32.xlu0 %v1490, 113
    %v2024 = vpop.permute.xlu0 %2023
    %2025 = vrot.lane.b32.xlu0 %v1494, 113
    %v2026 = vpop.permute.xlu0 %2025
    %2027 = vrot.lane.b32.xlu0 %v1498, 113
    %v2028 = vpop.permute.xlu0 %2027
    %2029 = vrot.lane.b32.xlu0 %v1502, 113
    %v2030 = vpop.permute.xlu0 %2029
    %v2031 = vsel %vm671, %v2016, %v2024
    %v2032 = vsel %vm671, %v2018, %v2026
    %v2033 = vsel %vm671, %v2020, %v2028
    %v2034 = vsel %vm671, %v2022, %v2030
    %v2035 = vsel %vm671, %v2008, %v2016
    %v2036 = vsel %vm671, %v2010, %v2018
    %v2037 = vsel %vm671, %v2012, %v2020
    %v2038 = vsel %vm671, %v2014, %v2022
    %v2039 = vsel %vm671, %v2000, %v2008
    %v2040 = vsel %vm671, %v2002, %v2010
    %v2041 = vsel %vm671, %v2004, %v2012
    %v2042 = vsel %vm671, %v2006, %v2014
    %v2043 = vsel %vm671, %v2024, %v2000
    %v2044 = vsel %vm671, %v2026, %v2002
    %v2045 = vsel %vm671, %v2028, %v2004
    %v2046 = vsel %vm671, %v2030, %v2006
    %v2047 = vld [vmem:[#allocation3 + $0x280] sm:$0xff]
    %v2048 = vld [vmem:[#allocation3 + $0x288] sm:$0xff]
    %v2049 = vld [vmem:[#allocation3 + $0x290] sm:$0xff]
    %v2050 = vld [vmem:[#allocation3 + $0x298] sm:$0xff]
    %v2051 = vld [vmem:[#allocation3 + $0x2a0] sm:$0xff]
    %v2052 = vld [vmem:[#allocation3 + $0x2a8] sm:$0xff]
    %v2053 = vld [vmem:[#allocation3 + $0x2b0] sm:$0xff]
    %v2054 = vld [vmem:[#allocation3 + $0x2b8] sm:$0xff]
    %v2055 = vld [vmem:[#allocation3 + $0x2c0] sm:$0xff]
    %v2056 = vld [vmem:[#allocation3 + $0x2c8] sm:$0xff]
    %v2057 = vld [vmem:[#allocation3 + $0x2d0] sm:$0xff]
    %v2058 = vld [vmem:[#allocation3 + $0x2d8] sm:$0xff]
    %v2059 = vld [vmem:[#allocation3 + $0x2e0] sm:$0xff]
    %v2060 = vld [vmem:[#allocation3 + $0x2e8] sm:$0xff]
    %v2061 = vld [vmem:[#allocation3 + $0x2f0] sm:$0xff]
    %v2062 = vld [vmem:[#allocation3 + $0x2f8] sm:$0xff]
    %v2063 = vmul.f32 %v2039, %v2047
    %v2064 = vmul.f32 %v2035, %v2048
    %v2065 = vmul.f32 %v2031, %v2049
    %v2066 = vmul.f32 %v2043, %v2050
    %v2067 = vmul.f32 %v2040, %v2051
    %v2068 = vmul.f32 %v2036, %v2052
    %v2069 = vmul.f32 %v2032, %v2053
    %v2070 = vmul.f32 %v2044, %v2054
    %v2071 = vmul.f32 %v2041, %v2055
    %v2072 = vmul.f32 %v2037, %v2056
    %v2073 = vmul.f32 %v2033, %v2057
    %v2074 = vmul.f32 %v2045, %v2058
    %v2075 = vmul.f32 %v2042, %v2059
    %v2076 = vmul.f32 %v2038, %v2060
    %v2077 = vmul.f32 %v2034, %v2061
    %v2078 = vmul.f32 %v2046, %v2062
    %2079 = vst [vmem:[#allocation2 + $0x300] sm:$0xff] %v2063
    %2080 = vst [vmem:[#allocation2 + $0x308] sm:$0xff] %v2064
    %2081 = vst [vmem:[#allocation2 + $0x310] sm:$0xff] %v2065
    %2082 = vst [vmem:[#allocation2 + $0x318] sm:$0xff] %v2066
    %2083 = vst [vmem:[#allocation2 + $0x320] sm:$0xff] %v2067
    %2084 = vst [vmem:[#allocation2 + $0x328] sm:$0xff] %v2068
    %2085 = vst [vmem:[#allocation2 + $0x330] sm:$0xff] %v2069
    %2086 = vst [vmem:[#allocation2 + $0x338] sm:$0xff] %v2070
    %2087 = vst [vmem:[#allocation2 + $0x340] sm:$0xff] %v2071
    %2088 = vst [vmem:[#allocation2 + $0x348] sm:$0xff] %v2072
    %2089 = vst [vmem:[#allocation2 + $0x350] sm:$0xff] %v2073
    %2090 = vst [vmem:[#allocation2 + $0x358] sm:$0xff] %v2074
    %2091 = vst [vmem:[#allocation2 + $0x360] sm:$0xff] %v2075
    %2092 = vst [vmem:[#allocation2 + $0x368] sm:$0xff] %v2076
    %2093 = vst [vmem:[#allocation2 + $0x370] sm:$0xff] %v2077
    %2094 = vst [vmem:[#allocation2 + $0x378] sm:$0xff] %v2078
    %2095 = vrot.lane.b32.xlu0 %v1487, 112
    %v2096 = vpop.permute.xlu0 %2095
    %2097 = vrot.lane.b32.xlu0 %v1491, 112
    %v2098 = vpop.permute.xlu0 %2097
    %2099 = vrot.lane.b32.xlu0 %v1495, 112
    %v2100 = vpop.permute.xlu0 %2099
    %2101 = vrot.lane.b32.xlu0 %v1499, 112
    %v2102 = vpop.permute.xlu0 %2101
    %2103 = vrot.lane.b32.xlu0 %v1488, 112
    %v2104 = vpop.permute.xlu0 %2103
    %2105 = vrot.lane.b32.xlu0 %v1492, 112
    %v2106 = vpop.permute.xlu0 %2105
    %2107 = vrot.lane.b32.xlu0 %v1496, 112
    %v2108 = vpop.permute.xlu0 %2107
    %2109 = vrot.lane.b32.xlu0 %v1500, 112
    %v2110 = vpop.permute.xlu0 %2109
    %2111 = vrot.lane.b32.xlu0 %v1489, 112
    %v2112 = vpop.permute.xlu0 %2111
    %2113 = vrot.lane.b32.xlu0 %v1493, 112
    %v2114 = vpop.permute.xlu0 %2113
    %2115 = vrot.lane.b32.xlu0 %v1497, 112
    %v2116 = vpop.permute.xlu0 %2115
    %2117 = vrot.lane.b32.xlu0 %v1501, 112
    %v2118 = vpop.permute.xlu0 %2117
    %2119 = vrot.lane.b32.xlu0 %v1490, 112
    %v2120 = vpop.permute.xlu0 %2119
    %2121 = vrot.lane.b32.xlu0 %v1494, 112
    %v2122 = vpop.permute.xlu0 %2121
    %2123 = vrot.lane.b32.xlu0 %v1498, 112
    %v2124 = vpop.permute.xlu0 %2123
    %2125 = vrot.lane.b32.xlu0 %v1502, 112
    %v2126 = vpop.permute.xlu0 %2125
    %v2127 = vsel %vm768, %v2112, %v2120
    %v2128 = vsel %vm768, %v2114, %v2122
    %v2129 = vsel %vm768, %v2116, %v2124
    %v2130 = vsel %vm768, %v2118, %v2126
    %v2131 = vsel %vm768, %v2104, %v2112
    %v2132 = vsel %vm768, %v2106, %v2114
    %v2133 = vsel %vm768, %v2108, %v2116
    %v2134 = vsel %vm768, %v2110, %v2118
    %v2135 = vsel %vm768, %v2096, %v2104
    %v2136 = vsel %vm768, %v2098, %v2106
    %v2137 = vsel %vm768, %v2100, %v2108
    %v2138 = vsel %vm768, %v2102, %v2110
    %v2139 = vsel %vm768, %v2120, %v2096
    %v2140 = vsel %vm768, %v2122, %v2098
    %v2141 = vsel %vm768, %v2124, %v2100
    %v2142 = vsel %vm768, %v2126, %v2102
    %v2143 = vld [vmem:[#allocation3 + $0x300] sm:$0xff]
    %v2144 = vld [vmem:[#allocation3 + $0x308] sm:$0xff]
    %v2145 = vld [vmem:[#allocation3 + $0x310] sm:$0xff]
    %v2146 = vld [vmem:[#allocation3 + $0x318] sm:$0xff]
    %v2147 = vld [vmem:[#allocation3 + $0x320] sm:$0xff]
    %v2148 = vld [vmem:[#allocation3 + $0x328] sm:$0xff]
    %v2149 = vld [vmem:[#allocation3 + $0x330] sm:$0xff]
    %v2150 = vld [vmem:[#allocation3 + $0x338] sm:$0xff]
    %v2151 = vld [vmem:[#allocation3 + $0x340] sm:$0xff]
    %v2152 = vld [vmem:[#allocation3 + $0x348] sm:$0xff]
    %v2153 = vld [vmem:[#allocation3 + $0x350] sm:$0xff]
    %v2154 = vld [vmem:[#allocation3 + $0x358] sm:$0xff]
    %v2155 = vld [vmem:[#allocation3 + $0x360] sm:$0xff]
    %v2156 = vld [vmem:[#allocation3 + $0x368] sm:$0xff]
    %v2157 = vld [vmem:[#allocation3 + $0x370] sm:$0xff]
    %v2158 = vld [vmem:[#allocation3 + $0x378] sm:$0xff]
    %v2159 = vmul.f32 %v2135, %v2143
    %v2160 = vmul.f32 %v2131, %v2144
    %v2161 = vmul.f32 %v2127, %v2145
    %v2162 = vmul.f32 %v2139, %v2146
    %v2163 = vmul.f32 %v2136, %v2147
    %v2164 = vmul.f32 %v2132, %v2148
    %v2165 = vmul.f32 %v2128, %v2149
    %v2166 = vmul.f32 %v2140, %v2150
    %v2167 = vmul.f32 %v2137, %v2151
    %v2168 = vmul.f32 %v2133, %v2152
    %v2169 = vmul.f32 %v2129, %v2153
    %v2170 = vmul.f32 %v2141, %v2154
    %v2171 = vmul.f32 %v2138, %v2155
    %v2172 = vmul.f32 %v2134, %v2156
    %v2173 = vmul.f32 %v2130, %v2157
    %v2174 = vmul.f32 %v2142, %v2158
    %2175 = vst [vmem:[#allocation2 + $0x380] sm:$0xff] %v2159
    %2176 = vst [vmem:[#allocation2 + $0x388] sm:$0xff] %v2160
    %2177 = vst [vmem:[#allocation2 + $0x390] sm:$0xff] %v2161
    %2178 = vst [vmem:[#allocation2 + $0x398] sm:$0xff] %v2162
    %2179 = vst [vmem:[#allocation2 + $0x3a0] sm:$0xff] %v2163
    %2180 = vst [vmem:[#allocation2 + $0x3a8] sm:$0xff] %v2164
    %2181 = vst [vmem:[#allocation2 + $0x3b0] sm:$0xff] %v2165
    %2182 = vst [vmem:[#allocation2 + $0x3b8] sm:$0xff] %v2166
    %2183 = vst [vmem:[#allocation2 + $0x3c0] sm:$0xff] %v2167
    %2184 = vst [vmem:[#allocation2 + $0x3c8] sm:$0xff] %v2168
    %2185 = vst [vmem:[#allocation2 + $0x3d0] sm:$0xff] %v2169
    %2186 = vst [vmem:[#allocation2 + $0x3d8] sm:$0xff] %v2170
    %2187 = vst [vmem:[#allocation2 + $0x3e0] sm:$0xff] %v2171
    %2188 = vst [vmem:[#allocation2 + $0x3e8] sm:$0xff] %v2172
    %2189 = vst [vmem:[#allocation2 + $0x3f0] sm:$0xff] %v2173
    %2190 = vst [vmem:[#allocation2 + $0x3f8] sm:$0xff] %v2174
    %2191 = vrot.lane.b32.xlu0 %v1487, 111
    %v2192 = vpop.permute.xlu0 %2191
    %2193 = vrot.lane.b32.xlu0 %v1491, 111
    %v2194 = vpop.permute.xlu0 %2193
    %2195 = vrot.lane.b32.xlu0 %v1495, 111
    %v2196 = vpop.permute.xlu0 %2195
    %2197 = vrot.lane.b32.xlu0 %v1499, 111
    %v2198 = vpop.permute.xlu0 %2197
    %2199 = vrot.lane.b32.xlu0 %v1488, 111
    %v2200 = vpop.permute.xlu0 %2199
    %2201 = vrot.lane.b32.xlu0 %v1492, 111
    %v2202 = vpop.permute.xlu0 %2201
    %2203 = vrot.lane.b32.xlu0 %v1496, 111
    %v2204 = vpop.permute.xlu0 %2203
    %2205 = vrot.lane.b32.xlu0 %v1500, 111
    %v2206 = vpop.permute.xlu0 %2205
    %2207 = vrot.lane.b32.xlu0 %v1489, 111
    %v2208 = vpop.permute.xlu0 %2207
    %2209 = vrot.lane.b32.xlu0 %v1493, 111
    %v2210 = vpop.permute.xlu0 %2209
    %2211 = vrot.lane.b32.xlu0 %v1497, 111
    %v2212 = vpop.permute.xlu0 %2211
    %2213 = vrot.lane.b32.xlu0 %v1501, 111
    %v2214 = vpop.permute.xlu0 %2213
    %2215 = vrot.lane.b32.xlu0 %v1490, 111
    %v2216 = vpop.permute.xlu0 %2215
    %2217 = vrot.lane.b32.xlu0 %v1494, 111
    %v2218 = vpop.permute.xlu0 %2217
    %2219 = vrot.lane.b32.xlu0 %v1498, 111
    %v2220 = vpop.permute.xlu0 %2219
    %2221 = vrot.lane.b32.xlu0 %v1502, 111
    %v2222 = vpop.permute.xlu0 %2221
    %v2223 = vsel %vm865, %v2208, %v2216
    %v2224 = vsel %vm865, %v2210, %v2218
    %v2225 = vsel %vm865, %v2212, %v2220
    %v2226 = vsel %vm865, %v2214, %v2222
    %v2227 = vsel %vm865, %v2200, %v2208
    %v2228 = vsel %vm865, %v2202, %v2210
    %v2229 = vsel %vm865, %v2204, %v2212
    %v2230 = vsel %vm865, %v2206, %v2214
    %v2231 = vsel %vm865, %v2192, %v2200
    %v2232 = vsel %vm865, %v2194, %v2202
    %v2233 = vsel %vm865, %v2196, %v2204
    %v2234 = vsel %vm865, %v2198, %v2206
    %v2235 = vsel %vm865, %v2216, %v2192
    %v2236 = vsel %vm865, %v2218, %v2194
    %v2237 = vsel %vm865, %v2220, %v2196
    %v2238 = vsel %vm865, %v2222, %v2198
    %v2239 = vld [vmem:[#allocation3 + $0x380] sm:$0xff]
    %v2240 = vld [vmem:[#allocation3 + $0x388] sm:$0xff]
    %v2241 = vld [vmem:[#allocation3 + $0x390] sm:$0xff]
    %v2242 = vld [vmem:[#allocation3 + $0x398] sm:$0xff]
    %v2243 = vld [vmem:[#allocation3 + $0x3a0] sm:$0xff]
    %v2244 = vld [vmem:[#allocation3 + $0x3a8] sm:$0xff]
    %v2245 = vld [vmem:[#allocation3 + $0x3b0] sm:$0xff]
    %v2246 = vld [vmem:[#allocation3 + $0x3b8] sm:$0xff]
    %v2247 = vld [vmem:[#allocation3 + $0x3c0] sm:$0xff]
    %v2248 = vld [vmem:[#allocation3 + $0x3c8] sm:$0xff]
    %v2249 = vld [vmem:[#allocation3 + $0x3d0] sm:$0xff]
    %v2250 = vld [vmem:[#allocation3 + $0x3d8] sm:$0xff]
    %v2251 = vld [vmem:[#allocation3 + $0x3e0] sm:$0xff]
    %v2252 = vld [vmem:[#allocation3 + $0x3e8] sm:$0xff]
    %v2253 = vld [vmem:[#allocation3 + $0x3f0] sm:$0xff]
    %v2254 = vld [vmem:[#allocation3 + $0x3f8] sm:$0xff]
    %v2255 = vmul.f32 %v2231, %v2239
    %v2256 = vmul.f32 %v2227, %v2240
    %v2257 = vmul.f32 %v2223, %v2241
    %v2258 = vmul.f32 %v2235, %v2242
    %v2259 = vmul.f32 %v2232, %v2243
    %v2260 = vmul.f32 %v2228, %v2244
    %v2261 = vmul.f32 %v2224, %v2245
    %v2262 = vmul.f32 %v2236, %v2246
    %v2263 = vmul.f32 %v2233, %v2247
    %v2264 = vmul.f32 %v2229, %v2248
    %v2265 = vmul.f32 %v2225, %v2249
    %v2266 = vmul.f32 %v2237, %v2250
    %v2267 = vmul.f32 %v2234, %v2251
    %v2268 = vmul.f32 %v2230, %v2252
    %v2269 = vmul.f32 %v2226, %v2253
    %v2270 = vmul.f32 %v2238, %v2254
    %2271 = vst [vmem:[#allocation2 + $0x400] sm:$0xff] %v2255
    %2272 = vst [vmem:[#allocation2 + $0x408] sm:$0xff] %v2256
    %2273 = vst [vmem:[#allocation2 + $0x410] sm:$0xff] %v2257
    %2274 = vst [vmem:[#allocation2 + $0x418] sm:$0xff] %v2258
    %2275 = vst [vmem:[#allocation2 + $0x420] sm:$0xff] %v2259
    %2276 = vst [vmem:[#allocation2 + $0x428] sm:$0xff] %v2260
    %2277 = vst [vmem:[#allocation2 + $0x430] sm:$0xff] %v2261
    %2278 = vst [vmem:[#allocation2 + $0x438] sm:$0xff] %v2262
    %2279 = vst [vmem:[#allocation2 + $0x440] sm:$0xff] %v2263
    %2280 = vst [vmem:[#allocation2 + $0x448] sm:$0xff] %v2264
    %2281 = vst [vmem:[#allocation2 + $0x450] sm:$0xff] %v2265
    %2282 = vst [vmem:[#allocation2 + $0x458] sm:$0xff] %v2266
    %2283 = vst [vmem:[#allocation2 + $0x460] sm:$0xff] %v2267
    %2284 = vst [vmem:[#allocation2 + $0x468] sm:$0xff] %v2268
    %2285 = vst [vmem:[#allocation2 + $0x470] sm:$0xff] %v2269
    %2286 = vst [vmem:[#allocation2 + $0x478] sm:$0xff] %v2270
    %v2287 = vld [vmem:[#allocation6 + $0x60] sm:$0xff]
    %v2288 = vld [vmem:[#allocation6 + $0x68] sm:$0xff]
    %v2289 = vld [vmem:[#allocation6 + $0x70] sm:$0xff]
    %v2290 = vld [vmem:[#allocation6 + $0x78] sm:$0xff]
    %v2291 = vld [vmem:[#allocation6 + $0x80] sm:$0xff]
    %v2292 = vld [vmem:[#allocation6 + $0x88] sm:$0xff]
    %v2293 = vld [vmem:[#allocation6 + $0x90] sm:$0xff]
    %v2294 = vld [vmem:[#allocation6 + $0x98] sm:$0xff]
    %v2295 = vld [vmem:[#allocation6 + $0xa0] sm:$0xff]
    %v2296 = vld [vmem:[#allocation6 + $0xa8] sm:$0xff]
    %v2297 = vld [vmem:[#allocation6 + $0xb0] sm:$0xff]
    %v2298 = vld [vmem:[#allocation6 + $0xb8] sm:$0xff]
    %v2299 = vld [vmem:[#allocation2] sm:$0xff]
    %v2300 = vld [vmem:[#allocation2 + $0x8] sm:$0xff]
    %v2301 = vld [vmem:[#allocation2 + $0x10] sm:$0xff]
    %v2302 = vld [vmem:[#allocation2 + $0x18] sm:$0xff]
    %v2303 = vld [vmem:[#allocation2 + $0x20] sm:$0xff]
    %v2304 = vld [vmem:[#allocation2 + $0x28] sm:$0xff]
    %v2305 = vld [vmem:[#allocation2 + $0x30] sm:$0xff]
    %v2306 = vld [vmem:[#allocation2 + $0x38] sm:$0xff]
    %v2307 = vld [vmem:[#allocation2 + $0x40] sm:$0xff]
    %v2308 = vld [vmem:[#allocation2 + $0x48] sm:$0xff]
    %v2309 = vld [vmem:[#allocation2 + $0x50] sm:$0xff]
    %v2310 = vld [vmem:[#allocation2 + $0x58] sm:$0xff]
    %v2311 = vld [vmem:[#allocation2 + $0x60] sm:$0xff]
    %v2312 = vld [vmem:[#allocation2 + $0x68] sm:$0xff]
    %v2313 = vld [vmem:[#allocation2 + $0x70] sm:$0xff]
    %v2314 = vld [vmem:[#allocation2 + $0x78] sm:$0xff]
    %v2315 = vld [vmem:[#allocation2 + $0x80] sm:$0xff]
    %v2316 = vld [vmem:[#allocation2 + $0x88] sm:$0xff]
    %v2317 = vld [vmem:[#allocation2 + $0x90] sm:$0xff]
    %v2318 = vld [vmem:[#allocation2 + $0x98] sm:$0xff]
    %v2319 = vld [vmem:[#allocation2 + $0xa0] sm:$0xff]
    %v2320 = vld [vmem:[#allocation2 + $0xa8] sm:$0xff]
    %v2321 = vld [vmem:[#allocation2 + $0xb0] sm:$0xff]
    %v2322 = vld [vmem:[#allocation2 + $0xb8] sm:$0xff]
    %v2323 = vld [vmem:[#allocation2 + $0xc0] sm:$0xff]
    %v2324 = vld [vmem:[#allocation2 + $0xc8] sm:$0xff]
    %v2325 = vld [vmem:[#allocation2 + $0xd0] sm:$0xff]
    %v2326 = vld [vmem:[#allocation2 + $0xd8] sm:$0xff]
    %v2327 = vld [vmem:[#allocation2 + $0xe0] sm:$0xff]
    %v2328 = vld [vmem:[#allocation2 + $0xe8] sm:$0xff]
    %v2329 = vld [vmem:[#allocation2 + $0xf0] sm:$0xff]
    %v2330 = vld [vmem:[#allocation2 + $0xf8] sm:$0xff]
    %v2331 = vld [vmem:[#allocation2 + $0x100] sm:$0xff]
    %v2332 = vld [vmem:[#allocation2 + $0x108] sm:$0xff]
    %v2333 = vld [vmem:[#allocation2 + $0x110] sm:$0xff]
    %v2334 = vld [vmem:[#allocation2 + $0x118] sm:$0xff]
    %v2335 = vld [vmem:[#allocation2 + $0x120] sm:$0xff]
    %v2336 = vld [vmem:[#allocation2 + $0x128] sm:$0xff]
    %v2337 = vld [vmem:[#allocation2 + $0x130] sm:$0xff]
    %v2338 = vld [vmem:[#allocation2 + $0x138] sm:$0xff]
    %v2339 = vld [vmem:[#allocation2 + $0x140] sm:$0xff]
    %v2340 = vld [vmem:[#allocation2 + $0x148] sm:$0xff]
    %v2341 = vld [vmem:[#allocation2 + $0x150] sm:$0xff]
    %v2342 = vld [vmem:[#allocation2 + $0x158] sm:$0xff]
    %v2343 = vld [vmem:[#allocation2 + $0x160] sm:$0xff]
    %v2344 = vld [vmem:[#allocation2 + $0x168] sm:$0xff]
    %v2345 = vld [vmem:[#allocation2 + $0x170] sm:$0xff]
    %v2346 = vld [vmem:[#allocation2 + $0x178] sm:$0xff]
    %v2347 = vld [vmem:[#allocation2 + $0x180] sm:$0xff]
    %v2348 = vld [vmem:[#allocation2 + $0x188] sm:$0xff]
    %v2349 = vld [vmem:[#allocation2 + $0x190] sm:$0xff]
    %v2350 = vld [vmem:[#allocation2 + $0x198] sm:$0xff]
    %v2351 = vld [vmem:[#allocation2 + $0x1a0] sm:$0xff]
    %v2352 = vld [vmem:[#allocation2 + $0x1a8] sm:$0xff]
    %v2353 = vld [vmem:[#allocation2 + $0x1b0] sm:$0xff]
    %v2354 = vld [vmem:[#allocation2 + $0x1b8] sm:$0xff]
    %v2355 = vld [vmem:[#allocation2 + $0x1c0] sm:$0xff]
    %v2356 = vld [vmem:[#allocation2 + $0x1c8] sm:$0xff]
    %v2357 = vld [vmem:[#allocation2 + $0x1d0] sm:$0xff]
    %v2358 = vld [vmem:[#allocation2 + $0x1d8] sm:$0xff]
    %v2359 = vld [vmem:[#allocation2 + $0x1e0] sm:$0xff]
    %v2360 = vld [vmem:[#allocation2 + $0x1e8] sm:$0xff]
    %v2361 = vld [vmem:[#allocation2 + $0x1f0] sm:$0xff]
    %v2362 = vld [vmem:[#allocation2 + $0x1f8] sm:$0xff]
    %v2363 = vld [vmem:[#allocation2 + $0x200] sm:$0xff]
    %v2364 = vld [vmem:[#allocation2 + $0x208] sm:$0xff]
    %v2365 = vld [vmem:[#allocation2 + $0x210] sm:$0xff]
    %v2366 = vld [vmem:[#allocation2 + $0x218] sm:$0xff]
    %v2367 = vld [vmem:[#allocation2 + $0x220] sm:$0xff]
    %v2368 = vld [vmem:[#allocation2 + $0x228] sm:$0xff]
    %v2369 = vld [vmem:[#allocation2 + $0x230] sm:$0xff]
    %v2370 = vld [vmem:[#allocation2 + $0x238] sm:$0xff]
    %v2371 = vld [vmem:[#allocation2 + $0x240] sm:$0xff]
    %v2372 = vld [vmem:[#allocation2 + $0x248] sm:$0xff]
    %v2373 = vld [vmem:[#allocation2 + $0x250] sm:$0xff]
    %v2374 = vld [vmem:[#allocation2 + $0x258] sm:$0xff]
    %v2375 = vld [vmem:[#allocation2 + $0x260] sm:$0xff]
    %v2376 = vld [vmem:[#allocation2 + $0x268] sm:$0xff]
    %v2377 = vld [vmem:[#allocation2 + $0x270] sm:$0xff]
    %v2378 = vld [vmem:[#allocation2 + $0x278] sm:$0xff]
    %v2379 = vld [vmem:[#allocation2 + $0x280] sm:$0xff]
    %v2380 = vld [vmem:[#allocation2 + $0x288] sm:$0xff]
    %v2381 = vld [vmem:[#allocation2 + $0x290] sm:$0xff]
    %v2382 = vld [vmem:[#allocation2 + $0x298] sm:$0xff]
    %v2383 = vld [vmem:[#allocation2 + $0x2a0] sm:$0xff]
    %v2384 = vld [vmem:[#allocation2 + $0x2a8] sm:$0xff]
    %v2385 = vld [vmem:[#allocation2 + $0x2b0] sm:$0xff]
    %v2386 = vld [vmem:[#allocation2 + $0x2b8] sm:$0xff]
    %v2387 = vld [vmem:[#allocation2 + $0x2c0] sm:$0xff]
    %v2388 = vld [vmem:[#allocation2 + $0x2c8] sm:$0xff]
    %v2389 = vld [vmem:[#allocation2 + $0x2d0] sm:$0xff]
    %v2390 = vld [vmem:[#allocation2 + $0x2d8] sm:$0xff]
    %v2391 = vld [vmem:[#allocation2 + $0x2e0] sm:$0xff]
    %v2392 = vld [vmem:[#allocation2 + $0x2e8] sm:$0xff]
    %v2393 = vld [vmem:[#allocation2 + $0x2f0] sm:$0xff]
    %v2394 = vld [vmem:[#allocation2 + $0x2f8] sm:$0xff]
    %v2395 = vld [vmem:[#allocation2 + $0x300] sm:$0xff]
    %v2396 = vld [vmem:[#allocation2 + $0x308] sm:$0xff]
    %v2397 = vld [vmem:[#allocation2 + $0x310] sm:$0xff]
    %v2398 = vld [vmem:[#allocation2 + $0x318] sm:$0xff]
    %v2399 = vld [vmem:[#allocation2 + $0x320] sm:$0xff]
    %v2400 = vld [vmem:[#allocation2 + $0x328] sm:$0xff]
    %v2401 = vld [vmem:[#allocation2 + $0x330] sm:$0xff]
    %v2402 = vld [vmem:[#allocation2 + $0x338] sm:$0xff]
    %v2403 = vld [vmem:[#allocation2 + $0x340] sm:$0xff]
    %v2404 = vld [vmem:[#allocation2 + $0x348] sm:$0xff]
    %v2405 = vld [vmem:[#allocation2 + $0x350] sm:$0xff]
    %v2406 = vld [vmem:[#allocation2 + $0x358] sm:$0xff]
    %v2407 = vld [vmem:[#allocation2 + $0x360] sm:$0xff]
    %v2408 = vld [vmem:[#allocation2 + $0x368] sm:$0xff]
    %v2409 = vld [vmem:[#allocation2 + $0x370] sm:$0xff]
    %v2410 = vld [vmem:[#allocation2 + $0x378] sm:$0xff]
    %v2411 = vld [vmem:[#allocation2 + $0x380] sm:$0xff]
    %v2412 = vld [vmem:[#allocation2 + $0x388] sm:$0xff]
    %v2413 = vld [vmem:[#allocation2 + $0x390] sm:$0xff]
    %v2414 = vld [vmem:[#allocation2 + $0x398] sm:$0xff]
    %v2415 = vld [vmem:[#allocation2 + $0x3a0] sm:$0xff]
    %v2416 = vld [vmem:[#allocation2 + $0x3a8] sm:$0xff]
    %v2417 = vld [vmem:[#allocation2 + $0x3b0] sm:$0xff]
    %v2418 = vld [vmem:[#allocation2 + $0x3b8] sm:$0xff]
    %v2419 = vld [vmem:[#allocation2 + $0x3c0] sm:$0xff]
    %v2420 = vld [vmem:[#allocation2 + $0x3c8] sm:$0xff]
    %v2421 = vld [vmem:[#allocation2 + $0x3d0] sm:$0xff]
    %v2422 = vld [vmem:[#allocation2 + $0x3d8] sm:$0xff]
    %v2423 = vld [vmem:[#allocation2 + $0x3e0] sm:$0xff]
    %v2424 = vld [vmem:[#allocation2 + $0x3e8] sm:$0xff]
    %v2425 = vld [vmem:[#allocation2 + $0x3f0] sm:$0xff]
    %v2426 = vld [vmem:[#allocation2 + $0x3f8] sm:$0xff]
    %v2427 = vld [vmem:[#allocation2 + $0x400] sm:$0xff]
    %v2428 = vld [vmem:[#allocation2 + $0x408] sm:$0xff]
    %v2429 = vld [vmem:[#allocation2 + $0x410] sm:$0xff]
    %v2430 = vld [vmem:[#allocation2 + $0x418] sm:$0xff]
    %v2431 = vld [vmem:[#allocation2 + $0x420] sm:$0xff]
    %v2432 = vld [vmem:[#allocation2 + $0x428] sm:$0xff]
    %v2433 = vld [vmem:[#allocation2 + $0x430] sm:$0xff]
    %v2434 = vld [vmem:[#allocation2 + $0x438] sm:$0xff]
    %v2435 = vld [vmem:[#allocation2 + $0x440] sm:$0xff]
    %v2436 = vld [vmem:[#allocation2 + $0x448] sm:$0xff]
    %v2437 = vld [vmem:[#allocation2 + $0x450] sm:$0xff]
    %v2438 = vld [vmem:[#allocation2 + $0x458] sm:$0xff]
    %v2439 = vld [vmem:[#allocation2 + $0x460] sm:$0xff]
    %v2440 = vld [vmem:[#allocation2 + $0x468] sm:$0xff]
    %v2441 = vld [vmem:[#allocation2 + $0x470] sm:$0xff]
    %v2442 = vld [vmem:[#allocation2 + $0x478] sm:$0xff]
    %v2443 = vld [vmem:[%s3 + $0x20] sm:$0xff]
    %v2444 = vld [vmem:[%s3 + $0x28] sm:$0xff]
    %v2445 = vld [vmem:[%s3 + $0x30] sm:$0xff]
    %v2446 = vld [vmem:[%s3 + $0x38] sm:$0xff]
    %2448 = vset.pattern.permute.xlu0 0
    %2449 = vperm.xlu0 %2448, %v2443
    %v2450 = vpop.permute.xlu0 %2449
    %2453 = vset.pattern.permute.xlu0 0
    %2454 = vperm.xlu0 %2453, %v2444
    %v2455 = vpop.permute.xlu0 %2454
    %2458 = vset.pattern.permute.xlu0 0
    %2459 = vperm.xlu0 %2458, %v2445
    %v2460 = vpop.permute.xlu0 %2459
    %2463 = vset.pattern.permute.xlu0 0
    %2464 = vperm.xlu0 %2463, %v2446
    %v2465 = vpop.permute.xlu0 %2464
    %v2468 = vsel %vm1110, %v2289, 0
    %v2471 = vsel %vm1110, %v2292, 0
    %v2474 = vsel %vm1110, %v2295, 0
    %v2477 = vsel %vm1110, %v2298, 0
    %2479 = vmatpush.msra.mxu0 %v2359
    %2480 = vmatpush.msra.mxu0 %v2355
    %2481 = vmatpush.msra.mxu0 %v2351
    %2482 = vmatpush.msra.mxu0 %v2347
    %2483 = vmatpush.msra.mxu0 %v2343
    %2484 = vmatpush.msra.mxu0 %v2339
    %2485 = vmatpush.msra.mxu0 %v2335
    %2486 = vmatpush.msra.mxu0 %v2331
    %2487 = vmatpush.msra.mxu0 %v2327
    %2488 = vmatpush.msra.mxu0 %v2323
    %2489 = vmatpush.msra.mxu0 %v2319
    %2490 = vmatpush.msra.mxu0 %v2315
    %2491 = vmatpush.msra.mxu0 %v2311
    %2492 = vmatpush.msra.mxu0 %v2307
    %2493 = vmatpush.msra.mxu0 %v2303
    %2494 = vmatpush.msra.mxu0 %v2299
    %2495 = vmatmul.f32.gmra.mxu0 %v2287
    %v2496 = vpop.f32.mrf.mxu0
    %v2497 = vadd.f32 %v2450, %v2496
    %2498 = vmatmul.f32.gmra.mxu0 %v2290
    %v2499 = vpop.f32.mrf.mxu0
    %v2500 = vadd.f32 %v2455, %v2499
    %2501 = vmatmul.f32.gmra.mxu0 %v2293
    %v2502 = vpop.f32.mrf.mxu0
    %v2503 = vadd.f32 %v2460, %v2502
    %2504 = vmatmul.f32.gmra.mxu0 %v2296
    %v2505 = vpop.f32.mrf.mxu0
    %v2506 = vadd.f32 %v2465, %v2505
    %2507 = vdwg.mxu0
    %2508 = vmatpush.msra.mxu0 %v2423
    %2509 = vmatpush.msra.mxu0 %v2419
    %2510 = vmatpush.msra.mxu0 %v2415
    %2511 = vmatpush.msra.mxu0 %v2411
    %2512 = vmatpush.msra.mxu0 %v2407
    %2513 = vmatpush.msra.mxu0 %v2403
    %2514 = vmatpush.msra.mxu0 %v2399
    %2515 = vmatpush.msra.mxu0 %v2395
    %2516 = vmatpush.msra.mxu0 %v2391
    %2517 = vmatpush.msra.mxu0 %v2387
    %2518 = vmatpush.msra.mxu0 %v2383
    %2519 = vmatpush.msra.mxu0 %v2379
    %2520 = vmatpush.msra.mxu0 %v2375
    %2521 = vmatpush.msra.mxu0 %v2371
    %2522 = vmatpush.msra.mxu0 %v2367
    %2523 = vmatpush.msra.mxu0 %v2363
    %2524 = vmatmul.f32.gmra.mxu0 %v2288
    %v2525 = vpop.f32.mrf.mxu0
    %v2526 = vadd.f32 %v2497, %v2525
    %2527 = vmatmul.f32.gmra.mxu0 %v2291
    %v2528 = vpop.f32.mrf.mxu0
    %v2529 = vadd.f32 %v2500, %v2528
    %2530 = vmatmul.f32.gmra.mxu0 %v2294
    %v2531 = vpop.f32.mrf.mxu0
    %v2532 = vadd.f32 %v2503, %v2531
    %2533 = vmatmul.f32.gmra.mxu0 %v2297
    %v2534 = vpop.f32.mrf.mxu0
    %v2535 = vadd.f32 %v2506, %v2534
    %2536 = vdwg.mxu0
    %2537 = vmatpush.msra.mxu0 0.0
    %2538 = vmatpush.msra.mxu0 0.0
    %2539 = vmatpush.msra.mxu0 0.0
    %2540 = vmatpush.msra.mxu0 0.0
    %2541 = vmatpush.msra.mxu0 0.0
    %2542 = vmatpush.msra.mxu0 0.0
    %2543 = vmatpush.msra.mxu0 0.0
    %2544 = vmatpush.msra.mxu0 0.0
    %2545 = vmatpush.msra.mxu0 0.0
    %2546 = vmatpush.msra.mxu0 0.0
    %2547 = vmatpush.msra.mxu0 0.0
    %2548 = vmatpush.msra.mxu0 0.0
    %2549 = vmatpush.msra.mxu0 %v2439
    %2550 = vmatpush.msra.mxu0 %v2435
    %2551 = vmatpush.msra.mxu0 %v2431
    %2552 = vmatpush.msra.mxu0 %v2427
    %2553 = vmatmul.f32.gmra.mxu0 %v2468
    %v2554 = vpop.f32.mrf.mxu0
    %v2555 = vadd.f32 %v2526, %v2554
    %2556 = vmatmul.f32.gmra.mxu0 %v2471
    %v2557 = vpop.f32.mrf.mxu0
    %v2558 = vadd.f32 %v2529, %v2557
    %2559 = vmatmul.f32.gmra.mxu0 %v2474
    %v2560 = vpop.f32.mrf.mxu0
    %v2561 = vadd.f32 %v2532, %v2560
    %2562 = vmatmul.f32.gmra.mxu0 %v2477
    %v2563 = vpop.f32.mrf.mxu0
    %v2564 = vadd.f32 %v2535, %v2563
    %2565 = vdwg.mxu0
    %2566 = vmatpush.msra.mxu0 %v2360
    %2567 = vmatpush.msra.mxu0 %v2356
    %2568 = vmatpush.msra.mxu0 %v2352
    %2569 = vmatpush.msra.mxu0 %v2348
    %2570 = vmatpush.msra.mxu0 %v2344
    %2571 = vmatpush.msra.mxu0 %v2340
    %2572 = vmatpush.msra.mxu0 %v2336
    %2573 = vmatpush.msra.mxu0 %v2332
    %2574 = vmatpush.msra.mxu0 %v2328
    %2575 = vmatpush.msra.mxu0 %v2324
    %2576 = vmatpush.msra.mxu0 %v2320
    %2577 = vmatpush.msra.mxu0 %v2316
    %2578 = vmatpush.msra.mxu0 %v2312
    %2579 = vmatpush.msra.mxu0 %v2308
    %2580 = vmatpush.msra.mxu0 %v2304
    %2581 = vmatpush.msra.mxu0 %v2300
    %2582 = vmatmul.f32.gmra.mxu0 %v2287
    %v2583 = vpop.f32.mrf.mxu0
    %v2584 = vadd.f32 %v2450, %v2583
    %2585 = vmatmul.f32.gmra.mxu0 %v2290
    %v2586 = vpop.f32.mrf.mxu0
    %v2587 = vadd.f32 %v2455, %v2586
    %2588 = vmatmul.f32.gmra.mxu0 %v2293
    %v2589 = vpop.f32.mrf.mxu0
    %v2590 = vadd.f32 %v2460, %v2589
    %2591 = vmatmul.f32.gmra.mxu0 %v2296
    %v2592 = vpop.f32.mrf.mxu0
    %v2593 = vadd.f32 %v2465, %v2592
    %2594 = vdwg.mxu0
    %2595 = vmatpush.msra.mxu0 %v2424
    %2596 = vmatpush.msra.mxu0 %v2420
    %2597 = vmatpush.msra.mxu0 %v2416
    %2598 = vmatpush.msra.mxu0 %v2412
    %2599 = vmatpush.msra.mxu0 %v2408
    %2600 = vmatpush.msra.mxu0 %v2404
    %2601 = vmatpush.msra.mxu0 %v2400
    %2602 = vmatpush.msra.mxu0 %v2396
    %2603 = vmatpush.msra.mxu0 %v2392
    %2604 = vmatpush.msra.mxu0 %v2388
    %2605 = vmatpush.msra.mxu0 %v2384
    %2606 = vmatpush.msra.mxu0 %v2380
    %2607 = vmatpush.msra.mxu0 %v2376
    %2608 = vmatpush.msra.mxu0 %v2372
    %2609 = vmatpush.msra.mxu0 %v2368
    %2610 = vmatpush.msra.mxu0 %v2364
    %2611 = vmatmul.f32.gmra.mxu0 %v2288
    %v2612 = vpop.f32.mrf.mxu0
    %v2613 = vadd.f32 %v2584, %v2612
    %2614 = vmatmul.f32.gmra.mxu0 %v2291
    %v2615 = vpop.f32.mrf.mxu0
    %v2616 = vadd.f32 %v2587, %v2615
    %2617 = vmatmul.f32.gmra.mxu0 %v2294
    %v2618 = vpop.f32.mrf.mxu0
    %v2619 = vadd.f32 %v2590, %v2618
    %2620 = vmatmul.f32.gmra.mxu0 %v2297
    %v2621 = vpop.f32.mrf.mxu0
    %v2622 = vadd.f32 %v2593, %v2621
    %2623 = vdwg.mxu0
    %2624 = vmatpush.msra.mxu0 0.0
    %2625 = vmatpush.msra.mxu0 0.0
    %2626 = vmatpush.msra.mxu0 0.0
    %2627 = vmatpush.msra.mxu0 0.0
    %2628 = vmatpush.msra.mxu0 0.0
    %2629 = vmatpush.msra.mxu0 0.0
    %2630 = vmatpush.msra.mxu0 0.0
    %2631 = vmatpush.msra.mxu0 0.0
    %2632 = vmatpush.msra.mxu0 0.0
    %2633 = vmatpush.msra.mxu0 0.0
    %2634 = vmatpush.msra.mxu0 0.0
    %2635 = vmatpush.msra.mxu0 0.0
    %2636 = vmatpush.msra.mxu0 %v2440
    %2637 = vmatpush.msra.mxu0 %v2436
    %2638 = vmatpush.msra.mxu0 %v2432
    %2639 = vmatpush.msra.mxu0 %v2428
    %2640 = vmatmul.f32.gmra.mxu0 %v2468
    %v2641 = vpop.f32.mrf.mxu0
    %v2642 = vadd.f32 %v2613, %v2641
    %2643 = vmatmul.f32.gmra.mxu0 %v2471
    %v2644 = vpop.f32.mrf.mxu0
    %v2645 = vadd.f32 %v2616, %v2644
    %2646 = vmatmul.f32.gmra.mxu0 %v2474
    %v2647 = vpop.f32.mrf.mxu0
    %v2648 = vadd.f32 %v2619, %v2647
    %2649 = vmatmul.f32.gmra.mxu0 %v2477
    %v2650 = vpop.f32.mrf.mxu0
    %v2651 = vadd.f32 %v2622, %v2650
    %2652 = vdwg.mxu0
    %2653 = vmatpush.msra.mxu0 %v2361
    %2654 = vmatpush.msra.mxu0 %v2357
    %2655 = vmatpush.msra.mxu0 %v2353
    %2656 = vmatpush.msra.mxu0 %v2349
    %2657 = vmatpush.msra.mxu0 %v2345
    %2658 = vmatpush.msra.mxu0 %v2341
    %2659 = vmatpush.msra.mxu0 %v2337
    %2660 = vmatpush.msra.mxu0 %v2333
    %2661 = vmatpush.msra.mxu0 %v2329
    %2662 = vmatpush.msra.mxu0 %v2325
    %2663 = vmatpush.msra.mxu0 %v2321
    %2664 = vmatpush.msra.mxu0 %v2317
    %2665 = vmatpush.msra.mxu0 %v2313
    %2666 = vmatpush.msra.mxu0 %v2309
    %2667 = vmatpush.msra.mxu0 %v2305
    %2668 = vmatpush.msra.mxu0 %v2301
    %2669 = vmatmul.f32.gmra.mxu0 %v2287
    %v2670 = vpop.f32.mrf.mxu0
    %v2671 = vadd.f32 %v2450, %v2670
    %2672 = vmatmul.f32.gmra.mxu0 %v2290
    %v2673 = vpop.f32.mrf.mxu0
    %v2674 = vadd.f32 %v2455, %v2673
    %2675 = vmatmul.f32.gmra.mxu0 %v2293
    %v2676 = vpop.f32.mrf.mxu0
    %v2677 = vadd.f32 %v2460, %v2676
    %2678 = vmatmul.f32.gmra.mxu0 %v2296
    %v2679 = vpop.f32.mrf.mxu0
    %v2680 = vadd.f32 %v2465, %v2679
    %2681 = vdwg.mxu0
    %2682 = vmatpush.msra.mxu0 %v2425
    %2683 = vmatpush.msra.mxu0 %v2421
    %2684 = vmatpush.msra.mxu0 %v2417
    %2685 = vmatpush.msra.mxu0 %v2413
    %2686 = vmatpush.msra.mxu0 %v2409
    %2687 = vmatpush.msra.mxu0 %v2405
    %2688 = vmatpush.msra.mxu0 %v2401
    %2689 = vmatpush.msra.mxu0 %v2397
    %2690 = vmatpush.msra.mxu0 %v2393
    %2691 = vmatpush.msra.mxu0 %v2389
    %2692 = vmatpush.msra.mxu0 %v2385
    %2693 = vmatpush.msra.mxu0 %v2381
    %2694 = vmatpush.msra.mxu0 %v2377
    %2695 = vmatpush.msra.mxu0 %v2373
    %2696 = vmatpush.msra.mxu0 %v2369
    %2697 = vmatpush.msra.mxu0 %v2365
    %2698 = vmatmul.f32.gmra.mxu0 %v2288
    %v2699 = vpop.f32.mrf.mxu0
    %v2700 = vadd.f32 %v2671, %v2699
    %2701 = vmatmul.f32.gmra.mxu0 %v2291
    %v2702 = vpop.f32.mrf.mxu0
    %v2703 = vadd.f32 %v2674, %v2702
    %2704 = vmatmul.f32.gmra.mxu0 %v2294
    %v2705 = vpop.f32.mrf.mxu0
    %v2706 = vadd.f32 %v2677, %v2705
    %2707 = vmatmul.f32.gmra.mxu0 %v2297
    %v2708 = vpop.f32.mrf.mxu0
    %v2709 = vadd.f32 %v2680, %v2708
    %2710 = vdwg.mxu0
    %2711 = vmatpush.msra.mxu0 0.0
    %2712 = vmatpush.msra.mxu0 0.0
    %2713 = vmatpush.msra.mxu0 0.0
    %2714 = vmatpush.msra.mxu0 0.0
    %2715 = vmatpush.msra.mxu0 0.0
    %2716 = vmatpush.msra.mxu0 0.0
    %2717 = vmatpush.msra.mxu0 0.0
    %2718 = vmatpush.msra.mxu0 0.0
    %2719 = vmatpush.msra.mxu0 0.0
    %2720 = vmatpush.msra.mxu0 0.0
    %2721 = vmatpush.msra.mxu0 0.0
    %2722 = vmatpush.msra.mxu0 0.0
    %2723 = vmatpush.msra.mxu0 %v2441
    %2724 = vmatpush.msra.mxu0 %v2437
    %2725 = vmatpush.msra.mxu0 %v2433
    %2726 = vmatpush.msra.mxu0 %v2429
    %2727 = vmatmul.f32.gmra.mxu0 %v2468
    %v2728 = vpop.f32.mrf.mxu0
    %v2729 = vadd.f32 %v2700, %v2728
    %2730 = vmatmul.f32.gmra.mxu0 %v2471
    %v2731 = vpop.f32.mrf.mxu0
    %v2732 = vadd.f32 %v2703, %v2731
    %2733 = vmatmul.f32.gmra.mxu0 %v2474
    %v2734 = vpop.f32.mrf.mxu0
    %v2735 = vadd.f32 %v2706, %v2734
    %2736 = vmatmul.f32.gmra.mxu0 %v2477
    %v2737 = vpop.f32.mrf.mxu0
    %v2738 = vadd.f32 %v2709, %v2737
    %2739 = vdwg.mxu0
    %2740 = vmatpush.msra.mxu0 %v2362
    %2741 = vmatpush.msra.mxu0 %v2358
    %2742 = vmatpush.msra.mxu0 %v2354
    %2743 = vmatpush.msra.mxu0 %v2350
    %2744 = vmatpush.msra.mxu0 %v2346
    %2745 = vmatpush.msra.mxu0 %v2342
    %2746 = vmatpush.msra.mxu0 %v2338
    %2747 = vmatpush.msra.mxu0 %v2334
    %2748 = vmatpush.msra.mxu0 %v2330
    %2749 = vmatpush.msra.mxu0 %v2326
    %2750 = vmatpush.msra.mxu0 %v2322
    %2751 = vmatpush.msra.mxu0 %v2318
    %2752 = vmatpush.msra.mxu0 %v2314
    %2753 = vmatpush.msra.mxu0 %v2310
    %2754 = vmatpush.msra.mxu0 %v2306
    %2755 = vmatpush.msra.mxu0 %v2302
    %2756 = vmatmul.f32.gmra.mxu0 %v2287
    %v2757 = vpop.f32.mrf.mxu0
    %v2758 = vadd.f32 %v2450, %v2757
    %2759 = vmatmul.f32.gmra.mxu0 %v2290
    %v2760 = vpop.f32.mrf.mxu0
    %v2761 = vadd.f32 %v2455, %v2760
    %2762 = vmatmul.f32.gmra.mxu0 %v2293
    %v2763 = vpop.f32.mrf.mxu0
    %v2764 = vadd.f32 %v2460, %v2763
    %2765 = vmatmul.f32.gmra.mxu0 %v2296
    %v2766 = vpop.f32.mrf.mxu0
    %v2767 = vadd.f32 %v2465, %v2766
    %2768 = vdwg.mxu0
    %2769 = vmatpush.msra.mxu0 %v2426
    %2770 = vmatpush.msra.mxu0 %v2422
    %2771 = vmatpush.msra.mxu0 %v2418
    %2772 = vmatpush.msra.mxu0 %v2414
    %2773 = vmatpush.msra.mxu0 %v2410
    %2774 = vmatpush.msra.mxu0 %v2406
    %2775 = vmatpush.msra.mxu0 %v2402
    %2776 = vmatpush.msra.mxu0 %v2398
    %2777 = vmatpush.msra.mxu0 %v2394
    %2778 = vmatpush.msra.mxu0 %v2390
    %2779 = vmatpush.msra.mxu0 %v2386
    %2780 = vmatpush.msra.mxu0 %v2382
    %2781 = vmatpush.msra.mxu0 %v2378
    %2782 = vmatpush.msra.mxu0 %v2374
    %2783 = vmatpush.msra.mxu0 %v2370
    %2784 = vmatpush.msra.mxu0 %v2366
    %2785 = vmatmul.f32.gmra.mxu0 %v2288
    %v2786 = vpop.f32.mrf.mxu0
    %v2787 = vadd.f32 %v2758, %v2786
    %2788 = vmatmul.f32.gmra.mxu0 %v2291
    %v2789 = vpop.f32.mrf.mxu0
    %v2790 = vadd.f32 %v2761, %v2789
    %2791 = vmatmul.f32.gmra.mxu0 %v2294
    %v2792 = vpop.f32.mrf.mxu0
    %v2793 = vadd.f32 %v2764, %v2792
    %2794 = vmatmul.f32.gmra.mxu0 %v2297
    %v2795 = vpop.f32.mrf.mxu0
    %v2796 = vadd.f32 %v2767, %v2795
    %2797 = vdwg.mxu0
    %2798 = vmatpush.msra.mxu0 0.0
    %2799 = vmatpush.msra.mxu0 0.0
    %2800 = vmatpush.msra.mxu0 0.0
    %2801 = vmatpush.msra.mxu0 0.0
    %2802 = vmatpush.msra.mxu0 0.0
    %2803 = vmatpush.msra.mxu0 0.0
    %2804 = vmatpush.msra.mxu0 0.0
    %2805 = vmatpush.msra.mxu0 0.0
    %2806 = vmatpush.msra.mxu0 0.0
    %2807 = vmatpush.msra.mxu0 0.0
    %2808 = vmatpush.msra.mxu0 0.0
    %2809 = vmatpush.msra.mxu0 0.0
    %2810 = vmatpush.msra.mxu0 %v2442
    %2811 = vmatpush.msra.mxu0 %v2438
    %2812 = vmatpush.msra.mxu0 %v2434
    %2813 = vmatpush.msra.mxu0 %v2430
    %2814 = vmatmul.f32.gmra.mxu0 %v2468
    %v2815 = vpop.f32.mrf.mxu0
    %v2816 = vadd.f32 %v2787, %v2815
    %2817 = vmatmul.f32.gmra.mxu0 %v2471
    %v2818 = vpop.f32.mrf.mxu0
    %v2819 = vadd.f32 %v2790, %v2818
    %2820 = vmatmul.f32.gmra.mxu0 %v2474
    %v2821 = vpop.f32.mrf.mxu0
    %v2822 = vadd.f32 %v2793, %v2821
    %2823 = vmatmul.f32.gmra.mxu0 %v2477
    %v2824 = vpop.f32.mrf.mxu0
    %v2825 = vadd.f32 %v2796, %v2824
    %2826 = vdwg.mxu0
    %v2827 = vadd.f32 %v2555, %v120
    %v2828 = vadd.f32 %v2642, %v121
    %v2829 = vadd.f32 %v2729, %v122
    %v2830 = vadd.f32 %v2816, %v123
    %v2831 = vadd.f32 %v2558, %v124
    %v2832 = vadd.f32 %v2645, %v125
    %v2833 = vadd.f32 %v2732, %v126
    %v2834 = vadd.f32 %v2819, %v127
    %v2835 = vadd.f32 %v2561, %v128
    %v2836 = vadd.f32 %v2648, %v129
    %v2837 = vadd.f32 %v2735, %v130
    %v2838 = vadd.f32 %v2822, %v131
    %v2839 = vadd.f32 %v2564, %v132
    %v2840 = vadd.f32 %v2651, %v133
    %v2841 = vadd.f32 %v2738, %v134
    %v2842 = vadd.f32 %v2825, %v135
    %2843 = vrot.lane.b32.xlu0 %v2827, 17
    %v2844 = vpop.permute.xlu0 %2843
    %2845 = vrot.lane.b32.xlu0 %v2831, 17
    %v2846 = vpop.permute.xlu0 %2845
    %2847 = vrot.lane.b32.xlu0 %v2835, 17
    %v2848 = vpop.permute.xlu0 %2847
    %2849 = vrot.lane.b32.xlu0 %v2839, 17
    %v2850 = vpop.permute.xlu0 %2849
    %2851 = vrot.lane.b32.xlu0 %v2828, 17
    %v2852 = vpop.permute.xlu0 %2851
    %2853 = vrot.lane.b32.xlu0 %v2832, 17
    %v2854 = vpop.permute.xlu0 %2853
    %2855 = vrot.lane.b32.xlu0 %v2836, 17
    %v2856 = vpop.permute.xlu0 %2855
    %2857 = vrot.lane.b32.xlu0 %v2840, 17
    %v2858 = vpop.permute.xlu0 %2857
    %2859 = vrot.lane.b32.xlu0 %v2829, 17
    %v2860 = vpop.permute.xlu0 %2859
    %2861 = vrot.lane.b32.xlu0 %v2833, 17
    %v2862 = vpop.permute.xlu0 %2861
    %2863 = vrot.lane.b32.xlu0 %v2837, 17
    %v2864 = vpop.permute.xlu0 %2863
    %2865 = vrot.lane.b32.xlu0 %v2841, 17
    %v2866 = vpop.permute.xlu0 %2865
    %2867 = vrot.lane.b32.xlu0 %v2830, 17
    %v2868 = vpop.permute.xlu0 %2867
    %2869 = vrot.lane.b32.xlu0 %v2834, 17
    %v2870 = vpop.permute.xlu0 %2869
    %2871 = vrot.lane.b32.xlu0 %v2838, 17
    %v2872 = vpop.permute.xlu0 %2871
    %2873 = vrot.lane.b32.xlu0 %v2842, 17
    %v2874 = vpop.permute.xlu0 %2873
    %v2875 = vsel %vm170, %v2860, %v2868
    %v2876 = vsel %vm170, %v2862, %v2870
    %v2877 = vsel %vm170, %v2864, %v2872
    %v2878 = vsel %vm170, %v2866, %v2874
    %v2879 = vsel %vm170, %v2852, %v2860
    %v2880 = vsel %vm170, %v2854, %v2862
    %v2881 = vsel %vm170, %v2856, %v2864
    %v2882 = vsel %vm170, %v2858, %v2866
    %v2883 = vsel %vm170, %v2844, %v2852
    %v2884 = vsel %vm170, %v2846, %v2854
    %v2885 = vsel %vm170, %v2848, %v2856
    %v2886 = vsel %vm170, %v2850, %v2858
    %v2887 = vsel %vm170, %v2868, %v2844
    %v2888 = vsel %vm170, %v2870, %v2846
    %v2889 = vsel %vm170, %v2872, %v2848
    %v2890 = vsel %vm170, %v2874, %v2850
    %v2891 = vld [vmem:[#allocation3] sm:$0xff]
    %v2892 = vld [vmem:[#allocation3 + $0x8] sm:$0xff]
    %v2893 = vld [vmem:[#allocation3 + $0x10] sm:$0xff]
    %v2894 = vld [vmem:[#allocation3 + $0x18] sm:$0xff]
    %v2895 = vld [vmem:[#allocation3 + $0x20] sm:$0xff]
    %v2896 = vld [vmem:[#allocation3 + $0x28] sm:$0xff]
    %v2897 = vld [vmem:[#allocation3 + $0x30] sm:$0xff]
    %v2898 = vld [vmem:[#allocation3 + $0x38] sm:$0xff]
    %v2899 = vld [vmem:[#allocation3 + $0x40] sm:$0xff]
    %v2900 = vld [vmem:[#allocation3 + $0x48] sm:$0xff]
    %v2901 = vld [vmem:[#allocation3 + $0x50] sm:$0xff]
    %v2902 = vld [vmem:[#allocation3 + $0x58] sm:$0xff]
    %v2903 = vld [vmem:[#allocation3 + $0x60] sm:$0xff]
    %v2904 = vld [vmem:[#allocation3 + $0x68] sm:$0xff]
    %v2905 = vld [vmem:[#allocation3 + $0x70] sm:$0xff]
    %v2906 = vld [vmem:[#allocation3 + $0x78] sm:$0xff]
    %v2907 = vmul.f32 %v2887, %v2891
    %v2908 = vmul.f32 %v2883, %v2892
    %v2909 = vmul.f32 %v2879, %v2893
    %v2910 = vmul.f32 %v2875, %v2894
    %v2911 = vmul.f32 %v2888, %v2895
    %v2912 = vmul.f32 %v2884, %v2896
    %v2913 = vmul.f32 %v2880, %v2897
    %v2914 = vmul.f32 %v2876, %v2898
    %v2915 = vmul.f32 %v2889, %v2899
    %v2916 = vmul.f32 %v2885, %v2900
    %v2917 = vmul.f32 %v2881, %v2901
    %v2918 = vmul.f32 %v2877, %v2902
    %v2919 = vmul.f32 %v2890, %v2903
    %v2920 = vmul.f32 %v2886, %v2904
    %v2921 = vmul.f32 %v2882, %v2905
    %v2922 = vmul.f32 %v2878, %v2906
    %2923 = vst [vmem:[#allocation2] sm:$0xff] %v2907
    %2924 = vst [vmem:[#allocation2 + $0x8] sm:$0xff] %v2908
    %2925 = vst [vmem:[#allocation2 + $0x10] sm:$0xff] %v2909
    %2926 = vst [vmem:[#allocation2 + $0x18] sm:$0xff] %v2910
    %2927 = vst [vmem:[#allocation2 + $0x20] sm:$0xff] %v2911
    %2928 = vst [vmem:[#allocation2 + $0x28] sm:$0xff] %v2912
    %2929 = vst [vmem:[#allocation2 + $0x30] sm:$0xff] %v2913
    %2930 = vst [vmem:[#allocation2 + $0x38] sm:$0xff] %v2914
    %2931 = vst [vmem:[#allocation2 + $0x40] sm:$0xff] %v2915
    %2932 = vst [vmem:[#allocation2 + $0x48] sm:$0xff] %v2916
    %2933 = vst [vmem:[#allocation2 + $0x50] sm:$0xff] %v2917
    %2934 = vst [vmem:[#allocation2 + $0x58] sm:$0xff] %v2918
    %2935 = vst [vmem:[#allocation2 + $0x60] sm:$0xff] %v2919
    %2936 = vst [vmem:[#allocation2 + $0x68] sm:$0xff] %v2920
    %2937 = vst [vmem:[#allocation2 + $0x70] sm:$0xff] %v2921
    %2938 = vst [vmem:[#allocation2 + $0x78] sm:$0xff] %v2922
    %2939 = vrot.lane.b32.xlu0 %v2827, 16
    %v2940 = vpop.permute.xlu0 %2939
    %2941 = vrot.lane.b32.xlu0 %v2831, 16
    %v2942 = vpop.permute.xlu0 %2941
    %2943 = vrot.lane.b32.xlu0 %v2835, 16
    %v2944 = vpop.permute.xlu0 %2943
    %2945 = vrot.lane.b32.xlu0 %v2839, 16
    %v2946 = vpop.permute.xlu0 %2945
    %2947 = vrot.lane.b32.xlu0 %v2828, 16
    %v2948 = vpop.permute.xlu0 %2947
    %2949 = vrot.lane.b32.xlu0 %v2832, 16
    %v2950 = vpop.permute.xlu0 %2949
    %2951 = vrot.lane.b32.xlu0 %v2836, 16
    %v2952 = vpop.permute.xlu0 %2951
    %2953 = vrot.lane.b32.xlu0 %v2840, 16
    %v2954 = vpop.permute.xlu0 %2953
    %2955 = vrot.lane.b32.xlu0 %v2829, 16
    %v2956 = vpop.permute.xlu0 %2955
    %2957 = vrot.lane.b32.xlu0 %v2833, 16
    %v2958 = vpop.permute.xlu0 %2957
    %2959 = vrot.lane.b32.xlu0 %v2837, 16
    %v2960 = vpop.permute.xlu0 %2959
    %2961 = vrot.lane.b32.xlu0 %v2841, 16
    %v2962 = vpop.permute.xlu0 %2961
    %2963 = vrot.lane.b32.xlu0 %v2830, 16
    %v2964 = vpop.permute.xlu0 %2963
    %2965 = vrot.lane.b32.xlu0 %v2834, 16
    %v2966 = vpop.permute.xlu0 %2965
    %2967 = vrot.lane.b32.xlu0 %v2838, 16
    %v2968 = vpop.permute.xlu0 %2967
    %2969 = vrot.lane.b32.xlu0 %v2842, 16
    %v2970 = vpop.permute.xlu0 %2969
    %v2971 = vsel %vm267, %v2956, %v2964
    %v2972 = vsel %vm267, %v2958, %v2966
    %v2973 = vsel %vm267, %v2960, %v2968
    %v2974 = vsel %vm267, %v2962, %v2970
    %v2975 = vsel %vm267, %v2948, %v2956
    %v2976 = vsel %vm267, %v2950, %v2958
    %v2977 = vsel %vm267, %v2952, %v2960
    %v2978 = vsel %vm267, %v2954, %v2962
    %v2979 = vsel %vm267, %v2940, %v2948
    %v2980 = vsel %vm267, %v2942, %v2950
    %v2981 = vsel %vm267, %v2944, %v2952
    %v2982 = vsel %vm267, %v2946, %v2954
    %v2983 = vsel %vm267, %v2964, %v2940
    %v2984 = vsel %vm267, %v2966, %v2942
    %v2985 = vsel %vm267, %v2968, %v2944
    %v2986 = vsel %vm267, %v2970, %v2946
    %v2987 = vld [vmem:[#allocation3 + $0x80] sm:$0xff]
    %v2988 = vld [vmem:[#allocation3 + $0x88] sm:$0xff]
    %v2989 = vld [vmem:[#allocation3 + $0x90] sm:$0xff]
    %v2990 = vld [vmem:[#allocation3 + $0x98] sm:$0xff]
    %v2991 = vld [vmem:[#allocation3 + $0xa0] sm:$0xff]
    %v2992 = vld [vmem:[#allocation3 + $0xa8] sm:$0xff]
    %v2993 = vld [vmem:[#allocation3 + $0xb0] sm:$0xff]
    %v2994 = vld [vmem:[#allocation3 + $0xb8] sm:$0xff]
    %v2995 = vld [vmem:[#allocation3 + $0xc0] sm:$0xff]
    %v2996 = vld [vmem:[#allocation3 + $0xc8] sm:$0xff]
    %v2997 = vld [vmem:[#allocation3 + $0xd0] sm:$0xff]
    %v2998 = vld [vmem:[#allocation3 + $0xd8] sm:$0xff]
    %v2999 = vld [vmem:[#allocation3 + $0xe0] sm:$0xff]
    %v3000 = vld [vmem:[#allocation3 + $0xe8] sm:$0xff]
    %v3001 = vld [vmem:[#allocation3 + $0xf0] sm:$0xff]
    %v3002 = vld [vmem:[#allocation3 + $0xf8] sm:$0xff]
    %v3003 = vmul.f32 %v2983, %v2987
    %v3004 = vmul.f32 %v2979, %v2988
    %v3005 = vmul.f32 %v2975, %v2989
    %v3006 = vmul.f32 %v2971, %v2990
    %v3007 = vmul.f32 %v2984, %v2991
    %v3008 = vmul.f32 %v2980, %v2992
    %v3009 = vmul.f32 %v2976, %v2993
    %v3010 = vmul.f32 %v2972, %v2994
    %v3011 = vmul.f32 %v2985, %v2995
    %v3012 = vmul.f32 %v2981, %v2996
    %v3013 = vmul.f32 %v2977, %v2997
    %v3014 = vmul.f32 %v2973, %v2998
    %v3015 = vmul.f32 %v2986, %v2999
    %v3016 = vmul.f32 %v2982, %v3000
    %v3017 = vmul.f32 %v2978, %v3001
    %v3018 = vmul.f32 %v2974, %v3002
    %3019 = vst [vmem:[#allocation2 + $0x80] sm:$0xff] %v3003
    %3020 = vst [vmem:[#allocation2 + $0x88] sm:$0xff] %v3004
    %3021 = vst [vmem:[#allocation2 + $0x90] sm:$0xff] %v3005
    %3022 = vst [vmem:[#allocation2 + $0x98] sm:$0xff] %v3006
    %3023 = vst [vmem:[#allocation2 + $0xa0] sm:$0xff] %v3007
    %3024 = vst [vmem:[#allocation2 + $0xa8] sm:$0xff] %v3008
    %3025 = vst [vmem:[#allocation2 + $0xb0] sm:$0xff] %v3009
    %3026 = vst [vmem:[#allocation2 + $0xb8] sm:$0xff] %v3010
    %3027 = vst [vmem:[#allocation2 + $0xc0] sm:$0xff] %v3011
    %3028 = vst [vmem:[#allocation2 + $0xc8] sm:$0xff] %v3012
    %3029 = vst [vmem:[#allocation2 + $0xd0] sm:$0xff] %v3013
    %3030 = vst [vmem:[#allocation2 + $0xd8] sm:$0xff] %v3014
    %3031 = vst [vmem:[#allocation2 + $0xe0] sm:$0xff] %v3015
    %3032 = vst [vmem:[#allocation2 + $0xe8] sm:$0xff] %v3016
    %3033 = vst [vmem:[#allocation2 + $0xf0] sm:$0xff] %v3017
    %3034 = vst [vmem:[#allocation2 + $0xf8] sm:$0xff] %v3018
    %3035 = vrot.lane.b32.xlu0 %v2827, 15
    %v3036 = vpop.permute.xlu0 %3035
    %3037 = vrot.lane.b32.xlu0 %v2831, 15
    %v3038 = vpop.permute.xlu0 %3037
    %3039 = vrot.lane.b32.xlu0 %v2835, 15
    %v3040 = vpop.permute.xlu0 %3039
    %3041 = vrot.lane.b32.xlu0 %v2839, 15
    %v3042 = vpop.permute.xlu0 %3041
    %3043 = vrot.lane.b32.xlu0 %v2828, 15
    %v3044 = vpop.permute.xlu0 %3043
    %3045 = vrot.lane.b32.xlu0 %v2832, 15
    %v3046 = vpop.permute.xlu0 %3045
    %3047 = vrot.lane.b32.xlu0 %v2836, 15
    %v3048 = vpop.permute.xlu0 %3047
    %3049 = vrot.lane.b32.xlu0 %v2840, 15
    %v3050 = vpop.permute.xlu0 %3049
    %3051 = vrot.lane.b32.xlu0 %v2829, 15
    %v3052 = vpop.permute.xlu0 %3051
    %3053 = vrot.lane.b32.xlu0 %v2833, 15
    %v3054 = vpop.permute.xlu0 %3053
    %3055 = vrot.lane.b32.xlu0 %v2837, 15
    %v3056 = vpop.permute.xlu0 %3055
    %3057 = vrot.lane.b32.xlu0 %v2841, 15
    %v3058 = vpop.permute.xlu0 %3057
    %3059 = vrot.lane.b32.xlu0 %v2830, 15
    %v3060 = vpop.permute.xlu0 %3059
    %3061 = vrot.lane.b32.xlu0 %v2834, 15
    %v3062 = vpop.permute.xlu0 %3061
    %3063 = vrot.lane.b32.xlu0 %v2838, 15
    %v3064 = vpop.permute.xlu0 %3063
    %3065 = vrot.lane.b32.xlu0 %v2842, 15
    %v3066 = vpop.permute.xlu0 %3065
    %v3067 = vsel %vm364, %v3052, %v3060
    %v3068 = vsel %vm364, %v3054, %v3062
    %v3069 = vsel %vm364, %v3056, %v3064
    %v3070 = vsel %vm364, %v3058, %v3066
    %v3071 = vsel %vm364, %v3044, %v3052
    %v3072 = vsel %vm364, %v3046, %v3054
    %v3073 = vsel %vm364, %v3048, %v3056
    %v3074 = vsel %vm364, %v3050, %v3058
    %v3075 = vsel %vm364, %v3036, %v3044
    %v3076 = vsel %vm364, %v3038, %v3046
    %v3077 = vsel %vm364, %v3040, %v3048
    %v3078 = vsel %vm364, %v3042, %v3050
    %v3079 = vsel %vm364, %v3060, %v3036
    %v3080 = vsel %vm364, %v3062, %v3038
    %v3081 = vsel %vm364, %v3064, %v3040
    %v3082 = vsel %vm364, %v3066, %v3042
    %v3083 = vld [vmem:[#allocation3 + $0x100] sm:$0xff]
    %v3084 = vld [vmem:[#allocation3 + $0x108] sm:$0xff]
    %v3085 = vld [vmem:[#allocation3 + $0x110] sm:$0xff]
    %v3086 = vld [vmem:[#allocation3 + $0x118] sm:$0xff]
    %v3087 = vld [vmem:[#allocation3 + $0x120] sm:$0xff]
    %v3088 = vld [vmem:[#allocation3 + $0x128] sm:$0xff]
    %v3089 = vld [vmem:[#allocation3 + $0x130] sm:$0xff]
    %v3090 = vld [vmem:[#allocation3 + $0x138] sm:$0xff]
    %v3091 = vld [vmem:[#allocation3 + $0x140] sm:$0xff]
    %v3092 = vld [vmem:[#allocation3 + $0x148] sm:$0xff]
    %v3093 = vld [vmem:[#allocation3 + $0x150] sm:$0xff]
    %v3094 = vld [vmem:[#allocation3 + $0x158] sm:$0xff]
    %v3095 = vld [vmem:[#allocation3 + $0x160] sm:$0xff]
    %v3096 = vld [vmem:[#allocation3 + $0x168] sm:$0xff]
    %v3097 = vld [vmem:[#allocation3 + $0x170] sm:$0xff]
    %v3098 = vld [vmem:[#allocation3 + $0x178] sm:$0xff]
    %v3099 = vmul.f32 %v3079, %v3083
    %v3100 = vmul.f32 %v3075, %v3084
    %v3101 = vmul.f32 %v3071, %v3085
    %v3102 = vmul.f32 %v3067, %v3086
    %v3103 = vmul.f32 %v3080, %v3087
    %v3104 = vmul.f32 %v3076, %v3088
    %v3105 = vmul.f32 %v3072, %v3089
    %v3106 = vmul.f32 %v3068, %v3090
    %v3107 = vmul.f32 %v3081, %v3091
    %v3108 = vmul.f32 %v3077, %v3092
    %v3109 = vmul.f32 %v3073, %v3093
    %v3110 = vmul.f32 %v3069, %v3094
    %v3111 = vmul.f32 %v3082, %v3095
    %v3112 = vmul.f32 %v3078, %v3096
    %v3113 = vmul.f32 %v3074, %v3097
    %v3114 = vmul.f32 %v3070, %v3098
    %3115 = vst [vmem:[#allocation2 + $0x100] sm:$0xff] %v3099
    %3116 = vst [vmem:[#allocation2 + $0x108] sm:$0xff] %v3100
    %3117 = vst [vmem:[#allocation2 + $0x110] sm:$0xff] %v3101
    %3118 = vst [vmem:[#allocation2 + $0x118] sm:$0xff] %v3102
    %3119 = vst [vmem:[#allocation2 + $0x120] sm:$0xff] %v3103
    %3120 = vst [vmem:[#allocation2 + $0x128] sm:$0xff] %v3104
    %3121 = vst [vmem:[#allocation2 + $0x130] sm:$0xff] %v3105
    %3122 = vst [vmem:[#allocation2 + $0x138] sm:$0xff] %v3106
    %3123 = vst [vmem:[#allocation2 + $0x140] sm:$0xff] %v3107
    %3124 = vst [vmem:[#allocation2 + $0x148] sm:$0xff] %v3108
    %3125 = vst [vmem:[#allocation2 + $0x150] sm:$0xff] %v3109
    %3126 = vst [vmem:[#allocation2 + $0x158] sm:$0xff] %v3110
    %3127 = vst [vmem:[#allocation2 + $0x160] sm:$0xff] %v3111
    %3128 = vst [vmem:[#allocation2 + $0x168] sm:$0xff] %v3112
    %3129 = vst [vmem:[#allocation2 + $0x170] sm:$0xff] %v3113
    %3130 = vst [vmem:[#allocation2 + $0x178] sm:$0xff] %v3114
    %3131 = vrot.lane.b32.xlu0 %v2827, 1
    %v3132 = vpop.permute.xlu0 %3131
    %3133 = vrot.lane.b32.xlu0 %v2831, 1
    %v3134 = vpop.permute.xlu0 %3133
    %3135 = vrot.lane.b32.xlu0 %v2835, 1
    %v3136 = vpop.permute.xlu0 %3135
    %3137 = vrot.lane.b32.xlu0 %v2839, 1
    %v3138 = vpop.permute.xlu0 %3137
    %3139 = vrot.lane.b32.xlu0 %v2828, 1
    %v3140 = vpop.permute.xlu0 %3139
    %3141 = vrot.lane.b32.xlu0 %v2832, 1
    %v3142 = vpop.permute.xlu0 %3141
    %3143 = vrot.lane.b32.xlu0 %v2836, 1
    %v3144 = vpop.permute.xlu0 %3143
    %3145 = vrot.lane.b32.xlu0 %v2840, 1
    %v3146 = vpop.permute.xlu0 %3145
    %3147 = vrot.lane.b32.xlu0 %v2829, 1
    %v3148 = vpop.permute.xlu0 %3147
    %3149 = vrot.lane.b32.xlu0 %v2833, 1
    %v3150 = vpop.permute.xlu0 %3149
    %3151 = vrot.lane.b32.xlu0 %v2837, 1
    %v3152 = vpop.permute.xlu0 %3151
    %3153 = vrot.lane.b32.xlu0 %v2841, 1
    %v3154 = vpop.permute.xlu0 %3153
    %3155 = vrot.lane.b32.xlu0 %v2830, 1
    %v3156 = vpop.permute.xlu0 %3155
    %3157 = vrot.lane.b32.xlu0 %v2834, 1
    %v3158 = vpop.permute.xlu0 %3157
    %3159 = vrot.lane.b32.xlu0 %v2838, 1
    %v3160 = vpop.permute.xlu0 %3159
    %3161 = vrot.lane.b32.xlu0 %v2842, 1
    %v3162 = vpop.permute.xlu0 %3161
    %v3163 = vsel %vm461, %v3148, %v3156
    %v3164 = vsel %vm461, %v3150, %v3158
    %v3165 = vsel %vm461, %v3152, %v3160
    %v3166 = vsel %vm461, %v3154, %v3162
    %v3167 = vsel %vm461, %v3140, %v3148
    %v3168 = vsel %vm461, %v3142, %v3150
    %v3169 = vsel %vm461, %v3144, %v3152
    %v3170 = vsel %vm461, %v3146, %v3154
    %v3171 = vsel %vm461, %v3132, %v3140
    %v3172 = vsel %vm461, %v3134, %v3142
    %v3173 = vsel %vm461, %v3136, %v3144
    %v3174 = vsel %vm461, %v3138, %v3146
    %v3175 = vsel %vm461, %v3156, %v3132
    %v3176 = vsel %vm461, %v3158, %v3134
    %v3177 = vsel %vm461, %v3160, %v3136
    %v3178 = vsel %vm461, %v3162, %v3138
    %v3179 = vld [vmem:[#allocation3 + $0x180] sm:$0xff]
    %v3180 = vld [vmem:[#allocation3 + $0x188] sm:$0xff]
    %v3181 = vld [vmem:[#allocation3 + $0x190] sm:$0xff]
    %v3182 = vld [vmem:[#allocation3 + $0x198] sm:$0xff]
    %v3183 = vld [vmem:[#allocation3 + $0x1a0] sm:$0xff]
    %v3184 = vld [vmem:[#allocation3 + $0x1a8] sm:$0xff]
    %v3185 = vld [vmem:[#allocation3 + $0x1b0] sm:$0xff]
    %v3186 = vld [vmem:[#allocation3 + $0x1b8] sm:$0xff]
    %v3187 = vld [vmem:[#allocation3 + $0x1c0] sm:$0xff]
    %v3188 = vld [vmem:[#allocation3 + $0x1c8] sm:$0xff]
    %v3189 = vld [vmem:[#allocation3 + $0x1d0] sm:$0xff]
    %v3190 = vld [vmem:[#allocation3 + $0x1d8] sm:$0xff]
    %v3191 = vld [vmem:[#allocation3 + $0x1e0] sm:$0xff]
    %v3192 = vld [vmem:[#allocation3 + $0x1e8] sm:$0xff]
    %v3193 = vld [vmem:[#allocation3 + $0x1f0] sm:$0xff]
    %v3194 = vld [vmem:[#allocation3 + $0x1f8] sm:$0xff]
    %v3195 = vmul.f32 %v3175, %v3179
    %v3196 = vmul.f32 %v3171, %v3180
    %v3197 = vmul.f32 %v3167, %v3181
    %v3198 = vmul.f32 %v3163, %v3182
    %v3199 = vmul.f32 %v3176, %v3183
    %v3200 = vmul.f32 %v3172, %v3184
    %v3201 = vmul.f32 %v3168, %v3185
    %v3202 = vmul.f32 %v3164, %v3186
    %v3203 = vmul.f32 %v3177, %v3187
    %v3204 = vmul.f32 %v3173, %v3188
    %v3205 = vmul.f32 %v3169, %v3189
    %v3206 = vmul.f32 %v3165, %v3190
    %v3207 = vmul.f32 %v3178, %v3191
    %v3208 = vmul.f32 %v3174, %v3192
    %v3209 = vmul.f32 %v3170, %v3193
    %v3210 = vmul.f32 %v3166, %v3194
    %3211 = vst [vmem:[#allocation2 + $0x180] sm:$0xff] %v3195
    %3212 = vst [vmem:[#allocation2 + $0x188] sm:$0xff] %v3196
    %3213 = vst [vmem:[#allocation2 + $0x190] sm:$0xff] %v3197
    %3214 = vst [vmem:[#allocation2 + $0x198] sm:$0xff] %v3198
    %3215 = vst [vmem:[#allocation2 + $0x1a0] sm:$0xff] %v3199
    %3216 = vst [vmem:[#allocation2 + $0x1a8] sm:$0xff] %v3200
    %3217 = vst [vmem:[#allocation2 + $0x1b0] sm:$0xff] %v3201
    %3218 = vst [vmem:[#allocation2 + $0x1b8] sm:$0xff] %v3202
    %3219 = vst [vmem:[#allocation2 + $0x1c0] sm:$0xff] %v3203
    %3220 = vst [vmem:[#allocation2 + $0x1c8] sm:$0xff] %v3204
    %3221 = vst [vmem:[#allocation2 + $0x1d0] sm:$0xff] %v3205
    %3222 = vst [vmem:[#allocation2 + $0x1d8] sm:$0xff] %v3206
    %3223 = vst [vmem:[#allocation2 + $0x1e0] sm:$0xff] %v3207
    %3224 = vst [vmem:[#allocation2 + $0x1e8] sm:$0xff] %v3208
    %3225 = vst [vmem:[#allocation2 + $0x1f0] sm:$0xff] %v3209
    %3226 = vst [vmem:[#allocation2 + $0x1f8] sm:$0xff] %v3210
    %3227 = vst [vmem:[#allocation2 + $0x200] sm:$0xff] %v2827
    %3228 = vst [vmem:[#allocation2 + $0x208] sm:$0xff] %v2828
    %3229 = vst [vmem:[#allocation2 + $0x210] sm:$0xff] %v2829
    %3230 = vst [vmem:[#allocation2 + $0x218] sm:$0xff] %v2830
    %3231 = vst [vmem:[#allocation2 + $0x220] sm:$0xff] %v2831
    %3232 = vst [vmem:[#allocation2 + $0x228] sm:$0xff] %v2832
    %3233 = vst [vmem:[#allocation2 + $0x230] sm:$0xff] %v2833
    %3234 = vst [vmem:[#allocation2 + $0x238] sm:$0xff] %v2834
    %3235 = vst [vmem:[#allocation2 + $0x240] sm:$0xff] %v2835
    %3236 = vst [vmem:[#allocation2 + $0x248] sm:$0xff] %v2836
    %3237 = vst [vmem:[#allocation2 + $0x250] sm:$0xff] %v2837
    %3238 = vst [vmem:[#allocation2 + $0x258] sm:$0xff] %v2838
    %3239 = vst [vmem:[#allocation2 + $0x260] sm:$0xff] %v2839
    %3240 = vst [vmem:[#allocation2 + $0x268] sm:$0xff] %v2840
    %3241 = vst [vmem:[#allocation2 + $0x270] sm:$0xff] %v2841
    %3242 = vst [vmem:[#allocation2 + $0x278] sm:$0xff] %v2842
    %3243 = vrot.lane.b32.xlu0 %v2827, 127
    %v3244 = vpop.permute.xlu0 %3243
    %3245 = vrot.lane.b32.xlu0 %v2831, 127
    %v3246 = vpop.permute.xlu0 %3245
    %3247 = vrot.lane.b32.xlu0 %v2835, 127
    %v3248 = vpop.permute.xlu0 %3247
    %3249 = vrot.lane.b32.xlu0 %v2839, 127
    %v3250 = vpop.permute.xlu0 %3249
    %3251 = vrot.lane.b32.xlu0 %v2828, 127
    %v3252 = vpop.permute.xlu0 %3251
    %3253 = vrot.lane.b32.xlu0 %v2832, 127
    %v3254 = vpop.permute.xlu0 %3253
    %3255 = vrot.lane.b32.xlu0 %v2836, 127
    %v3256 = vpop.permute.xlu0 %3255
    %3257 = vrot.lane.b32.xlu0 %v2840, 127
    %v3258 = vpop.permute.xlu0 %3257
    %3259 = vrot.lane.b32.xlu0 %v2829, 127
    %v3260 = vpop.permute.xlu0 %3259
    %3261 = vrot.lane.b32.xlu0 %v2833, 127
    %v3262 = vpop.permute.xlu0 %3261
    %3263 = vrot.lane.b32.xlu0 %v2837, 127
    %v3264 = vpop.permute.xlu0 %3263
    %3265 = vrot.lane.b32.xlu0 %v2841, 127
    %v3266 = vpop.permute.xlu0 %3265
    %3267 = vrot.lane.b32.xlu0 %v2830, 127
    %v3268 = vpop.permute.xlu0 %3267
    %3269 = vrot.lane.b32.xlu0 %v2834, 127
    %v3270 = vpop.permute.xlu0 %3269
    %3271 = vrot.lane.b32.xlu0 %v2838, 127
    %v3272 = vpop.permute.xlu0 %3271
    %3273 = vrot.lane.b32.xlu0 %v2842, 127
    %v3274 = vpop.permute.xlu0 %3273
    %v3275 = vsel %vm574, %v3260, %v3268
    %v3276 = vsel %vm574, %v3262, %v3270
    %v3277 = vsel %vm574, %v3264, %v3272
    %v3278 = vsel %vm574, %v3266, %v3274
    %v3279 = vsel %vm574, %v3252, %v3260
    %v3280 = vsel %vm574, %v3254, %v3262
    %v3281 = vsel %vm574, %v3256, %v3264
    %v3282 = vsel %vm574, %v3258, %v3266
    %v3283 = vsel %vm574, %v3244, %v3252
    %v3284 = vsel %vm574, %v3246, %v3254
    %v3285 = vsel %vm574, %v3248, %v3256
    %v3286 = vsel %vm574, %v3250, %v3258
    %v3287 = vsel %vm574, %v3268, %v3244
    %v3288 = vsel %vm574, %v3270, %v3246
    %v3289 = vsel %vm574, %v3272, %v3248
    %v3290 = vsel %vm574, %v3274, %v3250
    %v3291 = vld [vmem:[#allocation3 + $0x200] sm:$0xff]
    %v3292 = vld [vmem:[#allocation3 + $0x208] sm:$0xff]
    %v3293 = vld [vmem:[#allocation3 + $0x210] sm:$0xff]
    %v3294 = vld [vmem:[#allocation3 + $0x218] sm:$0xff]
    %v3295 = vld [vmem:[#allocation3 + $0x220] sm:$0xff]
    %v3296 = vld [vmem:[#allocation3 + $0x228] sm:$0xff]
    %v3297 = vld [vmem:[#allocation3 + $0x230] sm:$0xff]
    %v3298 = vld [vmem:[#allocation3 + $0x238] sm:$0xff]
    %v3299 = vld [vmem:[#allocation3 + $0x240] sm:$0xff]
    %v3300 = vld [vmem:[#allocation3 + $0x248] sm:$0xff]
    %v3301 = vld [vmem:[#allocation3 + $0x250] sm:$0xff]
    %v3302 = vld [vmem:[#allocation3 + $0x258] sm:$0xff]
    %v3303 = vld [vmem:[#allocation3 + $0x260] sm:$0xff]
    %v3304 = vld [vmem:[#allocation3 + $0x268] sm:$0xff]
    %v3305 = vld [vmem:[#allocation3 + $0x270] sm:$0xff]
    %v3306 = vld [vmem:[#allocation3 + $0x278] sm:$0xff]
    %v3307 = vmul.f32 %v3283, %v3291
    %v3308 = vmul.f32 %v3279, %v3292
    %v3309 = vmul.f32 %v3275, %v3293
    %v3310 = vmul.f32 %v3287, %v3294
    %v3311 = vmul.f32 %v3284, %v3295
    %v3312 = vmul.f32 %v3280, %v3296
    %v3313 = vmul.f32 %v3276, %v3297
    %v3314 = vmul.f32 %v3288, %v3298
    %v3315 = vmul.f32 %v3285, %v3299
    %v3316 = vmul.f32 %v3281, %v3300
    %v3317 = vmul.f32 %v3277, %v3301
    %v3318 = vmul.f32 %v3289, %v3302
    %v3319 = vmul.f32 %v3286, %v3303
    %v3320 = vmul.f32 %v3282, %v3304
    %v3321 = vmul.f32 %v3278, %v3305
    %v3322 = vmul.f32 %v3290, %v3306
    %3323 = vst [vmem:[#allocation2 + $0x280] sm:$0xff] %v3307
    %3324 = vst [vmem:[#allocation2 + $0x288] sm:$0xff] %v3308
    %3325 = vst [vmem:[#allocation2 + $0x290] sm:$0xff] %v3309
    %3326 = vst [vmem:[#allocation2 + $0x298] sm:$0xff] %v3310
    %3327 = vst [vmem:[#allocation2 + $0x2a0] sm:$0xff] %v3311
    %3328 = vst [vmem:[#allocation2 + $0x2a8] sm:$0xff] %v3312
    %3329 = vst [vmem:[#allocation2 + $0x2b0] sm:$0xff] %v3313
    %3330 = vst [vmem:[#allocation2 + $0x2b8] sm:$0xff] %v3314
    %3331 = vst [vmem:[#allocation2 + $0x2c0] sm:$0xff] %v3315
    %3332 = vst [vmem:[#allocation2 + $0x2c8] sm:$0xff] %v3316
    %3333 = vst [vmem:[#allocation2 + $0x2d0] sm:$0xff] %v3317
    %3334 = vst [vmem:[#allocation2 + $0x2d8] sm:$0xff] %v3318
    %3335 = vst [vmem:[#allocation2 + $0x2e0] sm:$0xff] %v3319
    %3336 = vst [vmem:[#allocation2 + $0x2e8] sm:$0xff] %v3320
    %3337 = vst [vmem:[#allocation2 + $0x2f0] sm:$0xff] %v3321
    %3338 = vst [vmem:[#allocation2 + $0x2f8] sm:$0xff] %v3322
    %3339 = vrot.lane.b32.xlu0 %v2827, 113
    %v3340 = vpop.permute.xlu0 %3339
    %3341 = vrot.lane.b32.xlu0 %v2831, 113
    %v3342 = vpop.permute.xlu0 %3341
    %3343 = vrot.lane.b32.xlu0 %v2835, 113
    %v3344 = vpop.permute.xlu0 %3343
    %3345 = vrot.lane.b32.xlu0 %v2839, 113
    %v3346 = vpop.permute.xlu0 %3345
    %3347 = vrot.lane.b32.xlu0 %v2828, 113
    %v3348 = vpop.permute.xlu0 %3347
    %3349 = vrot.lane.b32.xlu0 %v2832, 113
    %v3350 = vpop.permute.xlu0 %3349
    %3351 = vrot.lane.b32.xlu0 %v2836, 113
    %v3352 = vpop.permute.xlu0 %3351
    %3353 = vrot.lane.b32.xlu0 %v2840, 113
    %v3354 = vpop.permute.xlu0 %3353
    %3355 = vrot.lane.b32.xlu0 %v2829, 113
    %v3356 = vpop.permute.xlu0 %3355
    %3357 = vrot.lane.b32.xlu0 %v2833, 113
    %v3358 = vpop.permute.xlu0 %3357
    %3359 = vrot.lane.b32.xlu0 %v2837, 113
    %v3360 = vpop.permute.xlu0 %3359
    %3361 = vrot.lane.b32.xlu0 %v2841, 113
    %v3362 = vpop.permute.xlu0 %3361
    %3363 = vrot.lane.b32.xlu0 %v2830, 113
    %v3364 = vpop.permute.xlu0 %3363
    %3365 = vrot.lane.b32.xlu0 %v2834, 113
    %v3366 = vpop.permute.xlu0 %3365
    %3367 = vrot.lane.b32.xlu0 %v2838, 113
    %v3368 = vpop.permute.xlu0 %3367
    %3369 = vrot.lane.b32.xlu0 %v2842, 113
    %v3370 = vpop.permute.xlu0 %3369
    %v3371 = vsel %vm671, %v3356, %v3364
    %v3372 = vsel %vm671, %v3358, %v3366
    %v3373 = vsel %vm671, %v3360, %v3368
    %v3374 = vsel %vm671, %v3362, %v3370
    %v3375 = vsel %vm671, %v3348, %v3356
    %v3376 = vsel %vm671, %v3350, %v3358
    %v3377 = vsel %vm671, %v3352, %v3360
    %v3378 = vsel %vm671, %v3354, %v3362
    %v3379 = vsel %vm671, %v3340, %v3348
    %v3380 = vsel %vm671, %v3342, %v3350
    %v3381 = vsel %vm671, %v3344, %v3352
    %v3382 = vsel %vm671, %v3346, %v3354
    %v3383 = vsel %vm671, %v3364, %v3340
    %v3384 = vsel %vm671, %v3366, %v3342
    %v3385 = vsel %vm671, %v3368, %v3344
    %v3386 = vsel %vm671, %v3370, %v3346
    %v3387 = vld [vmem:[#allocation3 + $0x280] sm:$0xff]
    %v3388 = vld [vmem:[#allocation3 + $0x288] sm:$0xff]
    %v3389 = vld [vmem:[#allocation3 + $0x290] sm:$0xff]
    %v3390 = vld [vmem:[#allocation3 + $0x298] sm:$0xff]
    %v3391 = vld [vmem:[#allocation3 + $0x2a0] sm:$0xff]
    %v3392 = vld [vmem:[#allocation3 + $0x2a8] sm:$0xff]
    %v3393 = vld [vmem:[#allocation3 + $0x2b0] sm:$0xff]
    %v3394 = vld [vmem:[#allocation3 + $0x2b8] sm:$0xff]
    %v3395 = vld [vmem:[#allocation3 + $0x2c0] sm:$0xff]
    %v3396 = vld [vmem:[#allocation3 + $0x2c8] sm:$0xff]
    %v3397 = vld [vmem:[#allocation3 + $0x2d0] sm:$0xff]
    %v3398 = vld [vmem:[#allocation3 + $0x2d8] sm:$0xff]
    %v3399 = vld [vmem:[#allocation3 + $0x2e0] sm:$0xff]
    %v3400 = vld [vmem:[#allocation3 + $0x2e8] sm:$0xff]
    %v3401 = vld [vmem:[#allocation3 + $0x2f0] sm:$0xff]
    %v3402 = vld [vmem:[#allocation3 + $0x2f8] sm:$0xff]
    %v3403 = vmul.f32 %v3379, %v3387
    %v3404 = vmul.f32 %v3375, %v3388
    %v3405 = vmul.f32 %v3371, %v3389
    %v3406 = vmul.f32 %v3383, %v3390
    %v3407 = vmul.f32 %v3380, %v3391
    %v3408 = vmul.f32 %v3376, %v3392
    %v3409 = vmul.f32 %v3372, %v3393
    %v3410 = vmul.f32 %v3384, %v3394
    %v3411 = vmul.f32 %v3381, %v3395
    %v3412 = vmul.f32 %v3377, %v3396
    %v3413 = vmul.f32 %v3373, %v3397
    %v3414 = vmul.f32 %v3385, %v3398
    %v3415 = vmul.f32 %v3382, %v3399
    %v3416 = vmul.f32 %v3378, %v3400
    %v3417 = vmul.f32 %v3374, %v3401
    %v3418 = vmul.f32 %v3386, %v3402
    %3419 = vst [vmem:[#allocation2 + $0x300] sm:$0xff] %v3403
    %3420 = vst [vmem:[#allocation2 + $0x308] sm:$0xff] %v3404
    %3421 = vst [vmem:[#allocation2 + $0x310] sm:$0xff] %v3405
    %3422 = vst [vmem:[#allocation2 + $0x318] sm:$0xff] %v3406
    %3423 = vst [vmem:[#allocation2 + $0x320] sm:$0xff] %v3407
    %3424 = vst [vmem:[#allocation2 + $0x328] sm:$0xff] %v3408
    %3425 = vst [vmem:[#allocation2 + $0x330] sm:$0xff] %v3409
    %3426 = vst [vmem:[#allocation2 + $0x338] sm:$0xff] %v3410
    %3427 = vst [vmem:[#allocation2 + $0x340] sm:$0xff] %v3411
    %3428 = vst [vmem:[#allocation2 + $0x348] sm:$0xff] %v3412
    %3429 = vst [vmem:[#allocation2 + $0x350] sm:$0xff] %v3413
    %3430 = vst [vmem:[#allocation2 + $0x358] sm:$0xff] %v3414
    %3431 = vst [vmem:[#allocation2 + $0x360] sm:$0xff] %v3415
    %3432 = vst [vmem:[#allocation2 + $0x368] sm:$0xff] %v3416
    %3433 = vst [vmem:[#allocation2 + $0x370] sm:$0xff] %v3417
    %3434 = vst [vmem:[#allocation2 + $0x378] sm:$0xff] %v3418
    %3435 = vrot.lane.b32.xlu0 %v2827, 112
    %v3436 = vpop.permute.xlu0 %3435
    %3437 = vrot.lane.b32.xlu0 %v2831, 112
    %v3438 = vpop.permute.xlu0 %3437
    %3439 = vrot.lane.b32.xlu0 %v2835, 112
    %v3440 = vpop.permute.xlu0 %3439
    %3441 = vrot.lane.b32.xlu0 %v2839, 112
    %v3442 = vpop.permute.xlu0 %3441
    %3443 = vrot.lane.b32.xlu0 %v2828, 112
    %v3444 = vpop.permute.xlu0 %3443
    %3445 = vrot.lane.b32.xlu0 %v2832, 112
    %v3446 = vpop.permute.xlu0 %3445
    %3447 = vrot.lane.b32.xlu0 %v2836, 112
    %v3448 = vpop.permute.xlu0 %3447
    %3449 = vrot.lane.b32.xlu0 %v2840, 112
    %v3450 = vpop.permute.xlu0 %3449
    %3451 = vrot.lane.b32.xlu0 %v2829, 112
    %v3452 = vpop.permute.xlu0 %3451
    %3453 = vrot.lane.b32.xlu0 %v2833, 112
    %v3454 = vpop.permute.xlu0 %3453
    %3455 = vrot.lane.b32.xlu0 %v2837, 112
    %v3456 = vpop.permute.xlu0 %3455
    %3457 = vrot.lane.b32.xlu0 %v2841, 112
    %v3458 = vpop.permute.xlu0 %3457
    %3459 = vrot.lane.b32.xlu0 %v2830, 112
    %v3460 = vpop.permute.xlu0 %3459
    %3461 = vrot.lane.b32.xlu0 %v2834, 112
    %v3462 = vpop.permute.xlu0 %3461
    %3463 = vrot.lane.b32.xlu0 %v2838, 112
    %v3464 = vpop.permute.xlu0 %3463
    %3465 = vrot.lane.b32.xlu0 %v2842, 112
    %v3466 = vpop.permute.xlu0 %3465
    %v3467 = vsel %vm768, %v3452, %v3460
    %v3468 = vsel %vm768, %v3454, %v3462
    %v3469 = vsel %vm768, %v3456, %v3464
    %v3470 = vsel %vm768, %v3458, %v3466
    %v3471 = vsel %vm768, %v3444, %v3452
    %v3472 = vsel %vm768, %v3446, %v3454
    %v3473 = vsel %vm768, %v3448, %v3456
    %v3474 = vsel %vm768, %v3450, %v3458
    %v3475 = vsel %vm768, %v3436, %v3444
    %v3476 = vsel %vm768, %v3438, %v3446
    %v3477 = vsel %vm768, %v3440, %v3448
    %v3478 = vsel %vm768, %v3442, %v3450
    %v3479 = vsel %vm768, %v3460, %v3436
    %v3480 = vsel %vm768, %v3462, %v3438
    %v3481 = vsel %vm768, %v3464, %v3440
    %v3482 = vsel %vm768, %v3466, %v3442
    %v3483 = vld [vmem:[#allocation3 + $0x300] sm:$0xff]
    %v3484 = vld [vmem:[#allocation3 + $0x308] sm:$0xff]
    %v3485 = vld [vmem:[#allocation3 + $0x310] sm:$0xff]
    %v3486 = vld [vmem:[#allocation3 + $0x318] sm:$0xff]
    %v3487 = vld [vmem:[#allocation3 + $0x320] sm:$0xff]
    %v3488 = vld [vmem:[#allocation3 + $0x328] sm:$0xff]
    %v3489 = vld [vmem:[#allocation3 + $0x330] sm:$0xff]
    %v3490 = vld [vmem:[#allocation3 + $0x338] sm:$0xff]
    %v3491 = vld [vmem:[#allocation3 + $0x340] sm:$0xff]
    %v3492 = vld [vmem:[#allocation3 + $0x348] sm:$0xff]
    %v3493 = vld [vmem:[#allocation3 + $0x350] sm:$0xff]
    %v3494 = vld [vmem:[#allocation3 + $0x358] sm:$0xff]
    %v3495 = vld [vmem:[#allocation3 + $0x360] sm:$0xff]
    %v3496 = vld [vmem:[#allocation3 + $0x368] sm:$0xff]
    %v3497 = vld [vmem:[#allocation3 + $0x370] sm:$0xff]
    %v3498 = vld [vmem:[#allocation3 + $0x378] sm:$0xff]
    %v3499 = vmul.f32 %v3475, %v3483
    %v3500 = vmul.f32 %v3471, %v3484
    %v3501 = vmul.f32 %v3467, %v3485
    %v3502 = vmul.f32 %v3479, %v3486
    %v3503 = vmul.f32 %v3476, %v3487
    %v3504 = vmul.f32 %v3472, %v3488
    %v3505 = vmul.f32 %v3468, %v3489
    %v3506 = vmul.f32 %v3480, %v3490
    %v3507 = vmul.f32 %v3477, %v3491
    %v3508 = vmul.f32 %v3473, %v3492
    %v3509 = vmul.f32 %v3469, %v3493
    %v3510 = vmul.f32 %v3481, %v3494
    %v3511 = vmul.f32 %v3478, %v3495
    %v3512 = vmul.f32 %v3474, %v3496
    %v3513 = vmul.f32 %v3470, %v3497
    %v3514 = vmul.f32 %v3482, %v3498
    %3515 = vst [vmem:[#allocation2 + $0x380] sm:$0xff] %v3499
    %3516 = vst [vmem:[#allocation2 + $0x388] sm:$0xff] %v3500
    %3517 = vst [vmem:[#allocation2 + $0x390] sm:$0xff] %v3501
    %3518 = vst [vmem:[#allocation2 + $0x398] sm:$0xff] %v3502
    %3519 = vst [vmem:[#allocation2 + $0x3a0] sm:$0xff] %v3503
    %3520 = vst [vmem:[#allocation2 + $0x3a8] sm:$0xff] %v3504
    %3521 = vst [vmem:[#allocation2 + $0x3b0] sm:$0xff] %v3505
    %3522 = vst [vmem:[#allocation2 + $0x3b8] sm:$0xff] %v3506
    %3523 = vst [vmem:[#allocation2 + $0x3c0] sm:$0xff] %v3507
    %3524 = vst [vmem:[#allocation2 + $0x3c8] sm:$0xff] %v3508
    %3525 = vst [vmem:[#allocation2 + $0x3d0] sm:$0xff] %v3509
    %3526 = vst [vmem:[#allocation2 + $0x3d8] sm:$0xff] %v3510
    %3527 = vst [vmem:[#allocation2 + $0x3e0] sm:$0xff] %v3511
    %3528 = vst [vmem:[#allocation2 + $0x3e8] sm:$0xff] %v3512
    %3529 = vst [vmem:[#allocation2 + $0x3f0] sm:$0xff] %v3513
    %3530 = vst [vmem:[#allocation2 + $0x3f8] sm:$0xff] %v3514
    %3531 = vrot.lane.b32.xlu0 %v2827, 111
    %v3532 = vpop.permute.xlu0 %3531
    %3533 = vrot.lane.b32.xlu0 %v2831, 111
    %v3534 = vpop.permute.xlu0 %3533
    %3535 = vrot.lane.b32.xlu0 %v2835, 111
    %v3536 = vpop.permute.xlu0 %3535
    %3537 = vrot.lane.b32.xlu0 %v2839, 111
    %v3538 = vpop.permute.xlu0 %3537
    %3539 = vrot.lane.b32.xlu0 %v2828, 111
    %v3540 = vpop.permute.xlu0 %3539
    %3541 = vrot.lane.b32.xlu0 %v2832, 111
    %v3542 = vpop.permute.xlu0 %3541
    %3543 = vrot.lane.b32.xlu0 %v2836, 111
    %v3544 = vpop.permute.xlu0 %3543
    %3545 = vrot.lane.b32.xlu0 %v2840, 111
    %v3546 = vpop.permute.xlu0 %3545
    %3547 = vrot.lane.b32.xlu0 %v2829, 111
    %v3548 = vpop.permute.xlu0 %3547
    %3549 = vrot.lane.b32.xlu0 %v2833, 111
    %v3550 = vpop.permute.xlu0 %3549
    %3551 = vrot.lane.b32.xlu0 %v2837, 111
    %v3552 = vpop.permute.xlu0 %3551
    %3553 = vrot.lane.b32.xlu0 %v2841, 111
    %v3554 = vpop.permute.xlu0 %3553
    %3555 = vrot.lane.b32.xlu0 %v2830, 111
    %v3556 = vpop.permute.xlu0 %3555
    %3557 = vrot.lane.b32.xlu0 %v2834, 111
    %v3558 = vpop.permute.xlu0 %3557
    %3559 = vrot.lane.b32.xlu0 %v2838, 111
    %v3560 = vpop.permute.xlu0 %3559
    %3561 = vrot.lane.b32.xlu0 %v2842, 111
    %v3562 = vpop.permute.xlu0 %3561
    %v3563 = vsel %vm865, %v3548, %v3556
    %v3564 = vsel %vm865, %v3550, %v3558
    %v3565 = vsel %vm865, %v3552, %v3560
    %v3566 = vsel %vm865, %v3554, %v3562
    %v3567 = vsel %vm865, %v3540, %v3548
    %v3568 = vsel %vm865, %v3542, %v3550
    %v3569 = vsel %vm865, %v3544, %v3552
    %v3570 = vsel %vm865, %v3546, %v3554
    %v3571 = vsel %vm865, %v3532, %v3540
    %v3572 = vsel %vm865, %v3534, %v3542
    %v3573 = vsel %vm865, %v3536, %v3544
    %v3574 = vsel %vm865, %v3538, %v3546
    %v3575 = vsel %vm865, %v3556, %v3532
    %v3576 = vsel %vm865, %v3558, %v3534
    %v3577 = vsel %vm865, %v3560, %v3536
    %v3578 = vsel %vm865, %v3562, %v3538
    %v3579 = vld [vmem:[#allocation3 + $0x380] sm:$0xff]
    %v3580 = vld [vmem:[#allocation3 + $0x388] sm:$0xff]
    %v3581 = vld [vmem:[#allocation3 + $0x390] sm:$0xff]
    %v3582 = vld [vmem:[#allocation3 + $0x398] sm:$0xff]
    %v3583 = vld [vmem:[#allocation3 + $0x3a0] sm:$0xff]
    %v3584 = vld [vmem:[#allocation3 + $0x3a8] sm:$0xff]
    %v3585 = vld [vmem:[#allocation3 + $0x3b0] sm:$0xff]
    %v3586 = vld [vmem:[#allocation3 + $0x3b8] sm:$0xff]
    %v3587 = vld [vmem:[#allocation3 + $0x3c0] sm:$0xff]
    %v3588 = vld [vmem:[#allocation3 + $0x3c8] sm:$0xff]
    %v3589 = vld [vmem:[#allocation3 + $0x3d0] sm:$0xff]
    %v3590 = vld [vmem:[#allocation3 + $0x3d8] sm:$0xff]
    %v3591 = vld [vmem:[#allocation3 + $0x3e0] sm:$0xff]
    %v3592 = vld [vmem:[#allocation3 + $0x3e8] sm:$0xff]
    %v3593 = vld [vmem:[#allocation3 + $0x3f0] sm:$0xff]
    %v3594 = vld [vmem:[#allocation3 + $0x3f8] sm:$0xff]
    %v3595 = vmul.f32 %v3571, %v3579
    %v3596 = vmul.f32 %v3567, %v3580
    %v3597 = vmul.f32 %v3563, %v3581
    %v3598 = vmul.f32 %v3575, %v3582
    %v3599 = vmul.f32 %v3572, %v3583
    %v3600 = vmul.f32 %v3568, %v3584
    %v3601 = vmul.f32 %v3564, %v3585
    %v3602 = vmul.f32 %v3576, %v3586
    %v3603 = vmul.f32 %v3573, %v3587
    %v3604 = vmul.f32 %v3569, %v3588
    %v3605 = vmul.f32 %v3565, %v3589
    %v3606 = vmul.f32 %v3577, %v3590
    %v3607 = vmul.f32 %v3574, %v3591
    %v3608 = vmul.f32 %v3570, %v3592
    %v3609 = vmul.f32 %v3566, %v3593
    %v3610 = vmul.f32 %v3578, %v3594
    %3611 = vst [vmem:[#allocation2 + $0x400] sm:$0xff] %v3595
    %3612 = vst [vmem:[#allocation2 + $0x408] sm:$0xff] %v3596
    %3613 = vst [vmem:[#allocation2 + $0x410] sm:$0xff] %v3597
    %3614 = vst [vmem:[#allocation2 + $0x418] sm:$0xff] %v3598
    %3615 = vst [vmem:[#allocation2 + $0x420] sm:$0xff] %v3599
    %3616 = vst [vmem:[#allocation2 + $0x428] sm:$0xff] %v3600
    %3617 = vst [vmem:[#allocation2 + $0x430] sm:$0xff] %v3601
    %3618 = vst [vmem:[#allocation2 + $0x438] sm:$0xff] %v3602
    %3619 = vst [vmem:[#allocation2 + $0x440] sm:$0xff] %v3603
    %3620 = vst [vmem:[#allocation2 + $0x448] sm:$0xff] %v3604
    %3621 = vst [vmem:[#allocation2 + $0x450] sm:$0xff] %v3605
    %3622 = vst [vmem:[#allocation2 + $0x458] sm:$0xff] %v3606
    %3623 = vst [vmem:[#allocation2 + $0x460] sm:$0xff] %v3607
    %3624 = vst [vmem:[#allocation2 + $0x468] sm:$0xff] %v3608
    %3625 = vst [vmem:[#allocation2 + $0x470] sm:$0xff] %v3609
    %3626 = vst [vmem:[#allocation2 + $0x478] sm:$0xff] %v3610
    %v3627 = vld [vmem:[#allocation6 + $0xc0] sm:$0xff]
    %v3628 = vld [vmem:[#allocation6 + $0xc8] sm:$0xff]
    %v3629 = vld [vmem:[#allocation6 + $0xd0] sm:$0xff]
    %v3630 = vld [vmem:[#allocation6 + $0xd8] sm:$0xff]
    %v3631 = vld [vmem:[#allocation6 + $0xe0] sm:$0xff]
    %v3632 = vld [vmem:[#allocation6 + $0xe8] sm:$0xff]
    %v3633 = vld [vmem:[#allocation6 + $0xf0] sm:$0xff]
    %v3634 = vld [vmem:[#allocation6 + $0xf8] sm:$0xff]
    %v3635 = vld [vmem:[#allocation6 + $0x100] sm:$0xff]
    %v3636 = vld [vmem:[#allocation6 + $0x108] sm:$0xff]
    %v3637 = vld [vmem:[#allocation6 + $0x110] sm:$0xff]
    %v3638 = vld [vmem:[#allocation6 + $0x118] sm:$0xff]
    %v3639 = vld [vmem:[#allocation2] sm:$0xff]
    %v3640 = vld [vmem:[#allocation2 + $0x8] sm:$0xff]
    %v3641 = vld [vmem:[#allocation2 + $0x10] sm:$0xff]
    %v3642 = vld [vmem:[#allocation2 + $0x18] sm:$0xff]
    %v3643 = vld [vmem:[#allocation2 + $0x20] sm:$0xff]
    %v3644 = vld [vmem:[#allocation2 + $0x28] sm:$0xff]
    %v3645 = vld [vmem:[#allocation2 + $0x30] sm:$0xff]
    %v3646 = vld [vmem:[#allocation2 + $0x38] sm:$0xff]
    %v3647 = vld [vmem:[#allocation2 + $0x40] sm:$0xff]
    %v3648 = vld [vmem:[#allocation2 + $0x48] sm:$0xff]
    %v3649 = vld [vmem:[#allocation2 + $0x50] sm:$0xff]
    %v3650 = vld [vmem:[#allocation2 + $0x58] sm:$0xff]
    %v3651 = vld [vmem:[#allocation2 + $0x60] sm:$0xff]
    %v3652 = vld [vmem:[#allocation2 + $0x68] sm:$0xff]
    %v3653 = vld [vmem:[#allocation2 + $0x70] sm:$0xff]
    %v3654 = vld [vmem:[#allocation2 + $0x78] sm:$0xff]
    %v3655 = vld [vmem:[#allocation2 + $0x80] sm:$0xff]
    %v3656 = vld [vmem:[#allocation2 + $0x88] sm:$0xff]
    %v3657 = vld [vmem:[#allocation2 + $0x90] sm:$0xff]
    %v3658 = vld [vmem:[#allocation2 + $0x98] sm:$0xff]
    %v3659 = vld [vmem:[#allocation2 + $0xa0] sm:$0xff]
    %v3660 = vld [vmem:[#allocation2 + $0xa8] sm:$0xff]
    %v3661 = vld [vmem:[#allocation2 + $0xb0] sm:$0xff]
    %v3662 = vld [vmem:[#allocation2 + $0xb8] sm:$0xff]
    %v3663 = vld [vmem:[#allocation2 + $0xc0] sm:$0xff]
    %v3664 = vld [vmem:[#allocation2 + $0xc8] sm:$0xff]
    %v3665 = vld [vmem:[#allocation2 + $0xd0] sm:$0xff]
    %v3666 = vld [vmem:[#allocation2 + $0xd8] sm:$0xff]
    %v3667 = vld [vmem:[#allocation2 + $0xe0] sm:$0xff]
    %v3668 = vld [vmem:[#allocation2 + $0xe8] sm:$0xff]
    %v3669 = vld [vmem:[#allocation2 + $0xf0] sm:$0xff]
    %v3670 = vld [vmem:[#allocation2 + $0xf8] sm:$0xff]
    %v3671 = vld [vmem:[#allocation2 + $0x100] sm:$0xff]
    %v3672 = vld [vmem:[#allocation2 + $0x108] sm:$0xff]
    %v3673 = vld [vmem:[#allocation2 + $0x110] sm:$0xff]
    %v3674 = vld [vmem:[#allocation2 + $0x118] sm:$0xff]
    %v3675 = vld [vmem:[#allocation2 + $0x120] sm:$0xff]
    %v3676 = vld [vmem:[#allocation2 + $0x128] sm:$0xff]
    %v3677 = vld [vmem:[#allocation2 + $0x130] sm:$0xff]
    %v3678 = vld [vmem:[#allocation2 + $0x138] sm:$0xff]
    %v3679 = vld [vmem:[#allocation2 + $0x140] sm:$0xff]
    %v3680 = vld [vmem:[#allocation2 + $0x148] sm:$0xff]
    %v3681 = vld [vmem:[#allocation2 + $0x150] sm:$0xff]
    %v3682 = vld [vmem:[#allocation2 + $0x158] sm:$0xff]
    %v3683 = vld [vmem:[#allocation2 + $0x160] sm:$0xff]
    %v3684 = vld [vmem:[#allocation2 + $0x168] sm:$0xff]
    %v3685 = vld [vmem:[#allocation2 + $0x170] sm:$0xff]
    %v3686 = vld [vmem:[#allocation2 + $0x178] sm:$0xff]
    %v3687 = vld [vmem:[#allocation2 + $0x180] sm:$0xff]
    %v3688 = vld [vmem:[#allocation2 + $0x188] sm:$0xff]
    %v3689 = vld [vmem:[#allocation2 + $0x190] sm:$0xff]
    %v3690 = vld [vmem:[#allocation2 + $0x198] sm:$0xff]
    %v3691 = vld [vmem:[#allocation2 + $0x1a0] sm:$0xff]
    %v3692 = vld [vmem:[#allocation2 + $0x1a8] sm:$0xff]
    %v3693 = vld [vmem:[#allocation2 + $0x1b0] sm:$0xff]
    %v3694 = vld [vmem:[#allocation2 + $0x1b8] sm:$0xff]
    %v3695 = vld [vmem:[#allocation2 + $0x1c0] sm:$0xff]
    %v3696 = vld [vmem:[#allocation2 + $0x1c8] sm:$0xff]
    %v3697 = vld [vmem:[#allocation2 + $0x1d0] sm:$0xff]
    %v3698 = vld [vmem:[#allocation2 + $0x1d8] sm:$0xff]
    %v3699 = vld [vmem:[#allocation2 + $0x1e0] sm:$0xff]
    %v3700 = vld [vmem:[#allocation2 + $0x1e8] sm:$0xff]
    %v3701 = vld [vmem:[#allocation2 + $0x1f0] sm:$0xff]
    %v3702 = vld [vmem:[#allocation2 + $0x1f8] sm:$0xff]
    %v3703 = vld [vmem:[#allocation2 + $0x200] sm:$0xff]
    %v3704 = vld [vmem:[#allocation2 + $0x208] sm:$0xff]
    %v3705 = vld [vmem:[#allocation2 + $0x210] sm:$0xff]
    %v3706 = vld [vmem:[#allocation2 + $0x218] sm:$0xff]
    %v3707 = vld [vmem:[#allocation2 + $0x220] sm:$0xff]
    %v3708 = vld [vmem:[#allocation2 + $0x228] sm:$0xff]
    %v3709 = vld [vmem:[#allocation2 + $0x230] sm:$0xff]
    %v3710 = vld [vmem:[#allocation2 + $0x238] sm:$0xff]
    %v3711 = vld [vmem:[#allocation2 + $0x240] sm:$0xff]
    %v3712 = vld [vmem:[#allocation2 + $0x248] sm:$0xff]
    %v3713 = vld [vmem:[#allocation2 + $0x250] sm:$0xff]
    %v3714 = vld [vmem:[#allocation2 + $0x258] sm:$0xff]
    %v3715 = vld [vmem:[#allocation2 + $0x260] sm:$0xff]
    %v3716 = vld [vmem:[#allocation2 + $0x268] sm:$0xff]
    %v3717 = vld [vmem:[#allocation2 + $0x270] sm:$0xff]
    %v3718 = vld [vmem:[#allocation2 + $0x278] sm:$0xff]
    %v3719 = vld [vmem:[#allocation2 + $0x280] sm:$0xff]
    %v3720 = vld [vmem:[#allocation2 + $0x288] sm:$0xff]
    %v3721 = vld [vmem:[#allocation2 + $0x290] sm:$0xff]
    %v3722 = vld [vmem:[#allocation2 + $0x298] sm:$0xff]
    %v3723 = vld [vmem:[#allocation2 + $0x2a0] sm:$0xff]
    %v3724 = vld [vmem:[#allocation2 + $0x2a8] sm:$0xff]
    %v3725 = vld [vmem:[#allocation2 + $0x2b0] sm:$0xff]
    %v3726 = vld [vmem:[#allocation2 + $0x2b8] sm:$0xff]
    %v3727 = vld [vmem:[#allocation2 + $0x2c0] sm:$0xff]
    %v3728 = vld [vmem:[#allocation2 + $0x2c8] sm:$0xff]
    %v3729 = vld [vmem:[#allocation2 + $0x2d0] sm:$0xff]
    %v3730 = vld [vmem:[#allocation2 + $0x2d8] sm:$0xff]
    %v3731 = vld [vmem:[#allocation2 + $0x2e0] sm:$0xff]
    %v3732 = vld [vmem:[#allocation2 + $0x2e8] sm:$0xff]
    %v3733 = vld [vmem:[#allocation2 + $0x2f0] sm:$0xff]
    %v3734 = vld [vmem:[#allocation2 + $0x2f8] sm:$0xff]
    %v3735 = vld [vmem:[#allocation2 + $0x300] sm:$0xff]
    %v3736 = vld [vmem:[#allocation2 + $0x308] sm:$0xff]
    %v3737 = vld [vmem:[#allocation2 + $0x310] sm:$0xff]
    %v3738 = vld [vmem:[#allocation2 + $0x318] sm:$0xff]
    %v3739 = vld [vmem:[#allocation2 + $0x320] sm:$0xff]
    %v3740 = vld [vmem:[#allocation2 + $0x328] sm:$0xff]
    %v3741 = vld [vmem:[#allocation2 + $0x330] sm:$0xff]
    %v3742 = vld [vmem:[#allocation2 + $0x338] sm:$0xff]
    %v3743 = vld [vmem:[#allocation2 + $0x340] sm:$0xff]
    %v3744 = vld [vmem:[#allocation2 + $0x348] sm:$0xff]
    %v3745 = vld [vmem:[#allocation2 + $0x350] sm:$0xff]
    %v3746 = vld [vmem:[#allocation2 + $0x358] sm:$0xff]
    %v3747 = vld [vmem:[#allocation2 + $0x360] sm:$0xff]
    %v3748 = vld [vmem:[#allocation2 + $0x368] sm:$0xff]
    %v3749 = vld [vmem:[#allocation2 + $0x370] sm:$0xff]
    %v3750 = vld [vmem:[#allocation2 + $0x378] sm:$0xff]
    %v3751 = vld [vmem:[#allocation2 + $0x380] sm:$0xff]
    %v3752 = vld [vmem:[#allocation2 + $0x388] sm:$0xff]
    %v3753 = vld [vmem:[#allocation2 + $0x390] sm:$0xff]
    %v3754 = vld [vmem:[#allocation2 + $0x398] sm:$0xff]
    %v3755 = vld [vmem:[#allocation2 + $0x3a0] sm:$0xff]
    %v3756 = vld [vmem:[#allocation2 + $0x3a8] sm:$0xff]
    %v3757 = vld [vmem:[#allocation2 + $0x3b0] sm:$0xff]
    %v3758 = vld [vmem:[#allocation2 + $0x3b8] sm:$0xff]
    %v3759 = vld [vmem:[#allocation2 + $0x3c0] sm:$0xff]
    %v3760 = vld [vmem:[#allocation2 + $0x3c8] sm:$0xff]
    %v3761 = vld [vmem:[#allocation2 + $0x3d0] sm:$0xff]
    %v3762 = vld [vmem:[#allocation2 + $0x3d8] sm:$0xff]
    %v3763 = vld [vmem:[#allocation2 + $0x3e0] sm:$0xff]
    %v3764 = vld [vmem:[#allocation2 + $0x3e8] sm:$0xff]
    %v3765 = vld [vmem:[#allocation2 + $0x3f0] sm:$0xff]
    %v3766 = vld [vmem:[#allocation2 + $0x3f8] sm:$0xff]
    %v3767 = vld [vmem:[#allocation2 + $0x400] sm:$0xff]
    %v3768 = vld [vmem:[#allocation2 + $0x408] sm:$0xff]
    %v3769 = vld [vmem:[#allocation2 + $0x410] sm:$0xff]
    %v3770 = vld [vmem:[#allocation2 + $0x418] sm:$0xff]
    %v3771 = vld [vmem:[#allocation2 + $0x420] sm:$0xff]
    %v3772 = vld [vmem:[#allocation2 + $0x428] sm:$0xff]
    %v3773 = vld [vmem:[#allocation2 + $0x430] sm:$0xff]
    %v3774 = vld [vmem:[#allocation2 + $0x438] sm:$0xff]
    %v3775 = vld [vmem:[#allocation2 + $0x440] sm:$0xff]
    %v3776 = vld [vmem:[#allocation2 + $0x448] sm:$0xff]
    %v3777 = vld [vmem:[#allocation2 + $0x450] sm:$0xff]
    %v3778 = vld [vmem:[#allocation2 + $0x458] sm:$0xff]
    %v3779 = vld [vmem:[#allocation2 + $0x460] sm:$0xff]
    %v3780 = vld [vmem:[#allocation2 + $0x468] sm:$0xff]
    %v3781 = vld [vmem:[#allocation2 + $0x470] sm:$0xff]
    %v3782 = vld [vmem:[#allocation2 + $0x478] sm:$0xff]
    %v3783 = vld [vmem:[%s3 + $0x40] sm:$0xff]
    %v3784 = vld [vmem:[%s3 + $0x48] sm:$0xff]
    %v3785 = vld [vmem:[%s3 + $0x50] sm:$0xff]
    %v3786 = vld [vmem:[%s3 + $0x58] sm:$0xff]
    %3788 = vset.pattern.permute.xlu0 0
    %3789 = vperm.xlu0 %3788, %v3783
    %v3790 = vpop.permute.xlu0 %3789
    %3793 = vset.pattern.permute.xlu0 0
    %3794 = vperm.xlu0 %3793, %v3784
    %v3795 = vpop.permute.xlu0 %3794
    %3798 = vset.pattern.permute.xlu0 0
    %3799 = vperm.xlu0 %3798, %v3785
    %v3800 = vpop.permute.xlu0 %3799
    %3803 = vset.pattern.permute.xlu0 0
    %3804 = vperm.xlu0 %3803, %v3786
    %v3805 = vpop.permute.xlu0 %3804
    %v3808 = vsel %vm1110, %v3629, 0
    %v3811 = vsel %vm1110, %v3632, 0
    %v3814 = vsel %vm1110, %v3635, 0
    %v3817 = vsel %vm1110, %v3638, 0
    %3819 = vmatpush.msra.mxu0 %v3699
    %3820 = vmatpush.msra.mxu0 %v3695
    %3821 = vmatpush.msra.mxu0 %v3691
    %3822 = vmatpush.msra.mxu0 %v3687
    %3823 = vmatpush.msra.mxu0 %v3683
    %3824 = vmatpush.msra.mxu0 %v3679
    %3825 = vmatpush.msra.mxu0 %v3675
    %3826 = vmatpush.msra.mxu0 %v3671
    %3827 = vmatpush.msra.mxu0 %v3667
    %3828 = vmatpush.msra.mxu0 %v3663
    %3829 = vmatpush.msra.mxu0 %v3659
    %3830 = vmatpush.msra.mxu0 %v3655
    %3831 = vmatpush.msra.mxu0 %v3651
    %3832 = vmatpush.msra.mxu0 %v3647
    %3833 = vmatpush.msra.mxu0 %v3643
    %3834 = vmatpush.msra.mxu0 %v3639
    %3835 = vmatmul.f32.gmra.mxu0 %v3627
    %v3836 = vpop.f32.mrf.mxu0
    %v3837 = vadd.f32 %v3790, %v3836
    %3838 = vmatmul.f32.gmra.mxu0 %v3630
    %v3839 = vpop.f32.mrf.mxu0
    %v3840 = vadd.f32 %v3795, %v3839
    %3841 = vmatmul.f32.gmra.mxu0 %v3633
    %v3842 = vpop.f32.mrf.mxu0
    %v3843 = vadd.f32 %v3800, %v3842
    %3844 = vmatmul.f32.gmra.mxu0 %v3636
    %v3845 = vpop.f32.mrf.mxu0
    %v3846 = vadd.f32 %v3805, %v3845
    %3847 = vdwg.mxu0
    %3848 = vmatpush.msra.mxu0 %v3763
    %3849 = vmatpush.msra.mxu0 %v3759
    %3850 = vmatpush.msra.mxu0 %v3755
    %3851 = vmatpush.msra.mxu0 %v3751
    %3852 = vmatpush.msra.mxu0 %v3747
    %3853 = vmatpush.msra.mxu0 %v3743
    %3854 = vmatpush.msra.mxu0 %v3739
    %3855 = vmatpush.msra.mxu0 %v3735
    %3856 = vmatpush.msra.mxu0 %v3731
    %3857 = vmatpush.msra.mxu0 %v3727
    %3858 = vmatpush.msra.mxu0 %v3723
    %3859 = vmatpush.msra.mxu0 %v3719
    %3860 = vmatpush.msra.mxu0 %v3715
    %3861 = vmatpush.msra.mxu0 %v3711
    %3862 = vmatpush.msra.mxu0 %v3707
    %3863 = vmatpush.msra.mxu0 %v3703
    %3864 = vmatmul.f32.gmra.mxu0 %v3628
    %v3865 = vpop.f32.mrf.mxu0
    %v3866 = vadd.f32 %v3837, %v3865
    %3867 = vmatmul.f32.gmra.mxu0 %v3631
    %v3868 = vpop.f32.mrf.mxu0
    %v3869 = vadd.f32 %v3840, %v3868
    %3870 = vmatmul.f32.gmra.mxu0 %v3634
    %v3871 = vpop.f32.mrf.mxu0
    %v3872 = vadd.f32 %v3843, %v3871
    %3873 = vmatmul.f32.gmra.mxu0 %v3637
    %v3874 = vpop.f32.mrf.mxu0
    %v3875 = vadd.f32 %v3846, %v3874
    %3876 = vdwg.mxu0
    %3877 = vmatpush.msra.mxu0 0.0
    %3878 = vmatpush.msra.mxu0 0.0
    %3879 = vmatpush.msra.mxu0 0.0
    %3880 = vmatpush.msra.mxu0 0.0
    %3881 = vmatpush.msra.mxu0 0.0
    %3882 = vmatpush.msra.mxu0 0.0
    %3883 = vmatpush.msra.mxu0 0.0
    %3884 = vmatpush.msra.mxu0 0.0
    %3885 = vmatpush.msra.mxu0 0.0
    %3886 = vmatpush.msra.mxu0 0.0
    %3887 = vmatpush.msra.mxu0 0.0
    %3888 = vmatpush.msra.mxu0 0.0
    %3889 = vmatpush.msra.mxu0 %v3779
    %3890 = vmatpush.msra.mxu0 %v3775
    %3891 = vmatpush.msra.mxu0 %v3771
    %3892 = vmatpush.msra.mxu0 %v3767
    %3893 = vmatmul.f32.gmra.mxu0 %v3808
    %v3894 = vpop.f32.mrf.mxu0
    %v3895 = vadd.f32 %v3866, %v3894
    %3896 = vmatmul.f32.gmra.mxu0 %v3811
    %v3897 = vpop.f32.mrf.mxu0
    %v3898 = vadd.f32 %v3869, %v3897
    %3899 = vmatmul.f32.gmra.mxu0 %v3814
    %v3900 = vpop.f32.mrf.mxu0
    %v3901 = vadd.f32 %v3872, %v3900
    %3902 = vmatmul.f32.gmra.mxu0 %v3817
    %v3903 = vpop.f32.mrf.mxu0
    %v3904 = vadd.f32 %v3875, %v3903
    %3905 = vdwg.mxu0
    %3906 = vmatpush.msra.mxu0 %v3700
    %3907 = vmatpush.msra.mxu0 %v3696
    %3908 = vmatpush.msra.mxu0 %v3692
    %3909 = vmatpush.msra.mxu0 %v3688
    %3910 = vmatpush.msra.mxu0 %v3684
    %3911 = vmatpush.msra.mxu0 %v3680
    %3912 = vmatpush.msra.mxu0 %v3676
    %3913 = vmatpush.msra.mxu0 %v3672
    %3914 = vmatpush.msra.mxu0 %v3668
    %3915 = vmatpush.msra.mxu0 %v3664
    %3916 = vmatpush.msra.mxu0 %v3660
    %3917 = vmatpush.msra.mxu0 %v3656
    %3918 = vmatpush.msra.mxu0 %v3652
    %3919 = vmatpush.msra.mxu0 %v3648
    %3920 = vmatpush.msra.mxu0 %v3644
    %3921 = vmatpush.msra.mxu0 %v3640
    %3922 = vmatmul.f32.gmra.mxu0 %v3627
    %v3923 = vpop.f32.mrf.mxu0
    %v3924 = vadd.f32 %v3790, %v3923
    %3925 = vmatmul.f32.gmra.mxu0 %v3630
    %v3926 = vpop.f32.mrf.mxu0
    %v3927 = vadd.f32 %v3795, %v3926
    %3928 = vmatmul.f32.gmra.mxu0 %v3633
    %v3929 = vpop.f32.mrf.mxu0
    %v3930 = vadd.f32 %v3800, %v3929
    %3931 = vmatmul.f32.gmra.mxu0 %v3636
    %v3932 = vpop.f32.mrf.mxu0
    %v3933 = vadd.f32 %v3805, %v3932
    %3934 = vdwg.mxu0
    %3935 = vmatpush.msra.mxu0 %v3764
    %3936 = vmatpush.msra.mxu0 %v3760
    %3937 = vmatpush.msra.mxu0 %v3756
    %3938 = vmatpush.msra.mxu0 %v3752
    %3939 = vmatpush.msra.mxu0 %v3748
    %3940 = vmatpush.msra.mxu0 %v3744
    %3941 = vmatpush.msra.mxu0 %v3740
    %3942 = vmatpush.msra.mxu0 %v3736
    %3943 = vmatpush.msra.mxu0 %v3732
    %3944 = vmatpush.msra.mxu0 %v3728
    %3945 = vmatpush.msra.mxu0 %v3724
    %3946 = vmatpush.msra.mxu0 %v3720
    %3947 = vmatpush.msra.mxu0 %v3716
    %3948 = vmatpush.msra.mxu0 %v3712
    %3949 = vmatpush.msra.mxu0 %v3708
    %3950 = vmatpush.msra.mxu0 %v3704
    %3951 = vmatmul.f32.gmra.mxu0 %v3628
    %v3952 = vpop.f32.mrf.mxu0
    %v3953 = vadd.f32 %v3924, %v3952
    %3954 = vmatmul.f32.gmra.mxu0 %v3631
    %v3955 = vpop.f32.mrf.mxu0
    %v3956 = vadd.f32 %v3927, %v3955
    %3957 = vmatmul.f32.gmra.mxu0 %v3634
    %v3958 = vpop.f32.mrf.mxu0
    %v3959 = vadd.f32 %v3930, %v3958
    %3960 = vmatmul.f32.gmra.mxu0 %v3637
    %v3961 = vpop.f32.mrf.mxu0
    %v3962 = vadd.f32 %v3933, %v3961
    %3963 = vdwg.mxu0
    %3964 = vmatpush.msra.mxu0 0.0
    %3965 = vmatpush.msra.mxu0 0.0
    %3966 = vmatpush.msra.mxu0 0.0
    %3967 = vmatpush.msra.mxu0 0.0
    %3968 = vmatpush.msra.mxu0 0.0
    %3969 = vmatpush.msra.mxu0 0.0
    %3970 = vmatpush.msra.mxu0 0.0
    %3971 = vmatpush.msra.mxu0 0.0
    %3972 = vmatpush.msra.mxu0 0.0
    %3973 = vmatpush.msra.mxu0 0.0
    %3974 = vmatpush.msra.mxu0 0.0
    %3975 = vmatpush.msra.mxu0 0.0
    %3976 = vmatpush.msra.mxu0 %v3780
    %3977 = vmatpush.msra.mxu0 %v3776
    %3978 = vmatpush.msra.mxu0 %v3772
    %3979 = vmatpush.msra.mxu0 %v3768
    %3980 = vmatmul.f32.gmra.mxu0 %v3808
    %v3981 = vpop.f32.mrf.mxu0
    %v3982 = vadd.f32 %v3953, %v3981
    %3983 = vmatmul.f32.gmra.mxu0 %v3811
    %v3984 = vpop.f32.mrf.mxu0
    %v3985 = vadd.f32 %v3956, %v3984
    %3986 = vmatmul.f32.gmra.mxu0 %v3814
    %v3987 = vpop.f32.mrf.mxu0
    %v3988 = vadd.f32 %v3959, %v3987
    %3989 = vmatmul.f32.gmra.mxu0 %v3817
    %v3990 = vpop.f32.mrf.mxu0
    %v3991 = vadd.f32 %v3962, %v3990
    %3992 = vdwg.mxu0
    %3993 = vmatpush.msra.mxu0 %v3701
    %3994 = vmatpush.msra.mxu0 %v3697
    %3995 = vmatpush.msra.mxu0 %v3693
    %3996 = vmatpush.msra.mxu0 %v3689
    %3997 = vmatpush.msra.mxu0 %v3685
    %3998 = vmatpush.msra.mxu0 %v3681
    %3999 = vmatpush.msra.mxu0 %v3677
    %4000 = vmatpush.msra.mxu0 %v3673
    %4001 = vmatpush.msra.mxu0 %v3669
    %4002 = vmatpush.msra.mxu0 %v3665
    %4003 = vmatpush.msra.mxu0 %v3661
    %4004 = vmatpush.msra.mxu0 %v3657
    %4005 = vmatpush.msra.mxu0 %v3653
    %4006 = vmatpush.msra.mxu0 %v3649
    %4007 = vmatpush.msra.mxu0 %v3645
    %4008 = vmatpush.msra.mxu0 %v3641
    %4009 = vmatmul.f32.gmra.mxu0 %v3627
    %v4010 = vpop.f32.mrf.mxu0
    %v4011 = vadd.f32 %v3790, %v4010
    %4012 = vmatmul.f32.gmra.mxu0 %v3630
    %v4013 = vpop.f32.mrf.mxu0
    %v4014 = vadd.f32 %v3795, %v4013
    %4015 = vmatmul.f32.gmra.mxu0 %v3633
    %v4016 = vpop.f32.mrf.mxu0
    %v4017 = vadd.f32 %v3800, %v4016
    %4018 = vmatmul.f32.gmra.mxu0 %v3636
    %v4019 = vpop.f32.mrf.mxu0
    %v4020 = vadd.f32 %v3805, %v4019
    %4021 = vdwg.mxu0
    %4022 = vmatpush.msra.mxu0 %v3765
    %4023 = vmatpush.msra.mxu0 %v3761
    %4024 = vmatpush.msra.mxu0 %v3757
    %4025 = vmatpush.msra.mxu0 %v3753
    %4026 = vmatpush.msra.mxu0 %v3749
    %4027 = vmatpush.msra.mxu0 %v3745
    %4028 = vmatpush.msra.mxu0 %v3741
    %4029 = vmatpush.msra.mxu0 %v3737
    %4030 = vmatpush.msra.mxu0 %v3733
    %4031 = vmatpush.msra.mxu0 %v3729
    %4032 = vmatpush.msra.mxu0 %v3725
    %4033 = vmatpush.msra.mxu0 %v3721
    %4034 = vmatpush.msra.mxu0 %v3717
    %4035 = vmatpush.msra.mxu0 %v3713
    %4036 = vmatpush.msra.mxu0 %v3709
    %4037 = vmatpush.msra.mxu0 %v3705
    %4038 = vmatmul.f32.gmra.mxu0 %v3628
    %v4039 = vpop.f32.mrf.mxu0
    %v4040 = vadd.f32 %v4011, %v4039
    %4041 = vmatmul.f32.gmra.mxu0 %v3631
    %v4042 = vpop.f32.mrf.mxu0
    %v4043 = vadd.f32 %v4014, %v4042
    %4044 = vmatmul.f32.gmra.mxu0 %v3634
    %v4045 = vpop.f32.mrf.mxu0
    %v4046 = vadd.f32 %v4017, %v4045
    %4047 = vmatmul.f32.gmra.mxu0 %v3637
    %v4048 = vpop.f32.mrf.mxu0
    %v4049 = vadd.f32 %v4020, %v4048
    %4050 = vdwg.mxu0
    %4051 = vmatpush.msra.mxu0 0.0
    %4052 = vmatpush.msra.mxu0 0.0
    %4053 = vmatpush.msra.mxu0 0.0
    %4054 = vmatpush.msra.mxu0 0.0
    %4055 = vmatpush.msra.mxu0 0.0
    %4056 = vmatpush.msra.mxu0 0.0
    %4057 = vmatpush.msra.mxu0 0.0
    %4058 = vmatpush.msra.mxu0 0.0
    %4059 = vmatpush.msra.mxu0 0.0
    %4060 = vmatpush.msra.mxu0 0.0
    %4061 = vmatpush.msra.mxu0 0.0
    %4062 = vmatpush.msra.mxu0 0.0
    %4063 = vmatpush.msra.mxu0 %v3781
    %4064 = vmatpush.msra.mxu0 %v3777
    %4065 = vmatpush.msra.mxu0 %v3773
    %4066 = vmatpush.msra.mxu0 %v3769
    %4067 = vmatmul.f32.gmra.mxu0 %v3808
    %v4068 = vpop.f32.mrf.mxu0
    %v4069 = vadd.f32 %v4040, %v4068
    %4070 = vmatmul.f32.gmra.mxu0 %v3811
    %v4071 = vpop.f32.mrf.mxu0
    %v4072 = vadd.f32 %v4043, %v4071
    %4073 = vmatmul.f32.gmra.mxu0 %v3814
    %v4074 = vpop.f32.mrf.mxu0
    %v4075 = vadd.f32 %v4046, %v4074
    %4076 = vmatmul.f32.gmra.mxu0 %v3817
    %v4077 = vpop.f32.mrf.mxu0
    %v4078 = vadd.f32 %v4049, %v4077
    %4079 = vdwg.mxu0
    %4080 = vmatpush.msra.mxu0 %v3702
    %4081 = vmatpush.msra.mxu0 %v3698
    %4082 = vmatpush.msra.mxu0 %v3694
    %4083 = vmatpush.msra.mxu0 %v3690
    %4084 = vmatpush.msra.mxu0 %v3686
    %4085 = vmatpush.msra.mxu0 %v3682
    %4086 = vmatpush.msra.mxu0 %v3678
    %4087 = vmatpush.msra.mxu0 %v3674
    %4088 = vmatpush.msra.mxu0 %v3670
    %4089 = vmatpush.msra.mxu0 %v3666
    %4090 = vmatpush.msra.mxu0 %v3662
    %4091 = vmatpush.msra.mxu0 %v3658
    %4092 = vmatpush.msra.mxu0 %v3654
    %4093 = vmatpush.msra.mxu0 %v3650
    %4094 = vmatpush.msra.mxu0 %v3646
    %4095 = vmatpush.msra.mxu0 %v3642
    %4096 = vmatmul.f32.gmra.mxu0 %v3627
    %v4097 = vpop.f32.mrf.mxu0
    %v4098 = vadd.f32 %v3790, %v4097
    %4099 = vmatmul.f32.gmra.mxu0 %v3630
    %v4100 = vpop.f32.mrf.mxu0
    %v4101 = vadd.f32 %v3795, %v4100
    %4102 = vmatmul.f32.gmra.mxu0 %v3633
    %v4103 = vpop.f32.mrf.mxu0
    %v4104 = vadd.f32 %v3800, %v4103
    %4105 = vmatmul.f32.gmra.mxu0 %v3636
    %v4106 = vpop.f32.mrf.mxu0
    %v4107 = vadd.f32 %v3805, %v4106
    %4108 = vdwg.mxu0
    %4109 = vmatpush.msra.mxu0 %v3766
    %4110 = vmatpush.msra.mxu0 %v3762
    %4111 = vmatpush.msra.mxu0 %v3758
    %4112 = vmatpush.msra.mxu0 %v3754
    %4113 = vmatpush.msra.mxu0 %v3750
    %4114 = vmatpush.msra.mxu0 %v3746
    %4115 = vmatpush.msra.mxu0 %v3742
    %4116 = vmatpush.msra.mxu0 %v3738
    %4117 = vmatpush.msra.mxu0 %v3734
    %4118 = vmatpush.msra.mxu0 %v3730
    %4119 = vmatpush.msra.mxu0 %v3726
    %4120 = vmatpush.msra.mxu0 %v3722
    %4121 = vmatpush.msra.mxu0 %v3718
    %4122 = vmatpush.msra.mxu0 %v3714
    %4123 = vmatpush.msra.mxu0 %v3710
    %4124 = vmatpush.msra.mxu0 %v3706
    %4125 = vmatmul.f32.gmra.mxu0 %v3628
    %v4126 = vpop.f32.mrf.mxu0
    %v4127 = vadd.f32 %v4098, %v4126
    %4128 = vmatmul.f32.gmra.mxu0 %v3631
    %v4129 = vpop.f32.mrf.mxu0
    %v4130 = vadd.f32 %v4101, %v4129
    %4131 = vmatmul.f32.gmra.mxu0 %v3634
    %v4132 = vpop.f32.mrf.mxu0
    %v4133 = vadd.f32 %v4104, %v4132
    %4134 = vmatmul.f32.gmra.mxu0 %v3637
    %v4135 = vpop.f32.mrf.mxu0
    %v4136 = vadd.f32 %v4107, %v4135
    %4137 = vdwg.mxu0
    %4138 = vmatpush.msra.mxu0 0.0
    %4139 = vmatpush.msra.mxu0 0.0
    %4140 = vmatpush.msra.mxu0 0.0
    %4141 = vmatpush.msra.mxu0 0.0
    %4142 = vmatpush.msra.mxu0 0.0
    %4143 = vmatpush.msra.mxu0 0.0
    %4144 = vmatpush.msra.mxu0 0.0
    %4145 = vmatpush.msra.mxu0 0.0
    %4146 = vmatpush.msra.mxu0 0.0
    %4147 = vmatpush.msra.mxu0 0.0
    %4148 = vmatpush.msra.mxu0 0.0
    %4149 = vmatpush.msra.mxu0 0.0
    %4150 = vmatpush.msra.mxu0 %v3782
    %4151 = vmatpush.msra.mxu0 %v3778
    %4152 = vmatpush.msra.mxu0 %v3774
    %4153 = vmatpush.msra.mxu0 %v3770
    %4154 = vmatmul.f32.gmra.mxu0 %v3808
    %v4155 = vpop.f32.mrf.mxu0
    %v4156 = vadd.f32 %v4127, %v4155
    %4157 = vmatmul.f32.gmra.mxu0 %v3811
    %v4158 = vpop.f32.mrf.mxu0
    %v4159 = vadd.f32 %v4130, %v4158
    %4160 = vmatmul.f32.gmra.mxu0 %v3814
    %v4161 = vpop.f32.mrf.mxu0
    %v4162 = vadd.f32 %v4133, %v4161
    %4163 = vmatmul.f32.gmra.mxu0 %v3817
    %v4164 = vpop.f32.mrf.mxu0
    %v4165 = vadd.f32 %v4136, %v4164
    %4166 = vdwg.mxu0
    %v4167 = vmul.f32 %v3895, 0.01
    %v4168 = vmul.f32 %v3982, 0.01
    %v4169 = vmul.f32 %v4069, 0.01
    %v4170 = vmul.f32 %v4156, 0.01
    %v4171 = vmul.f32 %v3898, 0.01
    %v4172 = vmul.f32 %v3985, 0.01
    %v4173 = vmul.f32 %v4072, 0.01
    %v4174 = vmul.f32 %v4159, 0.01
    %v4175 = vmul.f32 %v3901, 0.01
    %v4176 = vmul.f32 %v3988, 0.01
    %v4177 = vmul.f32 %v4075, 0.01
    %v4178 = vmul.f32 %v4162, 0.01
    %v4179 = vmul.f32 %v3904, 0.01
    %v4180 = vmul.f32 %v3991, 0.01
    %v4181 = vmul.f32 %v4078, 0.01
    %v4182 = vmul.f32 %v4165, 0.01
    %v4183 = vmax.f32 %v3895, %v4167
    %v4184 = vmax.f32 %v3982, %v4168
    %v4185 = vmax.f32 %v4069, %v4169
    %v4186 = vmax.f32 %v4156, %v4170
    %v4187 = vmax.f32 %v3898, %v4171
    %v4188 = vmax.f32 %v3985, %v4172
    %v4189 = vmax.f32 %v4072, %v4173
    %v4190 = vmax.f32 %v4159, %v4174
    %v4191 = vmax.f32 %v3901, %v4175
    %v4192 = vmax.f32 %v3988, %v4176
    %v4193 = vmax.f32 %v4075, %v4177
    %v4194 = vmax.f32 %v4162, %v4178
    %v4195 = vmax.f32 %v3904, %v4179
    %v4196 = vmax.f32 %v3991, %v4180
    %v4197 = vmax.f32 %v4078, %v4181
    %v4198 = vmax.f32 %v4165, %v4182
    %4199 = vrot.lane.b32.xlu0 %v4183, 17
    %v4200 = vpop.permute.xlu0 %4199
    %4201 = vrot.lane.b32.xlu0 %v4187, 17
    %v4202 = vpop.permute.xlu0 %4201
    %4203 = vrot.lane.b32.xlu0 %v4191, 17
    %v4204 = vpop.permute.xlu0 %4203
    %4205 = vrot.lane.b32.xlu0 %v4195, 17
    %v4206 = vpop.permute.xlu0 %4205
    %4207 = vrot.lane.b32.xlu0 %v4184, 17
    %v4208 = vpop.permute.xlu0 %4207
    %4209 = vrot.lane.b32.xlu0 %v4188, 17
    %v4210 = vpop.permute.xlu0 %4209
    %4211 = vrot.lane.b32.xlu0 %v4192, 17
    %v4212 = vpop.permute.xlu0 %4211
    %4213 = vrot.lane.b32.xlu0 %v4196, 17
    %v4214 = vpop.permute.xlu0 %4213
    %4215 = vrot.lane.b32.xlu0 %v4185, 17
    %v4216 = vpop.permute.xlu0 %4215
    %4217 = vrot.lane.b32.xlu0 %v4189, 17
    %v4218 = vpop.permute.xlu0 %4217
    %4219 = vrot.lane.b32.xlu0 %v4193, 17
    %v4220 = vpop.permute.xlu0 %4219
    %4221 = vrot.lane.b32.xlu0 %v4197, 17
    %v4222 = vpop.permute.xlu0 %4221
    %4223 = vrot.lane.b32.xlu0 %v4186, 17
    %v4224 = vpop.permute.xlu0 %4223
    %4225 = vrot.lane.b32.xlu0 %v4190, 17
    %v4226 = vpop.permute.xlu0 %4225
    %4227 = vrot.lane.b32.xlu0 %v4194, 17
    %v4228 = vpop.permute.xlu0 %4227
    %4229 = vrot.lane.b32.xlu0 %v4198, 17
    %v4230 = vpop.permute.xlu0 %4229
    %v4231 = vsel %vm170, %v4216, %v4224
    %v4232 = vsel %vm170, %v4218, %v4226
    %v4233 = vsel %vm170, %v4220, %v4228
    %v4234 = vsel %vm170, %v4222, %v4230
    %v4235 = vsel %vm170, %v4208, %v4216
    %v4236 = vsel %vm170, %v4210, %v4218
    %v4237 = vsel %vm170, %v4212, %v4220
    %v4238 = vsel %vm170, %v4214, %v4222
    %v4239 = vsel %vm170, %v4200, %v4208
    %v4240 = vsel %vm170, %v4202, %v4210
    %v4241 = vsel %vm170, %v4204, %v4212
    %v4242 = vsel %vm170, %v4206, %v4214
    %v4243 = vsel %vm170, %v4224, %v4200
    %v4244 = vsel %vm170, %v4226, %v4202
    %v4245 = vsel %vm170, %v4228, %v4204
    %v4246 = vsel %vm170, %v4230, %v4206
    %v4247 = vld [vmem:[#allocation3] sm:$0xff]
    %v4248 = vld [vmem:[#allocation3 + $0x8] sm:$0xff]
    %v4249 = vld [vmem:[#allocation3 + $0x10] sm:$0xff]
    %v4250 = vld [vmem:[#allocation3 + $0x18] sm:$0xff]
    %v4251 = vld [vmem:[#allocation3 + $0x20] sm:$0xff]
    %v4252 = vld [vmem:[#allocation3 + $0x28] sm:$0xff]
    %v4253 = vld [vmem:[#allocation3 + $0x30] sm:$0xff]
    %v4254 = vld [vmem:[#allocation3 + $0x38] sm:$0xff]
    %v4255 = vld [vmem:[#allocation3 + $0x40] sm:$0xff]
    %v4256 = vld [vmem:[#allocation3 + $0x48] sm:$0xff]
    %v4257 = vld [vmem:[#allocation3 + $0x50] sm:$0xff]
    %v4258 = vld [vmem:[#allocation3 + $0x58] sm:$0xff]
    %v4259 = vld [vmem:[#allocation3 + $0x60] sm:$0xff]
    %v4260 = vld [vmem:[#allocation3 + $0x68] sm:$0xff]
    %v4261 = vld [vmem:[#allocation3 + $0x70] sm:$0xff]
    %v4262 = vld [vmem:[#allocation3 + $0x78] sm:$0xff]
    %v4263 = vmul.f32 %v4243, %v4247
    %v4264 = vmul.f32 %v4239, %v4248
    %v4265 = vmul.f32 %v4235, %v4249
    %v4266 = vmul.f32 %v4231, %v4250
    %v4267 = vmul.f32 %v4244, %v4251
    %v4268 = vmul.f32 %v4240, %v4252
    %v4269 = vmul.f32 %v4236, %v4253
    %v4270 = vmul.f32 %v4232, %v4254
    %v4271 = vmul.f32 %v4245, %v4255
    %v4272 = vmul.f32 %v4241, %v4256
    %v4273 = vmul.f32 %v4237, %v4257
    %v4274 = vmul.f32 %v4233, %v4258
    %v4275 = vmul.f32 %v4246, %v4259
    %v4276 = vmul.f32 %v4242, %v4260
    %v4277 = vmul.f32 %v4238, %v4261
    %v4278 = vmul.f32 %v4234, %v4262
    %4279 = vst [vmem:[#allocation2] sm:$0xff] %v4263
    %4280 = vst [vmem:[#allocation2 + $0x8] sm:$0xff] %v4264
    %4281 = vst [vmem:[#allocation2 + $0x10] sm:$0xff] %v4265
    %4282 = vst [vmem:[#allocation2 + $0x18] sm:$0xff] %v4266
    %4283 = vst [vmem:[#allocation2 + $0x20] sm:$0xff] %v4267
    %4284 = vst [vmem:[#allocation2 + $0x28] sm:$0xff] %v4268
    %4285 = vst [vmem:[#allocation2 + $0x30] sm:$0xff] %v4269
    %4286 = vst [vmem:[#allocation2 + $0x38] sm:$0xff] %v4270
    %4287 = vst [vmem:[#allocation2 + $0x40] sm:$0xff] %v4271
    %4288 = vst [vmem:[#allocation2 + $0x48] sm:$0xff] %v4272
    %4289 = vst [vmem:[#allocation2 + $0x50] sm:$0xff] %v4273
    %4290 = vst [vmem:[#allocation2 + $0x58] sm:$0xff] %v4274
    %4291 = vst [vmem:[#allocation2 + $0x60] sm:$0xff] %v4275
    %4292 = vst [vmem:[#allocation2 + $0x68] sm:$0xff] %v4276
    %4293 = vst [vmem:[#allocation2 + $0x70] sm:$0xff] %v4277
    %4294 = vst [vmem:[#allocation2 + $0x78] sm:$0xff] %v4278
    %4295 = vrot.lane.b32.xlu0 %v4183, 16
    %v4296 = vpop.permute.xlu0 %4295
    %4297 = vrot.lane.b32.xlu0 %v4187, 16
    %v4298 = vpop.permute.xlu0 %4297
    %4299 = vrot.lane.b32.xlu0 %v4191, 16
    %v4300 = vpop.permute.xlu0 %4299
    %4301 = vrot.lane.b32.xlu0 %v4195, 16
    %v4302 = vpop.permute.xlu0 %4301
    %4303 = vrot.lane.b32.xlu0 %v4184, 16
    %v4304 = vpop.permute.xlu0 %4303
    %4305 = vrot.lane.b32.xlu0 %v4188, 16
    %v4306 = vpop.permute.xlu0 %4305
    %4307 = vrot.lane.b32.xlu0 %v4192, 16
    %v4308 = vpop.permute.xlu0 %4307
    %4309 = vrot.lane.b32.xlu0 %v4196, 16
    %v4310 = vpop.permute.xlu0 %4309
    %4311 = vrot.lane.b32.xlu0 %v4185, 16
    %v4312 = vpop.permute.xlu0 %4311
    %4313 = vrot.lane.b32.xlu0 %v4189, 16
    %v4314 = vpop.permute.xlu0 %4313
    %4315 = vrot.lane.b32.xlu0 %v4193, 16
    %v4316 = vpop.permute.xlu0 %4315
    %4317 = vrot.lane.b32.xlu0 %v4197, 16
    %v4318 = vpop.permute.xlu0 %4317
    %4319 = vrot.lane.b32.xlu0 %v4186, 16
    %v4320 = vpop.permute.xlu0 %4319
    %4321 = vrot.lane.b32.xlu0 %v4190, 16
    %v4322 = vpop.permute.xlu0 %4321
    %4323 = vrot.lane.b32.xlu0 %v4194, 16
    %v4324 = vpop.permute.xlu0 %4323
    %4325 = vrot.lane.b32.xlu0 %v4198, 16
    %v4326 = vpop.permute.xlu0 %4325
    %v4327 = vsel %vm267, %v4312, %v4320
    %v4328 = vsel %vm267, %v4314, %v4322
    %v4329 = vsel %vm267, %v4316, %v4324
    %v4330 = vsel %vm267, %v4318, %v4326
    %v4331 = vsel %vm267, %v4304, %v4312
    %v4332 = vsel %vm267, %v4306, %v4314
    %v4333 = vsel %vm267, %v4308, %v4316
    %v4334 = vsel %vm267, %v4310, %v4318
    %v4335 = vsel %vm267, %v4296, %v4304
    %v4336 = vsel %vm267, %v4298, %v4306
    %v4337 = vsel %vm267, %v4300, %v4308
    %v4338 = vsel %vm267, %v4302, %v4310
    %v4339 = vsel %vm267, %v4320, %v4296
    %v4340 = vsel %vm267, %v4322, %v4298
    %v4341 = vsel %vm267, %v4324, %v4300
    %v4342 = vsel %vm267, %v4326, %v4302
    %v4343 = vld [vmem:[#allocation3 + $0x80] sm:$0xff]
    %v4344 = vld [vmem:[#allocation3 + $0x88] sm:$0xff]
    %v4345 = vld [vmem:[#allocation3 + $0x90] sm:$0xff]
    %v4346 = vld [vmem:[#allocation3 + $0x98] sm:$0xff]
    %v4347 = vld [vmem:[#allocation3 + $0xa0] sm:$0xff]
    %v4348 = vld [vmem:[#allocation3 + $0xa8] sm:$0xff]
    %v4349 = vld [vmem:[#allocation3 + $0xb0] sm:$0xff]
    %v4350 = vld [vmem:[#allocation3 + $0xb8] sm:$0xff]
    %v4351 = vld [vmem:[#allocation3 + $0xc0] sm:$0xff]
    %v4352 = vld [vmem:[#allocation3 + $0xc8] sm:$0xff]
    %v4353 = vld [vmem:[#allocation3 + $0xd0] sm:$0xff]
    %v4354 = vld [vmem:[#allocation3 + $0xd8] sm:$0xff]
    %v4355 = vld [vmem:[#allocation3 + $0xe0] sm:$0xff]
    %v4356 = vld [vmem:[#allocation3 + $0xe8] sm:$0xff]
    %v4357 = vld [vmem:[#allocation3 + $0xf0] sm:$0xff]
    %v4358 = vld [vmem:[#allocation3 + $0xf8] sm:$0xff]
    %v4359 = vmul.f32 %v4339, %v4343
    %v4360 = vmul.f32 %v4335, %v4344
    %v4361 = vmul.f32 %v4331, %v4345
    %v4362 = vmul.f32 %v4327, %v4346
    %v4363 = vmul.f32 %v4340, %v4347
    %v4364 = vmul.f32 %v4336, %v4348
    %v4365 = vmul.f32 %v4332, %v4349
    %v4366 = vmul.f32 %v4328, %v4350
    %v4367 = vmul.f32 %v4341, %v4351
    %v4368 = vmul.f32 %v4337, %v4352
    %v4369 = vmul.f32 %v4333, %v4353
    %v4370 = vmul.f32 %v4329, %v4354
    %v4371 = vmul.f32 %v4342, %v4355
    %v4372 = vmul.f32 %v4338, %v4356
    %v4373 = vmul.f32 %v4334, %v4357
    %v4374 = vmul.f32 %v4330, %v4358
    %4375 = vst [vmem:[#allocation2 + $0x80] sm:$0xff] %v4359
    %4376 = vst [vmem:[#allocation2 + $0x88] sm:$0xff] %v4360
    %4377 = vst [vmem:[#allocation2 + $0x90] sm:$0xff] %v4361
    %4378 = vst [vmem:[#allocation2 + $0x98] sm:$0xff] %v4362
    %4379 = vst [vmem:[#allocation2 + $0xa0] sm:$0xff] %v4363
    %4380 = vst [vmem:[#allocation2 + $0xa8] sm:$0xff] %v4364
    %4381 = vst [vmem:[#allocation2 + $0xb0] sm:$0xff] %v4365
    %4382 = vst [vmem:[#allocation2 + $0xb8] sm:$0xff] %v4366
    %4383 = vst [vmem:[#allocation2 + $0xc0] sm:$0xff] %v4367
    %4384 = vst [vmem:[#allocation2 + $0xc8] sm:$0xff] %v4368
    %4385 = vst [vmem:[#allocation2 + $0xd0] sm:$0xff] %v4369
    %4386 = vst [vmem:[#allocation2 + $0xd8] sm:$0xff] %v4370
    %4387 = vst [vmem:[#allocation2 + $0xe0] sm:$0xff] %v4371
    %4388 = vst [vmem:[#allocation2 + $0xe8] sm:$0xff] %v4372
    %4389 = vst [vmem:[#allocation2 + $0xf0] sm:$0xff] %v4373
    %4390 = vst [vmem:[#allocation2 + $0xf8] sm:$0xff] %v4374
    %4391 = vrot.lane.b32.xlu0 %v4183, 15
    %v4392 = vpop.permute.xlu0 %4391
    %4393 = vrot.lane.b32.xlu0 %v4187, 15
    %v4394 = vpop.permute.xlu0 %4393
    %4395 = vrot.lane.b32.xlu0 %v4191, 15
    %v4396 = vpop.permute.xlu0 %4395
    %4397 = vrot.lane.b32.xlu0 %v4195, 15
    %v4398 = vpop.permute.xlu0 %4397
    %4399 = vrot.lane.b32.xlu0 %v4184, 15
    %v4400 = vpop.permute.xlu0 %4399
    %4401 = vrot.lane.b32.xlu0 %v4188, 15
    %v4402 = vpop.permute.xlu0 %4401
    %4403 = vrot.lane.b32.xlu0 %v4192, 15
    %v4404 = vpop.permute.xlu0 %4403
    %4405 = vrot.lane.b32.xlu0 %v4196, 15
    %v4406 = vpop.permute.xlu0 %4405
    %4407 = vrot.lane.b32.xlu0 %v4185, 15
    %v4408 = vpop.permute.xlu0 %4407
    %4409 = vrot.lane.b32.xlu0 %v4189, 15
    %v4410 = vpop.permute.xlu0 %4409
    %4411 = vrot.lane.b32.xlu0 %v4193, 15
    %v4412 = vpop.permute.xlu0 %4411
    %4413 = vrot.lane.b32.xlu0 %v4197, 15
    %v4414 = vpop.permute.xlu0 %4413
    %4415 = vrot.lane.b32.xlu0 %v4186, 15
    %v4416 = vpop.permute.xlu0 %4415
    %4417 = vrot.lane.b32.xlu0 %v4190, 15
    %v4418 = vpop.permute.xlu0 %4417
    %4419 = vrot.lane.b32.xlu0 %v4194, 15
    %v4420 = vpop.permute.xlu0 %4419
    %4421 = vrot.lane.b32.xlu0 %v4198, 15
    %v4422 = vpop.permute.xlu0 %4421
    %v4423 = vsel %vm364, %v4408, %v4416
    %v4424 = vsel %vm364, %v4410, %v4418
    %v4425 = vsel %vm364, %v4412, %v4420
    %v4426 = vsel %vm364, %v4414, %v4422
    %v4427 = vsel %vm364, %v4400, %v4408
    %v4428 = vsel %vm364, %v4402, %v4410
    %v4429 = vsel %vm364, %v4404, %v4412
    %v4430 = vsel %vm364, %v4406, %v4414
    %v4431 = vsel %vm364, %v4392, %v4400
    %v4432 = vsel %vm364, %v4394, %v4402
    %v4433 = vsel %vm364, %v4396, %v4404
    %v4434 = vsel %vm364, %v4398, %v4406
    %v4435 = vsel %vm364, %v4416, %v4392
    %v4436 = vsel %vm364, %v4418, %v4394
    %v4437 = vsel %vm364, %v4420, %v4396
    %v4438 = vsel %vm364, %v4422, %v4398
    %v4439 = vld [vmem:[#allocation3 + $0x100] sm:$0xff]
    %v4440 = vld [vmem:[#allocation3 + $0x108] sm:$0xff]
    %v4441 = vld [vmem:[#allocation3 + $0x110] sm:$0xff]
    %v4442 = vld [vmem:[#allocation3 + $0x118] sm:$0xff]
    %v4443 = vld [vmem:[#allocation3 + $0x120] sm:$0xff]
    %v4444 = vld [vmem:[#allocation3 + $0x128] sm:$0xff]
    %v4445 = vld [vmem:[#allocation3 + $0x130] sm:$0xff]
    %v4446 = vld [vmem:[#allocation3 + $0x138] sm:$0xff]
    %v4447 = vld [vmem:[#allocation3 + $0x140] sm:$0xff]
    %v4448 = vld [vmem:[#allocation3 + $0x148] sm:$0xff]
    %v4449 = vld [vmem:[#allocation3 + $0x150] sm:$0xff]
    %v4450 = vld [vmem:[#allocation3 + $0x158] sm:$0xff]
    %v4451 = vld [vmem:[#allocation3 + $0x160] sm:$0xff]
    %v4452 = vld [vmem:[#allocation3 + $0x168] sm:$0xff]
    %v4453 = vld [vmem:[#allocation3 + $0x170] sm:$0xff]
    %v4454 = vld [vmem:[#allocation3 + $0x178] sm:$0xff]
    %v4455 = vmul.f32 %v4435, %v4439
    %v4456 = vmul.f32 %v4431, %v4440
    %v4457 = vmul.f32 %v4427, %v4441
    %v4458 = vmul.f32 %v4423, %v4442
    %v4459 = vmul.f32 %v4436, %v4443
    %v4460 = vmul.f32 %v4432, %v4444
    %v4461 = vmul.f32 %v4428, %v4445
    %v4462 = vmul.f32 %v4424, %v4446
    %v4463 = vmul.f32 %v4437, %v4447
    %v4464 = vmul.f32 %v4433, %v4448
    %v4465 = vmul.f32 %v4429, %v4449
    %v4466 = vmul.f32 %v4425, %v4450
    %v4467 = vmul.f32 %v4438, %v4451
    %v4468 = vmul.f32 %v4434, %v4452
    %v4469 = vmul.f32 %v4430, %v4453
    %v4470 = vmul.f32 %v4426, %v4454
    %4471 = vst [vmem:[#allocation2 + $0x100] sm:$0xff] %v4455
    %4472 = vst [vmem:[#allocation2 + $0x108] sm:$0xff] %v4456
    %4473 = vst [vmem:[#allocation2 + $0x110] sm:$0xff] %v4457
    %4474 = vst [vmem:[#allocation2 + $0x118] sm:$0xff] %v4458
    %4475 = vst [vmem:[#allocation2 + $0x120] sm:$0xff] %v4459
    %4476 = vst [vmem:[#allocation2 + $0x128] sm:$0xff] %v4460
    %4477 = vst [vmem:[#allocation2 + $0x130] sm:$0xff] %v4461
    %4478 = vst [vmem:[#allocation2 + $0x138] sm:$0xff] %v4462
    %4479 = vst [vmem:[#allocation2 + $0x140] sm:$0xff] %v4463
    %4480 = vst [vmem:[#allocation2 + $0x148] sm:$0xff] %v4464
    %4481 = vst [vmem:[#allocation2 + $0x150] sm:$0xff] %v4465
    %4482 = vst [vmem:[#allocation2 + $0x158] sm:$0xff] %v4466
    %4483 = vst [vmem:[#allocation2 + $0x160] sm:$0xff] %v4467
    %4484 = vst [vmem:[#allocation2 + $0x168] sm:$0xff] %v4468
    %4485 = vst [vmem:[#allocation2 + $0x170] sm:$0xff] %v4469
    %4486 = vst [vmem:[#allocation2 + $0x178] sm:$0xff] %v4470
    %4487 = vrot.lane.b32.xlu0 %v4183, 1
    %v4488 = vpop.permute.xlu0 %4487
    %4489 = vrot.lane.b32.xlu0 %v4187, 1
    %v4490 = vpop.permute.xlu0 %4489
    %4491 = vrot.lane.b32.xlu0 %v4191, 1
    %v4492 = vpop.permute.xlu0 %4491
    %4493 = vrot.lane.b32.xlu0 %v4195, 1
    %v4494 = vpop.permute.xlu0 %4493
    %4495 = vrot.lane.b32.xlu0 %v4184, 1
    %v4496 = vpop.permute.xlu0 %4495
    %4497 = vrot.lane.b32.xlu0 %v4188, 1
    %v4498 = vpop.permute.xlu0 %4497
    %4499 = vrot.lane.b32.xlu0 %v4192, 1
    %v4500 = vpop.permute.xlu0 %4499
    %4501 = vrot.lane.b32.xlu0 %v4196, 1
    %v4502 = vpop.permute.xlu0 %4501
    %4503 = vrot.lane.b32.xlu0 %v4185, 1
    %v4504 = vpop.permute.xlu0 %4503
    %4505 = vrot.lane.b32.xlu0 %v4189, 1
    %v4506 = vpop.permute.xlu0 %4505
    %4507 = vrot.lane.b32.xlu0 %v4193, 1
    %v4508 = vpop.permute.xlu0 %4507
    %4509 = vrot.lane.b32.xlu0 %v4197, 1
    %v4510 = vpop.permute.xlu0 %4509
    %4511 = vrot.lane.b32.xlu0 %v4186, 1
    %v4512 = vpop.permute.xlu0 %4511
    %4513 = vrot.lane.b32.xlu0 %v4190, 1
    %v4514 = vpop.permute.xlu0 %4513
    %4515 = vrot.lane.b32.xlu0 %v4194, 1
    %v4516 = vpop.permute.xlu0 %4515
    %4517 = vrot.lane.b32.xlu0 %v4198, 1
    %v4518 = vpop.permute.xlu0 %4517
    %v4519 = vsel %vm461, %v4504, %v4512
    %v4520 = vsel %vm461, %v4506, %v4514
    %v4521 = vsel %vm461, %v4508, %v4516
    %v4522 = vsel %vm461, %v4510, %v4518
    %v4523 = vsel %vm461, %v4496, %v4504
    %v4524 = vsel %vm461, %v4498, %v4506
    %v4525 = vsel %vm461, %v4500, %v4508
    %v4526 = vsel %vm461, %v4502, %v4510
    %v4527 = vsel %vm461, %v4488, %v4496
    %v4528 = vsel %vm461, %v4490, %v4498
    %v4529 = vsel %vm461, %v4492, %v4500
    %v4530 = vsel %vm461, %v4494, %v4502
    %v4531 = vsel %vm461, %v4512, %v4488
    %v4532 = vsel %vm461, %v4514, %v4490
    %v4533 = vsel %vm461, %v4516, %v4492
    %v4534 = vsel %vm461, %v4518, %v4494
    %v4535 = vld [vmem:[#allocation3 + $0x180] sm:$0xff]
    %v4536 = vld [vmem:[#allocation3 + $0x188] sm:$0xff]
    %v4537 = vld [vmem:[#allocation3 + $0x190] sm:$0xff]
    %v4538 = vld [vmem:[#allocation3 + $0x198] sm:$0xff]
    %v4539 = vld [vmem:[#allocation3 + $0x1a0] sm:$0xff]
    %v4540 = vld [vmem:[#allocation3 + $0x1a8] sm:$0xff]
    %v4541 = vld [vmem:[#allocation3 + $0x1b0] sm:$0xff]
    %v4542 = vld [vmem:[#allocation3 + $0x1b8] sm:$0xff]
    %v4543 = vld [vmem:[#allocation3 + $0x1c0] sm:$0xff]
    %v4544 = vld [vmem:[#allocation3 + $0x1c8] sm:$0xff]
    %v4545 = vld [vmem:[#allocation3 + $0x1d0] sm:$0xff]
    %v4546 = vld [vmem:[#allocation3 + $0x1d8] sm:$0xff]
    %v4547 = vld [vmem:[#allocation3 + $0x1e0] sm:$0xff]
    %v4548 = vld [vmem:[#allocation3 + $0x1e8] sm:$0xff]
    %v4549 = vld [vmem:[#allocation3 + $0x1f0] sm:$0xff]
    %v4550 = vld [vmem:[#allocation3 + $0x1f8] sm:$0xff]
    %v4551 = vmul.f32 %v4531, %v4535
    %v4552 = vmul.f32 %v4527, %v4536
    %v4553 = vmul.f32 %v4523, %v4537
    %v4554 = vmul.f32 %v4519, %v4538
    %v4555 = vmul.f32 %v4532, %v4539
    %v4556 = vmul.f32 %v4528, %v4540
    %v4557 = vmul.f32 %v4524, %v4541
    %v4558 = vmul.f32 %v4520, %v4542
    %v4559 = vmul.f32 %v4533, %v4543
    %v4560 = vmul.f32 %v4529, %v4544
    %v4561 = vmul.f32 %v4525, %v4545
    %v4562 = vmul.f32 %v4521, %v4546
    %v4563 = vmul.f32 %v4534, %v4547
    %v4564 = vmul.f32 %v4530, %v4548
    %v4565 = vmul.f32 %v4526, %v4549
    %v4566 = vmul.f32 %v4522, %v4550
    %4567 = vst [vmem:[#allocation2 + $0x180] sm:$0xff] %v4551
    %4568 = vst [vmem:[#allocation2 + $0x188] sm:$0xff] %v4552
    %4569 = vst [vmem:[#allocation2 + $0x190] sm:$0xff] %v4553
    %4570 = vst [vmem:[#allocation2 + $0x198] sm:$0xff] %v4554
    %4571 = vst [vmem:[#allocation2 + $0x1a0] sm:$0xff] %v4555
    %4572 = vst [vmem:[#allocation2 + $0x1a8] sm:$0xff] %v4556
    %4573 = vst [vmem:[#allocation2 + $0x1b0] sm:$0xff] %v4557
    %4574 = vst [vmem:[#allocation2 + $0x1b8] sm:$0xff] %v4558
    %4575 = vst [vmem:[#allocation2 + $0x1c0] sm:$0xff] %v4559
    %4576 = vst [vmem:[#allocation2 + $0x1c8] sm:$0xff] %v4560
    %4577 = vst [vmem:[#allocation2 + $0x1d0] sm:$0xff] %v4561
    %4578 = vst [vmem:[#allocation2 + $0x1d8] sm:$0xff] %v4562
    %4579 = vst [vmem:[#allocation2 + $0x1e0] sm:$0xff] %v4563
    %4580 = vst [vmem:[#allocation2 + $0x1e8] sm:$0xff] %v4564
    %4581 = vst [vmem:[#allocation2 + $0x1f0] sm:$0xff] %v4565
    %4582 = vst [vmem:[#allocation2 + $0x1f8] sm:$0xff] %v4566
    %4583 = vst [vmem:[#allocation2 + $0x200] sm:$0xff] %v4183
    %4584 = vst [vmem:[#allocation2 + $0x208] sm:$0xff] %v4184
    %4585 = vst [vmem:[#allocation2 + $0x210] sm:$0xff] %v4185
    %4586 = vst [vmem:[#allocation2 + $0x218] sm:$0xff] %v4186
    %4587 = vst [vmem:[#allocation2 + $0x220] sm:$0xff] %v4187
    %4588 = vst [vmem:[#allocation2 + $0x228] sm:$0xff] %v4188
    %4589 = vst [vmem:[#allocation2 + $0x230] sm:$0xff] %v4189
    %4590 = vst [vmem:[#allocation2 + $0x238] sm:$0xff] %v4190
    %4591 = vst [vmem:[#allocation2 + $0x240] sm:$0xff] %v4191
    %4592 = vst [vmem:[#allocation2 + $0x248] sm:$0xff] %v4192
    %4593 = vst [vmem:[#allocation2 + $0x250] sm:$0xff] %v4193
    %4594 = vst [vmem:[#allocation2 + $0x258] sm:$0xff] %v4194
    %4595 = vst [vmem:[#allocation2 + $0x260] sm:$0xff] %v4195
    %4596 = vst [vmem:[#allocation2 + $0x268] sm:$0xff] %v4196
    %4597 = vst [vmem:[#allocation2 + $0x270] sm:$0xff] %v4197
    %4598 = vst [vmem:[#allocation2 + $0x278] sm:$0xff] %v4198
    %4599 = vrot.lane.b32.xlu0 %v4183, 127
    %v4600 = vpop.permute.xlu0 %4599
    %4601 = vrot.lane.b32.xlu0 %v4187, 127
    %v4602 = vpop.permute.xlu0 %4601
    %4603 = vrot.lane.b32.xlu0 %v4191, 127
    %v4604 = vpop.permute.xlu0 %4603
    %4605 = vrot.lane.b32.xlu0 %v4195, 127
    %v4606 = vpop.permute.xlu0 %4605
    %4607 = vrot.lane.b32.xlu0 %v4184, 127
    %v4608 = vpop.permute.xlu0 %4607
    %4609 = vrot.lane.b32.xlu0 %v4188, 127
    %v4610 = vpop.permute.xlu0 %4609
    %4611 = vrot.lane.b32.xlu0 %v4192, 127
    %v4612 = vpop.permute.xlu0 %4611
    %4613 = vrot.lane.b32.xlu0 %v4196, 127
    %v4614 = vpop.permute.xlu0 %4613
    %4615 = vrot.lane.b32.xlu0 %v4185, 127
    %v4616 = vpop.permute.xlu0 %4615
    %4617 = vrot.lane.b32.xlu0 %v4189, 127
    %v4618 = vpop.permute.xlu0 %4617
    %4619 = vrot.lane.b32.xlu0 %v4193, 127
    %v4620 = vpop.permute.xlu0 %4619
    %4621 = vrot.lane.b32.xlu0 %v4197, 127
    %v4622 = vpop.permute.xlu0 %4621
    %4623 = vrot.lane.b32.xlu0 %v4186, 127
    %v4624 = vpop.permute.xlu0 %4623
    %4625 = vrot.lane.b32.xlu0 %v4190, 127
    %v4626 = vpop.permute.xlu0 %4625
    %4627 = vrot.lane.b32.xlu0 %v4194, 127
    %v4628 = vpop.permute.xlu0 %4627
    %4629 = vrot.lane.b32.xlu0 %v4198, 127
    %v4630 = vpop.permute.xlu0 %4629
    %v4631 = vsel %vm574, %v4616, %v4624
    %v4632 = vsel %vm574, %v4618, %v4626
    %v4633 = vsel %vm574, %v4620, %v4628
    %v4634 = vsel %vm574, %v4622, %v4630
    %v4635 = vsel %vm574, %v4608, %v4616
    %v4636 = vsel %vm574, %v4610, %v4618
    %v4637 = vsel %vm574, %v4612, %v4620
    %v4638 = vsel %vm574, %v4614, %v4622
    %v4639 = vsel %vm574, %v4600, %v4608
    %v4640 = vsel %vm574, %v4602, %v4610
    %v4641 = vsel %vm574, %v4604, %v4612
    %v4642 = vsel %vm574, %v4606, %v4614
    %v4643 = vsel %vm574, %v4624, %v4600
    %v4644 = vsel %vm574, %v4626, %v4602
    %v4645 = vsel %vm574, %v4628, %v4604
    %v4646 = vsel %vm574, %v4630, %v4606
    %v4647 = vld [vmem:[#allocation3 + $0x200] sm:$0xff]
    %v4648 = vld [vmem:[#allocation3 + $0x208] sm:$0xff]
    %v4649 = vld [vmem:[#allocation3 + $0x210] sm:$0xff]
    %v4650 = vld [vmem:[#allocation3 + $0x218] sm:$0xff]
    %v4651 = vld [vmem:[#allocation3 + $0x220] sm:$0xff]
    %v4652 = vld [vmem:[#allocation3 + $0x228] sm:$0xff]
    %v4653 = vld [vmem:[#allocation3 + $0x230] sm:$0xff]
    %v4654 = vld [vmem:[#allocation3 + $0x238] sm:$0xff]
    %v4655 = vld [vmem:[#allocation3 + $0x240] sm:$0xff]
    %v4656 = vld [vmem:[#allocation3 + $0x248] sm:$0xff]
    %v4657 = vld [vmem:[#allocation3 + $0x250] sm:$0xff]
    %v4658 = vld [vmem:[#allocation3 + $0x258] sm:$0xff]
    %v4659 = vld [vmem:[#allocation3 + $0x260] sm:$0xff]
    %v4660 = vld [vmem:[#allocation3 + $0x268] sm:$0xff]
    %v4661 = vld [vmem:[#allocation3 + $0x270] sm:$0xff]
    %v4662 = vld [vmem:[#allocation3 + $0x278] sm:$0xff]
    %v4663 = vmul.f32 %v4639, %v4647
    %v4664 = vmul.f32 %v4635, %v4648
    %v4665 = vmul.f32 %v4631, %v4649
    %v4666 = vmul.f32 %v4643, %v4650
    %v4667 = vmul.f32 %v4640, %v4651
    %v4668 = vmul.f32 %v4636, %v4652
    %v4669 = vmul.f32 %v4632, %v4653
    %v4670 = vmul.f32 %v4644, %v4654
    %v4671 = vmul.f32 %v4641, %v4655
    %v4672 = vmul.f32 %v4637, %v4656
    %v4673 = vmul.f32 %v4633, %v4657
    %v4674 = vmul.f32 %v4645, %v4658
    %v4675 = vmul.f32 %v4642, %v4659
    %v4676 = vmul.f32 %v4638, %v4660
    %v4677 = vmul.f32 %v4634, %v4661
    %v4678 = vmul.f32 %v4646, %v4662
    %4679 = vst [vmem:[#allocation2 + $0x280] sm:$0xff] %v4663
    %4680 = vst [vmem:[#allocation2 + $0x288] sm:$0xff] %v4664
    %4681 = vst [vmem:[#allocation2 + $0x290] sm:$0xff] %v4665
    %4682 = vst [vmem:[#allocation2 + $0x298] sm:$0xff] %v4666
    %4683 = vst [vmem:[#allocation2 + $0x2a0] sm:$0xff] %v4667
    %4684 = vst [vmem:[#allocation2 + $0x2a8] sm:$0xff] %v4668
    %4685 = vst [vmem:[#allocation2 + $0x2b0] sm:$0xff] %v4669
    %4686 = vst [vmem:[#allocation2 + $0x2b8] sm:$0xff] %v4670
    %4687 = vst [vmem:[#allocation2 + $0x2c0] sm:$0xff] %v4671
    %4688 = vst [vmem:[#allocation2 + $0x2c8] sm:$0xff] %v4672
    %4689 = vst [vmem:[#allocation2 + $0x2d0] sm:$0xff] %v4673
    %4690 = vst [vmem:[#allocation2 + $0x2d8] sm:$0xff] %v4674
    %4691 = vst [vmem:[#allocation2 + $0x2e0] sm:$0xff] %v4675
    %4692 = vst [vmem:[#allocation2 + $0x2e8] sm:$0xff] %v4676
    %4693 = vst [vmem:[#allocation2 + $0x2f0] sm:$0xff] %v4677
    %4694 = vst [vmem:[#allocation2 + $0x2f8] sm:$0xff] %v4678
    %4695 = vrot.lane.b32.xlu0 %v4183, 113
    %v4696 = vpop.permute.xlu0 %4695
    %4697 = vrot.lane.b32.xlu0 %v4187, 113
    %v4698 = vpop.permute.xlu0 %4697
    %4699 = vrot.lane.b32.xlu0 %v4191, 113
    %v4700 = vpop.permute.xlu0 %4699
    %4701 = vrot.lane.b32.xlu0 %v4195, 113
    %v4702 = vpop.permute.xlu0 %4701
    %4703 = vrot.lane.b32.xlu0 %v4184, 113
    %v4704 = vpop.permute.xlu0 %4703
    %4705 = vrot.lane.b32.xlu0 %v4188, 113
    %v4706 = vpop.permute.xlu0 %4705
    %4707 = vrot.lane.b32.xlu0 %v4192, 113
    %v4708 = vpop.permute.xlu0 %4707
    %4709 = vrot.lane.b32.xlu0 %v4196, 113
    %v4710 = vpop.permute.xlu0 %4709
    %4711 = vrot.lane.b32.xlu0 %v4185, 113
    %v4712 = vpop.permute.xlu0 %4711
    %4713 = vrot.lane.b32.xlu0 %v4189, 113
    %v4714 = vpop.permute.xlu0 %4713
    %4715 = vrot.lane.b32.xlu0 %v4193, 113
    %v4716 = vpop.permute.xlu0 %4715
    %4717 = vrot.lane.b32.xlu0 %v4197, 113
    %v4718 = vpop.permute.xlu0 %4717
    %4719 = vrot.lane.b32.xlu0 %v4186, 113
    %v4720 = vpop.permute.xlu0 %4719
    %4721 = vrot.lane.b32.xlu0 %v4190, 113
    %v4722 = vpop.permute.xlu0 %4721
    %4723 = vrot.lane.b32.xlu0 %v4194, 113
    %v4724 = vpop.permute.xlu0 %4723
    %4725 = vrot.lane.b32.xlu0 %v4198, 113
    %v4726 = vpop.permute.xlu0 %4725
    %v4727 = vsel %vm671, %v4712, %v4720
    %v4728 = vsel %vm671, %v4714, %v4722
    %v4729 = vsel %vm671, %v4716, %v4724
    %v4730 = vsel %vm671, %v4718, %v4726
    %v4731 = vsel %vm671, %v4704, %v4712
    %v4732 = vsel %vm671, %v4706, %v4714
    %v4733 = vsel %vm671, %v4708, %v4716
    %v4734 = vsel %vm671, %v4710, %v4718
    %v4735 = vsel %vm671, %v4696, %v4704
    %v4736 = vsel %vm671, %v4698, %v4706
    %v4737 = vsel %vm671, %v4700, %v4708
    %v4738 = vsel %vm671, %v4702, %v4710
    %v4739 = vsel %vm671, %v4720, %v4696
    %v4740 = vsel %vm671, %v4722, %v4698
    %v4741 = vsel %vm671, %v4724, %v4700
    %v4742 = vsel %vm671, %v4726, %v4702
    %v4743 = vld [vmem:[#allocation3 + $0x280] sm:$0xff]
    %v4744 = vld [vmem:[#allocation3 + $0x288] sm:$0xff]
    %v4745 = vld [vmem:[#allocation3 + $0x290] sm:$0xff]
    %v4746 = vld [vmem:[#allocation3 + $0x298] sm:$0xff]
    %v4747 = vld [vmem:[#allocation3 + $0x2a0] sm:$0xff]
    %v4748 = vld [vmem:[#allocation3 + $0x2a8] sm:$0xff]
    %v4749 = vld [vmem:[#allocation3 + $0x2b0] sm:$0xff]
    %v4750 = vld [vmem:[#allocation3 + $0x2b8] sm:$0xff]
    %v4751 = vld [vmem:[#allocation3 + $0x2c0] sm:$0xff]
    %v4752 = vld [vmem:[#allocation3 + $0x2c8] sm:$0xff]
    %v4753 = vld [vmem:[#allocation3 + $0x2d0] sm:$0xff]
    %v4754 = vld [vmem:[#allocation3 + $0x2d8] sm:$0xff]
    %v4755 = vld [vmem:[#allocation3 + $0x2e0] sm:$0xff]
    %v4756 = vld [vmem:[#allocation3 + $0x2e8] sm:$0xff]
    %v4757 = vld [vmem:[#allocation3 + $0x2f0] sm:$0xff]
    %v4758 = vld [vmem:[#allocation3 + $0x2f8] sm:$0xff]
    %v4759 = vmul.f32 %v4735, %v4743
    %v4760 = vmul.f32 %v4731, %v4744
    %v4761 = vmul.f32 %v4727, %v4745
    %v4762 = vmul.f32 %v4739, %v4746
    %v4763 = vmul.f32 %v4736, %v4747
    %v4764 = vmul.f32 %v4732, %v4748
    %v4765 = vmul.f32 %v4728, %v4749
    %v4766 = vmul.f32 %v4740, %v4750
    %v4767 = vmul.f32 %v4737, %v4751
    %v4768 = vmul.f32 %v4733, %v4752
    %v4769 = vmul.f32 %v4729, %v4753
    %v4770 = vmul.f32 %v4741, %v4754
    %v4771 = vmul.f32 %v4738, %v4755
    %v4772 = vmul.f32 %v4734, %v4756
    %v4773 = vmul.f32 %v4730, %v4757
    %v4774 = vmul.f32 %v4742, %v4758
    %4775 = vst [vmem:[#allocation2 + $0x300] sm:$0xff] %v4759
    %4776 = vst [vmem:[#allocation2 + $0x308] sm:$0xff] %v4760
    %4777 = vst [vmem:[#allocation2 + $0x310] sm:$0xff] %v4761
    %4778 = vst [vmem:[#allocation2 + $0x318] sm:$0xff] %v4762
    %4779 = vst [vmem:[#allocation2 + $0x320] sm:$0xff] %v4763
    %4780 = vst [vmem:[#allocation2 + $0x328] sm:$0xff] %v4764
    %4781 = vst [vmem:[#allocation2 + $0x330] sm:$0xff] %v4765
    %4782 = vst [vmem:[#allocation2 + $0x338] sm:$0xff] %v4766
    %4783 = vst [vmem:[#allocation2 + $0x340] sm:$0xff] %v4767
    %4784 = vst [vmem:[#allocation2 + $0x348] sm:$0xff] %v4768
    %4785 = vst [vmem:[#allocation2 + $0x350] sm:$0xff] %v4769
    %4786 = vst [vmem:[#allocation2 + $0x358] sm:$0xff] %v4770
    %4787 = vst [vmem:[#allocation2 + $0x360] sm:$0xff] %v4771
    %4788 = vst [vmem:[#allocation2 + $0x368] sm:$0xff] %v4772
    %4789 = vst [vmem:[#allocation2 + $0x370] sm:$0xff] %v4773
    %4790 = vst [vmem:[#allocation2 + $0x378] sm:$0xff] %v4774
    %4791 = vrot.lane.b32.xlu0 %v4183, 112
    %v4792 = vpop.permute.xlu0 %4791
    %4793 = vrot.lane.b32.xlu0 %v4187, 112
    %v4794 = vpop.permute.xlu0 %4793
    %4795 = vrot.lane.b32.xlu0 %v4191, 112
    %v4796 = vpop.permute.xlu0 %4795
    %4797 = vrot.lane.b32.xlu0 %v4195, 112
    %v4798 = vpop.permute.xlu0 %4797
    %4799 = vrot.lane.b32.xlu0 %v4184, 112
    %v4800 = vpop.permute.xlu0 %4799
    %4801 = vrot.lane.b32.xlu0 %v4188, 112
    %v4802 = vpop.permute.xlu0 %4801
    %4803 = vrot.lane.b32.xlu0 %v4192, 112
    %v4804 = vpop.permute.xlu0 %4803
    %4805 = vrot.lane.b32.xlu0 %v4196, 112
    %v4806 = vpop.permute.xlu0 %4805
    %4807 = vrot.lane.b32.xlu0 %v4185, 112
    %v4808 = vpop.permute.xlu0 %4807
    %4809 = vrot.lane.b32.xlu0 %v4189, 112
    %v4810 = vpop.permute.xlu0 %4809
    %4811 = vrot.lane.b32.xlu0 %v4193, 112
    %v4812 = vpop.permute.xlu0 %4811
    %4813 = vrot.lane.b32.xlu0 %v4197, 112
    %v4814 = vpop.permute.xlu0 %4813
    %4815 = vrot.lane.b32.xlu0 %v4186, 112
    %v4816 = vpop.permute.xlu0 %4815
    %4817 = vrot.lane.b32.xlu0 %v4190, 112
    %v4818 = vpop.permute.xlu0 %4817
    %4819 = vrot.lane.b32.xlu0 %v4194, 112
    %v4820 = vpop.permute.xlu0 %4819
    %4821 = vrot.lane.b32.xlu0 %v4198, 112
    %v4822 = vpop.permute.xlu0 %4821
    %v4823 = vsel %vm768, %v4808, %v4816
    %v4824 = vsel %vm768, %v4810, %v4818
    %v4825 = vsel %vm768, %v4812, %v4820
    %v4826 = vsel %vm768, %v4814, %v4822
    %v4827 = vsel %vm768, %v4800, %v4808
    %v4828 = vsel %vm768, %v4802, %v4810
    %v4829 = vsel %vm768, %v4804, %v4812
    %v4830 = vsel %vm768, %v4806, %v4814
    %v4831 = vsel %vm768, %v4792, %v4800
    %v4832 = vsel %vm768, %v4794, %v4802
    %v4833 = vsel %vm768, %v4796, %v4804
    %v4834 = vsel %vm768, %v4798, %v4806
    %v4835 = vsel %vm768, %v4816, %v4792
    %v4836 = vsel %vm768, %v4818, %v4794
    %v4837 = vsel %vm768, %v4820, %v4796
    %v4838 = vsel %vm768, %v4822, %v4798
    %v4839 = vld [vmem:[#allocation3 + $0x300] sm:$0xff]
    %v4840 = vld [vmem:[#allocation3 + $0x308] sm:$0xff]
    %v4841 = vld [vmem:[#allocation3 + $0x310] sm:$0xff]
    %v4842 = vld [vmem:[#allocation3 + $0x318] sm:$0xff]
    %v4843 = vld [vmem:[#allocation3 + $0x320] sm:$0xff]
    %v4844 = vld [vmem:[#allocation3 + $0x328] sm:$0xff]
    %v4845 = vld [vmem:[#allocation3 + $0x330] sm:$0xff]
    %v4846 = vld [vmem:[#allocation3 + $0x338] sm:$0xff]
    %v4847 = vld [vmem:[#allocation3 + $0x340] sm:$0xff]
    %v4848 = vld [vmem:[#allocation3 + $0x348] sm:$0xff]
    %v4849 = vld [vmem:[#allocation3 + $0x350] sm:$0xff]
    %v4850 = vld [vmem:[#allocation3 + $0x358] sm:$0xff]
    %v4851 = vld [vmem:[#allocation3 + $0x360] sm:$0xff]
    %v4852 = vld [vmem:[#allocation3 + $0x368] sm:$0xff]
    %v4853 = vld [vmem:[#allocation3 + $0x370] sm:$0xff]
    %v4854 = vld [vmem:[#allocation3 + $0x378] sm:$0xff]
    %v4855 = vmul.f32 %v4831, %v4839
    %v4856 = vmul.f32 %v4827, %v4840
    %v4857 = vmul.f32 %v4823, %v4841
    %v4858 = vmul.f32 %v4835, %v4842
    %v4859 = vmul.f32 %v4832, %v4843
    %v4860 = vmul.f32 %v4828, %v4844
    %v4861 = vmul.f32 %v4824, %v4845
    %v4862 = vmul.f32 %v4836, %v4846
    %v4863 = vmul.f32 %v4833, %v4847
    %v4864 = vmul.f32 %v4829, %v4848
    %v4865 = vmul.f32 %v4825, %v4849
    %v4866 = vmul.f32 %v4837, %v4850
    %v4867 = vmul.f32 %v4834, %v4851
    %v4868 = vmul.f32 %v4830, %v4852
    %v4869 = vmul.f32 %v4826, %v4853
    %v4870 = vmul.f32 %v4838, %v4854
    %4871 = vst [vmem:[#allocation2 + $0x380] sm:$0xff] %v4855
    %4872 = vst [vmem:[#allocation2 + $0x388] sm:$0xff] %v4856
    %4873 = vst [vmem:[#allocation2 + $0x390] sm:$0xff] %v4857
    %4874 = vst [vmem:[#allocation2 + $0x398] sm:$0xff] %v4858
    %4875 = vst [vmem:[#allocation2 + $0x3a0] sm:$0xff] %v4859
    %4876 = vst [vmem:[#allocation2 + $0x3a8] sm:$0xff] %v4860
    %4877 = vst [vmem:[#allocation2 + $0x3b0] sm:$0xff] %v4861
    %4878 = vst [vmem:[#allocation2 + $0x3b8] sm:$0xff] %v4862
    %4879 = vst [vmem:[#allocation2 + $0x3c0] sm:$0xff] %v4863
    %4880 = vst [vmem:[#allocation2 + $0x3c8] sm:$0xff] %v4864
    %4881 = vst [vmem:[#allocation2 + $0x3d0] sm:$0xff] %v4865
    %4882 = vst [vmem:[#allocation2 + $0x3d8] sm:$0xff] %v4866
    %4883 = vst [vmem:[#allocation2 + $0x3e0] sm:$0xff] %v4867
    %4884 = vst [vmem:[#allocation2 + $0x3e8] sm:$0xff] %v4868
    %4885 = vst [vmem:[#allocation2 + $0x3f0] sm:$0xff] %v4869
    %4886 = vst [vmem:[#allocation2 + $0x3f8] sm:$0xff] %v4870
    %4887 = vrot.lane.b32.xlu0 %v4183, 111
    %v4888 = vpop.permute.xlu0 %4887
    %4889 = vrot.lane.b32.xlu0 %v4187, 111
    %v4890 = vpop.permute.xlu0 %4889
    %4891 = vrot.lane.b32.xlu0 %v4191, 111
    %v4892 = vpop.permute.xlu0 %4891
    %4893 = vrot.lane.b32.xlu0 %v4195, 111
    %v4894 = vpop.permute.xlu0 %4893
    %4895 = vrot.lane.b32.xlu0 %v4184, 111
    %v4896 = vpop.permute.xlu0 %4895
    %4897 = vrot.lane.b32.xlu0 %v4188, 111
    %v4898 = vpop.permute.xlu0 %4897
    %4899 = vrot.lane.b32.xlu0 %v4192, 111
    %v4900 = vpop.permute.xlu0 %4899
    %4901 = vrot.lane.b32.xlu0 %v4196, 111
    %v4902 = vpop.permute.xlu0 %4901
    %4903 = vrot.lane.b32.xlu0 %v4185, 111
    %v4904 = vpop.permute.xlu0 %4903
    %4905 = vrot.lane.b32.xlu0 %v4189, 111
    %v4906 = vpop.permute.xlu0 %4905
    %4907 = vrot.lane.b32.xlu0 %v4193, 111
    %v4908 = vpop.permute.xlu0 %4907
    %4909 = vrot.lane.b32.xlu0 %v4197, 111
    %v4910 = vpop.permute.xlu0 %4909
    %4911 = vrot.lane.b32.xlu0 %v4186, 111
    %v4912 = vpop.permute.xlu0 %4911
    %4913 = vrot.lane.b32.xlu0 %v4190, 111
    %v4914 = vpop.permute.xlu0 %4913
    %4915 = vrot.lane.b32.xlu0 %v4194, 111
    %v4916 = vpop.permute.xlu0 %4915
    %4917 = vrot.lane.b32.xlu0 %v4198, 111
    %v4918 = vpop.permute.xlu0 %4917
    %v4919 = vsel %vm865, %v4904, %v4912
    %v4920 = vsel %vm865, %v4906, %v4914
    %v4921 = vsel %vm865, %v4908, %v4916
    %v4922 = vsel %vm865, %v4910, %v4918
    %v4923 = vsel %vm865, %v4896, %v4904
    %v4924 = vsel %vm865, %v4898, %v4906
    %v4925 = vsel %vm865, %v4900, %v4908
    %v4926 = vsel %vm865, %v4902, %v4910
    %v4927 = vsel %vm865, %v4888, %v4896
    %v4928 = vsel %vm865, %v4890, %v4898
    %v4929 = vsel %vm865, %v4892, %v4900
    %v4930 = vsel %vm865, %v4894, %v4902
    %v4931 = vsel %vm865, %v4912, %v4888
    %v4932 = vsel %vm865, %v4914, %v4890
    %v4933 = vsel %vm865, %v4916, %v4892
    %v4934 = vsel %vm865, %v4918, %v4894
    %v4935 = vld [vmem:[#allocation3 + $0x380] sm:$0xff]
    %v4936 = vld [vmem:[#allocation3 + $0x388] sm:$0xff]
    %v4937 = vld [vmem:[#allocation3 + $0x390] sm:$0xff]
    %v4938 = vld [vmem:[#allocation3 + $0x398] sm:$0xff]
    %v4939 = vld [vmem:[#allocation3 + $0x3a0] sm:$0xff]
    %v4940 = vld [vmem:[#allocation3 + $0x3a8] sm:$0xff]
    %v4941 = vld [vmem:[#allocation3 + $0x3b0] sm:$0xff]
    %v4942 = vld [vmem:[#allocation3 + $0x3b8] sm:$0xff]
    %v4943 = vld [vmem:[#allocation3 + $0x3c0] sm:$0xff]
    %v4944 = vld [vmem:[#allocation3 + $0x3c8] sm:$0xff]
    %v4945 = vld [vmem:[#allocation3 + $0x3d0] sm:$0xff]
    %v4946 = vld [vmem:[#allocation3 + $0x3d8] sm:$0xff]
    %v4947 = vld [vmem:[#allocation3 + $0x3e0] sm:$0xff]
    %v4948 = vld [vmem:[#allocation3 + $0x3e8] sm:$0xff]
    %v4949 = vld [vmem:[#allocation3 + $0x3f0] sm:$0xff]
    %v4950 = vld [vmem:[#allocation3 + $0x3f8] sm:$0xff]
    %v4951 = vmul.f32 %v4927, %v4935
    %v4952 = vmul.f32 %v4923, %v4936
    %v4953 = vmul.f32 %v4919, %v4937
    %v4954 = vmul.f32 %v4931, %v4938
    %v4955 = vmul.f32 %v4928, %v4939
    %v4956 = vmul.f32 %v4924, %v4940
    %v4957 = vmul.f32 %v4920, %v4941
    %v4958 = vmul.f32 %v4932, %v4942
    %v4959 = vmul.f32 %v4929, %v4943
    %v4960 = vmul.f32 %v4925, %v4944
    %v4961 = vmul.f32 %v4921, %v4945
    %v4962 = vmul.f32 %v4933, %v4946
    %v4963 = vmul.f32 %v4930, %v4947
    %v4964 = vmul.f32 %v4926, %v4948
    %v4965 = vmul.f32 %v4922, %v4949
    %v4966 = vmul.f32 %v4934, %v4950
    %4967 = vst [vmem:[#allocation2 + $0x400] sm:$0xff] %v4951
    %4968 = vst [vmem:[#allocation2 + $0x408] sm:$0xff] %v4952
    %4969 = vst [vmem:[#allocation2 + $0x410] sm:$0xff] %v4953
    %4970 = vst [vmem:[#allocation2 + $0x418] sm:$0xff] %v4954
    %4971 = vst [vmem:[#allocation2 + $0x420] sm:$0xff] %v4955
    %4972 = vst [vmem:[#allocation2 + $0x428] sm:$0xff] %v4956
    %4973 = vst [vmem:[#allocation2 + $0x430] sm:$0xff] %v4957
    %4974 = vst [vmem:[#allocation2 + $0x438] sm:$0xff] %v4958
    %4975 = vst [vmem:[#allocation2 + $0x440] sm:$0xff] %v4959
    %4976 = vst [vmem:[#allocation2 + $0x448] sm:$0xff] %v4960
    %4977 = vst [vmem:[#allocation2 + $0x450] sm:$0xff] %v4961
    %4978 = vst [vmem:[#allocation2 + $0x458] sm:$0xff] %v4962
    %4979 = vst [vmem:[#allocation2 + $0x460] sm:$0xff] %v4963
    %4980 = vst [vmem:[#allocation2 + $0x468] sm:$0xff] %v4964
    %4981 = vst [vmem:[#allocation2 + $0x470] sm:$0xff] %v4965
    %4982 = vst [vmem:[#allocation2 + $0x478] sm:$0xff] %v4966
    %v4983 = vld [vmem:[#allocation6 + $0x120] sm:$0xff]
    %v4984 = vld [vmem:[#allocation6 + $0x128] sm:$0xff]
    %v4985 = vld [vmem:[#allocation6 + $0x130] sm:$0xff]
    %v4986 = vld [vmem:[#allocation6 + $0x138] sm:$0xff]
    %v4987 = vld [vmem:[#allocation6 + $0x140] sm:$0xff]
    %v4988 = vld [vmem:[#allocation6 + $0x148] sm:$0xff]
    %v4989 = vld [vmem:[#allocation6 + $0x150] sm:$0xff]
    %v4990 = vld [vmem:[#allocation6 + $0x158] sm:$0xff]
    %v4991 = vld [vmem:[#allocation6 + $0x160] sm:$0xff]
    %v4992 = vld [vmem:[#allocation6 + $0x168] sm:$0xff]
    %v4993 = vld [vmem:[#allocation6 + $0x170] sm:$0xff]
    %v4994 = vld [vmem:[#allocation6 + $0x178] sm:$0xff]
    %v4995 = vld [vmem:[#allocation2] sm:$0xff]
    %v4996 = vld [vmem:[#allocation2 + $0x8] sm:$0xff]
    %v4997 = vld [vmem:[#allocation2 + $0x10] sm:$0xff]
    %v4998 = vld [vmem:[#allocation2 + $0x18] sm:$0xff]
    %v4999 = vld [vmem:[#allocation2 + $0x20] sm:$0xff]
    %v5000 = vld [vmem:[#allocation2 + $0x28] sm:$0xff]
    %v5001 = vld [vmem:[#allocation2 + $0x30] sm:$0xff]
    %v5002 = vld [vmem:[#allocation2 + $0x38] sm:$0xff]
    %v5003 = vld [vmem:[#allocation2 + $0x40] sm:$0xff]
    %v5004 = vld [vmem:[#allocation2 + $0x48] sm:$0xff]
    %v5005 = vld [vmem:[#allocation2 + $0x50] sm:$0xff]
    %v5006 = vld [vmem:[#allocation2 + $0x58] sm:$0xff]
    %v5007 = vld [vmem:[#allocation2 + $0x60] sm:$0xff]
    %v5008 = vld [vmem:[#allocation2 + $0x68] sm:$0xff]
    %v5009 = vld [vmem:[#allocation2 + $0x70] sm:$0xff]
    %v5010 = vld [vmem:[#allocation2 + $0x78] sm:$0xff]
    %v5011 = vld [vmem:[#allocation2 + $0x80] sm:$0xff]
    %v5012 = vld [vmem:[#allocation2 + $0x88] sm:$0xff]
    %v5013 = vld [vmem:[#allocation2 + $0x90] sm:$0xff]
    %v5014 = vld [vmem:[#allocation2 + $0x98] sm:$0xff]
    %v5015 = vld [vmem:[#allocation2 + $0xa0] sm:$0xff]
    %v5016 = vld [vmem:[#allocation2 + $0xa8] sm:$0xff]
    %v5017 = vld [vmem:[#allocation2 + $0xb0] sm:$0xff]
    %v5018 = vld [vmem:[#allocation2 + $0xb8] sm:$0xff]
    %v5019 = vld [vmem:[#allocation2 + $0xc0] sm:$0xff]
    %v5020 = vld [vmem:[#allocation2 + $0xc8] sm:$0xff]
    %v5021 = vld [vmem:[#allocation2 + $0xd0] sm:$0xff]
    %v5022 = vld [vmem:[#allocation2 + $0xd8] sm:$0xff]
    %v5023 = vld [vmem:[#allocation2 + $0xe0] sm:$0xff]
    %v5024 = vld [vmem:[#allocation2 + $0xe8] sm:$0xff]
    %v5025 = vld [vmem:[#allocation2 + $0xf0] sm:$0xff]
    %v5026 = vld [vmem:[#allocation2 + $0xf8] sm:$0xff]
    %v5027 = vld [vmem:[#allocation2 + $0x100] sm:$0xff]
    %v5028 = vld [vmem:[#allocation2 + $0x108] sm:$0xff]
    %v5029 = vld [vmem:[#allocation2 + $0x110] sm:$0xff]
    %v5030 = vld [vmem:[#allocation2 + $0x118] sm:$0xff]
    %v5031 = vld [vmem:[#allocation2 + $0x120] sm:$0xff]
    %v5032 = vld [vmem:[#allocation2 + $0x128] sm:$0xff]
    %v5033 = vld [vmem:[#allocation2 + $0x130] sm:$0xff]
    %v5034 = vld [vmem:[#allocation2 + $0x138] sm:$0xff]
    %v5035 = vld [vmem:[#allocation2 + $0x140] sm:$0xff]
    %v5036 = vld [vmem:[#allocation2 + $0x148] sm:$0xff]
    %v5037 = vld [vmem:[#allocation2 + $0x150] sm:$0xff]
    %v5038 = vld [vmem:[#allocation2 + $0x158] sm:$0xff]
    %v5039 = vld [vmem:[#allocation2 + $0x160] sm:$0xff]
    %v5040 = vld [vmem:[#allocation2 + $0x168] sm:$0xff]
    %v5041 = vld [vmem:[#allocation2 + $0x170] sm:$0xff]
    %v5042 = vld [vmem:[#allocation2 + $0x178] sm:$0xff]
    %v5043 = vld [vmem:[#allocation2 + $0x180] sm:$0xff]
    %v5044 = vld [vmem:[#allocation2 + $0x188] sm:$0xff]
    %v5045 = vld [vmem:[#allocation2 + $0x190] sm:$0xff]
    %v5046 = vld [vmem:[#allocation2 + $0x198] sm:$0xff]
    %v5047 = vld [vmem:[#allocation2 + $0x1a0] sm:$0xff]
    %v5048 = vld [vmem:[#allocation2 + $0x1a8] sm:$0xff]
    %v5049 = vld [vmem:[#allocation2 + $0x1b0] sm:$0xff]
    %v5050 = vld [vmem:[#allocation2 + $0x1b8] sm:$0xff]
    %v5051 = vld [vmem:[#allocation2 + $0x1c0] sm:$0xff]
    %v5052 = vld [vmem:[#allocation2 + $0x1c8] sm:$0xff]
    %v5053 = vld [vmem:[#allocation2 + $0x1d0] sm:$0xff]
    %v5054 = vld [vmem:[#allocation2 + $0x1d8] sm:$0xff]
    %v5055 = vld [vmem:[#allocation2 + $0x1e0] sm:$0xff]
    %v5056 = vld [vmem:[#allocation2 + $0x1e8] sm:$0xff]
    %v5057 = vld [vmem:[#allocation2 + $0x1f0] sm:$0xff]
    %v5058 = vld [vmem:[#allocation2 + $0x1f8] sm:$0xff]
    %v5059 = vld [vmem:[#allocation2 + $0x200] sm:$0xff]
    %v5060 = vld [vmem:[#allocation2 + $0x208] sm:$0xff]
    %v5061 = vld [vmem:[#allocation2 + $0x210] sm:$0xff]
    %v5062 = vld [vmem:[#allocation2 + $0x218] sm:$0xff]
    %v5063 = vld [vmem:[#allocation2 + $0x220] sm:$0xff]
    %v5064 = vld [vmem:[#allocation2 + $0x228] sm:$0xff]
    %v5065 = vld [vmem:[#allocation2 + $0x230] sm:$0xff]
    %v5066 = vld [vmem:[#allocation2 + $0x238] sm:$0xff]
    %v5067 = vld [vmem:[#allocation2 + $0x240] sm:$0xff]
    %v5068 = vld [vmem:[#allocation2 + $0x248] sm:$0xff]
    %v5069 = vld [vmem:[#allocation2 + $0x250] sm:$0xff]
    %v5070 = vld [vmem:[#allocation2 + $0x258] sm:$0xff]
    %v5071 = vld [vmem:[#allocation2 + $0x260] sm:$0xff]
    %v5072 = vld [vmem:[#allocation2 + $0x268] sm:$0xff]
    %v5073 = vld [vmem:[#allocation2 + $0x270] sm:$0xff]
    %v5074 = vld [vmem:[#allocation2 + $0x278] sm:$0xff]
    %v5075 = vld [vmem:[#allocation2 + $0x280] sm:$0xff]
    %v5076 = vld [vmem:[#allocation2 + $0x288] sm:$0xff]
    %v5077 = vld [vmem:[#allocation2 + $0x290] sm:$0xff]
    %v5078 = vld [vmem:[#allocation2 + $0x298] sm:$0xff]
    %v5079 = vld [vmem:[#allocation2 + $0x2a0] sm:$0xff]
    %v5080 = vld [vmem:[#allocation2 + $0x2a8] sm:$0xff]
    %v5081 = vld [vmem:[#allocation2 + $0x2b0] sm:$0xff]
    %v5082 = vld [vmem:[#allocation2 + $0x2b8] sm:$0xff]
    %v5083 = vld [vmem:[#allocation2 + $0x2c0] sm:$0xff]
    %v5084 = vld [vmem:[#allocation2 + $0x2c8] sm:$0xff]
    %v5085 = vld [vmem:[#allocation2 + $0x2d0] sm:$0xff]
    %v5086 = vld [vmem:[#allocation2 + $0x2d8] sm:$0xff]
    %v5087 = vld [vmem:[#allocation2 + $0x2e0] sm:$0xff]
    %v5088 = vld [vmem:[#allocation2 + $0x2e8] sm:$0xff]
    %v5089 = vld [vmem:[#allocation2 + $0x2f0] sm:$0xff]
    %v5090 = vld [vmem:[#allocation2 + $0x2f8] sm:$0xff]
    %v5091 = vld [vmem:[#allocation2 + $0x300] sm:$0xff]
    %v5092 = vld [vmem:[#allocation2 + $0x308] sm:$0xff]
    %v5093 = vld [vmem:[#allocation2 + $0x310] sm:$0xff]
    %v5094 = vld [vmem:[#allocation2 + $0x318] sm:$0xff]
    %v5095 = vld [vmem:[#allocation2 + $0x320] sm:$0xff]
    %v5096 = vld [vmem:[#allocation2 + $0x328] sm:$0xff]
    %v5097 = vld [vmem:[#allocation2 + $0x330] sm:$0xff]
    %v5098 = vld [vmem:[#allocation2 + $0x338] sm:$0xff]
    %v5099 = vld [vmem:[#allocation2 + $0x340] sm:$0xff]
    %v5100 = vld [vmem:[#allocation2 + $0x348] sm:$0xff]
    %v5101 = vld [vmem:[#allocation2 + $0x350] sm:$0xff]
    %v5102 = vld [vmem:[#allocation2 + $0x358] sm:$0xff]
    %v5103 = vld [vmem:[#allocation2 + $0x360] sm:$0xff]
    %v5104 = vld [vmem:[#allocation2 + $0x368] sm:$0xff]
    %v5105 = vld [vmem:[#allocation2 + $0x370] sm:$0xff]
    %v5106 = vld [vmem:[#allocation2 + $0x378] sm:$0xff]
    %v5107 = vld [vmem:[#allocation2 + $0x380] sm:$0xff]
    %v5108 = vld [vmem:[#allocation2 + $0x388] sm:$0xff]
    %v5109 = vld [vmem:[#allocation2 + $0x390] sm:$0xff]
    %v5110 = vld [vmem:[#allocation2 + $0x398] sm:$0xff]
    %v5111 = vld [vmem:[#allocation2 + $0x3a0] sm:$0xff]
    %v5112 = vld [vmem:[#allocation2 + $0x3a8] sm:$0xff]
    %v5113 = vld [vmem:[#allocation2 + $0x3b0] sm:$0xff]
    %v5114 = vld [vmem:[#allocation2 + $0x3b8] sm:$0xff]
    %v5115 = vld [vmem:[#allocation2 + $0x3c0] sm:$0xff]
    %v5116 = vld [vmem:[#allocation2 + $0x3c8] sm:$0xff]
    %v5117 = vld [vmem:[#allocation2 + $0x3d0] sm:$0xff]
    %v5118 = vld [vmem:[#allocation2 + $0x3d8] sm:$0xff]
    %v5119 = vld [vmem:[#allocation2 + $0x3e0] sm:$0xff]
    %v5120 = vld [vmem:[#allocation2 + $0x3e8] sm:$0xff]
    %v5121 = vld [vmem:[#allocation2 + $0x3f0] sm:$0xff]
    %v5122 = vld [vmem:[#allocation2 + $0x3f8] sm:$0xff]
    %v5123 = vld [vmem:[#allocation2 + $0x400] sm:$0xff]
    %v5124 = vld [vmem:[#allocation2 + $0x408] sm:$0xff]
    %v5125 = vld [vmem:[#allocation2 + $0x410] sm:$0xff]
    %v5126 = vld [vmem:[#allocation2 + $0x418] sm:$0xff]
    %v5127 = vld [vmem:[#allocation2 + $0x420] sm:$0xff]
    %v5128 = vld [vmem:[#allocation2 + $0x428] sm:$0xff]
    %v5129 = vld [vmem:[#allocation2 + $0x430] sm:$0xff]
    %v5130 = vld [vmem:[#allocation2 + $0x438] sm:$0xff]
    %v5131 = vld [vmem:[#allocation2 + $0x440] sm:$0xff]
    %v5132 = vld [vmem:[#allocation2 + $0x448] sm:$0xff]
    %v5133 = vld [vmem:[#allocation2 + $0x450] sm:$0xff]
    %v5134 = vld [vmem:[#allocation2 + $0x458] sm:$0xff]
    %v5135 = vld [vmem:[#allocation2 + $0x460] sm:$0xff]
    %v5136 = vld [vmem:[#allocation2 + $0x468] sm:$0xff]
    %v5137 = vld [vmem:[#allocation2 + $0x470] sm:$0xff]
    %v5138 = vld [vmem:[#allocation2 + $0x478] sm:$0xff]
    %v5139 = vld [vmem:[%s3 + $0x60] sm:$0xff]
    %v5140 = vld [vmem:[%s3 + $0x68] sm:$0xff]
    %v5141 = vld [vmem:[%s3 + $0x70] sm:$0xff]
    %v5142 = vld [vmem:[%s3 + $0x78] sm:$0xff]
    %5144 = vset.pattern.permute.xlu0 0
    %5145 = vperm.xlu0 %5144, %v5139
    %v5146 = vpop.permute.xlu0 %5145
    %5149 = vset.pattern.permute.xlu0 0
    %5150 = vperm.xlu0 %5149, %v5140
    %v5151 = vpop.permute.xlu0 %5150
    %5154 = vset.pattern.permute.xlu0 0
    %5155 = vperm.xlu0 %5154, %v5141
    %v5156 = vpop.permute.xlu0 %5155
    %5159 = vset.pattern.permute.xlu0 0
    %5160 = vperm.xlu0 %5159, %v5142
    %v5161 = vpop.permute.xlu0 %5160
    %v5164 = vsel %vm1110, %v4985, 0
    %v5167 = vsel %vm1110, %v4988, 0
    %v5170 = vsel %vm1110, %v4991, 0
    %v5173 = vsel %vm1110, %v4994, 0
    %5175 = vmatpush.msra.mxu0 %v5055
    %5176 = vmatpush.msra.mxu0 %v5051
    %5177 = vmatpush.msra.mxu0 %v5047
    %5178 = vmatpush.msra.mxu0 %v5043
    %5179 = vmatpush.msra.mxu0 %v5039
    %5180 = vmatpush.msra.mxu0 %v5035
    %5181 = vmatpush.msra.mxu0 %v5031
    %5182 = vmatpush.msra.mxu0 %v5027
    %5183 = vmatpush.msra.mxu0 %v5023
    %5184 = vmatpush.msra.mxu0 %v5019
    %5185 = vmatpush.msra.mxu0 %v5015
    %5186 = vmatpush.msra.mxu0 %v5011
    %5187 = vmatpush.msra.mxu0 %v5007
    %5188 = vmatpush.msra.mxu0 %v5003
    %5189 = vmatpush.msra.mxu0 %v4999
    %5190 = vmatpush.msra.mxu0 %v4995
    %5191 = vmatmul.f32.gmra.mxu0 %v4983
    %v5192 = vpop.f32.mrf.mxu0
    %v5193 = vadd.f32 %v5146, %v5192
    %5194 = vmatmul.f32.gmra.mxu0 %v4986
    %v5195 = vpop.f32.mrf.mxu0
    %v5196 = vadd.f32 %v5151, %v5195
    %5197 = vmatmul.f32.gmra.mxu0 %v4989
    %v5198 = vpop.f32.mrf.mxu0
    %v5199 = vadd.f32 %v5156, %v5198
    %5200 = vmatmul.f32.gmra.mxu0 %v4992
    %v5201 = vpop.f32.mrf.mxu0
    %v5202 = vadd.f32 %v5161, %v5201
    %5203 = vdwg.mxu0
    %5204 = vmatpush.msra.mxu0 %v5119
    %5205 = vmatpush.msra.mxu0 %v5115
    %5206 = vmatpush.msra.mxu0 %v5111
    %5207 = vmatpush.msra.mxu0 %v5107
    %5208 = vmatpush.msra.mxu0 %v5103
    %5209 = vmatpush.msra.mxu0 %v5099
    %5210 = vmatpush.msra.mxu0 %v5095
    %5211 = vmatpush.msra.mxu0 %v5091
    %5212 = vmatpush.msra.mxu0 %v5087
    %5213 = vmatpush.msra.mxu0 %v5083
    %5214 = vmatpush.msra.mxu0 %v5079
    %5215 = vmatpush.msra.mxu0 %v5075
    %5216 = vmatpush.msra.mxu0 %v5071
    %5217 = vmatpush.msra.mxu0 %v5067
    %5218 = vmatpush.msra.mxu0 %v5063
    %5219 = vmatpush.msra.mxu0 %v5059
    %5220 = vmatmul.f32.gmra.mxu0 %v4984
    %v5221 = vpop.f32.mrf.mxu0
    %v5222 = vadd.f32 %v5193, %v5221
    %5223 = vmatmul.f32.gmra.mxu0 %v4987
    %v5224 = vpop.f32.mrf.mxu0
    %v5225 = vadd.f32 %v5196, %v5224
    %5226 = vmatmul.f32.gmra.mxu0 %v4990
    %v5227 = vpop.f32.mrf.mxu0
    %v5228 = vadd.f32 %v5199, %v5227
    %5229 = vmatmul.f32.gmra.mxu0 %v4993
    %v5230 = vpop.f32.mrf.mxu0
    %v5231 = vadd.f32 %v5202, %v5230
    %5232 = vdwg.mxu0
    %5233 = vmatpush.msra.mxu0 0.0
    %5234 = vmatpush.msra.mxu0 0.0
    %5235 = vmatpush.msra.mxu0 0.0
    %5236 = vmatpush.msra.mxu0 0.0
    %5237 = vmatpush.msra.mxu0 0.0
    %5238 = vmatpush.msra.mxu0 0.0
    %5239 = vmatpush.msra.mxu0 0.0
    %5240 = vmatpush.msra.mxu0 0.0
    %5241 = vmatpush.msra.mxu0 0.0
    %5242 = vmatpush.msra.mxu0 0.0
    %5243 = vmatpush.msra.mxu0 0.0
    %5244 = vmatpush.msra.mxu0 0.0
    %5245 = vmatpush.msra.mxu0 %v5135
    %5246 = vmatpush.msra.mxu0 %v5131
    %5247 = vmatpush.msra.mxu0 %v5127
    %5248 = vmatpush.msra.mxu0 %v5123
    %5249 = vmatmul.f32.gmra.mxu0 %v5164
    %v5250 = vpop.f32.mrf.mxu0
    %v5251 = vadd.f32 %v5222, %v5250
    %5252 = vmatmul.f32.gmra.mxu0 %v5167
    %v5253 = vpop.f32.mrf.mxu0
    %v5254 = vadd.f32 %v5225, %v5253
    %5255 = vmatmul.f32.gmra.mxu0 %v5170
    %v5256 = vpop.f32.mrf.mxu0
    %v5257 = vadd.f32 %v5228, %v5256
    %5258 = vmatmul.f32.gmra.mxu0 %v5173
    %v5259 = vpop.f32.mrf.mxu0
    %v5260 = vadd.f32 %v5231, %v5259
    %5261 = vdwg.mxu0
    %5262 = vmatpush.msra.mxu0 %v5056
    %5263 = vmatpush.msra.mxu0 %v5052
    %5264 = vmatpush.msra.mxu0 %v5048
    %5265 = vmatpush.msra.mxu0 %v5044
    %5266 = vmatpush.msra.mxu0 %v5040
    %5267 = vmatpush.msra.mxu0 %v5036
    %5268 = vmatpush.msra.mxu0 %v5032
    %5269 = vmatpush.msra.mxu0 %v5028
    %5270 = vmatpush.msra.mxu0 %v5024
    %5271 = vmatpush.msra.mxu0 %v5020
    %5272 = vmatpush.msra.mxu0 %v5016
    %5273 = vmatpush.msra.mxu0 %v5012
    %5274 = vmatpush.msra.mxu0 %v5008
    %5275 = vmatpush.msra.mxu0 %v5004
    %5276 = vmatpush.msra.mxu0 %v5000
    %5277 = vmatpush.msra.mxu0 %v4996
    %5278 = vmatmul.f32.gmra.mxu0 %v4983
    %v5279 = vpop.f32.mrf.mxu0
    %v5280 = vadd.f32 %v5146, %v5279
    %5281 = vmatmul.f32.gmra.mxu0 %v4986
    %v5282 = vpop.f32.mrf.mxu0
    %v5283 = vadd.f32 %v5151, %v5282
    %5284 = vmatmul.f32.gmra.mxu0 %v4989
    %v5285 = vpop.f32.mrf.mxu0
    %v5286 = vadd.f32 %v5156, %v5285
    %5287 = vmatmul.f32.gmra.mxu0 %v4992
    %v5288 = vpop.f32.mrf.mxu0
    %v5289 = vadd.f32 %v5161, %v5288
    %5290 = vdwg.mxu0
    %5291 = vmatpush.msra.mxu0 %v5120
    %5292 = vmatpush.msra.mxu0 %v5116
    %5293 = vmatpush.msra.mxu0 %v5112
    %5294 = vmatpush.msra.mxu0 %v5108
    %5295 = vmatpush.msra.mxu0 %v5104
    %5296 = vmatpush.msra.mxu0 %v5100
    %5297 = vmatpush.msra.mxu0 %v5096
    %5298 = vmatpush.msra.mxu0 %v5092
    %5299 = vmatpush.msra.mxu0 %v5088
    %5300 = vmatpush.msra.mxu0 %v5084
    %5301 = vmatpush.msra.mxu0 %v5080
    %5302 = vmatpush.msra.mxu0 %v5076
    %5303 = vmatpush.msra.mxu0 %v5072
    %5304 = vmatpush.msra.mxu0 %v5068
    %5305 = vmatpush.msra.mxu0 %v5064
    %5306 = vmatpush.msra.mxu0 %v5060
    %5307 = vmatmul.f32.gmra.mxu0 %v4984
    %v5308 = vpop.f32.mrf.mxu0
    %v5309 = vadd.f32 %v5280, %v5308
    %5310 = vmatmul.f32.gmra.mxu0 %v4987
    %v5311 = vpop.f32.mrf.mxu0
    %v5312 = vadd.f32 %v5283, %v5311
    %5313 = vmatmul.f32.gmra.mxu0 %v4990
    %v5314 = vpop.f32.mrf.mxu0
    %v5315 = vadd.f32 %v5286, %v5314
    %5316 = vmatmul.f32.gmra.mxu0 %v4993
    %v5317 = vpop.f32.mrf.mxu0
    %v5318 = vadd.f32 %v5289, %v5317
    %5319 = vdwg.mxu0
    %5320 = vmatpush.msra.mxu0 0.0
    %5321 = vmatpush.msra.mxu0 0.0
    %5322 = vmatpush.msra.mxu0 0.0
    %5323 = vmatpush.msra.mxu0 0.0
    %5324 = vmatpush.msra.mxu0 0.0
    %5325 = vmatpush.msra.mxu0 0.0
    %5326 = vmatpush.msra.mxu0 0.0
    %5327 = vmatpush.msra.mxu0 0.0
    %5328 = vmatpush.msra.mxu0 0.0
    %5329 = vmatpush.msra.mxu0 0.0
    %5330 = vmatpush.msra.mxu0 0.0
    %5331 = vmatpush.msra.mxu0 0.0
    %5332 = vmatpush.msra.mxu0 %v5136
    %5333 = vmatpush.msra.mxu0 %v5132
    %5334 = vmatpush.msra.mxu0 %v5128
    %5335 = vmatpush.msra.mxu0 %v5124
    %5336 = vmatmul.f32.gmra.mxu0 %v5164
    %v5337 = vpop.f32.mrf.mxu0
    %v5338 = vadd.f32 %v5309, %v5337
    %5339 = vmatmul.f32.gmra.mxu0 %v5167
    %v5340 = vpop.f32.mrf.mxu0
    %v5341 = vadd.f32 %v5312, %v5340
    %5342 = vmatmul.f32.gmra.mxu0 %v5170
    %v5343 = vpop.f32.mrf.mxu0
    %v5344 = vadd.f32 %v5315, %v5343
    %5345 = vmatmul.f32.gmra.mxu0 %v5173
    %v5346 = vpop.f32.mrf.mxu0
    %v5347 = vadd.f32 %v5318, %v5346
    %5348 = vdwg.mxu0
    %5349 = vmatpush.msra.mxu0 %v5057
    %5350 = vmatpush.msra.mxu0 %v5053
    %5351 = vmatpush.msra.mxu0 %v5049
    %5352 = vmatpush.msra.mxu0 %v5045
    %5353 = vmatpush.msra.mxu0 %v5041
    %5354 = vmatpush.msra.mxu0 %v5037
    %5355 = vmatpush.msra.mxu0 %v5033
    %5356 = vmatpush.msra.mxu0 %v5029
    %5357 = vmatpush.msra.mxu0 %v5025
    %5358 = vmatpush.msra.mxu0 %v5021
    %5359 = vmatpush.msra.mxu0 %v5017
    %5360 = vmatpush.msra.mxu0 %v5013
    %5361 = vmatpush.msra.mxu0 %v5009
    %5362 = vmatpush.msra.mxu0 %v5005
    %5363 = vmatpush.msra.mxu0 %v5001
    %5364 = vmatpush.msra.mxu0 %v4997
    %5365 = vmatmul.f32.gmra.mxu0 %v4983
    %v5366 = vpop.f32.mrf.mxu0
    %v5367 = vadd.f32 %v5146, %v5366
    %5368 = vmatmul.f32.gmra.mxu0 %v4986
    %v5369 = vpop.f32.mrf.mxu0
    %v5370 = vadd.f32 %v5151, %v5369
    %5371 = vmatmul.f32.gmra.mxu0 %v4989
    %v5372 = vpop.f32.mrf.mxu0
    %v5373 = vadd.f32 %v5156, %v5372
    %5374 = vmatmul.f32.gmra.mxu0 %v4992
    %v5375 = vpop.f32.mrf.mxu0
    %v5376 = vadd.f32 %v5161, %v5375
    %5377 = vdwg.mxu0
    %5378 = vmatpush.msra.mxu0 %v5121
    %5379 = vmatpush.msra.mxu0 %v5117
    %5380 = vmatpush.msra.mxu0 %v5113
    %5381 = vmatpush.msra.mxu0 %v5109
    %5382 = vmatpush.msra.mxu0 %v5105
    %5383 = vmatpush.msra.mxu0 %v5101
    %5384 = vmatpush.msra.mxu0 %v5097
    %5385 = vmatpush.msra.mxu0 %v5093
    %5386 = vmatpush.msra.mxu0 %v5089
    %5387 = vmatpush.msra.mxu0 %v5085
    %5388 = vmatpush.msra.mxu0 %v5081
    %5389 = vmatpush.msra.mxu0 %v5077
    %5390 = vmatpush.msra.mxu0 %v5073
    %5391 = vmatpush.msra.mxu0 %v5069
    %5392 = vmatpush.msra.mxu0 %v5065
    %5393 = vmatpush.msra.mxu0 %v5061
    %5394 = vmatmul.f32.gmra.mxu0 %v4984
    %v5395 = vpop.f32.mrf.mxu0
    %v5396 = vadd.f32 %v5367, %v5395
    %5397 = vmatmul.f32.gmra.mxu0 %v4987
    %v5398 = vpop.f32.mrf.mxu0
    %v5399 = vadd.f32 %v5370, %v5398
    %5400 = vmatmul.f32.gmra.mxu0 %v4990
    %v5401 = vpop.f32.mrf.mxu0
    %v5402 = vadd.f32 %v5373, %v5401
    %5403 = vmatmul.f32.gmra.mxu0 %v4993
    %v5404 = vpop.f32.mrf.mxu0
    %v5405 = vadd.f32 %v5376, %v5404
    %5406 = vdwg.mxu0
    %5407 = vmatpush.msra.mxu0 0.0
    %5408 = vmatpush.msra.mxu0 0.0
    %5409 = vmatpush.msra.mxu0 0.0
    %5410 = vmatpush.msra.mxu0 0.0
    %5411 = vmatpush.msra.mxu0 0.0
    %5412 = vmatpush.msra.mxu0 0.0
    %5413 = vmatpush.msra.mxu0 0.0
    %5414 = vmatpush.msra.mxu0 0.0
    %5415 = vmatpush.msra.mxu0 0.0
    %5416 = vmatpush.msra.mxu0 0.0
    %5417 = vmatpush.msra.mxu0 0.0
    %5418 = vmatpush.msra.mxu0 0.0
    %5419 = vmatpush.msra.mxu0 %v5137
    %5420 = vmatpush.msra.mxu0 %v5133
    %5421 = vmatpush.msra.mxu0 %v5129
    %5422 = vmatpush.msra.mxu0 %v5125
    %5423 = vmatmul.f32.gmra.mxu0 %v5164
    %v5424 = vpop.f32.mrf.mxu0
    %v5425 = vadd.f32 %v5396, %v5424
    %5426 = vmatmul.f32.gmra.mxu0 %v5167
    %v5427 = vpop.f32.mrf.mxu0
    %v5428 = vadd.f32 %v5399, %v5427
    %5429 = vmatmul.f32.gmra.mxu0 %v5170
    %v5430 = vpop.f32.mrf.mxu0
    %v5431 = vadd.f32 %v5402, %v5430
    %5432 = vmatmul.f32.gmra.mxu0 %v5173
    %v5433 = vpop.f32.mrf.mxu0
    %v5434 = vadd.f32 %v5405, %v5433
    %5435 = vdwg.mxu0
    %5436 = vmatpush.msra.mxu0 %v5058
    %5437 = vmatpush.msra.mxu0 %v5054
    %5438 = vmatpush.msra.mxu0 %v5050
    %5439 = vmatpush.msra.mxu0 %v5046
    %5440 = vmatpush.msra.mxu0 %v5042
    %5441 = vmatpush.msra.mxu0 %v5038
    %5442 = vmatpush.msra.mxu0 %v5034
    %5443 = vmatpush.msra.mxu0 %v5030
    %5444 = vmatpush.msra.mxu0 %v5026
    %5445 = vmatpush.msra.mxu0 %v5022
    %5446 = vmatpush.msra.mxu0 %v5018
    %5447 = vmatpush.msra.mxu0 %v5014
    %5448 = vmatpush.msra.mxu0 %v5010
    %5449 = vmatpush.msra.mxu0 %v5006
    %5450 = vmatpush.msra.mxu0 %v5002
    %5451 = vmatpush.msra.mxu0 %v4998
    %5452 = vmatmul.f32.gmra.mxu0 %v4983
    %v5453 = vpop.f32.mrf.mxu0
    %v5454 = vadd.f32 %v5146, %v5453
    %5455 = vmatmul.f32.gmra.mxu0 %v4986
    %v5456 = vpop.f32.mrf.mxu0
    %v5457 = vadd.f32 %v5151, %v5456
    %5458 = vmatmul.f32.gmra.mxu0 %v4989
    %v5459 = vpop.f32.mrf.mxu0
    %v5460 = vadd.f32 %v5156, %v5459
    %5461 = vmatmul.f32.gmra.mxu0 %v4992
    %v5462 = vpop.f32.mrf.mxu0
    %v5463 = vadd.f32 %v5161, %v5462
    %5464 = vdwg.mxu0
    %5465 = vmatpush.msra.mxu0 %v5122
    %5466 = vmatpush.msra.mxu0 %v5118
    %5467 = vmatpush.msra.mxu0 %v5114
    %5468 = vmatpush.msra.mxu0 %v5110
    %5469 = vmatpush.msra.mxu0 %v5106
    %5470 = vmatpush.msra.mxu0 %v5102
    %5471 = vmatpush.msra.mxu0 %v5098
    %5472 = vmatpush.msra.mxu0 %v5094
    %5473 = vmatpush.msra.mxu0 %v5090
    %5474 = vmatpush.msra.mxu0 %v5086
    %5475 = vmatpush.msra.mxu0 %v5082
    %5476 = vmatpush.msra.mxu0 %v5078
    %5477 = vmatpush.msra.mxu0 %v5074
    %5478 = vmatpush.msra.mxu0 %v5070
    %5479 = vmatpush.msra.mxu0 %v5066
    %5480 = vmatpush.msra.mxu0 %v5062
    %5481 = vmatmul.f32.gmra.mxu0 %v4984
    %v5482 = vpop.f32.mrf.mxu0
    %v5483 = vadd.f32 %v5454, %v5482
    %5484 = vmatmul.f32.gmra.mxu0 %v4987
    %v5485 = vpop.f32.mrf.mxu0
    %v5486 = vadd.f32 %v5457, %v5485
    %5487 = vmatmul.f32.gmra.mxu0 %v4990
    %v5488 = vpop.f32.mrf.mxu0
    %v5489 = vadd.f32 %v5460, %v5488
    %5490 = vmatmul.f32.gmra.mxu0 %v4993
    %v5491 = vpop.f32.mrf.mxu0
    %v5492 = vadd.f32 %v5463, %v5491
    %5493 = vdwg.mxu0
    %5494 = vmatpush.msra.mxu0 0.0
    %5495 = vmatpush.msra.mxu0 0.0
    %5496 = vmatpush.msra.mxu0 0.0
    %5497 = vmatpush.msra.mxu0 0.0
    %5498 = vmatpush.msra.mxu0 0.0
    %5499 = vmatpush.msra.mxu0 0.0
    %5500 = vmatpush.msra.mxu0 0.0
    %5501 = vmatpush.msra.mxu0 0.0
    %5502 = vmatpush.msra.mxu0 0.0
    %5503 = vmatpush.msra.mxu0 0.0
    %5504 = vmatpush.msra.mxu0 0.0
    %5505 = vmatpush.msra.mxu0 0.0
    %5506 = vmatpush.msra.mxu0 %v5138
    %5507 = vmatpush.msra.mxu0 %v5134
    %5508 = vmatpush.msra.mxu0 %v5130
    %5509 = vmatpush.msra.mxu0 %v5126
    %5510 = vmatmul.f32.gmra.mxu0 %v5164
    %v5511 = vpop.f32.mrf.mxu0
    %v5512 = vadd.f32 %v5483, %v5511
    %5513 = vmatmul.f32.gmra.mxu0 %v5167
    %v5514 = vpop.f32.mrf.mxu0
    %v5515 = vadd.f32 %v5486, %v5514
    %5516 = vmatmul.f32.gmra.mxu0 %v5170
    %v5517 = vpop.f32.mrf.mxu0
    %v5518 = vadd.f32 %v5489, %v5517
    %5519 = vmatmul.f32.gmra.mxu0 %v5173
    %v5520 = vpop.f32.mrf.mxu0
    %v5521 = vadd.f32 %v5492, %v5520
    %5522 = vdwg.mxu0
    %v5523 = vadd.f32 %v5251, %v2827
    %v5524 = vadd.f32 %v5338, %v2828
    %v5525 = vadd.f32 %v5425, %v2829
    %v5526 = vadd.f32 %v5512, %v2830
    %v5527 = vadd.f32 %v5254, %v2831
    %v5528 = vadd.f32 %v5341, %v2832
    %v5529 = vadd.f32 %v5428, %v2833
    %v5530 = vadd.f32 %v5515, %v2834
    %v5531 = vadd.f32 %v5257, %v2835
    %v5532 = vadd.f32 %v5344, %v2836
    %v5533 = vadd.f32 %v5431, %v2837
    %v5534 = vadd.f32 %v5518, %v2838
    %v5535 = vadd.f32 %v5260, %v2839
    %v5536 = vadd.f32 %v5347, %v2840
    %v5537 = vadd.f32 %v5434, %v2841
    %v5538 = vadd.f32 %v5521, %v2842
    %5539 = vrot.lane.b32.xlu0 %v5523, 17
    %v5540 = vpop.permute.xlu0 %5539
    %5541 = vrot.lane.b32.xlu0 %v5527, 17
    %v5542 = vpop.permute.xlu0 %5541
    %5543 = vrot.lane.b32.xlu0 %v5531, 17
    %v5544 = vpop.permute.xlu0 %5543
    %5545 = vrot.lane.b32.xlu0 %v5535, 17
    %v5546 = vpop.permute.xlu0 %5545
    %5547 = vrot.lane.b32.xlu0 %v5524, 17
    %v5548 = vpop.permute.xlu0 %5547
    %5549 = vrot.lane.b32.xlu0 %v5528, 17
    %v5550 = vpop.permute.xlu0 %5549
    %5551 = vrot.lane.b32.xlu0 %v5532, 17
    %v5552 = vpop.permute.xlu0 %5551
    %5553 = vrot.lane.b32.xlu0 %v5536, 17
    %v5554 = vpop.permute.xlu0 %5553
    %5555 = vrot.lane.b32.xlu0 %v5525, 17
    %v5556 = vpop.permute.xlu0 %5555
    %5557 = vrot.lane.b32.xlu0 %v5529, 17
    %v5558 = vpop.permute.xlu0 %5557
    %5559 = vrot.lane.b32.xlu0 %v5533, 17
    %v5560 = vpop.permute.xlu0 %5559
    %5561 = vrot.lane.b32.xlu0 %v5537, 17
    %v5562 = vpop.permute.xlu0 %5561
    %5563 = vrot.lane.b32.xlu0 %v5526, 17
    %v5564 = vpop.permute.xlu0 %5563
    %5565 = vrot.lane.b32.xlu0 %v5530, 17
    %v5566 = vpop.permute.xlu0 %5565
    %5567 = vrot.lane.b32.xlu0 %v5534, 17
    %v5568 = vpop.permute.xlu0 %5567
    %5569 = vrot.lane.b32.xlu0 %v5538, 17
    %v5570 = vpop.permute.xlu0 %5569
    %v5571 = vsel %vm170, %v5556, %v5564
    %v5572 = vsel %vm170, %v5558, %v5566
    %v5573 = vsel %vm170, %v5560, %v5568
    %v5574 = vsel %vm170, %v5562, %v5570
    %v5575 = vsel %vm170, %v5548, %v5556
    %v5576 = vsel %vm170, %v5550, %v5558
    %v5577 = vsel %vm170, %v5552, %v5560
    %v5578 = vsel %vm170, %v5554, %v5562
    %v5579 = vsel %vm170, %v5540, %v5548
    %v5580 = vsel %vm170, %v5542, %v5550
    %v5581 = vsel %vm170, %v5544, %v5552
    %v5582 = vsel %vm170, %v5546, %v5554
    %v5583 = vsel %vm170, %v5564, %v5540
    %v5584 = vsel %vm170, %v5566, %v5542
    %v5585 = vsel %vm170, %v5568, %v5544
    %v5586 = vsel %vm170, %v5570, %v5546
    %v5587 = vld [vmem:[#allocation3] sm:$0xff]
    %v5588 = vld [vmem:[#allocation3 + $0x8] sm:$0xff]
    %v5589 = vld [vmem:[#allocation3 + $0x10] sm:$0xff]
    %v5590 = vld [vmem:[#allocation3 + $0x18] sm:$0xff]
    %v5591 = vld [vmem:[#allocation3 + $0x20] sm:$0xff]
    %v5592 = vld [vmem:[#allocation3 + $0x28] sm:$0xff]
    %v5593 = vld [vmem:[#allocation3 + $0x30] sm:$0xff]
    %v5594 = vld [vmem:[#allocation3 + $0x38] sm:$0xff]
    %v5595 = vld [vmem:[#allocation3 + $0x40] sm:$0xff]
    %v5596 = vld [vmem:[#allocation3 + $0x48] sm:$0xff]
    %v5597 = vld [vmem:[#allocation3 + $0x50] sm:$0xff]
    %v5598 = vld [vmem:[#allocation3 + $0x58] sm:$0xff]
    %v5599 = vld [vmem:[#allocation3 + $0x60] sm:$0xff]
    %v5600 = vld [vmem:[#allocation3 + $0x68] sm:$0xff]
    %v5601 = vld [vmem:[#allocation3 + $0x70] sm:$0xff]
    %v5602 = vld [vmem:[#allocation3 + $0x78] sm:$0xff]
    %v5603 = vmul.f32 %v5583, %v5587
    %v5604 = vmul.f32 %v5579, %v5588
    %v5605 = vmul.f32 %v5575, %v5589
    %v5606 = vmul.f32 %v5571, %v5590
    %v5607 = vmul.f32 %v5584, %v5591
    %v5608 = vmul.f32 %v5580, %v5592
    %v5609 = vmul.f32 %v5576, %v5593
    %v5610 = vmul.f32 %v5572, %v5594
    %v5611 = vmul.f32 %v5585, %v5595
    %v5612 = vmul.f32 %v5581, %v5596
    %v5613 = vmul.f32 %v5577, %v5597
    %v5614 = vmul.f32 %v5573, %v5598
    %v5615 = vmul.f32 %v5586, %v5599
    %v5616 = vmul.f32 %v5582, %v5600
    %v5617 = vmul.f32 %v5578, %v5601
    %v5618 = vmul.f32 %v5574, %v5602
    %5619 = vst [vmem:[#allocation2] sm:$0xff] %v5603
    %5620 = vst [vmem:[#allocation2 + $0x8] sm:$0xff] %v5604
    %5621 = vst [vmem:[#allocation2 + $0x10] sm:$0xff] %v5605
    %5622 = vst [vmem:[#allocation2 + $0x18] sm:$0xff] %v5606
    %5623 = vst [vmem:[#allocation2 + $0x20] sm:$0xff] %v5607
    %5624 = vst [vmem:[#allocation2 + $0x28] sm:$0xff] %v5608
    %5625 = vst [vmem:[#allocation2 + $0x30] sm:$0xff] %v5609
    %5626 = vst [vmem:[#allocation2 + $0x38] sm:$0xff] %v5610
    %5627 = vst [vmem:[#allocation2 + $0x40] sm:$0xff] %v5611
    %5628 = vst [vmem:[#allocation2 + $0x48] sm:$0xff] %v5612
    %5629 = vst [vmem:[#allocation2 + $0x50] sm:$0xff] %v5613
    %5630 = vst [vmem:[#allocation2 + $0x58] sm:$0xff] %v5614
    %5631 = vst [vmem:[#allocation2 + $0x60] sm:$0xff] %v5615
    %5632 = vst [vmem:[#allocation2 + $0x68] sm:$0xff] %v5616
    %5633 = vst [vmem:[#allocation2 + $0x70] sm:$0xff] %v5617
    %5634 = vst [vmem:[#allocation2 + $0x78] sm:$0xff] %v5618
    %5635 = vrot.lane.b32.xlu0 %v5523, 16
    %v5636 = vpop.permute.xlu0 %5635
    %5637 = vrot.lane.b32.xlu0 %v5527, 16
    %v5638 = vpop.permute.xlu0 %5637
    %5639 = vrot.lane.b32.xlu0 %v5531, 16
    %v5640 = vpop.permute.xlu0 %5639
    %5641 = vrot.lane.b32.xlu0 %v5535, 16
    %v5642 = vpop.permute.xlu0 %5641
    %5643 = vrot.lane.b32.xlu0 %v5524, 16
    %v5644 = vpop.permute.xlu0 %5643
    %5645 = vrot.lane.b32.xlu0 %v5528, 16
    %v5646 = vpop.permute.xlu0 %5645
    %5647 = vrot.lane.b32.xlu0 %v5532, 16
    %v5648 = vpop.permute.xlu0 %5647
    %5649 = vrot.lane.b32.xlu0 %v5536, 16
    %v5650 = vpop.permute.xlu0 %5649
    %5651 = vrot.lane.b32.xlu0 %v5525, 16
    %v5652 = vpop.permute.xlu0 %5651
    %5653 = vrot.lane.b32.xlu0 %v5529, 16
    %v5654 = vpop.permute.xlu0 %5653
    %5655 = vrot.lane.b32.xlu0 %v5533, 16
    %v5656 = vpop.permute.xlu0 %5655
    %5657 = vrot.lane.b32.xlu0 %v5537, 16
    %v5658 = vpop.permute.xlu0 %5657
    %5659 = vrot.lane.b32.xlu0 %v5526, 16
    %v5660 = vpop.permute.xlu0 %5659
    %5661 = vrot.lane.b32.xlu0 %v5530, 16
    %v5662 = vpop.permute.xlu0 %5661
    %5663 = vrot.lane.b32.xlu0 %v5534, 16
    %v5664 = vpop.permute.xlu0 %5663
    %5665 = vrot.lane.b32.xlu0 %v5538, 16
    %v5666 = vpop.permute.xlu0 %5665
    %v5667 = vsel %vm267, %v5652, %v5660
    %v5668 = vsel %vm267, %v5654, %v5662
    %v5669 = vsel %vm267, %v5656, %v5664
    %v5670 = vsel %vm267, %v5658, %v5666
    %v5671 = vsel %vm267, %v5644, %v5652
    %v5672 = vsel %vm267, %v5646, %v5654
    %v5673 = vsel %vm267, %v5648, %v5656
    %v5674 = vsel %vm267, %v5650, %v5658
    %v5675 = vsel %vm267, %v5636, %v5644
    %v5676 = vsel %vm267, %v5638, %v5646
    %v5677 = vsel %vm267, %v5640, %v5648
    %v5678 = vsel %vm267, %v5642, %v5650
    %v5679 = vsel %vm267, %v5660, %v5636
    %v5680 = vsel %vm267, %v5662, %v5638
    %v5681 = vsel %vm267, %v5664, %v5640
    %v5682 = vsel %vm267, %v5666, %v5642
    %v5683 = vld [vmem:[#allocation3 + $0x80] sm:$0xff]
    %v5684 = vld [vmem:[#allocation3 + $0x88] sm:$0xff]
    %v5685 = vld [vmem:[#allocation3 + $0x90] sm:$0xff]
    %v5686 = vld [vmem:[#allocation3 + $0x98] sm:$0xff]
    %v5687 = vld [vmem:[#allocation3 + $0xa0] sm:$0xff]
    %v5688 = vld [vmem:[#allocation3 + $0xa8] sm:$0xff]
    %v5689 = vld [vmem:[#allocation3 + $0xb0] sm:$0xff]
    %v5690 = vld [vmem:[#allocation3 + $0xb8] sm:$0xff]
    %v5691 = vld [vmem:[#allocation3 + $0xc0] sm:$0xff]
    %v5692 = vld [vmem:[#allocation3 + $0xc8] sm:$0xff]
    %v5693 = vld [vmem:[#allocation3 + $0xd0] sm:$0xff]
    %v5694 = vld [vmem:[#allocation3 + $0xd8] sm:$0xff]
    %v5695 = vld [vmem:[#allocation3 + $0xe0] sm:$0xff]
    %v5696 = vld [vmem:[#allocation3 + $0xe8] sm:$0xff]
    %v5697 = vld [vmem:[#allocation3 + $0xf0] sm:$0xff]
    %v5698 = vld [vmem:[#allocation3 + $0xf8] sm:$0xff]
    %v5699 = vmul.f32 %v5679, %v5683
    %v5700 = vmul.f32 %v5675, %v5684
    %v5701 = vmul.f32 %v5671, %v5685
    %v5702 = vmul.f32 %v5667, %v5686
    %v5703 = vmul.f32 %v5680, %v5687
    %v5704 = vmul.f32 %v5676, %v5688
    %v5705 = vmul.f32 %v5672, %v5689
    %v5706 = vmul.f32 %v5668, %v5690
    %v5707 = vmul.f32 %v5681, %v5691
    %v5708 = vmul.f32 %v5677, %v5692
    %v5709 = vmul.f32 %v5673, %v5693
    %v5710 = vmul.f32 %v5669, %v5694
    %v5711 = vmul.f32 %v5682, %v5695
    %v5712 = vmul.f32 %v5678, %v5696
    %v5713 = vmul.f32 %v5674, %v5697
    %v5714 = vmul.f32 %v5670, %v5698
    %5715 = vst [vmem:[#allocation2 + $0x80] sm:$0xff] %v5699
    %5716 = vst [vmem:[#allocation2 + $0x88] sm:$0xff] %v5700
    %5717 = vst [vmem:[#allocation2 + $0x90] sm:$0xff] %v5701
    %5718 = vst [vmem:[#allocation2 + $0x98] sm:$0xff] %v5702
    %5719 = vst [vmem:[#allocation2 + $0xa0] sm:$0xff] %v5703
    %5720 = vst [vmem:[#allocation2 + $0xa8] sm:$0xff] %v5704
    %5721 = vst [vmem:[#allocation2 + $0xb0] sm:$0xff] %v5705
    %5722 = vst [vmem:[#allocation2 + $0xb8] sm:$0xff] %v5706
    %5723 = vst [vmem:[#allocation2 + $0xc0] sm:$0xff] %v5707
    %5724 = vst [vmem:[#allocation2 + $0xc8] sm:$0xff] %v5708
    %5725 = vst [vmem:[#allocation2 + $0xd0] sm:$0xff] %v5709
    %5726 = vst [vmem:[#allocation2 + $0xd8] sm:$0xff] %v5710
    %5727 = vst [vmem:[#allocation2 + $0xe0] sm:$0xff] %v5711
    %5728 = vst [vmem:[#allocation2 + $0xe8] sm:$0xff] %v5712
    %5729 = vst [vmem:[#allocation2 + $0xf0] sm:$0xff] %v5713
    %5730 = vst [vmem:[#allocation2 + $0xf8] sm:$0xff] %v5714
    %5731 = vrot.lane.b32.xlu0 %v5523, 15
    %v5732 = vpop.permute.xlu0 %5731
    %5733 = vrot.lane.b32.xlu0 %v5527, 15
    %v5734 = vpop.permute.xlu0 %5733
    %5735 = vrot.lane.b32.xlu0 %v5531, 15
    %v5736 = vpop.permute.xlu0 %5735
    %5737 = vrot.lane.b32.xlu0 %v5535, 15
    %v5738 = vpop.permute.xlu0 %5737
    %5739 = vrot.lane.b32.xlu0 %v5524, 15
    %v5740 = vpop.permute.xlu0 %5739
    %5741 = vrot.lane.b32.xlu0 %v5528, 15
    %v5742 = vpop.permute.xlu0 %5741
    %5743 = vrot.lane.b32.xlu0 %v5532, 15
    %v5744 = vpop.permute.xlu0 %5743
    %5745 = vrot.lane.b32.xlu0 %v5536, 15
    %v5746 = vpop.permute.xlu0 %5745
    %5747 = vrot.lane.b32.xlu0 %v5525, 15
    %v5748 = vpop.permute.xlu0 %5747
    %5749 = vrot.lane.b32.xlu0 %v5529, 15
    %v5750 = vpop.permute.xlu0 %5749
    %5751 = vrot.lane.b32.xlu0 %v5533, 15
    %v5752 = vpop.permute.xlu0 %5751
    %5753 = vrot.lane.b32.xlu0 %v5537, 15
    %v5754 = vpop.permute.xlu0 %5753
    %5755 = vrot.lane.b32.xlu0 %v5526, 15
    %v5756 = vpop.permute.xlu0 %5755
    %5757 = vrot.lane.b32.xlu0 %v5530, 15
    %v5758 = vpop.permute.xlu0 %5757
    %5759 = vrot.lane.b32.xlu0 %v5534, 15
    %v5760 = vpop.permute.xlu0 %5759
    %5761 = vrot.lane.b32.xlu0 %v5538, 15
    %v5762 = vpop.permute.xlu0 %5761
    %v5763 = vsel %vm364, %v5748, %v5756
    %v5764 = vsel %vm364, %v5750, %v5758
    %v5765 = vsel %vm364, %v5752, %v5760
    %v5766 = vsel %vm364, %v5754, %v5762
    %v5767 = vsel %vm364, %v5740, %v5748
    %v5768 = vsel %vm364, %v5742, %v5750
    %v5769 = vsel %vm364, %v5744, %v5752
    %v5770 = vsel %vm364, %v5746, %v5754
    %v5771 = vsel %vm364, %v5732, %v5740
    %v5772 = vsel %vm364, %v5734, %v5742
    %v5773 = vsel %vm364, %v5736, %v5744
    %v5774 = vsel %vm364, %v5738, %v5746
    %v5775 = vsel %vm364, %v5756, %v5732
    %v5776 = vsel %vm364, %v5758, %v5734
    %v5777 = vsel %vm364, %v5760, %v5736
    %v5778 = vsel %vm364, %v5762, %v5738
    %v5779 = vld [vmem:[#allocation3 + $0x100] sm:$0xff]
    %v5780 = vld [vmem:[#allocation3 + $0x108] sm:$0xff]
    %v5781 = vld [vmem:[#allocation3 + $0x110] sm:$0xff]
    %v5782 = vld [vmem:[#allocation3 + $0x118] sm:$0xff]
    %v5783 = vld [vmem:[#allocation3 + $0x120] sm:$0xff]
    %v5784 = vld [vmem:[#allocation3 + $0x128] sm:$0xff]
    %v5785 = vld [vmem:[#allocation3 + $0x130] sm:$0xff]
    %v5786 = vld [vmem:[#allocation3 + $0x138] sm:$0xff]
    %v5787 = vld [vmem:[#allocation3 + $0x140] sm:$0xff]
    %v5788 = vld [vmem:[#allocation3 + $0x148] sm:$0xff]
    %v5789 = vld [vmem:[#allocation3 + $0x150] sm:$0xff]
    %v5790 = vld [vmem:[#allocation3 + $0x158] sm:$0xff]
    %v5791 = vld [vmem:[#allocation3 + $0x160] sm:$0xff]
    %v5792 = vld [vmem:[#allocation3 + $0x168] sm:$0xff]
    %v5793 = vld [vmem:[#allocation3 + $0x170] sm:$0xff]
    %v5794 = vld [vmem:[#allocation3 + $0x178] sm:$0xff]
    %v5795 = vmul.f32 %v5775, %v5779
    %v5796 = vmul.f32 %v5771, %v5780
    %v5797 = vmul.f32 %v5767, %v5781
    %v5798 = vmul.f32 %v5763, %v5782
    %v5799 = vmul.f32 %v5776, %v5783
    %v5800 = vmul.f32 %v5772, %v5784
    %v5801 = vmul.f32 %v5768, %v5785
    %v5802 = vmul.f32 %v5764, %v5786
    %v5803 = vmul.f32 %v5777, %v5787
    %v5804 = vmul.f32 %v5773, %v5788
    %v5805 = vmul.f32 %v5769, %v5789
    %v5806 = vmul.f32 %v5765, %v5790
    %v5807 = vmul.f32 %v5778, %v5791
    %v5808 = vmul.f32 %v5774, %v5792
    %v5809 = vmul.f32 %v5770, %v5793
    %v5810 = vmul.f32 %v5766, %v5794
    %5811 = vst [vmem:[#allocation2 + $0x100] sm:$0xff] %v5795
    %5812 = vst [vmem:[#allocation2 + $0x108] sm:$0xff] %v5796
    %5813 = vst [vmem:[#allocation2 + $0x110] sm:$0xff] %v5797
    %5814 = vst [vmem:[#allocation2 + $0x118] sm:$0xff] %v5798
    %5815 = vst [vmem:[#allocation2 + $0x120] sm:$0xff] %v5799
    %5816 = vst [vmem:[#allocation2 + $0x128] sm:$0xff] %v5800
    %5817 = vst [vmem:[#allocation2 + $0x130] sm:$0xff] %v5801
    %5818 = vst [vmem:[#allocation2 + $0x138] sm:$0xff] %v5802
    %5819 = vst [vmem:[#allocation2 + $0x140] sm:$0xff] %v5803
    %5820 = vst [vmem:[#allocation2 + $0x148] sm:$0xff] %v5804
    %5821 = vst [vmem:[#allocation2 + $0x150] sm:$0xff] %v5805
    %5822 = vst [vmem:[#allocation2 + $0x158] sm:$0xff] %v5806
    %5823 = vst [vmem:[#allocation2 + $0x160] sm:$0xff] %v5807
    %5824 = vst [vmem:[#allocation2 + $0x168] sm:$0xff] %v5808
    %5825 = vst [vmem:[#allocation2 + $0x170] sm:$0xff] %v5809
    %5826 = vst [vmem:[#allocation2 + $0x178] sm:$0xff] %v5810
    %5827 = vrot.lane.b32.xlu0 %v5523, 1
    %v5828 = vpop.permute.xlu0 %5827
    %5829 = vrot.lane.b32.xlu0 %v5527, 1
    %v5830 = vpop.permute.xlu0 %5829
    %5831 = vrot.lane.b32.xlu0 %v5531, 1
    %v5832 = vpop.permute.xlu0 %5831
    %5833 = vrot.lane.b32.xlu0 %v5535, 1
    %v5834 = vpop.permute.xlu0 %5833
    %5835 = vrot.lane.b32.xlu0 %v5524, 1
    %v5836 = vpop.permute.xlu0 %5835
    %5837 = vrot.lane.b32.xlu0 %v5528, 1
    %v5838 = vpop.permute.xlu0 %5837
    %5839 = vrot.lane.b32.xlu0 %v5532, 1
    %v5840 = vpop.permute.xlu0 %5839
    %5841 = vrot.lane.b32.xlu0 %v5536, 1
    %v5842 = vpop.permute.xlu0 %5841
    %5843 = vrot.lane.b32.xlu0 %v5525, 1
    %v5844 = vpop.permute.xlu0 %5843
    %5845 = vrot.lane.b32.xlu0 %v5529, 1
    %v5846 = vpop.permute.xlu0 %5845
    %5847 = vrot.lane.b32.xlu0 %v5533, 1
    %v5848 = vpop.permute.xlu0 %5847
    %5849 = vrot.lane.b32.xlu0 %v5537, 1
    %v5850 = vpop.permute.xlu0 %5849
    %5851 = vrot.lane.b32.xlu0 %v5526, 1
    %v5852 = vpop.permute.xlu0 %5851
    %5853 = vrot.lane.b32.xlu0 %v5530, 1
    %v5854 = vpop.permute.xlu0 %5853
    %5855 = vrot.lane.b32.xlu0 %v5534, 1
    %v5856 = vpop.permute.xlu0 %5855
    %5857 = vrot.lane.b32.xlu0 %v5538, 1
    %v5858 = vpop.permute.xlu0 %5857
    %v5859 = vsel %vm461, %v5844, %v5852
    %v5860 = vsel %vm461, %v5846, %v5854
    %v5861 = vsel %vm461, %v5848, %v5856
    %v5862 = vsel %vm461, %v5850, %v5858
    %v5863 = vsel %vm461, %v5836, %v5844
    %v5864 = vsel %vm461, %v5838, %v5846
    %v5865 = vsel %vm461, %v5840, %v5848
    %v5866 = vsel %vm461, %v5842, %v5850
    %v5867 = vsel %vm461, %v5828, %v5836
    %v5868 = vsel %vm461, %v5830, %v5838
    %v5869 = vsel %vm461, %v5832, %v5840
    %v5870 = vsel %vm461, %v5834, %v5842
    %v5871 = vsel %vm461, %v5852, %v5828
    %v5872 = vsel %vm461, %v5854, %v5830
    %v5873 = vsel %vm461, %v5856, %v5832
    %v5874 = vsel %vm461, %v5858, %v5834
    %v5875 = vld [vmem:[#allocation3 + $0x180] sm:$0xff]
    %v5876 = vld [vmem:[#allocation3 + $0x188] sm:$0xff]
    %v5877 = vld [vmem:[#allocation3 + $0x190] sm:$0xff]
    %v5878 = vld [vmem:[#allocation3 + $0x198] sm:$0xff]
    %v5879 = vld [vmem:[#allocation3 + $0x1a0] sm:$0xff]
    %v5880 = vld [vmem:[#allocation3 + $0x1a8] sm:$0xff]
    %v5881 = vld [vmem:[#allocation3 + $0x1b0] sm:$0xff]
    %v5882 = vld [vmem:[#allocation3 + $0x1b8] sm:$0xff]
    %v5883 = vld [vmem:[#allocation3 + $0x1c0] sm:$0xff]
    %v5884 = vld [vmem:[#allocation3 + $0x1c8] sm:$0xff]
    %v5885 = vld [vmem:[#allocation3 + $0x1d0] sm:$0xff]
    %v5886 = vld [vmem:[#allocation3 + $0x1d8] sm:$0xff]
    %v5887 = vld [vmem:[#allocation3 + $0x1e0] sm:$0xff]
    %v5888 = vld [vmem:[#allocation3 + $0x1e8] sm:$0xff]
    %v5889 = vld [vmem:[#allocation3 + $0x1f0] sm:$0xff]
    %v5890 = vld [vmem:[#allocation3 + $0x1f8] sm:$0xff]
    %v5891 = vmul.f32 %v5871, %v5875
    %v5892 = vmul.f32 %v5867, %v5876
    %v5893 = vmul.f32 %v5863, %v5877
    %v5894 = vmul.f32 %v5859, %v5878
    %v5895 = vmul.f32 %v5872, %v5879
    %v5896 = vmul.f32 %v5868, %v5880
    %v5897 = vmul.f32 %v5864, %v5881
    %v5898 = vmul.f32 %v5860, %v5882
    %v5899 = vmul.f32 %v5873, %v5883
    %v5900 = vmul.f32 %v5869, %v5884
    %v5901 = vmul.f32 %v5865, %v5885
    %v5902 = vmul.f32 %v5861, %v5886
    %v5903 = vmul.f32 %v5874, %v5887
    %v5904 = vmul.f32 %v5870, %v5888
    %v5905 = vmul.f32 %v5866, %v5889
    %v5906 = vmul.f32 %v5862, %v5890
    %5907 = vst [vmem:[#allocation2 + $0x180] sm:$0xff] %v5891
    %5908 = vst [vmem:[#allocation2 + $0x188] sm:$0xff] %v5892
    %5909 = vst [vmem:[#allocation2 + $0x190] sm:$0xff] %v5893
    %5910 = vst [vmem:[#allocation2 + $0x198] sm:$0xff] %v5894
    %5911 = vst [vmem:[#allocation2 + $0x1a0] sm:$0xff] %v5895
    %5912 = vst [vmem:[#allocation2 + $0x1a8] sm:$0xff] %v5896
    %5913 = vst [vmem:[#allocation2 + $0x1b0] sm:$0xff] %v5897
    %5914 = vst [vmem:[#allocation2 + $0x1b8] sm:$0xff] %v5898
    %5915 = vst [vmem:[#allocation2 + $0x1c0] sm:$0xff] %v5899
    %5916 = vst [vmem:[#allocation2 + $0x1c8] sm:$0xff] %v5900
    %5917 = vst [vmem:[#allocation2 + $0x1d0] sm:$0xff] %v5901
    %5918 = vst [vmem:[#allocation2 + $0x1d8] sm:$0xff] %v5902
    %5919 = vst [vmem:[#allocation2 + $0x1e0] sm:$0xff] %v5903
    %5920 = vst [vmem:[#allocation2 + $0x1e8] sm:$0xff] %v5904
    %5921 = vst [vmem:[#allocation2 + $0x1f0] sm:$0xff] %v5905
    %5922 = vst [vmem:[#allocation2 + $0x1f8] sm:$0xff] %v5906
    %5923 = vst [vmem:[#allocation2 + $0x200] sm:$0xff] %v5523
    %5924 = vst [vmem:[#allocation2 + $0x208] sm:$0xff] %v5524
    %5925 = vst [vmem:[#allocation2 + $0x210] sm:$0xff] %v5525
    %5926 = vst [vmem:[#allocation2 + $0x218] sm:$0xff] %v5526
    %5927 = vst [vmem:[#allocation2 + $0x220] sm:$0xff] %v5527
    %5928 = vst [vmem:[#allocation2 + $0x228] sm:$0xff] %v5528
    %5929 = vst [vmem:[#allocation2 + $0x230] sm:$0xff] %v5529
    %5930 = vst [vmem:[#allocation2 + $0x238] sm:$0xff] %v5530
    %5931 = vst [vmem:[#allocation2 + $0x240] sm:$0xff] %v5531
    %5932 = vst [vmem:[#allocation2 + $0x248] sm:$0xff] %v5532
    %5933 = vst [vmem:[#allocation2 + $0x250] sm:$0xff] %v5533
    %5934 = vst [vmem:[#allocation2 + $0x258] sm:$0xff] %v5534
    %5935 = vst [vmem:[#allocation2 + $0x260] sm:$0xff] %v5535
    %5936 = vst [vmem:[#allocation2 + $0x268] sm:$0xff] %v5536
    %5937 = vst [vmem:[#allocation2 + $0x270] sm:$0xff] %v5537
    %5938 = vst [vmem:[#allocation2 + $0x278] sm:$0xff] %v5538
    %5939 = vrot.lane.b32.xlu0 %v5523, 127
    %v5940 = vpop.permute.xlu0 %5939
    %5941 = vrot.lane.b32.xlu0 %v5527, 127
    %v5942 = vpop.permute.xlu0 %5941
    %5943 = vrot.lane.b32.xlu0 %v5531, 127
    %v5944 = vpop.permute.xlu0 %5943
    %5945 = vrot.lane.b32.xlu0 %v5535, 127
    %v5946 = vpop.permute.xlu0 %5945
    %5947 = vrot.lane.b32.xlu0 %v5524, 127
    %v5948 = vpop.permute.xlu0 %5947
    %5949 = vrot.lane.b32.xlu0 %v5528, 127
    %v5950 = vpop.permute.xlu0 %5949
    %5951 = vrot.lane.b32.xlu0 %v5532, 127
    %v5952 = vpop.permute.xlu0 %5951
    %5953 = vrot.lane.b32.xlu0 %v5536, 127
    %v5954 = vpop.permute.xlu0 %5953
    %5955 = vrot.lane.b32.xlu0 %v5525, 127
    %v5956 = vpop.permute.xlu0 %5955
    %5957 = vrot.lane.b32.xlu0 %v5529, 127
    %v5958 = vpop.permute.xlu0 %5957
    %5959 = vrot.lane.b32.xlu0 %v5533, 127
    %v5960 = vpop.permute.xlu0 %5959
    %5961 = vrot.lane.b32.xlu0 %v5537, 127
    %v5962 = vpop.permute.xlu0 %5961
    %5963 = vrot.lane.b32.xlu0 %v5526, 127
    %v5964 = vpop.permute.xlu0 %5963
    %5965 = vrot.lane.b32.xlu0 %v5530, 127
    %v5966 = vpop.permute.xlu0 %5965
    %5967 = vrot.lane.b32.xlu0 %v5534, 127
    %v5968 = vpop.permute.xlu0 %5967
    %5969 = vrot.lane.b32.xlu0 %v5538, 127
    %v5970 = vpop.permute.xlu0 %5969
    %v5971 = vsel %vm574, %v5956, %v5964
    %v5972 = vsel %vm574, %v5958, %v5966
    %v5973 = vsel %vm574, %v5960, %v5968
    %v5974 = vsel %vm574, %v5962, %v5970
    %v5975 = vsel %vm574, %v5948, %v5956
    %v5976 = vsel %vm574, %v5950, %v5958
    %v5977 = vsel %vm574, %v5952, %v5960
    %v5978 = vsel %vm574, %v5954, %v5962
    %v5979 = vsel %vm574, %v5940, %v5948
    %v5980 = vsel %vm574, %v5942, %v5950
    %v5981 = vsel %vm574, %v5944, %v5952
    %v5982 = vsel %vm574, %v5946, %v5954
    %v5983 = vsel %vm574, %v5964, %v5940
    %v5984 = vsel %vm574, %v5966, %v5942
    %v5985 = vsel %vm574, %v5968, %v5944
    %v5986 = vsel %vm574, %v5970, %v5946
    %v5987 = vld [vmem:[#allocation3 + $0x200] sm:$0xff]
    %v5988 = vld [vmem:[#allocation3 + $0x208] sm:$0xff]
    %v5989 = vld [vmem:[#allocation3 + $0x210] sm:$0xff]
    %v5990 = vld [vmem:[#allocation3 + $0x218] sm:$0xff]
    %v5991 = vld [vmem:[#allocation3 + $0x220] sm:$0xff]
    %v5992 = vld [vmem:[#allocation3 + $0x228] sm:$0xff]
    %v5993 = vld [vmem:[#allocation3 + $0x230] sm:$0xff]
    %v5994 = vld [vmem:[#allocation3 + $0x238] sm:$0xff]
    %v5995 = vld [vmem:[#allocation3 + $0x240] sm:$0xff]
    %v5996 = vld [vmem:[#allocation3 + $0x248] sm:$0xff]
    %v5997 = vld [vmem:[#allocation3 + $0x250] sm:$0xff]
    %v5998 = vld [vmem:[#allocation3 + $0x258] sm:$0xff]
    %v5999 = vld [vmem:[#allocation3 + $0x260] sm:$0xff]
    %v6000 = vld [vmem:[#allocation3 + $0x268] sm:$0xff]
    %v6001 = vld [vmem:[#allocation3 + $0x270] sm:$0xff]
    %v6002 = vld [vmem:[#allocation3 + $0x278] sm:$0xff]
    %v6003 = vmul.f32 %v5979, %v5987
    %v6004 = vmul.f32 %v5975, %v5988
    %v6005 = vmul.f32 %v5971, %v5989
    %v6006 = vmul.f32 %v5983, %v5990
    %v6007 = vmul.f32 %v5980, %v5991
    %v6008 = vmul.f32 %v5976, %v5992
    %v6009 = vmul.f32 %v5972, %v5993
    %v6010 = vmul.f32 %v5984, %v5994
    %v6011 = vmul.f32 %v5981, %v5995
    %v6012 = vmul.f32 %v5977, %v5996
    %v6013 = vmul.f32 %v5973, %v5997
    %v6014 = vmul.f32 %v5985, %v5998
    %v6015 = vmul.f32 %v5982, %v5999
    %v6016 = vmul.f32 %v5978, %v6000
    %v6017 = vmul.f32 %v5974, %v6001
    %v6018 = vmul.f32 %v5986, %v6002
    %6019 = vst [vmem:[#allocation2 + $0x280] sm:$0xff] %v6003
    %6020 = vst [vmem:[#allocation2 + $0x288] sm:$0xff] %v6004
    %6021 = vst [vmem:[#allocation2 + $0x290] sm:$0xff] %v6005
    %6022 = vst [vmem:[#allocation2 + $0x298] sm:$0xff] %v6006
    %6023 = vst [vmem:[#allocation2 + $0x2a0] sm:$0xff] %v6007
    %6024 = vst [vmem:[#allocation2 + $0x2a8] sm:$0xff] %v6008
    %6025 = vst [vmem:[#allocation2 + $0x2b0] sm:$0xff] %v6009
    %6026 = vst [vmem:[#allocation2 + $0x2b8] sm:$0xff] %v6010
    %6027 = vst [vmem:[#allocation2 + $0x2c0] sm:$0xff] %v6011
    %6028 = vst [vmem:[#allocation2 + $0x2c8] sm:$0xff] %v6012
    %6029 = vst [vmem:[#allocation2 + $0x2d0] sm:$0xff] %v6013
    %6030 = vst [vmem:[#allocation2 + $0x2d8] sm:$0xff] %v6014
    %6031 = vst [vmem:[#allocation2 + $0x2e0] sm:$0xff] %v6015
    %6032 = vst [vmem:[#allocation2 + $0x2e8] sm:$0xff] %v6016
    %6033 = vst [vmem:[#allocation2 + $0x2f0] sm:$0xff] %v6017
    %6034 = vst [vmem:[#allocation2 + $0x2f8] sm:$0xff] %v6018
    %6035 = vrot.lane.b32.xlu0 %v5523, 113
    %v6036 = vpop.permute.xlu0 %6035
    %6037 = vrot.lane.b32.xlu0 %v5527, 113
    %v6038 = vpop.permute.xlu0 %6037
    %6039 = vrot.lane.b32.xlu0 %v5531, 113
    %v6040 = vpop.permute.xlu0 %6039
    %6041 = vrot.lane.b32.xlu0 %v5535, 113
    %v6042 = vpop.permute.xlu0 %6041
    %6043 = vrot.lane.b32.xlu0 %v5524, 113
    %v6044 = vpop.permute.xlu0 %6043
    %6045 = vrot.lane.b32.xlu0 %v5528, 113
    %v6046 = vpop.permute.xlu0 %6045
    %6047 = vrot.lane.b32.xlu0 %v5532, 113
    %v6048 = vpop.permute.xlu0 %6047
    %6049 = vrot.lane.b32.xlu0 %v5536, 113
    %v6050 = vpop.permute.xlu0 %6049
    %6051 = vrot.lane.b32.xlu0 %v5525, 113
    %v6052 = vpop.permute.xlu0 %6051
    %6053 = vrot.lane.b32.xlu0 %v5529, 113
    %v6054 = vpop.permute.xlu0 %6053
    %6055 = vrot.lane.b32.xlu0 %v5533, 113
    %v6056 = vpop.permute.xlu0 %6055
    %6057 = vrot.lane.b32.xlu0 %v5537, 113
    %v6058 = vpop.permute.xlu0 %6057
    %6059 = vrot.lane.b32.xlu0 %v5526, 113
    %v6060 = vpop.permute.xlu0 %6059
    %6061 = vrot.lane.b32.xlu0 %v5530, 113
    %v6062 = vpop.permute.xlu0 %6061
    %6063 = vrot.lane.b32.xlu0 %v5534, 113
    %v6064 = vpop.permute.xlu0 %6063
    %6065 = vrot.lane.b32.xlu0 %v5538, 113
    %v6066 = vpop.permute.xlu0 %6065
    %v6067 = vsel %vm671, %v6052, %v6060
    %v6068 = vsel %vm671, %v6054, %v6062
    %v6069 = vsel %vm671, %v6056, %v6064
    %v6070 = vsel %vm671, %v6058, %v6066
    %v6071 = vsel %vm671, %v6044, %v6052
    %v6072 = vsel %vm671, %v6046, %v6054
    %v6073 = vsel %vm671, %v6048, %v6056
    %v6074 = vsel %vm671, %v6050, %v6058
    %v6075 = vsel %vm671, %v6036, %v6044
    %v6076 = vsel %vm671, %v6038, %v6046
    %v6077 = vsel %vm671, %v6040, %v6048
    %v6078 = vsel %vm671, %v6042, %v6050
    %v6079 = vsel %vm671, %v6060, %v6036
    %v6080 = vsel %vm671, %v6062, %v6038
    %v6081 = vsel %vm671, %v6064, %v6040
    %v6082 = vsel %vm671, %v6066, %v6042
    %v6083 = vld [vmem:[#allocation3 + $0x280] sm:$0xff]
    %v6084 = vld [vmem:[#allocation3 + $0x288] sm:$0xff]
    %v6085 = vld [vmem:[#allocation3 + $0x290] sm:$0xff]
    %v6086 = vld [vmem:[#allocation3 + $0x298] sm:$0xff]
    %v6087 = vld [vmem:[#allocation3 + $0x2a0] sm:$0xff]
    %v6088 = vld [vmem:[#allocation3 + $0x2a8] sm:$0xff]
    %v6089 = vld [vmem:[#allocation3 + $0x2b0] sm:$0xff]
    %v6090 = vld [vmem:[#allocation3 + $0x2b8] sm:$0xff]
    %v6091 = vld [vmem:[#allocation3 + $0x2c0] sm:$0xff]
    %v6092 = vld [vmem:[#allocation3 + $0x2c8] sm:$0xff]
    %v6093 = vld [vmem:[#allocation3 + $0x2d0] sm:$0xff]
    %v6094 = vld [vmem:[#allocation3 + $0x2d8] sm:$0xff]
    %v6095 = vld [vmem:[#allocation3 + $0x2e0] sm:$0xff]
    %v6096 = vld [vmem:[#allocation3 + $0x2e8] sm:$0xff]
    %v6097 = vld [vmem:[#allocation3 + $0x2f0] sm:$0xff]
    %v6098 = vld [vmem:[#allocation3 + $0x2f8] sm:$0xff]
    %v6099 = vmul.f32 %v6075, %v6083
    %v6100 = vmul.f32 %v6071, %v6084
    %v6101 = vmul.f32 %v6067, %v6085
    %v6102 = vmul.f32 %v6079, %v6086
    %v6103 = vmul.f32 %v6076, %v6087
    %v6104 = vmul.f32 %v6072, %v6088
    %v6105 = vmul.f32 %v6068, %v6089
    %v6106 = vmul.f32 %v6080, %v6090
    %v6107 = vmul.f32 %v6077, %v6091
    %v6108 = vmul.f32 %v6073, %v6092
    %v6109 = vmul.f32 %v6069, %v6093
    %v6110 = vmul.f32 %v6081, %v6094
    %v6111 = vmul.f32 %v6078, %v6095
    %v6112 = vmul.f32 %v6074, %v6096
    %v6113 = vmul.f32 %v6070, %v6097
    %v6114 = vmul.f32 %v6082, %v6098
    %6115 = vst [vmem:[#allocation2 + $0x300] sm:$0xff] %v6099
    %6116 = vst [vmem:[#allocation2 + $0x308] sm:$0xff] %v6100
    %6117 = vst [vmem:[#allocation2 + $0x310] sm:$0xff] %v6101
    %6118 = vst [vmem:[#allocation2 + $0x318] sm:$0xff] %v6102
    %6119 = vst [vmem:[#allocation2 + $0x320] sm:$0xff] %v6103
    %6120 = vst [vmem:[#allocation2 + $0x328] sm:$0xff] %v6104
    %6121 = vst [vmem:[#allocation2 + $0x330] sm:$0xff] %v6105
    %6122 = vst [vmem:[#allocation2 + $0x338] sm:$0xff] %v6106
    %6123 = vst [vmem:[#allocation2 + $0x340] sm:$0xff] %v6107
    %6124 = vst [vmem:[#allocation2 + $0x348] sm:$0xff] %v6108
    %6125 = vst [vmem:[#allocation2 + $0x350] sm:$0xff] %v6109
    %6126 = vst [vmem:[#allocation2 + $0x358] sm:$0xff] %v6110
    %6127 = vst [vmem:[#allocation2 + $0x360] sm:$0xff] %v6111
    %6128 = vst [vmem:[#allocation2 + $0x368] sm:$0xff] %v6112
    %6129 = vst [vmem:[#allocation2 + $0x370] sm:$0xff] %v6113
    %6130 = vst [vmem:[#allocation2 + $0x378] sm:$0xff] %v6114
    %6131 = vrot.lane.b32.xlu0 %v5523, 112
    %v6132 = vpop.permute.xlu0 %6131
    %6133 = vrot.lane.b32.xlu0 %v5527, 112
    %v6134 = vpop.permute.xlu0 %6133
    %6135 = vrot.lane.b32.xlu0 %v5531, 112
    %v6136 = vpop.permute.xlu0 %6135
    %6137 = vrot.lane.b32.xlu0 %v5535, 112
    %v6138 = vpop.permute.xlu0 %6137
    %6139 = vrot.lane.b32.xlu0 %v5524, 112
    %v6140 = vpop.permute.xlu0 %6139
    %6141 = vrot.lane.b32.xlu0 %v5528, 112
    %v6142 = vpop.permute.xlu0 %6141
    %6143 = vrot.lane.b32.xlu0 %v5532, 112
    %v6144 = vpop.permute.xlu0 %6143
    %6145 = vrot.lane.b32.xlu0 %v5536, 112
    %v6146 = vpop.permute.xlu0 %6145
    %6147 = vrot.lane.b32.xlu0 %v5525, 112
    %v6148 = vpop.permute.xlu0 %6147
    %6149 = vrot.lane.b32.xlu0 %v5529, 112
    %v6150 = vpop.permute.xlu0 %6149
    %6151 = vrot.lane.b32.xlu0 %v5533, 112
    %v6152 = vpop.permute.xlu0 %6151
    %6153 = vrot.lane.b32.xlu0 %v5537, 112
    %v6154 = vpop.permute.xlu0 %6153
    %6155 = vrot.lane.b32.xlu0 %v5526, 112
    %v6156 = vpop.permute.xlu0 %6155
    %6157 = vrot.lane.b32.xlu0 %v5530, 112
    %v6158 = vpop.permute.xlu0 %6157
    %6159 = vrot.lane.b32.xlu0 %v5534, 112
    %v6160 = vpop.permute.xlu0 %6159
    %6161 = vrot.lane.b32.xlu0 %v5538, 112
    %v6162 = vpop.permute.xlu0 %6161
    %v6163 = vsel %vm768, %v6148, %v6156
    %v6164 = vsel %vm768, %v6150, %v6158
    %v6165 = vsel %vm768, %v6152, %v6160
    %v6166 = vsel %vm768, %v6154, %v6162
    %v6167 = vsel %vm768, %v6140, %v6148
    %v6168 = vsel %vm768, %v6142, %v6150
    %v6169 = vsel %vm768, %v6144, %v6152
    %v6170 = vsel %vm768, %v6146, %v6154
    %v6171 = vsel %vm768, %v6132, %v6140
    %v6172 = vsel %vm768, %v6134, %v6142
    %v6173 = vsel %vm768, %v6136, %v6144
    %v6174 = vsel %vm768, %v6138, %v6146
    %v6175 = vsel %vm768, %v6156, %v6132
    %v6176 = vsel %vm768, %v6158, %v6134
    %v6177 = vsel %vm768, %v6160, %v6136
    %v6178 = vsel %vm768, %v6162, %v6138
    %v6179 = vld [vmem:[#allocation3 + $0x300] sm:$0xff]
    %v6180 = vld [vmem:[#allocation3 + $0x308] sm:$0xff]
    %v6181 = vld [vmem:[#allocation3 + $0x310] sm:$0xff]
    %v6182 = vld [vmem:[#allocation3 + $0x318] sm:$0xff]
    %v6183 = vld [vmem:[#allocation3 + $0x320] sm:$0xff]
    %v6184 = vld [vmem:[#allocation3 + $0x328] sm:$0xff]
    %v6185 = vld [vmem:[#allocation3 + $0x330] sm:$0xff]
    %v6186 = vld [vmem:[#allocation3 + $0x338] sm:$0xff]
    %v6187 = vld [vmem:[#allocation3 + $0x340] sm:$0xff]
    %v6188 = vld [vmem:[#allocation3 + $0x348] sm:$0xff]
    %v6189 = vld [vmem:[#allocation3 + $0x350] sm:$0xff]
    %v6190 = vld [vmem:[#allocation3 + $0x358] sm:$0xff]
    %v6191 = vld [vmem:[#allocation3 + $0x360] sm:$0xff]
    %v6192 = vld [vmem:[#allocation3 + $0x368] sm:$0xff]
    %v6193 = vld [vmem:[#allocation3 + $0x370] sm:$0xff]
    %v6194 = vld [vmem:[#allocation3 + $0x378] sm:$0xff]
    %v6195 = vmul.f32 %v6171, %v6179
    %v6196 = vmul.f32 %v6167, %v6180
    %v6197 = vmul.f32 %v6163, %v6181
    %v6198 = vmul.f32 %v6175, %v6182
    %v6199 = vmul.f32 %v6172, %v6183
    %v6200 = vmul.f32 %v6168, %v6184
    %v6201 = vmul.f32 %v6164, %v6185
    %v6202 = vmul.f32 %v6176, %v6186
    %v6203 = vmul.f32 %v6173, %v6187
    %v6204 = vmul.f32 %v6169, %v6188
    %v6205 = vmul.f32 %v6165, %v6189
    %v6206 = vmul.f32 %v6177, %v6190
    %v6207 = vmul.f32 %v6174, %v6191
    %v6208 = vmul.f32 %v6170, %v6192
    %v6209 = vmul.f32 %v6166, %v6193
    %v6210 = vmul.f32 %v6178, %v6194
    %6211 = vst [vmem:[#allocation2 + $0x380] sm:$0xff] %v6195
    %6212 = vst [vmem:[#allocation2 + $0x388] sm:$0xff] %v6196
    %6213 = vst [vmem:[#allocation2 + $0x390] sm:$0xff] %v6197
    %6214 = vst [vmem:[#allocation2 + $0x398] sm:$0xff] %v6198
    %6215 = vst [vmem:[#allocation2 + $0x3a0] sm:$0xff] %v6199
    %6216 = vst [vmem:[#allocation2 + $0x3a8] sm:$0xff] %v6200
    %6217 = vst [vmem:[#allocation2 + $0x3b0] sm:$0xff] %v6201
    %6218 = vst [vmem:[#allocation2 + $0x3b8] sm:$0xff] %v6202
    %6219 = vst [vmem:[#allocation2 + $0x3c0] sm:$0xff] %v6203
    %6220 = vst [vmem:[#allocation2 + $0x3c8] sm:$0xff] %v6204
    %6221 = vst [vmem:[#allocation2 + $0x3d0] sm:$0xff] %v6205
    %6222 = vst [vmem:[#allocation2 + $0x3d8] sm:$0xff] %v6206
    %6223 = vst [vmem:[#allocation2 + $0x3e0] sm:$0xff] %v6207
    %6224 = vst [vmem:[#allocation2 + $0x3e8] sm:$0xff] %v6208
    %6225 = vst [vmem:[#allocation2 + $0x3f0] sm:$0xff] %v6209
    %6226 = vst [vmem:[#allocation2 + $0x3f8] sm:$0xff] %v6210
    %6227 = vrot.lane.b32.xlu0 %v5523, 111
    %v6228 = vpop.permute.xlu0 %6227
    %6229 = vrot.lane.b32.xlu0 %v5527, 111
    %v6230 = vpop.permute.xlu0 %6229
    %6231 = vrot.lane.b32.xlu0 %v5531, 111
    %v6232 = vpop.permute.xlu0 %6231
    %6233 = vrot.lane.b32.xlu0 %v5535, 111
    %v6234 = vpop.permute.xlu0 %6233
    %6235 = vrot.lane.b32.xlu0 %v5524, 111
    %v6236 = vpop.permute.xlu0 %6235
    %6237 = vrot.lane.b32.xlu0 %v5528, 111
    %v6238 = vpop.permute.xlu0 %6237
    %6239 = vrot.lane.b32.xlu0 %v5532, 111
    %v6240 = vpop.permute.xlu0 %6239
    %6241 = vrot.lane.b32.xlu0 %v5536, 111
    %v6242 = vpop.permute.xlu0 %6241
    %6243 = vrot.lane.b32.xlu0 %v5525, 111
    %v6244 = vpop.permute.xlu0 %6243
    %6245 = vrot.lane.b32.xlu0 %v5529, 111
    %v6246 = vpop.permute.xlu0 %6245
    %6247 = vrot.lane.b32.xlu0 %v5533, 111
    %v6248 = vpop.permute.xlu0 %6247
    %6249 = vrot.lane.b32.xlu0 %v5537, 111
    %v6250 = vpop.permute.xlu0 %6249
    %6251 = vrot.lane.b32.xlu0 %v5526, 111
    %v6252 = vpop.permute.xlu0 %6251
    %6253 = vrot.lane.b32.xlu0 %v5530, 111
    %v6254 = vpop.permute.xlu0 %6253
    %6255 = vrot.lane.b32.xlu0 %v5534, 111
    %v6256 = vpop.permute.xlu0 %6255
    %6257 = vrot.lane.b32.xlu0 %v5538, 111
    %v6258 = vpop.permute.xlu0 %6257
    %v6259 = vsel %vm865, %v6244, %v6252
    %v6260 = vsel %vm865, %v6246, %v6254
    %v6261 = vsel %vm865, %v6248, %v6256
    %v6262 = vsel %vm865, %v6250, %v6258
    %v6263 = vsel %vm865, %v6236, %v6244
    %v6264 = vsel %vm865, %v6238, %v6246
    %v6265 = vsel %vm865, %v6240, %v6248
    %v6266 = vsel %vm865, %v6242, %v6250
    %v6267 = vsel %vm865, %v6228, %v6236
    %v6268 = vsel %vm865, %v6230, %v6238
    %v6269 = vsel %vm865, %v6232, %v6240
    %v6270 = vsel %vm865, %v6234, %v6242
    %v6271 = vsel %vm865, %v6252, %v6228
    %v6272 = vsel %vm865, %v6254, %v6230
    %v6273 = vsel %vm865, %v6256, %v6232
    %v6274 = vsel %vm865, %v6258, %v6234
    %v6275 = vld [vmem:[#allocation3 + $0x380] sm:$0xff]
    %v6276 = vld [vmem:[#allocation3 + $0x388] sm:$0xff]
    %v6277 = vld [vmem:[#allocation3 + $0x390] sm:$0xff]
    %v6278 = vld [vmem:[#allocation3 + $0x398] sm:$0xff]
    %v6279 = vld [vmem:[#allocation3 + $0x3a0] sm:$0xff]
    %v6280 = vld [vmem:[#allocation3 + $0x3a8] sm:$0xff]
    %v6281 = vld [vmem:[#allocation3 + $0x3b0] sm:$0xff]
    %v6282 = vld [vmem:[#allocation3 + $0x3b8] sm:$0xff]
    %v6283 = vld [vmem:[#allocation3 + $0x3c0] sm:$0xff]
    %v6284 = vld [vmem:[#allocation3 + $0x3c8] sm:$0xff]
    %v6285 = vld [vmem:[#allocation3 + $0x3d0] sm:$0xff]
    %v6286 = vld [vmem:[#allocation3 + $0x3d8] sm:$0xff]
    %v6287 = vld [vmem:[#allocation3 + $0x3e0] sm:$0xff]
    %v6288 = vld [vmem:[#allocation3 + $0x3e8] sm:$0xff]
    %v6289 = vld [vmem:[#allocation3 + $0x3f0] sm:$0xff]
    %v6290 = vld [vmem:[#allocation3 + $0x3f8] sm:$0xff]
    %v6291 = vmul.f32 %v6267, %v6275
    %v6292 = vmul.f32 %v6263, %v6276
    %v6293 = vmul.f32 %v6259, %v6277
    %v6294 = vmul.f32 %v6271, %v6278
    %v6295 = vmul.f32 %v6268, %v6279
    %v6296 = vmul.f32 %v6264, %v6280
    %v6297 = vmul.f32 %v6260, %v6281
    %v6298 = vmul.f32 %v6272, %v6282
    %v6299 = vmul.f32 %v6269, %v6283
    %v6300 = vmul.f32 %v6265, %v6284
    %v6301 = vmul.f32 %v6261, %v6285
    %v6302 = vmul.f32 %v6273, %v6286
    %v6303 = vmul.f32 %v6270, %v6287
    %v6304 = vmul.f32 %v6266, %v6288
    %v6305 = vmul.f32 %v6262, %v6289
    %v6306 = vmul.f32 %v6274, %v6290
    %6307 = vst [vmem:[#allocation2 + $0x400] sm:$0xff] %v6291
    %6308 = vst [vmem:[#allocation2 + $0x408] sm:$0xff] %v6292
    %6309 = vst [vmem:[#allocation2 + $0x410] sm:$0xff] %v6293
    %6310 = vst [vmem:[#allocation2 + $0x418] sm:$0xff] %v6294
    %6311 = vst [vmem:[#allocation2 + $0x420] sm:$0xff] %v6295
    %6312 = vst [vmem:[#allocation2 + $0x428] sm:$0xff] %v6296
    %6313 = vst [vmem:[#allocation2 + $0x430] sm:$0xff] %v6297
    %6314 = vst [vmem:[#allocation2 + $0x438] sm:$0xff] %v6298
    %6315 = vst [vmem:[#allocation2 + $0x440] sm:$0xff] %v6299
    %6316 = vst [vmem:[#allocation2 + $0x448] sm:$0xff] %v6300
    %6317 = vst [vmem:[#allocation2 + $0x450] sm:$0xff] %v6301
    %6318 = vst [vmem:[#allocation2 + $0x458] sm:$0xff] %v6302
    %6319 = vst [vmem:[#allocation2 + $0x460] sm:$0xff] %v6303
    %6320 = vst [vmem:[#allocation2 + $0x468] sm:$0xff] %v6304
    %6321 = vst [vmem:[#allocation2 + $0x470] sm:$0xff] %v6305
    %6322 = vst [vmem:[#allocation2 + $0x478] sm:$0xff] %v6306
    %v6323 = vld [vmem:[#allocation6 + $0x180] sm:$0xff]
    %v6324 = vld [vmem:[#allocation6 + $0x188] sm:$0xff]
    %v6325 = vld [vmem:[#allocation6 + $0x190] sm:$0xff]
    %v6326 = vld [vmem:[#allocation6 + $0x198] sm:$0xff]
    %v6327 = vld [vmem:[#allocation6 + $0x1a0] sm:$0xff]
    %v6328 = vld [vmem:[#allocation6 + $0x1a8] sm:$0xff]
    %v6329 = vld [vmem:[#allocation6 + $0x1b0] sm:$0xff]
    %v6330 = vld [vmem:[#allocation6 + $0x1b8] sm:$0xff]
    %v6331 = vld [vmem:[#allocation6 + $0x1c0] sm:$0xff]
    %v6332 = vld [vmem:[#allocation6 + $0x1c8] sm:$0xff]
    %v6333 = vld [vmem:[#allocation6 + $0x1d0] sm:$0xff]
    %v6334 = vld [vmem:[#allocation6 + $0x1d8] sm:$0xff]
    %v6335 = vld [vmem:[#allocation2] sm:$0xff]
    %v6336 = vld [vmem:[#allocation2 + $0x8] sm:$0xff]
    %v6337 = vld [vmem:[#allocation2 + $0x10] sm:$0xff]
    %v6338 = vld [vmem:[#allocation2 + $0x18] sm:$0xff]
    %v6339 = vld [vmem:[#allocation2 + $0x20] sm:$0xff]
    %v6340 = vld [vmem:[#allocation2 + $0x28] sm:$0xff]
    %v6341 = vld [vmem:[#allocation2 + $0x30] sm:$0xff]
    %v6342 = vld [vmem:[#allocation2 + $0x38] sm:$0xff]
    %v6343 = vld [vmem:[#allocation2 + $0x40] sm:$0xff]
    %v6344 = vld [vmem:[#allocation2 + $0x48] sm:$0xff]
    %v6345 = vld [vmem:[#allocation2 + $0x50] sm:$0xff]
    %v6346 = vld [vmem:[#allocation2 + $0x58] sm:$0xff]
    %v6347 = vld [vmem:[#allocation2 + $0x60] sm:$0xff]
    %v6348 = vld [vmem:[#allocation2 + $0x68] sm:$0xff]
    %v6349 = vld [vmem:[#allocation2 + $0x70] sm:$0xff]
    %v6350 = vld [vmem:[#allocation2 + $0x78] sm:$0xff]
    %v6351 = vld [vmem:[#allocation2 + $0x80] sm:$0xff]
    %v6352 = vld [vmem:[#allocation2 + $0x88] sm:$0xff]
    %v6353 = vld [vmem:[#allocation2 + $0x90] sm:$0xff]
    %v6354 = vld [vmem:[#allocation2 + $0x98] sm:$0xff]
    %v6355 = vld [vmem:[#allocation2 + $0xa0] sm:$0xff]
    %v6356 = vld [vmem:[#allocation2 + $0xa8] sm:$0xff]
    %v6357 = vld [vmem:[#allocation2 + $0xb0] sm:$0xff]
    %v6358 = vld [vmem:[#allocation2 + $0xb8] sm:$0xff]
    %v6359 = vld [vmem:[#allocation2 + $0xc0] sm:$0xff]
    %v6360 = vld [vmem:[#allocation2 + $0xc8] sm:$0xff]
    %v6361 = vld [vmem:[#allocation2 + $0xd0] sm:$0xff]
    %v6362 = vld [vmem:[#allocation2 + $0xd8] sm:$0xff]
    %v6363 = vld [vmem:[#allocation2 + $0xe0] sm:$0xff]
    %v6364 = vld [vmem:[#allocation2 + $0xe8] sm:$0xff]
    %v6365 = vld [vmem:[#allocation2 + $0xf0] sm:$0xff]
    %v6366 = vld [vmem:[#allocation2 + $0xf8] sm:$0xff]
    %v6367 = vld [vmem:[#allocation2 + $0x100] sm:$0xff]
    %v6368 = vld [vmem:[#allocation2 + $0x108] sm:$0xff]
    %v6369 = vld [vmem:[#allocation2 + $0x110] sm:$0xff]
    %v6370 = vld [vmem:[#allocation2 + $0x118] sm:$0xff]
    %v6371 = vld [vmem:[#allocation2 + $0x120] sm:$0xff]
    %v6372 = vld [vmem:[#allocation2 + $0x128] sm:$0xff]
    %v6373 = vld [vmem:[#allocation2 + $0x130] sm:$0xff]
    %v6374 = vld [vmem:[#allocation2 + $0x138] sm:$0xff]
    %v6375 = vld [vmem:[#allocation2 + $0x140] sm:$0xff]
    %v6376 = vld [vmem:[#allocation2 + $0x148] sm:$0xff]
    %v6377 = vld [vmem:[#allocation2 + $0x150] sm:$0xff]
    %v6378 = vld [vmem:[#allocation2 + $0x158] sm:$0xff]
    %v6379 = vld [vmem:[#allocation2 + $0x160] sm:$0xff]
    %v6380 = vld [vmem:[#allocation2 + $0x168] sm:$0xff]
    %v6381 = vld [vmem:[#allocation2 + $0x170] sm:$0xff]
    %v6382 = vld [vmem:[#allocation2 + $0x178] sm:$0xff]
    %v6383 = vld [vmem:[#allocation2 + $0x180] sm:$0xff]
    %v6384 = vld [vmem:[#allocation2 + $0x188] sm:$0xff]
    %v6385 = vld [vmem:[#allocation2 + $0x190] sm:$0xff]
    %v6386 = vld [vmem:[#allocation2 + $0x198] sm:$0xff]
    %v6387 = vld [vmem:[#allocation2 + $0x1a0] sm:$0xff]
    %v6388 = vld [vmem:[#allocation2 + $0x1a8] sm:$0xff]
    %v6389 = vld [vmem:[#allocation2 + $0x1b0] sm:$0xff]
    %v6390 = vld [vmem:[#allocation2 + $0x1b8] sm:$0xff]
    %v6391 = vld [vmem:[#allocation2 + $0x1c0] sm:$0xff]
    %v6392 = vld [vmem:[#allocation2 + $0x1c8] sm:$0xff]
    %v6393 = vld [vmem:[#allocation2 + $0x1d0] sm:$0xff]
    %v6394 = vld [vmem:[#allocation2 + $0x1d8] sm:$0xff]
    %v6395 = vld [vmem:[#allocation2 + $0x1e0] sm:$0xff]
    %v6396 = vld [vmem:[#allocation2 + $0x1e8] sm:$0xff]
    %v6397 = vld [vmem:[#allocation2 + $0x1f0] sm:$0xff]
    %v6398 = vld [vmem:[#allocation2 + $0x1f8] sm:$0xff]
    %v6399 = vld [vmem:[#allocation2 + $0x200] sm:$0xff]
    %v6400 = vld [vmem:[#allocation2 + $0x208] sm:$0xff]
    %v6401 = vld [vmem:[#allocation2 + $0x210] sm:$0xff]
    %v6402 = vld [vmem:[#allocation2 + $0x218] sm:$0xff]
    %v6403 = vld [vmem:[#allocation2 + $0x220] sm:$0xff]
    %v6404 = vld [vmem:[#allocation2 + $0x228] sm:$0xff]
    %v6405 = vld [vmem:[#allocation2 + $0x230] sm:$0xff]
    %v6406 = vld [vmem:[#allocation2 + $0x238] sm:$0xff]
    %v6407 = vld [vmem:[#allocation2 + $0x240] sm:$0xff]
    %v6408 = vld [vmem:[#allocation2 + $0x248] sm:$0xff]
    %v6409 = vld [vmem:[#allocation2 + $0x250] sm:$0xff]
    %v6410 = vld [vmem:[#allocation2 + $0x258] sm:$0xff]
    %v6411 = vld [vmem:[#allocation2 + $0x260] sm:$0xff]
    %v6412 = vld [vmem:[#allocation2 + $0x268] sm:$0xff]
    %v6413 = vld [vmem:[#allocation2 + $0x270] sm:$0xff]
    %v6414 = vld [vmem:[#allocation2 + $0x278] sm:$0xff]
    %v6415 = vld [vmem:[#allocation2 + $0x280] sm:$0xff]
    %v6416 = vld [vmem:[#allocation2 + $0x288] sm:$0xff]
    %v6417 = vld [vmem:[#allocation2 + $0x290] sm:$0xff]
    %v6418 = vld [vmem:[#allocation2 + $0x298] sm:$0xff]
    %v6419 = vld [vmem:[#allocation2 + $0x2a0] sm:$0xff]
    %v6420 = vld [vmem:[#allocation2 + $0x2a8] sm:$0xff]
    %v6421 = vld [vmem:[#allocation2 + $0x2b0] sm:$0xff]
    %v6422 = vld [vmem:[#allocation2 + $0x2b8] sm:$0xff]
    %v6423 = vld [vmem:[#allocation2 + $0x2c0] sm:$0xff]
    %v6424 = vld [vmem:[#allocation2 + $0x2c8] sm:$0xff]
    %v6425 = vld [vmem:[#allocation2 + $0x2d0] sm:$0xff]
    %v6426 = vld [vmem:[#allocation2 + $0x2d8] sm:$0xff]
    %v6427 = vld [vmem:[#allocation2 + $0x2e0] sm:$0xff]
    %v6428 = vld [vmem:[#allocation2 + $0x2e8] sm:$0xff]
    %v6429 = vld [vmem:[#allocation2 + $0x2f0] sm:$0xff]
    %v6430 = vld [vmem:[#allocation2 + $0x2f8] sm:$0xff]
    %v6431 = vld [vmem:[#allocation2 + $0x300] sm:$0xff]
    %v6432 = vld [vmem:[#allocation2 + $0x308] sm:$0xff]
    %v6433 = vld [vmem:[#allocation2 + $0x310] sm:$0xff]
    %v6434 = vld [vmem:[#allocation2 + $0x318] sm:$0xff]
    %v6435 = vld [vmem:[#allocation2 + $0x320] sm:$0xff]
    %v6436 = vld [vmem:[#allocation2 + $0x328] sm:$0xff]
    %v6437 = vld [vmem:[#allocation2 + $0x330] sm:$0xff]
    %v6438 = vld [vmem:[#allocation2 + $0x338] sm:$0xff]
    %v6439 = vld [vmem:[#allocation2 + $0x340] sm:$0xff]
    %v6440 = vld [vmem:[#allocation2 + $0x348] sm:$0xff]
    %v6441 = vld [vmem:[#allocation2 + $0x350] sm:$0xff]
    %v6442 = vld [vmem:[#allocation2 + $0x358] sm:$0xff]
    %v6443 = vld [vmem:[#allocation2 + $0x360] sm:$0xff]
    %v6444 = vld [vmem:[#allocation2 + $0x368] sm:$0xff]
    %v6445 = vld [vmem:[#allocation2 + $0x370] sm:$0xff]
    %v6446 = vld [vmem:[#allocation2 + $0x378] sm:$0xff]
    %v6447 = vld [vmem:[#allocation2 + $0x380] sm:$0xff]
    %v6448 = vld [vmem:[#allocation2 + $0x388] sm:$0xff]
    %v6449 = vld [vmem:[#allocation2 + $0x390] sm:$0xff]
    %v6450 = vld [vmem:[#allocation2 + $0x398] sm:$0xff]
    %v6451 = vld [vmem:[#allocation2 + $0x3a0] sm:$0xff]
    %v6452 = vld [vmem:[#allocation2 + $0x3a8] sm:$0xff]
    %v6453 = vld [vmem:[#allocation2 + $0x3b0] sm:$0xff]
    %v6454 = vld [vmem:[#allocation2 + $0x3b8] sm:$0xff]
    %v6455 = vld [vmem:[#allocation2 + $0x3c0] sm:$0xff]
    %v6456 = vld [vmem:[#allocation2 + $0x3c8] sm:$0xff]
    %v6457 = vld [vmem:[#allocation2 + $0x3d0] sm:$0xff]
    %v6458 = vld [vmem:[#allocation2 + $0x3d8] sm:$0xff]
    %v6459 = vld [vmem:[#allocation2 + $0x3e0] sm:$0xff]
    %v6460 = vld [vmem:[#allocation2 + $0x3e8] sm:$0xff]
    %v6461 = vld [vmem:[#allocation2 + $0x3f0] sm:$0xff]
    %v6462 = vld [vmem:[#allocation2 + $0x3f8] sm:$0xff]
    %v6463 = vld [vmem:[#allocation2 + $0x400] sm:$0xff]
    %v6464 = vld [vmem:[#allocation2 + $0x408] sm:$0xff]
    %v6465 = vld [vmem:[#allocation2 + $0x410] sm:$0xff]
    %v6466 = vld [vmem:[#allocation2 + $0x418] sm:$0xff]
    %v6467 = vld [vmem:[#allocation2 + $0x420] sm:$0xff]
    %v6468 = vld [vmem:[#allocation2 + $0x428] sm:$0xff]
    %v6469 = vld [vmem:[#allocation2 + $0x430] sm:$0xff]
    %v6470 = vld [vmem:[#allocation2 + $0x438] sm:$0xff]
    %v6471 = vld [vmem:[#allocation2 + $0x440] sm:$0xff]
    %v6472 = vld [vmem:[#allocation2 + $0x448] sm:$0xff]
    %v6473 = vld [vmem:[#allocation2 + $0x450] sm:$0xff]
    %v6474 = vld [vmem:[#allocation2 + $0x458] sm:$0xff]
    %v6475 = vld [vmem:[#allocation2 + $0x460] sm:$0xff]
    %v6476 = vld [vmem:[#allocation2 + $0x468] sm:$0xff]
    %v6477 = vld [vmem:[#allocation2 + $0x470] sm:$0xff]
    %v6478 = vld [vmem:[#allocation2 + $0x478] sm:$0xff]
    %v6479 = vld [vmem:[%s3 + $0x80] sm:$0xff]
    %v6480 = vld [vmem:[%s3 + $0x88] sm:$0xff]
    %v6481 = vld [vmem:[%s3 + $0x90] sm:$0xff]
    %v6482 = vld [vmem:[%s3 + $0x98] sm:$0xff]
    %6484 = vset.pattern.permute.xlu0 0
    %6485 = vperm.xlu0 %6484, %v6479
    %v6486 = vpop.permute.xlu0 %6485
    %6489 = vset.pattern.permute.xlu0 0
    %6490 = vperm.xlu0 %6489, %v6480
    %v6491 = vpop.permute.xlu0 %6490
    %6494 = vset.pattern.permute.xlu0 0
    %6495 = vperm.xlu0 %6494, %v6481
    %v6496 = vpop.permute.xlu0 %6495
    %6499 = vset.pattern.permute.xlu0 0
    %6500 = vperm.xlu0 %6499, %v6482
    %v6501 = vpop.permute.xlu0 %6500
    %v6504 = vsel %vm1110, %v6325, 0
    %v6507 = vsel %vm1110, %v6328, 0
    %v6510 = vsel %vm1110, %v6331, 0
    %v6513 = vsel %vm1110, %v6334, 0
    %6515 = vmatpush.msra.mxu0 %v6395
    %6516 = vmatpush.msra.mxu0 %v6391
    %6517 = vmatpush.msra.mxu0 %v6387
    %6518 = vmatpush.msra.mxu0 %v6383
    %6519 = vmatpush.msra.mxu0 %v6379
    %6520 = vmatpush.msra.mxu0 %v6375
    %6521 = vmatpush.msra.mxu0 %v6371
    %6522 = vmatpush.msra.mxu0 %v6367
    %6523 = vmatpush.msra.mxu0 %v6363
    %6524 = vmatpush.msra.mxu0 %v6359
    %6525 = vmatpush.msra.mxu0 %v6355
    %6526 = vmatpush.msra.mxu0 %v6351
    %6527 = vmatpush.msra.mxu0 %v6347
    %6528 = vmatpush.msra.mxu0 %v6343
    %6529 = vmatpush.msra.mxu0 %v6339
    %6530 = vmatpush.msra.mxu0 %v6335
    %6531 = vmatmul.f32.gmra.mxu0 %v6323
    %v6532 = vpop.f32.mrf.mxu0
    %v6533 = vadd.f32 %v6486, %v6532
    %6534 = vmatmul.f32.gmra.mxu0 %v6326
    %v6535 = vpop.f32.mrf.mxu0
    %v6536 = vadd.f32 %v6491, %v6535
    %6537 = vmatmul.f32.gmra.mxu0 %v6329
    %v6538 = vpop.f32.mrf.mxu0
    %v6539 = vadd.f32 %v6496, %v6538
    %6540 = vmatmul.f32.gmra.mxu0 %v6332
    %v6541 = vpop.f32.mrf.mxu0
    %v6542 = vadd.f32 %v6501, %v6541
    %6543 = vdwg.mxu0
    %6544 = vmatpush.msra.mxu0 %v6459
    %6545 = vmatpush.msra.mxu0 %v6455
    %6546 = vmatpush.msra.mxu0 %v6451
    %6547 = vmatpush.msra.mxu0 %v6447
    %6548 = vmatpush.msra.mxu0 %v6443
    %6549 = vmatpush.msra.mxu0 %v6439
    %6550 = vmatpush.msra.mxu0 %v6435
    %6551 = vmatpush.msra.mxu0 %v6431
    %6552 = vmatpush.msra.mxu0 %v6427
    %6553 = vmatpush.msra.mxu0 %v6423
    %6554 = vmatpush.msra.mxu0 %v6419
    %6555 = vmatpush.msra.mxu0 %v6415
    %6556 = vmatpush.msra.mxu0 %v6411
    %6557 = vmatpush.msra.mxu0 %v6407
    %6558 = vmatpush.msra.mxu0 %v6403
    %6559 = vmatpush.msra.mxu0 %v6399
    %6560 = vmatmul.f32.gmra.mxu0 %v6324
    %v6561 = vpop.f32.mrf.mxu0
    %v6562 = vadd.f32 %v6533, %v6561
    %6563 = vmatmul.f32.gmra.mxu0 %v6327
    %v6564 = vpop.f32.mrf.mxu0
    %v6565 = vadd.f32 %v6536, %v6564
    %6566 = vmatmul.f32.gmra.mxu0 %v6330
    %v6567 = vpop.f32.mrf.mxu0
    %v6568 = vadd.f32 %v6539, %v6567
    %6569 = vmatmul.f32.gmra.mxu0 %v6333
    %v6570 = vpop.f32.mrf.mxu0
    %v6571 = vadd.f32 %v6542, %v6570
    %6572 = vdwg.mxu0
    %6573 = vmatpush.msra.mxu0 0.0
    %6574 = vmatpush.msra.mxu0 0.0
    %6575 = vmatpush.msra.mxu0 0.0
    %6576 = vmatpush.msra.mxu0 0.0
    %6577 = vmatpush.msra.mxu0 0.0
    %6578 = vmatpush.msra.mxu0 0.0
    %6579 = vmatpush.msra.mxu0 0.0
    %6580 = vmatpush.msra.mxu0 0.0
    %6581 = vmatpush.msra.mxu0 0.0
    %6582 = vmatpush.msra.mxu0 0.0
    %6583 = vmatpush.msra.mxu0 0.0
    %6584 = vmatpush.msra.mxu0 0.0
    %6585 = vmatpush.msra.mxu0 %v6475
    %6586 = vmatpush.msra.mxu0 %v6471
    %6587 = vmatpush.msra.mxu0 %v6467
    %6588 = vmatpush.msra.mxu0 %v6463
    %6589 = vmatmul.f32.gmra.mxu0 %v6504
    %v6590 = vpop.f32.mrf.mxu0
    %v6591 = vadd.f32 %v6562, %v6590
    %6592 = vmatmul.f32.gmra.mxu0 %v6507
    %v6593 = vpop.f32.mrf.mxu0
    %v6594 = vadd.f32 %v6565, %v6593
    %6595 = vmatmul.f32.gmra.mxu0 %v6510
    %v6596 = vpop.f32.mrf.mxu0
    %v6597 = vadd.f32 %v6568, %v6596
    %6598 = vmatmul.f32.gmra.mxu0 %v6513
    %v6599 = vpop.f32.mrf.mxu0
    %v6600 = vadd.f32 %v6571, %v6599
    %6601 = vdwg.mxu0
    %6602 = vmatpush.msra.mxu0 %v6396
    %6603 = vmatpush.msra.mxu0 %v6392
    %6604 = vmatpush.msra.mxu0 %v6388
    %6605 = vmatpush.msra.mxu0 %v6384
    %6606 = vmatpush.msra.mxu0 %v6380
    %6607 = vmatpush.msra.mxu0 %v6376
    %6608 = vmatpush.msra.mxu0 %v6372
    %6609 = vmatpush.msra.mxu0 %v6368
    %6610 = vmatpush.msra.mxu0 %v6364
    %6611 = vmatpush.msra.mxu0 %v6360
    %6612 = vmatpush.msra.mxu0 %v6356
    %6613 = vmatpush.msra.mxu0 %v6352
    %6614 = vmatpush.msra.mxu0 %v6348
    %6615 = vmatpush.msra.mxu0 %v6344
    %6616 = vmatpush.msra.mxu0 %v6340
    %6617 = vmatpush.msra.mxu0 %v6336
    %6618 = vmatmul.f32.gmra.mxu0 %v6323
    %v6619 = vpop.f32.mrf.mxu0
    %v6620 = vadd.f32 %v6486, %v6619
    %6621 = vmatmul.f32.gmra.mxu0 %v6326
    %v6622 = vpop.f32.mrf.mxu0
    %v6623 = vadd.f32 %v6491, %v6622
    %6624 = vmatmul.f32.gmra.mxu0 %v6329
    %v6625 = vpop.f32.mrf.mxu0
    %v6626 = vadd.f32 %v6496, %v6625
    %6627 = vmatmul.f32.gmra.mxu0 %v6332
    %v6628 = vpop.f32.mrf.mxu0
    %v6629 = vadd.f32 %v6501, %v6628
    %6630 = vdwg.mxu0
    %6631 = vmatpush.msra.mxu0 %v6460
    %6632 = vmatpush.msra.mxu0 %v6456
    %6633 = vmatpush.msra.mxu0 %v6452
    %6634 = vmatpush.msra.mxu0 %v6448
    %6635 = vmatpush.msra.mxu0 %v6444
    %6636 = vmatpush.msra.mxu0 %v6440
    %6637 = vmatpush.msra.mxu0 %v6436
    %6638 = vmatpush.msra.mxu0 %v6432
    %6639 = vmatpush.msra.mxu0 %v6428
    %6640 = vmatpush.msra.mxu0 %v6424
    %6641 = vmatpush.msra.mxu0 %v6420
    %6642 = vmatpush.msra.mxu0 %v6416
    %6643 = vmatpush.msra.mxu0 %v6412
    %6644 = vmatpush.msra.mxu0 %v6408
    %6645 = vmatpush.msra.mxu0 %v6404
    %6646 = vmatpush.msra.mxu0 %v6400
    %6647 = vmatmul.f32.gmra.mxu0 %v6324
    %v6648 = vpop.f32.mrf.mxu0
    %v6649 = vadd.f32 %v6620, %v6648
    %6650 = vmatmul.f32.gmra.mxu0 %v6327
    %v6651 = vpop.f32.mrf.mxu0
    %v6652 = vadd.f32 %v6623, %v6651
    %6653 = vmatmul.f32.gmra.mxu0 %v6330
    %v6654 = vpop.f32.mrf.mxu0
    %v6655 = vadd.f32 %v6626, %v6654
    %6656 = vmatmul.f32.gmra.mxu0 %v6333
    %v6657 = vpop.f32.mrf.mxu0
    %v6658 = vadd.f32 %v6629, %v6657
    %6659 = vdwg.mxu0
    %6660 = vmatpush.msra.mxu0 0.0
    %6661 = vmatpush.msra.mxu0 0.0
    %6662 = vmatpush.msra.mxu0 0.0
    %6663 = vmatpush.msra.mxu0 0.0
    %6664 = vmatpush.msra.mxu0 0.0
    %6665 = vmatpush.msra.mxu0 0.0
    %6666 = vmatpush.msra.mxu0 0.0
    %6667 = vmatpush.msra.mxu0 0.0
    %6668 = vmatpush.msra.mxu0 0.0
    %6669 = vmatpush.msra.mxu0 0.0
    %6670 = vmatpush.msra.mxu0 0.0
    %6671 = vmatpush.msra.mxu0 0.0
    %6672 = vmatpush.msra.mxu0 %v6476
    %6673 = vmatpush.msra.mxu0 %v6472
    %6674 = vmatpush.msra.mxu0 %v6468
    %6675 = vmatpush.msra.mxu0 %v6464
    %6676 = vmatmul.f32.gmra.mxu0 %v6504
    %v6677 = vpop.f32.mrf.mxu0
    %v6678 = vadd.f32 %v6649, %v6677
    %6679 = vmatmul.f32.gmra.mxu0 %v6507
    %v6680 = vpop.f32.mrf.mxu0
    %v6681 = vadd.f32 %v6652, %v6680
    %6682 = vmatmul.f32.gmra.mxu0 %v6510
    %v6683 = vpop.f32.mrf.mxu0
    %v6684 = vadd.f32 %v6655, %v6683
    %6685 = vmatmul.f32.gmra.mxu0 %v6513
    %v6686 = vpop.f32.mrf.mxu0
    %v6687 = vadd.f32 %v6658, %v6686
    %6688 = vdwg.mxu0
    %6689 = vmatpush.msra.mxu0 %v6397
    %6690 = vmatpush.msra.mxu0 %v6393
    %6691 = vmatpush.msra.mxu0 %v6389
    %6692 = vmatpush.msra.mxu0 %v6385
    %6693 = vmatpush.msra.mxu0 %v6381
    %6694 = vmatpush.msra.mxu0 %v6377
    %6695 = vmatpush.msra.mxu0 %v6373
    %6696 = vmatpush.msra.mxu0 %v6369
    %6697 = vmatpush.msra.mxu0 %v6365
    %6698 = vmatpush.msra.mxu0 %v6361
    %6699 = vmatpush.msra.mxu0 %v6357
    %6700 = vmatpush.msra.mxu0 %v6353
    %6701 = vmatpush.msra.mxu0 %v6349
    %6702 = vmatpush.msra.mxu0 %v6345
    %6703 = vmatpush.msra.mxu0 %v6341
    %6704 = vmatpush.msra.mxu0 %v6337
    %6705 = vmatmul.f32.gmra.mxu0 %v6323
    %v6706 = vpop.f32.mrf.mxu0
    %v6707 = vadd.f32 %v6486, %v6706
    %6708 = vmatmul.f32.gmra.mxu0 %v6326
    %v6709 = vpop.f32.mrf.mxu0
    %v6710 = vadd.f32 %v6491, %v6709
    %6711 = vmatmul.f32.gmra.mxu0 %v6329
    %v6712 = vpop.f32.mrf.mxu0
    %v6713 = vadd.f32 %v6496, %v6712
    %6714 = vmatmul.f32.gmra.mxu0 %v6332
    %v6715 = vpop.f32.mrf.mxu0
    %v6716 = vadd.f32 %v6501, %v6715
    %6717 = vdwg.mxu0
    %6718 = vmatpush.msra.mxu0 %v6461
    %6719 = vmatpush.msra.mxu0 %v6457
    %6720 = vmatpush.msra.mxu0 %v6453
    %6721 = vmatpush.msra.mxu0 %v6449
    %6722 = vmatpush.msra.mxu0 %v6445
    %6723 = vmatpush.msra.mxu0 %v6441
    %6724 = vmatpush.msra.mxu0 %v6437
    %6725 = vmatpush.msra.mxu0 %v6433
    %6726 = vmatpush.msra.mxu0 %v6429
    %6727 = vmatpush.msra.mxu0 %v6425
    %6728 = vmatpush.msra.mxu0 %v6421
    %6729 = vmatpush.msra.mxu0 %v6417
    %6730 = vmatpush.msra.mxu0 %v6413
    %6731 = vmatpush.msra.mxu0 %v6409
    %6732 = vmatpush.msra.mxu0 %v6405
    %6733 = vmatpush.msra.mxu0 %v6401
    %6734 = vmatmul.f32.gmra.mxu0 %v6324
    %v6735 = vpop.f32.mrf.mxu0
    %v6736 = vadd.f32 %v6707, %v6735
    %6737 = vmatmul.f32.gmra.mxu0 %v6327
    %v6738 = vpop.f32.mrf.mxu0
    %v6739 = vadd.f32 %v6710, %v6738
    %6740 = vmatmul.f32.gmra.mxu0 %v6330
    %v6741 = vpop.f32.mrf.mxu0
    %v6742 = vadd.f32 %v6713, %v6741
    %6743 = vmatmul.f32.gmra.mxu0 %v6333
    %v6744 = vpop.f32.mrf.mxu0
    %v6745 = vadd.f32 %v6716, %v6744
    %6746 = vdwg.mxu0
    %6747 = vmatpush.msra.mxu0 0.0
    %6748 = vmatpush.msra.mxu0 0.0
    %6749 = vmatpush.msra.mxu0 0.0
    %6750 = vmatpush.msra.mxu0 0.0
    %6751 = vmatpush.msra.mxu0 0.0
    %6752 = vmatpush.msra.mxu0 0.0
    %6753 = vmatpush.msra.mxu0 0.0
    %6754 = vmatpush.msra.mxu0 0.0
    %6755 = vmatpush.msra.mxu0 0.0
    %6756 = vmatpush.msra.mxu0 0.0
    %6757 = vmatpush.msra.mxu0 0.0
    %6758 = vmatpush.msra.mxu0 0.0
    %6759 = vmatpush.msra.mxu0 %v6477
    %6760 = vmatpush.msra.mxu0 %v6473
    %6761 = vmatpush.msra.mxu0 %v6469
    %6762 = vmatpush.msra.mxu0 %v6465
    %6763 = vmatmul.f32.gmra.mxu0 %v6504
    %v6764 = vpop.f32.mrf.mxu0
    %v6765 = vadd.f32 %v6736, %v6764
    %6766 = vmatmul.f32.gmra.mxu0 %v6507
    %v6767 = vpop.f32.mrf.mxu0
    %v6768 = vadd.f32 %v6739, %v6767
    %6769 = vmatmul.f32.gmra.mxu0 %v6510
    %v6770 = vpop.f32.mrf.mxu0
    %v6771 = vadd.f32 %v6742, %v6770
    %6772 = vmatmul.f32.gmra.mxu0 %v6513
    %v6773 = vpop.f32.mrf.mxu0
    %v6774 = vadd.f32 %v6745, %v6773
    %6775 = vdwg.mxu0
    %6776 = vmatpush.msra.mxu0 %v6398
    %6777 = vmatpush.msra.mxu0 %v6394
    %6778 = vmatpush.msra.mxu0 %v6390
    %6779 = vmatpush.msra.mxu0 %v6386
    %6780 = vmatpush.msra.mxu0 %v6382
    %6781 = vmatpush.msra.mxu0 %v6378
    %6782 = vmatpush.msra.mxu0 %v6374
    %6783 = vmatpush.msra.mxu0 %v6370
    %6784 = vmatpush.msra.mxu0 %v6366
    %6785 = vmatpush.msra.mxu0 %v6362
    %6786 = vmatpush.msra.mxu0 %v6358
    %6787 = vmatpush.msra.mxu0 %v6354
    %6788 = vmatpush.msra.mxu0 %v6350
    %6789 = vmatpush.msra.mxu0 %v6346
    %6790 = vmatpush.msra.mxu0 %v6342
    %6791 = vmatpush.msra.mxu0 %v6338
    %6792 = vmatmul.f32.gmra.mxu0 %v6323
    %v6793 = vpop.f32.mrf.mxu0
    %v6794 = vadd.f32 %v6486, %v6793
    %6795 = vmatmul.f32.gmra.mxu0 %v6326
    %v6796 = vpop.f32.mrf.mxu0
    %v6797 = vadd.f32 %v6491, %v6796
    %6798 = vmatmul.f32.gmra.mxu0 %v6329
    %v6799 = vpop.f32.mrf.mxu0
    %v6800 = vadd.f32 %v6496, %v6799
    %6801 = vmatmul.f32.gmra.mxu0 %v6332
    %v6802 = vpop.f32.mrf.mxu0
    %v6803 = vadd.f32 %v6501, %v6802
    %6804 = vdwg.mxu0
    %6805 = vmatpush.msra.mxu0 %v6462
    %6806 = vmatpush.msra.mxu0 %v6458
    %6807 = vmatpush.msra.mxu0 %v6454
    %6808 = vmatpush.msra.mxu0 %v6450
    %6809 = vmatpush.msra.mxu0 %v6446
    %6810 = vmatpush.msra.mxu0 %v6442
    %6811 = vmatpush.msra.mxu0 %v6438
    %6812 = vmatpush.msra.mxu0 %v6434
    %6813 = vmatpush.msra.mxu0 %v6430
    %6814 = vmatpush.msra.mxu0 %v6426
    %6815 = vmatpush.msra.mxu0 %v6422
    %6816 = vmatpush.msra.mxu0 %v6418
    %6817 = vmatpush.msra.mxu0 %v6414
    %6818 = vmatpush.msra.mxu0 %v6410
    %6819 = vmatpush.msra.mxu0 %v6406
    %6820 = vmatpush.msra.mxu0 %v6402
    %6821 = vmatmul.f32.gmra.mxu0 %v6324
    %v6822 = vpop.f32.mrf.mxu0
    %v6823 = vadd.f32 %v6794, %v6822
    %6824 = vmatmul.f32.gmra.mxu0 %v6327
    %v6825 = vpop.f32.mrf.mxu0
    %v6826 = vadd.f32 %v6797, %v6825
    %6827 = vmatmul.f32.gmra.mxu0 %v6330
    %v6828 = vpop.f32.mrf.mxu0
    %v6829 = vadd.f32 %v6800, %v6828
    %6830 = vmatmul.f32.gmra.mxu0 %v6333
    %v6831 = vpop.f32.mrf.mxu0
    %v6832 = vadd.f32 %v6803, %v6831
    %6833 = vdwg.mxu0
    %6834 = vmatpush.msra.mxu0 0.0
    %6835 = vmatpush.msra.mxu0 0.0
    %6836 = vmatpush.msra.mxu0 0.0
    %6837 = vmatpush.msra.mxu0 0.0
    %6838 = vmatpush.msra.mxu0 0.0
    %6839 = vmatpush.msra.mxu0 0.0
    %6840 = vmatpush.msra.mxu0 0.0
    %6841 = vmatpush.msra.mxu0 0.0
    %6842 = vmatpush.msra.mxu0 0.0
    %6843 = vmatpush.msra.mxu0 0.0
    %6844 = vmatpush.msra.mxu0 0.0
    %6845 = vmatpush.msra.mxu0 0.0
    %6846 = vmatpush.msra.mxu0 %v6478
    %6847 = vmatpush.msra.mxu0 %v6474
    %6848 = vmatpush.msra.mxu0 %v6470
    %6849 = vmatpush.msra.mxu0 %v6466
    %6850 = vmatmul.f32.gmra.mxu0 %v6504
    %v6851 = vpop.f32.mrf.mxu0
    %v6852 = vadd.f32 %v6823, %v6851
    %6853 = vmatmul.f32.gmra.mxu0 %v6507
    %v6854 = vpop.f32.mrf.mxu0
    %v6855 = vadd.f32 %v6826, %v6854
    %6856 = vmatmul.f32.gmra.mxu0 %v6510
    %v6857 = vpop.f32.mrf.mxu0
    %v6858 = vadd.f32 %v6829, %v6857
    %6859 = vmatmul.f32.gmra.mxu0 %v6513
    %v6860 = vpop.f32.mrf.mxu0
    %v6861 = vadd.f32 %v6832, %v6860
    %6862 = vdwg.mxu0
    %v6863 = vmul.f32 %v6591, 0.01
    %v6864 = vmul.f32 %v6678, 0.01
    %v6865 = vmul.f32 %v6765, 0.01
    %v6866 = vmul.f32 %v6852, 0.01
    %v6867 = vmul.f32 %v6594, 0.01
    %v6868 = vmul.f32 %v6681, 0.01
    %v6869 = vmul.f32 %v6768, 0.01
    %v6870 = vmul.f32 %v6855, 0.01
    %v6871 = vmul.f32 %v6597, 0.01
    %v6872 = vmul.f32 %v6684, 0.01
    %v6873 = vmul.f32 %v6771, 0.01
    %v6874 = vmul.f32 %v6858, 0.01
    %v6875 = vmul.f32 %v6600, 0.01
    %v6876 = vmul.f32 %v6687, 0.01
    %v6877 = vmul.f32 %v6774, 0.01
    %v6878 = vmul.f32 %v6861, 0.01
    %v6879 = vmax.f32 %v6591, %v6863
    %v6880 = vmax.f32 %v6678, %v6864
    %v6881 = vmax.f32 %v6765, %v6865
    %v6882 = vmax.f32 %v6852, %v6866
    %v6883 = vmax.f32 %v6594, %v6867
    %v6884 = vmax.f32 %v6681, %v6868
    %v6885 = vmax.f32 %v6768, %v6869
    %v6886 = vmax.f32 %v6855, %v6870
    %v6887 = vmax.f32 %v6597, %v6871
    %v6888 = vmax.f32 %v6684, %v6872
    %v6889 = vmax.f32 %v6771, %v6873
    %v6890 = vmax.f32 %v6858, %v6874
    %v6891 = vmax.f32 %v6600, %v6875
    %v6892 = vmax.f32 %v6687, %v6876
    %v6893 = vmax.f32 %v6774, %v6877
    %v6894 = vmax.f32 %v6861, %v6878
    %6895 = vrot.lane.b32.xlu0 %v6879, 17
    %v6896 = vpop.permute.xlu0 %6895
    %6897 = vrot.lane.b32.xlu0 %v6883, 17
    %v6898 = vpop.permute.xlu0 %6897
    %6899 = vrot.lane.b32.xlu0 %v6887, 17
    %v6900 = vpop.permute.xlu0 %6899
    %6901 = vrot.lane.b32.xlu0 %v6891, 17
    %v6902 = vpop.permute.xlu0 %6901
    %6903 = vrot.lane.b32.xlu0 %v6880, 17
    %v6904 = vpop.permute.xlu0 %6903
    %6905 = vrot.lane.b32.xlu0 %v6884, 17
    %v6906 = vpop.permute.xlu0 %6905
    %6907 = vrot.lane.b32.xlu0 %v6888, 17
    %v6908 = vpop.permute.xlu0 %6907
    %6909 = vrot.lane.b32.xlu0 %v6892, 17
    %v6910 = vpop.permute.xlu0 %6909
    %6911 = vrot.lane.b32.xlu0 %v6881, 17
    %v6912 = vpop.permute.xlu0 %6911
    %6913 = vrot.lane.b32.xlu0 %v6885, 17
    %v6914 = vpop.permute.xlu0 %6913
    %6915 = vrot.lane.b32.xlu0 %v6889, 17
    %v6916 = vpop.permute.xlu0 %6915
    %6917 = vrot.lane.b32.xlu0 %v6893, 17
    %v6918 = vpop.permute.xlu0 %6917
    %6919 = vrot.lane.b32.xlu0 %v6882, 17
    %v6920 = vpop.permute.xlu0 %6919
    %6921 = vrot.lane.b32.xlu0 %v6886, 17
    %v6922 = vpop.permute.xlu0 %6921
    %6923 = vrot.lane.b32.xlu0 %v6890, 17
    %v6924 = vpop.permute.xlu0 %6923
    %6925 = vrot.lane.b32.xlu0 %v6894, 17
    %v6926 = vpop.permute.xlu0 %6925
    %v6927 = vsel %vm170, %v6912, %v6920
    %v6928 = vsel %vm170, %v6914, %v6922
    %v6929 = vsel %vm170, %v6916, %v6924
    %v6930 = vsel %vm170, %v6918, %v6926
    %v6931 = vsel %vm170, %v6904, %v6912
    %v6932 = vsel %vm170, %v6906, %v6914
    %v6933 = vsel %vm170, %v6908, %v6916
    %v6934 = vsel %vm170, %v6910, %v6918
    %v6935 = vsel %vm170, %v6896, %v6904
    %v6936 = vsel %vm170, %v6898, %v6906
    %v6937 = vsel %vm170, %v6900, %v6908
    %v6938 = vsel %vm170, %v6902, %v6910
    %v6939 = vsel %vm170, %v6920, %v6896
    %v6940 = vsel %vm170, %v6922, %v6898
    %v6941 = vsel %vm170, %v6924, %v6900
    %v6942 = vsel %vm170, %v6926, %v6902
    %v6943 = vld [vmem:[#allocation3] sm:$0xff]
    %v6944 = vld [vmem:[#allocation3 + $0x8] sm:$0xff]
    %v6945 = vld [vmem:[#allocation3 + $0x10] sm:$0xff]
    %v6946 = vld [vmem:[#allocation3 + $0x18] sm:$0xff]
    %v6947 = vld [vmem:[#allocation3 + $0x20] sm:$0xff]
    %v6948 = vld [vmem:[#allocation3 + $0x28] sm:$0xff]
    %v6949 = vld [vmem:[#allocation3 + $0x30] sm:$0xff]
    %v6950 = vld [vmem:[#allocation3 + $0x38] sm:$0xff]
    %v6951 = vld [vmem:[#allocation3 + $0x40] sm:$0xff]
    %v6952 = vld [vmem:[#allocation3 + $0x48] sm:$0xff]
    %v6953 = vld [vmem:[#allocation3 + $0x50] sm:$0xff]
    %v6954 = vld [vmem:[#allocation3 + $0x58] sm:$0xff]
    %v6955 = vld [vmem:[#allocation3 + $0x60] sm:$0xff]
    %v6956 = vld [vmem:[#allocation3 + $0x68] sm:$0xff]
    %v6957 = vld [vmem:[#allocation3 + $0x70] sm:$0xff]
    %v6958 = vld [vmem:[#allocation3 + $0x78] sm:$0xff]
    %v6959 = vmul.f32 %v6939, %v6943
    %v6960 = vmul.f32 %v6935, %v6944
    %v6961 = vmul.f32 %v6931, %v6945
    %v6962 = vmul.f32 %v6927, %v6946
    %v6963 = vmul.f32 %v6940, %v6947
    %v6964 = vmul.f32 %v6936, %v6948
    %v6965 = vmul.f32 %v6932, %v6949
    %v6966 = vmul.f32 %v6928, %v6950
    %v6967 = vmul.f32 %v6941, %v6951
    %v6968 = vmul.f32 %v6937, %v6952
    %v6969 = vmul.f32 %v6933, %v6953
    %v6970 = vmul.f32 %v6929, %v6954
    %v6971 = vmul.f32 %v6942, %v6955
    %v6972 = vmul.f32 %v6938, %v6956
    %v6973 = vmul.f32 %v6934, %v6957
    %v6974 = vmul.f32 %v6930, %v6958
    %6975 = vst [vmem:[#allocation2] sm:$0xff] %v6959
    %6976 = vst [vmem:[#allocation2 + $0x8] sm:$0xff] %v6960
    %6977 = vst [vmem:[#allocation2 + $0x10] sm:$0xff] %v6961
    %6978 = vst [vmem:[#allocation2 + $0x18] sm:$0xff] %v6962
    %6979 = vst [vmem:[#allocation2 + $0x20] sm:$0xff] %v6963
    %6980 = vst [vmem:[#allocation2 + $0x28] sm:$0xff] %v6964
    %6981 = vst [vmem:[#allocation2 + $0x30] sm:$0xff] %v6965
    %6982 = vst [vmem:[#allocation2 + $0x38] sm:$0xff] %v6966
    %6983 = vst [vmem:[#allocation2 + $0x40] sm:$0xff] %v6967
    %6984 = vst [vmem:[#allocation2 + $0x48] sm:$0xff] %v6968
    %6985 = vst [vmem:[#allocation2 + $0x50] sm:$0xff] %v6969
    %6986 = vst [vmem:[#allocation2 + $0x58] sm:$0xff] %v6970
    %6987 = vst [vmem:[#allocation2 + $0x60] sm:$0xff] %v6971
    %6988 = vst [vmem:[#allocation2 + $0x68] sm:$0xff] %v6972
    %6989 = vst [vmem:[#allocation2 + $0x70] sm:$0xff] %v6973
    %6990 = vst [vmem:[#allocation2 + $0x78] sm:$0xff] %v6974
    %6991 = vrot.lane.b32.xlu0 %v6879, 16
    %v6992 = vpop.permute.xlu0 %6991
    %6993 = vrot.lane.b32.xlu0 %v6883, 16
    %v6994 = vpop.permute.xlu0 %6993
    %6995 = vrot.lane.b32.xlu0 %v6887, 16
    %v6996 = vpop.permute.xlu0 %6995
    %6997 = vrot.lane.b32.xlu0 %v6891, 16
    %v6998 = vpop.permute.xlu0 %6997
    %6999 = vrot.lane.b32.xlu0 %v6880, 16
    %v7000 = vpop.permute.xlu0 %6999
    %7001 = vrot.lane.b32.xlu0 %v6884, 16
    %v7002 = vpop.permute.xlu0 %7001
    %7003 = vrot.lane.b32.xlu0 %v6888, 16
    %v7004 = vpop.permute.xlu0 %7003
    %7005 = vrot.lane.b32.xlu0 %v6892, 16
    %v7006 = vpop.permute.xlu0 %7005
    %7007 = vrot.lane.b32.xlu0 %v6881, 16
    %v7008 = vpop.permute.xlu0 %7007
    %7009 = vrot.lane.b32.xlu0 %v6885, 16
    %v7010 = vpop.permute.xlu0 %7009
    %7011 = vrot.lane.b32.xlu0 %v6889, 16
    %v7012 = vpop.permute.xlu0 %7011
    %7013 = vrot.lane.b32.xlu0 %v6893, 16
    %v7014 = vpop.permute.xlu0 %7013
    %7015 = vrot.lane.b32.xlu0 %v6882, 16
    %v7016 = vpop.permute.xlu0 %7015
    %7017 = vrot.lane.b32.xlu0 %v6886, 16
    %v7018 = vpop.permute.xlu0 %7017
    %7019 = vrot.lane.b32.xlu0 %v6890, 16
    %v7020 = vpop.permute.xlu0 %7019
    %7021 = vrot.lane.b32.xlu0 %v6894, 16
    %v7022 = vpop.permute.xlu0 %7021
    %v7023 = vsel %vm267, %v7008, %v7016
    %v7024 = vsel %vm267, %v7010, %v7018
    %v7025 = vsel %vm267, %v7012, %v7020
    %v7026 = vsel %vm267, %v7014, %v7022
    %v7027 = vsel %vm267, %v7000, %v7008
    %v7028 = vsel %vm267, %v7002, %v7010
    %v7029 = vsel %vm267, %v7004, %v7012
    %v7030 = vsel %vm267, %v7006, %v7014
    %v7031 = vsel %vm267, %v6992, %v7000
    %v7032 = vsel %vm267, %v6994, %v7002
    %v7033 = vsel %vm267, %v6996, %v7004
    %v7034 = vsel %vm267, %v6998, %v7006
    %v7035 = vsel %vm267, %v7016, %v6992
    %v7036 = vsel %vm267, %v7018, %v6994
    %v7037 = vsel %vm267, %v7020, %v6996
    %v7038 = vsel %vm267, %v7022, %v6998
    %v7039 = vld [vmem:[#allocation3 + $0x80] sm:$0xff]
    %v7040 = vld [vmem:[#allocation3 + $0x88] sm:$0xff]
    %v7041 = vld [vmem:[#allocation3 + $0x90] sm:$0xff]
    %v7042 = vld [vmem:[#allocation3 + $0x98] sm:$0xff]
    %v7043 = vld [vmem:[#allocation3 + $0xa0] sm:$0xff]
    %v7044 = vld [vmem:[#allocation3 + $0xa8] sm:$0xff]
    %v7045 = vld [vmem:[#allocation3 + $0xb0] sm:$0xff]
    %v7046 = vld [vmem:[#allocation3 + $0xb8] sm:$0xff]
    %v7047 = vld [vmem:[#allocation3 + $0xc0] sm:$0xff]
    %v7048 = vld [vmem:[#allocation3 + $0xc8] sm:$0xff]
    %v7049 = vld [vmem:[#allocation3 + $0xd0] sm:$0xff]
    %v7050 = vld [vmem:[#allocation3 + $0xd8] sm:$0xff]
    %v7051 = vld [vmem:[#allocation3 + $0xe0] sm:$0xff]
    %v7052 = vld [vmem:[#allocation3 + $0xe8] sm:$0xff]
    %v7053 = vld [vmem:[#allocation3 + $0xf0] sm:$0xff]
    %v7054 = vld [vmem:[#allocation3 + $0xf8] sm:$0xff]
    %v7055 = vmul.f32 %v7035, %v7039
    %v7056 = vmul.f32 %v7031, %v7040
    %v7057 = vmul.f32 %v7027, %v7041
    %v7058 = vmul.f32 %v7023, %v7042
    %v7059 = vmul.f32 %v7036, %v7043
    %v7060 = vmul.f32 %v7032, %v7044
    %v7061 = vmul.f32 %v7028, %v7045
    %v7062 = vmul.f32 %v7024, %v7046
    %v7063 = vmul.f32 %v7037, %v7047
    %v7064 = vmul.f32 %v7033, %v7048
    %v7065 = vmul.f32 %v7029, %v7049
    %v7066 = vmul.f32 %v7025, %v7050
    %v7067 = vmul.f32 %v7038, %v7051
    %v7068 = vmul.f32 %v7034, %v7052
    %v7069 = vmul.f32 %v7030, %v7053
    %v7070 = vmul.f32 %v7026, %v7054
    %7071 = vst [vmem:[#allocation2 + $0x80] sm:$0xff] %v7055
    %7072 = vst [vmem:[#allocation2 + $0x88] sm:$0xff] %v7056
    %7073 = vst [vmem:[#allocation2 + $0x90] sm:$0xff] %v7057
    %7074 = vst [vmem:[#allocation2 + $0x98] sm:$0xff] %v7058
    %7075 = vst [vmem:[#allocation2 + $0xa0] sm:$0xff] %v7059
    %7076 = vst [vmem:[#allocation2 + $0xa8] sm:$0xff] %v7060
    %7077 = vst [vmem:[#allocation2 + $0xb0] sm:$0xff] %v7061
    %7078 = vst [vmem:[#allocation2 + $0xb8] sm:$0xff] %v7062
    %7079 = vst [vmem:[#allocation2 + $0xc0] sm:$0xff] %v7063
    %7080 = vst [vmem:[#allocation2 + $0xc8] sm:$0xff] %v7064
    %7081 = vst [vmem:[#allocation2 + $0xd0] sm:$0xff] %v7065
    %7082 = vst [vmem:[#allocation2 + $0xd8] sm:$0xff] %v7066
    %7083 = vst [vmem:[#allocation2 + $0xe0] sm:$0xff] %v7067
    %7084 = vst [vmem:[#allocation2 + $0xe8] sm:$0xff] %v7068
    %7085 = vst [vmem:[#allocation2 + $0xf0] sm:$0xff] %v7069
    %7086 = vst [vmem:[#allocation2 + $0xf8] sm:$0xff] %v7070
    %7087 = vrot.lane.b32.xlu0 %v6879, 15
    %v7088 = vpop.permute.xlu0 %7087
    %7089 = vrot.lane.b32.xlu0 %v6883, 15
    %v7090 = vpop.permute.xlu0 %7089
    %7091 = vrot.lane.b32.xlu0 %v6887, 15
    %v7092 = vpop.permute.xlu0 %7091
    %7093 = vrot.lane.b32.xlu0 %v6891, 15
    %v7094 = vpop.permute.xlu0 %7093
    %7095 = vrot.lane.b32.xlu0 %v6880, 15
    %v7096 = vpop.permute.xlu0 %7095
    %7097 = vrot.lane.b32.xlu0 %v6884, 15
    %v7098 = vpop.permute.xlu0 %7097
    %7099 = vrot.lane.b32.xlu0 %v6888, 15
    %v7100 = vpop.permute.xlu0 %7099
    %7101 = vrot.lane.b32.xlu0 %v6892, 15
    %v7102 = vpop.permute.xlu0 %7101
    %7103 = vrot.lane.b32.xlu0 %v6881, 15
    %v7104 = vpop.permute.xlu0 %7103
    %7105 = vrot.lane.b32.xlu0 %v6885, 15
    %v7106 = vpop.permute.xlu0 %7105
    %7107 = vrot.lane.b32.xlu0 %v6889, 15
    %v7108 = vpop.permute.xlu0 %7107
    %7109 = vrot.lane.b32.xlu0 %v6893, 15
    %v7110 = vpop.permute.xlu0 %7109
    %7111 = vrot.lane.b32.xlu0 %v6882, 15
    %v7112 = vpop.permute.xlu0 %7111
    %7113 = vrot.lane.b32.xlu0 %v6886, 15
    %v7114 = vpop.permute.xlu0 %7113
    %7115 = vrot.lane.b32.xlu0 %v6890, 15
    %v7116 = vpop.permute.xlu0 %7115
    %7117 = vrot.lane.b32.xlu0 %v6894, 15
    %v7118 = vpop.permute.xlu0 %7117
    %v7119 = vsel %vm364, %v7104, %v7112
    %v7120 = vsel %vm364, %v7106, %v7114
    %v7121 = vsel %vm364, %v7108, %v7116
    %v7122 = vsel %vm364, %v7110, %v7118
    %v7123 = vsel %vm364, %v7096, %v7104
    %v7124 = vsel %vm364, %v7098, %v7106
    %v7125 = vsel %vm364, %v7100, %v7108
    %v7126 = vsel %vm364, %v7102, %v7110
    %v7127 = vsel %vm364, %v7088, %v7096
    %v7128 = vsel %vm364, %v7090, %v7098
    %v7129 = vsel %vm364, %v7092, %v7100
    %v7130 = vsel %vm364, %v7094, %v7102
    %v7131 = vsel %vm364, %v7112, %v7088
    %v7132 = vsel %vm364, %v7114, %v7090
    %v7133 = vsel %vm364, %v7116, %v7092
    %v7134 = vsel %vm364, %v7118, %v7094
    %v7135 = vld [vmem:[#allocation3 + $0x100] sm:$0xff]
    %v7136 = vld [vmem:[#allocation3 + $0x108] sm:$0xff]
    %v7137 = vld [vmem:[#allocation3 + $0x110] sm:$0xff]
    %v7138 = vld [vmem:[#allocation3 + $0x118] sm:$0xff]
    %v7139 = vld [vmem:[#allocation3 + $0x120] sm:$0xff]
    %v7140 = vld [vmem:[#allocation3 + $0x128] sm:$0xff]
    %v7141 = vld [vmem:[#allocation3 + $0x130] sm:$0xff]
    %v7142 = vld [vmem:[#allocation3 + $0x138] sm:$0xff]
    %v7143 = vld [vmem:[#allocation3 + $0x140] sm:$0xff]
    %v7144 = vld [vmem:[#allocation3 + $0x148] sm:$0xff]
    %v7145 = vld [vmem:[#allocation3 + $0x150] sm:$0xff]
    %v7146 = vld [vmem:[#allocation3 + $0x158] sm:$0xff]
    %v7147 = vld [vmem:[#allocation3 + $0x160] sm:$0xff]
    %v7148 = vld [vmem:[#allocation3 + $0x168] sm:$0xff]
    %v7149 = vld [vmem:[#allocation3 + $0x170] sm:$0xff]
    %v7150 = vld [vmem:[#allocation3 + $0x178] sm:$0xff]
    %v7151 = vmul.f32 %v7131, %v7135
    %v7152 = vmul.f32 %v7127, %v7136
    %v7153 = vmul.f32 %v7123, %v7137
    %v7154 = vmul.f32 %v7119, %v7138
    %v7155 = vmul.f32 %v7132, %v7139
    %v7156 = vmul.f32 %v7128, %v7140
    %v7157 = vmul.f32 %v7124, %v7141
    %v7158 = vmul.f32 %v7120, %v7142
    %v7159 = vmul.f32 %v7133, %v7143
    %v7160 = vmul.f32 %v7129, %v7144
    %v7161 = vmul.f32 %v7125, %v7145
    %v7162 = vmul.f32 %v7121, %v7146
    %v7163 = vmul.f32 %v7134, %v7147
    %v7164 = vmul.f32 %v7130, %v7148
    %v7165 = vmul.f32 %v7126, %v7149
    %v7166 = vmul.f32 %v7122, %v7150
    %7167 = vst [vmem:[#allocation2 + $0x100] sm:$0xff] %v7151
    %7168 = vst [vmem:[#allocation2 + $0x108] sm:$0xff] %v7152
    %7169 = vst [vmem:[#allocation2 + $0x110] sm:$0xff] %v7153
    %7170 = vst [vmem:[#allocation2 + $0x118] sm:$0xff] %v7154
    %7171 = vst [vmem:[#allocation2 + $0x120] sm:$0xff] %v7155
    %7172 = vst [vmem:[#allocation2 + $0x128] sm:$0xff] %v7156
    %7173 = vst [vmem:[#allocation2 + $0x130] sm:$0xff] %v7157
    %7174 = vst [vmem:[#allocation2 + $0x138] sm:$0xff] %v7158
    %7175 = vst [vmem:[#allocation2 + $0x140] sm:$0xff] %v7159
    %7176 = vst [vmem:[#allocation2 + $0x148] sm:$0xff] %v7160
    %7177 = vst [vmem:[#allocation2 + $0x150] sm:$0xff] %v7161
    %7178 = vst [vmem:[#allocation2 + $0x158] sm:$0xff] %v7162
    %7179 = vst [vmem:[#allocation2 + $0x160] sm:$0xff] %v7163
    %7180 = vst [vmem:[#allocation2 + $0x168] sm:$0xff] %v7164
    %7181 = vst [vmem:[#allocation2 + $0x170] sm:$0xff] %v7165
    %7182 = vst [vmem:[#allocation2 + $0x178] sm:$0xff] %v7166
    %7183 = vrot.lane.b32.xlu0 %v6879, 1
    %v7184 = vpop.permute.xlu0 %7183
    %7185 = vrot.lane.b32.xlu0 %v6883, 1
    %v7186 = vpop.permute.xlu0 %7185
    %7187 = vrot.lane.b32.xlu0 %v6887, 1
    %v7188 = vpop.permute.xlu0 %7187
    %7189 = vrot.lane.b32.xlu0 %v6891, 1
    %v7190 = vpop.permute.xlu0 %7189
    %7191 = vrot.lane.b32.xlu0 %v6880, 1
    %v7192 = vpop.permute.xlu0 %7191
    %7193 = vrot.lane.b32.xlu0 %v6884, 1
    %v7194 = vpop.permute.xlu0 %7193
    %7195 = vrot.lane.b32.xlu0 %v6888, 1
    %v7196 = vpop.permute.xlu0 %7195
    %7197 = vrot.lane.b32.xlu0 %v6892, 1
    %v7198 = vpop.permute.xlu0 %7197
    %7199 = vrot.lane.b32.xlu0 %v6881, 1
    %v7200 = vpop.permute.xlu0 %7199
    %7201 = vrot.lane.b32.xlu0 %v6885, 1
    %v7202 = vpop.permute.xlu0 %7201
    %7203 = vrot.lane.b32.xlu0 %v6889, 1
    %v7204 = vpop.permute.xlu0 %7203
    %7205 = vrot.lane.b32.xlu0 %v6893, 1
    %v7206 = vpop.permute.xlu0 %7205
    %7207 = vrot.lane.b32.xlu0 %v6882, 1
    %v7208 = vpop.permute.xlu0 %7207
    %7209 = vrot.lane.b32.xlu0 %v6886, 1
    %v7210 = vpop.permute.xlu0 %7209
    %7211 = vrot.lane.b32.xlu0 %v6890, 1
    %v7212 = vpop.permute.xlu0 %7211
    %7213 = vrot.lane.b32.xlu0 %v6894, 1
    %v7214 = vpop.permute.xlu0 %7213
    %v7215 = vsel %vm461, %v7200, %v7208
    %v7216 = vsel %vm461, %v7202, %v7210
    %v7217 = vsel %vm461, %v7204, %v7212
    %v7218 = vsel %vm461, %v7206, %v7214
    %v7219 = vsel %vm461, %v7192, %v7200
    %v7220 = vsel %vm461, %v7194, %v7202
    %v7221 = vsel %vm461, %v7196, %v7204
    %v7222 = vsel %vm461, %v7198, %v7206
    %v7223 = vsel %vm461, %v7184, %v7192
    %v7224 = vsel %vm461, %v7186, %v7194
    %v7225 = vsel %vm461, %v7188, %v7196
    %v7226 = vsel %vm461, %v7190, %v7198
    %v7227 = vsel %vm461, %v7208, %v7184
    %v7228 = vsel %vm461, %v7210, %v7186
    %v7229 = vsel %vm461, %v7212, %v7188
    %v7230 = vsel %vm461, %v7214, %v7190
    %v7231 = vld [vmem:[#allocation3 + $0x180] sm:$0xff]
    %v7232 = vld [vmem:[#allocation3 + $0x188] sm:$0xff]
    %v7233 = vld [vmem:[#allocation3 + $0x190] sm:$0xff]
    %v7234 = vld [vmem:[#allocation3 + $0x198] sm:$0xff]
    %v7235 = vld [vmem:[#allocation3 + $0x1a0] sm:$0xff]
    %v7236 = vld [vmem:[#allocation3 + $0x1a8] sm:$0xff]
    %v7237 = vld [vmem:[#allocation3 + $0x1b0] sm:$0xff]
    %v7238 = vld [vmem:[#allocation3 + $0x1b8] sm:$0xff]
    %v7239 = vld [vmem:[#allocation3 + $0x1c0] sm:$0xff]
    %v7240 = vld [vmem:[#allocation3 + $0x1c8] sm:$0xff]
    %v7241 = vld [vmem:[#allocation3 + $0x1d0] sm:$0xff]
    %v7242 = vld [vmem:[#allocation3 + $0x1d8] sm:$0xff]
    %v7243 = vld [vmem:[#allocation3 + $0x1e0] sm:$0xff]
    %v7244 = vld [vmem:[#allocation3 + $0x1e8] sm:$0xff]
    %v7245 = vld [vmem:[#allocation3 + $0x1f0] sm:$0xff]
    %v7246 = vld [vmem:[#allocation3 + $0x1f8] sm:$0xff]
    %v7247 = vmul.f32 %v7227, %v7231
    %v7248 = vmul.f32 %v7223, %v7232
    %v7249 = vmul.f32 %v7219, %v7233
    %v7250 = vmul.f32 %v7215, %v7234
    %v7251 = vmul.f32 %v7228, %v7235
    %v7252 = vmul.f32 %v7224, %v7236
    %v7253 = vmul.f32 %v7220, %v7237
    %v7254 = vmul.f32 %v7216, %v7238
    %v7255 = vmul.f32 %v7229, %v7239
    %v7256 = vmul.f32 %v7225, %v7240
    %v7257 = vmul.f32 %v7221, %v7241
    %v7258 = vmul.f32 %v7217, %v7242
    %v7259 = vmul.f32 %v7230, %v7243
    %v7260 = vmul.f32 %v7226, %v7244
    %v7261 = vmul.f32 %v7222, %v7245
    %v7262 = vmul.f32 %v7218, %v7246
    %7263 = vst [vmem:[#allocation2 + $0x180] sm:$0xff] %v7247
    %7264 = vst [vmem:[#allocation2 + $0x188] sm:$0xff] %v7248
    %7265 = vst [vmem:[#allocation2 + $0x190] sm:$0xff] %v7249
    %7266 = vst [vmem:[#allocation2 + $0x198] sm:$0xff] %v7250
    %7267 = vst [vmem:[#allocation2 + $0x1a0] sm:$0xff] %v7251
    %7268 = vst [vmem:[#allocation2 + $0x1a8] sm:$0xff] %v7252
    %7269 = vst [vmem:[#allocation2 + $0x1b0] sm:$0xff] %v7253
    %7270 = vst [vmem:[#allocation2 + $0x1b8] sm:$0xff] %v7254
    %7271 = vst [vmem:[#allocation2 + $0x1c0] sm:$0xff] %v7255
    %7272 = vst [vmem:[#allocation2 + $0x1c8] sm:$0xff] %v7256
    %7273 = vst [vmem:[#allocation2 + $0x1d0] sm:$0xff] %v7257
    %7274 = vst [vmem:[#allocation2 + $0x1d8] sm:$0xff] %v7258
    %7275 = vst [vmem:[#allocation2 + $0x1e0] sm:$0xff] %v7259
    %7276 = vst [vmem:[#allocation2 + $0x1e8] sm:$0xff] %v7260
    %7277 = vst [vmem:[#allocation2 + $0x1f0] sm:$0xff] %v7261
    %7278 = vst [vmem:[#allocation2 + $0x1f8] sm:$0xff] %v7262
    %7279 = vst [vmem:[#allocation2 + $0x200] sm:$0xff] %v6879
    %7280 = vst [vmem:[#allocation2 + $0x208] sm:$0xff] %v6880
    %7281 = vst [vmem:[#allocation2 + $0x210] sm:$0xff] %v6881
    %7282 = vst [vmem:[#allocation2 + $0x218] sm:$0xff] %v6882
    %7283 = vst [vmem:[#allocation2 + $0x220] sm:$0xff] %v6883
    %7284 = vst [vmem:[#allocation2 + $0x228] sm:$0xff] %v6884
    %7285 = vst [vmem:[#allocation2 + $0x230] sm:$0xff] %v6885
    %7286 = vst [vmem:[#allocation2 + $0x238] sm:$0xff] %v6886
    %7287 = vst [vmem:[#allocation2 + $0x240] sm:$0xff] %v6887
    %7288 = vst [vmem:[#allocation2 + $0x248] sm:$0xff] %v6888
    %7289 = vst [vmem:[#allocation2 + $0x250] sm:$0xff] %v6889
    %7290 = vst [vmem:[#allocation2 + $0x258] sm:$0xff] %v6890
    %7291 = vst [vmem:[#allocation2 + $0x260] sm:$0xff] %v6891
    %7292 = vst [vmem:[#allocation2 + $0x268] sm:$0xff] %v6892
    %7293 = vst [vmem:[#allocation2 + $0x270] sm:$0xff] %v6893
    %7294 = vst [vmem:[#allocation2 + $0x278] sm:$0xff] %v6894
    %7295 = vrot.lane.b32.xlu0 %v6879, 127
    %v7296 = vpop.permute.xlu0 %7295
    %7297 = vrot.lane.b32.xlu0 %v6883, 127
    %v7298 = vpop.permute.xlu0 %7297
    %7299 = vrot.lane.b32.xlu0 %v6887, 127
    %v7300 = vpop.permute.xlu0 %7299
    %7301 = vrot.lane.b32.xlu0 %v6891, 127
    %v7302 = vpop.permute.xlu0 %7301
    %7303 = vrot.lane.b32.xlu0 %v6880, 127
    %v7304 = vpop.permute.xlu0 %7303
    %7305 = vrot.lane.b32.xlu0 %v6884, 127
    %v7306 = vpop.permute.xlu0 %7305
    %7307 = vrot.lane.b32.xlu0 %v6888, 127
    %v7308 = vpop.permute.xlu0 %7307
    %7309 = vrot.lane.b32.xlu0 %v6892, 127
    %v7310 = vpop.permute.xlu0 %7309
    %7311 = vrot.lane.b32.xlu0 %v6881, 127
    %v7312 = vpop.permute.xlu0 %7311
    %7313 = vrot.lane.b32.xlu0 %v6885, 127
    %v7314 = vpop.permute.xlu0 %7313
    %7315 = vrot.lane.b32.xlu0 %v6889, 127
    %v7316 = vpop.permute.xlu0 %7315
    %7317 = vrot.lane.b32.xlu0 %v6893, 127
    %v7318 = vpop.permute.xlu0 %7317
    %7319 = vrot.lane.b32.xlu0 %v6882, 127
    %v7320 = vpop.permute.xlu0 %7319
    %7321 = vrot.lane.b32.xlu0 %v6886, 127
    %v7322 = vpop.permute.xlu0 %7321
    %7323 = vrot.lane.b32.xlu0 %v6890, 127
    %v7324 = vpop.permute.xlu0 %7323
    %7325 = vrot.lane.b32.xlu0 %v6894, 127
    %v7326 = vpop.permute.xlu0 %7325
    %v7327 = vsel %vm574, %v7312, %v7320
    %v7328 = vsel %vm574, %v7314, %v7322
    %v7329 = vsel %vm574, %v7316, %v7324
    %v7330 = vsel %vm574, %v7318, %v7326
    %v7331 = vsel %vm574, %v7304, %v7312
    %v7332 = vsel %vm574, %v7306, %v7314
    %v7333 = vsel %vm574, %v7308, %v7316
    %v7334 = vsel %vm574, %v7310, %v7318
    %v7335 = vsel %vm574, %v7296, %v7304
    %v7336 = vsel %vm574, %v7298, %v7306
    %v7337 = vsel %vm574, %v7300, %v7308
    %v7338 = vsel %vm574, %v7302, %v7310
    %v7339 = vsel %vm574, %v7320, %v7296
    %v7340 = vsel %vm574, %v7322, %v7298
    %v7341 = vsel %vm574, %v7324, %v7300
    %v7342 = vsel %vm574, %v7326, %v7302
    %v7343 = vld [vmem:[#allocation3 + $0x200] sm:$0xff]
    %v7344 = vld [vmem:[#allocation3 + $0x208] sm:$0xff]
    %v7345 = vld [vmem:[#allocation3 + $0x210] sm:$0xff]
    %v7346 = vld [vmem:[#allocation3 + $0x218] sm:$0xff]
    %v7347 = vld [vmem:[#allocation3 + $0x220] sm:$0xff]
    %v7348 = vld [vmem:[#allocation3 + $0x228] sm:$0xff]
    %v7349 = vld [vmem:[#allocation3 + $0x230] sm:$0xff]
    %v7350 = vld [vmem:[#allocation3 + $0x238] sm:$0xff]
    %v7351 = vld [vmem:[#allocation3 + $0x240] sm:$0xff]
    %v7352 = vld [vmem:[#allocation3 + $0x248] sm:$0xff]
    %v7353 = vld [vmem:[#allocation3 + $0x250] sm:$0xff]
    %v7354 = vld [vmem:[#allocation3 + $0x258] sm:$0xff]
    %v7355 = vld [vmem:[#allocation3 + $0x260] sm:$0xff]
    %v7356 = vld [vmem:[#allocation3 + $0x268] sm:$0xff]
    %v7357 = vld [vmem:[#allocation3 + $0x270] sm:$0xff]
    %v7358 = vld [vmem:[#allocation3 + $0x278] sm:$0xff]
    %v7359 = vmul.f32 %v7335, %v7343
    %v7360 = vmul.f32 %v7331, %v7344
    %v7361 = vmul.f32 %v7327, %v7345
    %v7362 = vmul.f32 %v7339, %v7346
    %v7363 = vmul.f32 %v7336, %v7347
    %v7364 = vmul.f32 %v7332, %v7348
    %v7365 = vmul.f32 %v7328, %v7349
    %v7366 = vmul.f32 %v7340, %v7350
    %v7367 = vmul.f32 %v7337, %v7351
    %v7368 = vmul.f32 %v7333, %v7352
    %v7369 = vmul.f32 %v7329, %v7353
    %v7370 = vmul.f32 %v7341, %v7354
    %v7371 = vmul.f32 %v7338, %v7355
    %v7372 = vmul.f32 %v7334, %v7356
    %v7373 = vmul.f32 %v7330, %v7357
    %v7374 = vmul.f32 %v7342, %v7358
    %7375 = vst [vmem:[#allocation2 + $0x280] sm:$0xff] %v7359
    %7376 = vst [vmem:[#allocation2 + $0x288] sm:$0xff] %v7360
    %7377 = vst [vmem:[#allocation2 + $0x290] sm:$0xff] %v7361
    %7378 = vst [vmem:[#allocation2 + $0x298] sm:$0xff] %v7362
    %7379 = vst [vmem:[#allocation2 + $0x2a0] sm:$0xff] %v7363
    %7380 = vst [vmem:[#allocation2 + $0x2a8] sm:$0xff] %v7364
    %7381 = vst [vmem:[#allocation2 + $0x2b0] sm:$0xff] %v7365
    %7382 = vst [vmem:[#allocation2 + $0x2b8] sm:$0xff] %v7366
    %7383 = vst [vmem:[#allocation2 + $0x2c0] sm:$0xff] %v7367
    %7384 = vst [vmem:[#allocation2 + $0x2c8] sm:$0xff] %v7368
    %7385 = vst [vmem:[#allocation2 + $0x2d0] sm:$0xff] %v7369
    %7386 = vst [vmem:[#allocation2 + $0x2d8] sm:$0xff] %v7370
    %7387 = vst [vmem:[#allocation2 + $0x2e0] sm:$0xff] %v7371
    %7388 = vst [vmem:[#allocation2 + $0x2e8] sm:$0xff] %v7372
    %7389 = vst [vmem:[#allocation2 + $0x2f0] sm:$0xff] %v7373
    %7390 = vst [vmem:[#allocation2 + $0x2f8] sm:$0xff] %v7374
    %7391 = vrot.lane.b32.xlu0 %v6879, 113
    %v7392 = vpop.permute.xlu0 %7391
    %7393 = vrot.lane.b32.xlu0 %v6883, 113
    %v7394 = vpop.permute.xlu0 %7393
    %7395 = vrot.lane.b32.xlu0 %v6887, 113
    %v7396 = vpop.permute.xlu0 %7395
    %7397 = vrot.lane.b32.xlu0 %v6891, 113
    %v7398 = vpop.permute.xlu0 %7397
    %7399 = vrot.lane.b32.xlu0 %v6880, 113
    %v7400 = vpop.permute.xlu0 %7399
    %7401 = vrot.lane.b32.xlu0 %v6884, 113
    %v7402 = vpop.permute.xlu0 %7401
    %7403 = vrot.lane.b32.xlu0 %v6888, 113
    %v7404 = vpop.permute.xlu0 %7403
    %7405 = vrot.lane.b32.xlu0 %v6892, 113
    %v7406 = vpop.permute.xlu0 %7405
    %7407 = vrot.lane.b32.xlu0 %v6881, 113
    %v7408 = vpop.permute.xlu0 %7407
    %7409 = vrot.lane.b32.xlu0 %v6885, 113
    %v7410 = vpop.permute.xlu0 %7409
    %7411 = vrot.lane.b32.xlu0 %v6889, 113
    %v7412 = vpop.permute.xlu0 %7411
    %7413 = vrot.lane.b32.xlu0 %v6893, 113
    %v7414 = vpop.permute.xlu0 %7413
    %7415 = vrot.lane.b32.xlu0 %v6882, 113
    %v7416 = vpop.permute.xlu0 %7415
    %7417 = vrot.lane.b32.xlu0 %v6886, 113
    %v7418 = vpop.permute.xlu0 %7417
    %7419 = vrot.lane.b32.xlu0 %v6890, 113
    %v7420 = vpop.permute.xlu0 %7419
    %7421 = vrot.lane.b32.xlu0 %v6894, 113
    %v7422 = vpop.permute.xlu0 %7421
    %v7423 = vsel %vm671, %v7408, %v7416
    %v7424 = vsel %vm671, %v7410, %v7418
    %v7425 = vsel %vm671, %v7412, %v7420
    %v7426 = vsel %vm671, %v7414, %v7422
    %v7427 = vsel %vm671, %v7400, %v7408
    %v7428 = vsel %vm671, %v7402, %v7410
    %v7429 = vsel %vm671, %v7404, %v7412
    %v7430 = vsel %vm671, %v7406, %v7414
    %v7431 = vsel %vm671, %v7392, %v7400
    %v7432 = vsel %vm671, %v7394, %v7402
    %v7433 = vsel %vm671, %v7396, %v7404
    %v7434 = vsel %vm671, %v7398, %v7406
    %v7435 = vsel %vm671, %v7416, %v7392
    %v7436 = vsel %vm671, %v7418, %v7394
    %v7437 = vsel %vm671, %v7420, %v7396
    %v7438 = vsel %vm671, %v7422, %v7398
    %v7439 = vld [vmem:[#allocation3 + $0x280] sm:$0xff]
    %v7440 = vld [vmem:[#allocation3 + $0x288] sm:$0xff]
    %v7441 = vld [vmem:[#allocation3 + $0x290] sm:$0xff]
    %v7442 = vld [vmem:[#allocation3 + $0x298] sm:$0xff]
    %v7443 = vld [vmem:[#allocation3 + $0x2a0] sm:$0xff]
    %v7444 = vld [vmem:[#allocation3 + $0x2a8] sm:$0xff]
    %v7445 = vld [vmem:[#allocation3 + $0x2b0] sm:$0xff]
    %v7446 = vld [vmem:[#allocation3 + $0x2b8] sm:$0xff]
    %v7447 = vld [vmem:[#allocation3 + $0x2c0] sm:$0xff]
    %v7448 = vld [vmem:[#allocation3 + $0x2c8] sm:$0xff]
    %v7449 = vld [vmem:[#allocation3 + $0x2d0] sm:$0xff]
    %v7450 = vld [vmem:[#allocation3 + $0x2d8] sm:$0xff]
    %v7451 = vld [vmem:[#allocation3 + $0x2e0] sm:$0xff]
    %v7452 = vld [vmem:[#allocation3 + $0x2e8] sm:$0xff]
    %v7453 = vld [vmem:[#allocation3 + $0x2f0] sm:$0xff]
    %v7454 = vld [vmem:[#allocation3 + $0x2f8] sm:$0xff]
    %v7455 = vmul.f32 %v7431, %v7439
    %v7456 = vmul.f32 %v7427, %v7440
    %v7457 = vmul.f32 %v7423, %v7441
    %v7458 = vmul.f32 %v7435, %v7442
    %v7459 = vmul.f32 %v7432, %v7443
    %v7460 = vmul.f32 %v7428, %v7444
    %v7461 = vmul.f32 %v7424, %v7445
    %v7462 = vmul.f32 %v7436, %v7446
    %v7463 = vmul.f32 %v7433, %v7447
    %v7464 = vmul.f32 %v7429, %v7448
    %v7465 = vmul.f32 %v7425, %v7449
    %v7466 = vmul.f32 %v7437, %v7450
    %v7467 = vmul.f32 %v7434, %v7451
    %v7468 = vmul.f32 %v7430, %v7452
    %v7469 = vmul.f32 %v7426, %v7453
    %v7470 = vmul.f32 %v7438, %v7454
    %7471 = vst [vmem:[#allocation2 + $0x300] sm:$0xff] %v7455
    %7472 = vst [vmem:[#allocation2 + $0x308] sm:$0xff] %v7456
    %7473 = vst [vmem:[#allocation2 + $0x310] sm:$0xff] %v7457
    %7474 = vst [vmem:[#allocation2 + $0x318] sm:$0xff] %v7458
    %7475 = vst [vmem:[#allocation2 + $0x320] sm:$0xff] %v7459
    %7476 = vst [vmem:[#allocation2 + $0x328] sm:$0xff] %v7460
    %7477 = vst [vmem:[#allocation2 + $0x330] sm:$0xff] %v7461
    %7478 = vst [vmem:[#allocation2 + $0x338] sm:$0xff] %v7462
    %7479 = vst [vmem:[#allocation2 + $0x340] sm:$0xff] %v7463
    %7480 = vst [vmem:[#allocation2 + $0x348] sm:$0xff] %v7464
    %7481 = vst [vmem:[#allocation2 + $0x350] sm:$0xff] %v7465
    %7482 = vst [vmem:[#allocation2 + $0x358] sm:$0xff] %v7466
    %7483 = vst [vmem:[#allocation2 + $0x360] sm:$0xff] %v7467
    %7484 = vst [vmem:[#allocation2 + $0x368] sm:$0xff] %v7468
    %7485 = vst [vmem:[#allocation2 + $0x370] sm:$0xff] %v7469
    %7486 = vst [vmem:[#allocation2 + $0x378] sm:$0xff] %v7470
    %7487 = vrot.lane.b32.xlu0 %v6879, 112
    %v7488 = vpop.permute.xlu0 %7487
    %7489 = vrot.lane.b32.xlu0 %v6883, 112
    %v7490 = vpop.permute.xlu0 %7489
    %7491 = vrot.lane.b32.xlu0 %v6887, 112
    %v7492 = vpop.permute.xlu0 %7491
    %7493 = vrot.lane.b32.xlu0 %v6891, 112
    %v7494 = vpop.permute.xlu0 %7493
    %7495 = vrot.lane.b32.xlu0 %v6880, 112
    %v7496 = vpop.permute.xlu0 %7495
    %7497 = vrot.lane.b32.xlu0 %v6884, 112
    %v7498 = vpop.permute.xlu0 %7497
    %7499 = vrot.lane.b32.xlu0 %v6888, 112
    %v7500 = vpop.permute.xlu0 %7499
    %7501 = vrot.lane.b32.xlu0 %v6892, 112
    %v7502 = vpop.permute.xlu0 %7501
    %7503 = vrot.lane.b32.xlu0 %v6881, 112
    %v7504 = vpop.permute.xlu0 %7503
    %7505 = vrot.lane.b32.xlu0 %v6885, 112
    %v7506 = vpop.permute.xlu0 %7505
    %7507 = vrot.lane.b32.xlu0 %v6889, 112
    %v7508 = vpop.permute.xlu0 %7507
    %7509 = vrot.lane.b32.xlu0 %v6893, 112
    %v7510 = vpop.permute.xlu0 %7509
    %7511 = vrot.lane.b32.xlu0 %v6882, 112
    %v7512 = vpop.permute.xlu0 %7511
    %7513 = vrot.lane.b32.xlu0 %v6886, 112
    %v7514 = vpop.permute.xlu0 %7513
    %7515 = vrot.lane.b32.xlu0 %v6890, 112
    %v7516 = vpop.permute.xlu0 %7515
    %7517 = vrot.lane.b32.xlu0 %v6894, 112
    %v7518 = vpop.permute.xlu0 %7517
    %v7519 = vsel %vm768, %v7504, %v7512
    %v7520 = vsel %vm768, %v7506, %v7514
    %v7521 = vsel %vm768, %v7508, %v7516
    %v7522 = vsel %vm768, %v7510, %v7518
    %v7523 = vsel %vm768, %v7496, %v7504
    %v7524 = vsel %vm768, %v7498, %v7506
    %v7525 = vsel %vm768, %v7500, %v7508
    %v7526 = vsel %vm768, %v7502, %v7510
    %v7527 = vsel %vm768, %v7488, %v7496
    %v7528 = vsel %vm768, %v7490, %v7498
    %v7529 = vsel %vm768, %v7492, %v7500
    %v7530 = vsel %vm768, %v7494, %v7502
    %v7531 = vsel %vm768, %v7512, %v7488
    %v7532 = vsel %vm768, %v7514, %v7490
    %v7533 = vsel %vm768, %v7516, %v7492
    %v7534 = vsel %vm768, %v7518, %v7494
    %v7535 = vld [vmem:[#allocation3 + $0x300] sm:$0xff]
    %v7536 = vld [vmem:[#allocation3 + $0x308] sm:$0xff]
    %v7537 = vld [vmem:[#allocation3 + $0x310] sm:$0xff]
    %v7538 = vld [vmem:[#allocation3 + $0x318] sm:$0xff]
    %v7539 = vld [vmem:[#allocation3 + $0x320] sm:$0xff]
    %v7540 = vld [vmem:[#allocation3 + $0x328] sm:$0xff]
    %v7541 = vld [vmem:[#allocation3 + $0x330] sm:$0xff]
    %v7542 = vld [vmem:[#allocation3 + $0x338] sm:$0xff]
    %v7543 = vld [vmem:[#allocation3 + $0x340] sm:$0xff]
    %v7544 = vld [vmem:[#allocation3 + $0x348] sm:$0xff]
    %v7545 = vld [vmem:[#allocation3 + $0x350] sm:$0xff]
    %v7546 = vld [vmem:[#allocation3 + $0x358] sm:$0xff]
    %v7547 = vld [vmem:[#allocation3 + $0x360] sm:$0xff]
    %v7548 = vld [vmem:[#allocation3 + $0x368] sm:$0xff]
    %v7549 = vld [vmem:[#allocation3 + $0x370] sm:$0xff]
    %v7550 = vld [vmem:[#allocation3 + $0x378] sm:$0xff]
    %v7551 = vmul.f32 %v7527, %v7535
    %v7552 = vmul.f32 %v7523, %v7536
    %v7553 = vmul.f32 %v7519, %v7537
    %v7554 = vmul.f32 %v7531, %v7538
    %v7555 = vmul.f32 %v7528, %v7539
    %v7556 = vmul.f32 %v7524, %v7540
    %v7557 = vmul.f32 %v7520, %v7541
    %v7558 = vmul.f32 %v7532, %v7542
    %v7559 = vmul.f32 %v7529, %v7543
    %v7560 = vmul.f32 %v7525, %v7544
    %v7561 = vmul.f32 %v7521, %v7545
    %v7562 = vmul.f32 %v7533, %v7546
    %v7563 = vmul.f32 %v7530, %v7547
    %v7564 = vmul.f32 %v7526, %v7548
    %v7565 = vmul.f32 %v7522, %v7549
    %v7566 = vmul.f32 %v7534, %v7550
    %7567 = vst [vmem:[#allocation2 + $0x380] sm:$0xff] %v7551
    %7568 = vst [vmem:[#allocation2 + $0x388] sm:$0xff] %v7552
    %7569 = vst [vmem:[#allocation2 + $0x390] sm:$0xff] %v7553
    %7570 = vst [vmem:[#allocation2 + $0x398] sm:$0xff] %v7554
    %7571 = vst [vmem:[#allocation2 + $0x3a0] sm:$0xff] %v7555
    %7572 = vst [vmem:[#allocation2 + $0x3a8] sm:$0xff] %v7556
    %7573 = vst [vmem:[#allocation2 + $0x3b0] sm:$0xff] %v7557
    %7574 = vst [vmem:[#allocation2 + $0x3b8] sm:$0xff] %v7558
    %7575 = vst [vmem:[#allocation2 + $0x3c0] sm:$0xff] %v7559
    %7576 = vst [vmem:[#allocation2 + $0x3c8] sm:$0xff] %v7560
    %7577 = vst [vmem:[#allocation2 + $0x3d0] sm:$0xff] %v7561
    %7578 = vst [vmem:[#allocation2 + $0x3d8] sm:$0xff] %v7562
    %7579 = vst [vmem:[#allocation2 + $0x3e0] sm:$0xff] %v7563
    %7580 = vst [vmem:[#allocation2 + $0x3e8] sm:$0xff] %v7564
    %7581 = vst [vmem:[#allocation2 + $0x3f0] sm:$0xff] %v7565
    %7582 = vst [vmem:[#allocation2 + $0x3f8] sm:$0xff] %v7566
    %7583 = vrot.lane.b32.xlu0 %v6879, 111
    %v7584 = vpop.permute.xlu0 %7583
    %7585 = vrot.lane.b32.xlu0 %v6883, 111
    %v7586 = vpop.permute.xlu0 %7585
    %7587 = vrot.lane.b32.xlu0 %v6887, 111
    %v7588 = vpop.permute.xlu0 %7587
    %7589 = vrot.lane.b32.xlu0 %v6891, 111
    %v7590 = vpop.permute.xlu0 %7589
    %7591 = vrot.lane.b32.xlu0 %v6880, 111
    %v7592 = vpop.permute.xlu0 %7591
    %7593 = vrot.lane.b32.xlu0 %v6884, 111
    %v7594 = vpop.permute.xlu0 %7593
    %7595 = vrot.lane.b32.xlu0 %v6888, 111
    %v7596 = vpop.permute.xlu0 %7595
    %7597 = vrot.lane.b32.xlu0 %v6892, 111
    %v7598 = vpop.permute.xlu0 %7597
    %7599 = vrot.lane.b32.xlu0 %v6881, 111
    %v7600 = vpop.permute.xlu0 %7599
    %7601 = vrot.lane.b32.xlu0 %v6885, 111
    %v7602 = vpop.permute.xlu0 %7601
    %7603 = vrot.lane.b32.xlu0 %v6889, 111
    %v7604 = vpop.permute.xlu0 %7603
    %7605 = vrot.lane.b32.xlu0 %v6893, 111
    %v7606 = vpop.permute.xlu0 %7605
    %7607 = vrot.lane.b32.xlu0 %v6882, 111
    %v7608 = vpop.permute.xlu0 %7607
    %7609 = vrot.lane.b32.xlu0 %v6886, 111
    %v7610 = vpop.permute.xlu0 %7609
    %7611 = vrot.lane.b32.xlu0 %v6890, 111
    %v7612 = vpop.permute.xlu0 %7611
    %7613 = vrot.lane.b32.xlu0 %v6894, 111
    %v7614 = vpop.permute.xlu0 %7613
    %v7615 = vsel %vm865, %v7600, %v7608
    %v7616 = vsel %vm865, %v7602, %v7610
    %v7617 = vsel %vm865, %v7604, %v7612
    %v7618 = vsel %vm865, %v7606, %v7614
    %v7619 = vsel %vm865, %v7592, %v7600
    %v7620 = vsel %vm865, %v7594, %v7602
    %v7621 = vsel %vm865, %v7596, %v7604
    %v7622 = vsel %vm865, %v7598, %v7606
    %v7623 = vsel %vm865, %v7584, %v7592
    %v7624 = vsel %vm865, %v7586, %v7594
    %v7625 = vsel %vm865, %v7588, %v7596
    %v7626 = vsel %vm865, %v7590, %v7598
    %v7627 = vsel %vm865, %v7608, %v7584
    %v7628 = vsel %vm865, %v7610, %v7586
    %v7629 = vsel %vm865, %v7612, %v7588
    %v7630 = vsel %vm865, %v7614, %v7590
    %v7631 = vld [vmem:[#allocation3 + $0x380] sm:$0xff]
    %v7632 = vld [vmem:[#allocation3 + $0x388] sm:$0xff]
    %v7633 = vld [vmem:[#allocation3 + $0x390] sm:$0xff]
    %v7634 = vld [vmem:[#allocation3 + $0x398] sm:$0xff]
    %v7635 = vld [vmem:[#allocation3 + $0x3a0] sm:$0xff]
    %v7636 = vld [vmem:[#allocation3 + $0x3a8] sm:$0xff]
    %v7637 = vld [vmem:[#allocation3 + $0x3b0] sm:$0xff]
    %v7638 = vld [vmem:[#allocation3 + $0x3b8] sm:$0xff]
    %v7639 = vld [vmem:[#allocation3 + $0x3c0] sm:$0xff]
    %v7640 = vld [vmem:[#allocation3 + $0x3c8] sm:$0xff]
    %v7641 = vld [vmem:[#allocation3 + $0x3d0] sm:$0xff]
    %v7642 = vld [vmem:[#allocation3 + $0x3d8] sm:$0xff]
    %v7643 = vld [vmem:[#allocation3 + $0x3e0] sm:$0xff]
    %v7644 = vld [vmem:[#allocation3 + $0x3e8] sm:$0xff]
    %v7645 = vld [vmem:[#allocation3 + $0x3f0] sm:$0xff]
    %v7646 = vld [vmem:[#allocation3 + $0x3f8] sm:$0xff]
    %v7647 = vmul.f32 %v7623, %v7631
    %v7648 = vmul.f32 %v7619, %v7632
    %v7649 = vmul.f32 %v7615, %v7633
    %v7650 = vmul.f32 %v7627, %v7634
    %v7651 = vmul.f32 %v7624, %v7635
    %v7652 = vmul.f32 %v7620, %v7636
    %v7653 = vmul.f32 %v7616, %v7637
    %v7654 = vmul.f32 %v7628, %v7638
    %v7655 = vmul.f32 %v7625, %v7639
    %v7656 = vmul.f32 %v7621, %v7640
    %v7657 = vmul.f32 %v7617, %v7641
    %v7658 = vmul.f32 %v7629, %v7642
    %v7659 = vmul.f32 %v7626, %v7643
    %v7660 = vmul.f32 %v7622, %v7644
    %v7661 = vmul.f32 %v7618, %v7645
    %v7662 = vmul.f32 %v7630, %v7646
    %7663 = vst [vmem:[#allocation2 + $0x400] sm:$0xff] %v7647
    %7664 = vst [vmem:[#allocation2 + $0x408] sm:$0xff] %v7648
    %7665 = vst [vmem:[#allocation2 + $0x410] sm:$0xff] %v7649
    %7666 = vst [vmem:[#allocation2 + $0x418] sm:$0xff] %v7650
    %7667 = vst [vmem:[#allocation2 + $0x420] sm:$0xff] %v7651
    %7668 = vst [vmem:[#allocation2 + $0x428] sm:$0xff] %v7652
    %7669 = vst [vmem:[#allocation2 + $0x430] sm:$0xff] %v7653
    %7670 = vst [vmem:[#allocation2 + $0x438] sm:$0xff] %v7654
    %7671 = vst [vmem:[#allocation2 + $0x440] sm:$0xff] %v7655
    %7672 = vst [vmem:[#allocation2 + $0x448] sm:$0xff] %v7656
    %7673 = vst [vmem:[#allocation2 + $0x450] sm:$0xff] %v7657
    %7674 = vst [vmem:[#allocation2 + $0x458] sm:$0xff] %v7658
    %7675 = vst [vmem:[#allocation2 + $0x460] sm:$0xff] %v7659
    %7676 = vst [vmem:[#allocation2 + $0x468] sm:$0xff] %v7660
    %7677 = vst [vmem:[#allocation2 + $0x470] sm:$0xff] %v7661
    %7678 = vst [vmem:[#allocation2 + $0x478] sm:$0xff] %v7662
    %v7679 = vld [vmem:[#allocation6 + $0x1e0] sm:$0xff]
    %v7680 = vld [vmem:[#allocation6 + $0x1e8] sm:$0xff]
    %v7681 = vld [vmem:[#allocation6 + $0x1f0] sm:$0xff]
    %v7682 = vld [vmem:[#allocation6 + $0x1f8] sm:$0xff]
    %v7683 = vld [vmem:[#allocation6 + $0x200] sm:$0xff]
    %v7684 = vld [vmem:[#allocation6 + $0x208] sm:$0xff]
    %v7685 = vld [vmem:[#allocation6 + $0x210] sm:$0xff]
    %v7686 = vld [vmem:[#allocation6 + $0x218] sm:$0xff]
    %v7687 = vld [vmem:[#allocation6 + $0x220] sm:$0xff]
    %v7688 = vld [vmem:[#allocation6 + $0x228] sm:$0xff]
    %v7689 = vld [vmem:[#allocation6 + $0x230] sm:$0xff]
    %v7690 = vld [vmem:[#allocation6 + $0x238] sm:$0xff]
    %v7691 = vld [vmem:[#allocation2] sm:$0xff]
    %v7692 = vld [vmem:[#allocation2 + $0x8] sm:$0xff]
    %v7693 = vld [vmem:[#allocation2 + $0x10] sm:$0xff]
    %v7694 = vld [vmem:[#allocation2 + $0x18] sm:$0xff]
    %v7695 = vld [vmem:[#allocation2 + $0x20] sm:$0xff]
    %v7696 = vld [vmem:[#allocation2 + $0x28] sm:$0xff]
    %v7697 = vld [vmem:[#allocation2 + $0x30] sm:$0xff]
    %v7698 = vld [vmem:[#allocation2 + $0x38] sm:$0xff]
    %v7699 = vld [vmem:[#allocation2 + $0x40] sm:$0xff]
    %v7700 = vld [vmem:[#allocation2 + $0x48] sm:$0xff]
    %v7701 = vld [vmem:[#allocation2 + $0x50] sm:$0xff]
    %v7702 = vld [vmem:[#allocation2 + $0x58] sm:$0xff]
    %v7703 = vld [vmem:[#allocation2 + $0x60] sm:$0xff]
    %v7704 = vld [vmem:[#allocation2 + $0x68] sm:$0xff]
    %v7705 = vld [vmem:[#allocation2 + $0x70] sm:$0xff]
    %v7706 = vld [vmem:[#allocation2 + $0x78] sm:$0xff]
    %v7707 = vld [vmem:[#allocation2 + $0x80] sm:$0xff]
    %v7708 = vld [vmem:[#allocation2 + $0x88] sm:$0xff]
    %v7709 = vld [vmem:[#allocation2 + $0x90] sm:$0xff]
    %v7710 = vld [vmem:[#allocation2 + $0x98] sm:$0xff]
    %v7711 = vld [vmem:[#allocation2 + $0xa0] sm:$0xff]
    %v7712 = vld [vmem:[#allocation2 + $0xa8] sm:$0xff]
    %v7713 = vld [vmem:[#allocation2 + $0xb0] sm:$0xff]
    %v7714 = vld [vmem:[#allocation2 + $0xb8] sm:$0xff]
    %v7715 = vld [vmem:[#allocation2 + $0xc0] sm:$0xff]
    %v7716 = vld [vmem:[#allocation2 + $0xc8] sm:$0xff]
    %v7717 = vld [vmem:[#allocation2 + $0xd0] sm:$0xff]
    %v7718 = vld [vmem:[#allocation2 + $0xd8] sm:$0xff]
    %v7719 = vld [vmem:[#allocation2 + $0xe0] sm:$0xff]
    %v7720 = vld [vmem:[#allocation2 + $0xe8] sm:$0xff]
    %v7721 = vld [vmem:[#allocation2 + $0xf0] sm:$0xff]
    %v7722 = vld [vmem:[#allocation2 + $0xf8] sm:$0xff]
    %v7723 = vld [vmem:[#allocation2 + $0x100] sm:$0xff]
    %v7724 = vld [vmem:[#allocation2 + $0x108] sm:$0xff]
    %v7725 = vld [vmem:[#allocation2 + $0x110] sm:$0xff]
    %v7726 = vld [vmem:[#allocation2 + $0x118] sm:$0xff]
    %v7727 = vld [vmem:[#allocation2 + $0x120] sm:$0xff]
    %v7728 = vld [vmem:[#allocation2 + $0x128] sm:$0xff]
    %v7729 = vld [vmem:[#allocation2 + $0x130] sm:$0xff]
    %v7730 = vld [vmem:[#allocation2 + $0x138] sm:$0xff]
    %v7731 = vld [vmem:[#allocation2 + $0x140] sm:$0xff]
    %v7732 = vld [vmem:[#allocation2 + $0x148] sm:$0xff]
    %v7733 = vld [vmem:[#allocation2 + $0x150] sm:$0xff]
    %v7734 = vld [vmem:[#allocation2 + $0x158] sm:$0xff]
    %v7735 = vld [vmem:[#allocation2 + $0x160] sm:$0xff]
    %v7736 = vld [vmem:[#allocation2 + $0x168] sm:$0xff]
    %v7737 = vld [vmem:[#allocation2 + $0x170] sm:$0xff]
    %v7738 = vld [vmem:[#allocation2 + $0x178] sm:$0xff]
    %v7739 = vld [vmem:[#allocation2 + $0x180] sm:$0xff]
    %v7740 = vld [vmem:[#allocation2 + $0x188] sm:$0xff]
    %v7741 = vld [vmem:[#allocation2 + $0x190] sm:$0xff]
    %v7742 = vld [vmem:[#allocation2 + $0x198] sm:$0xff]
    %v7743 = vld [vmem:[#allocation2 + $0x1a0] sm:$0xff]
    %v7744 = vld [vmem:[#allocation2 + $0x1a8] sm:$0xff]
    %v7745 = vld [vmem:[#allocation2 + $0x1b0] sm:$0xff]
    %v7746 = vld [vmem:[#allocation2 + $0x1b8] sm:$0xff]
    %v7747 = vld [vmem:[#allocation2 + $0x1c0] sm:$0xff]
    %v7748 = vld [vmem:[#allocation2 + $0x1c8] sm:$0xff]
    %v7749 = vld [vmem:[#allocation2 + $0x1d0] sm:$0xff]
    %v7750 = vld [vmem:[#allocation2 + $0x1d8] sm:$0xff]
    %v7751 = vld [vmem:[#allocation2 + $0x1e0] sm:$0xff]
    %v7752 = vld [vmem:[#allocation2 + $0x1e8] sm:$0xff]
    %v7753 = vld [vmem:[#allocation2 + $0x1f0] sm:$0xff]
    %v7754 = vld [vmem:[#allocation2 + $0x1f8] sm:$0xff]
    %v7755 = vld [vmem:[#allocation2 + $0x200] sm:$0xff]
    %v7756 = vld [vmem:[#allocation2 + $0x208] sm:$0xff]
    %v7757 = vld [vmem:[#allocation2 + $0x210] sm:$0xff]
    %v7758 = vld [vmem:[#allocation2 + $0x218] sm:$0xff]
    %v7759 = vld [vmem:[#allocation2 + $0x220] sm:$0xff]
    %v7760 = vld [vmem:[#allocation2 + $0x228] sm:$0xff]
    %v7761 = vld [vmem:[#allocation2 + $0x230] sm:$0xff]
    %v7762 = vld [vmem:[#allocation2 + $0x238] sm:$0xff]
    %v7763 = vld [vmem:[#allocation2 + $0x240] sm:$0xff]
    %v7764 = vld [vmem:[#allocation2 + $0x248] sm:$0xff]
    %v7765 = vld [vmem:[#allocation2 + $0x250] sm:$0xff]
    %v7766 = vld [vmem:[#allocation2 + $0x258] sm:$0xff]
    %v7767 = vld [vmem:[#allocation2 + $0x260] sm:$0xff]
    %v7768 = vld [vmem:[#allocation2 + $0x268] sm:$0xff]
    %v7769 = vld [vmem:[#allocation2 + $0x270] sm:$0xff]
    %v7770 = vld [vmem:[#allocation2 + $0x278] sm:$0xff]
    %v7771 = vld [vmem:[#allocation2 + $0x280] sm:$0xff]
    %v7772 = vld [vmem:[#allocation2 + $0x288] sm:$0xff]
    %v7773 = vld [vmem:[#allocation2 + $0x290] sm:$0xff]
    %v7774 = vld [vmem:[#allocation2 + $0x298] sm:$0xff]
    %v7775 = vld [vmem:[#allocation2 + $0x2a0] sm:$0xff]
    %v7776 = vld [vmem:[#allocation2 + $0x2a8] sm:$0xff]
    %v7777 = vld [vmem:[#allocation2 + $0x2b0] sm:$0xff]
    %v7778 = vld [vmem:[#allocation2 + $0x2b8] sm:$0xff]
    %v7779 = vld [vmem:[#allocation2 + $0x2c0] sm:$0xff]
    %v7780 = vld [vmem:[#allocation2 + $0x2c8] sm:$0xff]
    %v7781 = vld [vmem:[#allocation2 + $0x2d0] sm:$0xff]
    %v7782 = vld [vmem:[#allocation2 + $0x2d8] sm:$0xff]
    %v7783 = vld [vmem:[#allocation2 + $0x2e0] sm:$0xff]
    %v7784 = vld [vmem:[#allocation2 + $0x2e8] sm:$0xff]
    %v7785 = vld [vmem:[#allocation2 + $0x2f0] sm:$0xff]
    %v7786 = vld [vmem:[#allocation2 + $0x2f8] sm:$0xff]
    %v7787 = vld [vmem:[#allocation2 + $0x300] sm:$0xff]
    %v7788 = vld [vmem:[#allocation2 + $0x308] sm:$0xff]
    %v7789 = vld [vmem:[#allocation2 + $0x310] sm:$0xff]
    %v7790 = vld [vmem:[#allocation2 + $0x318] sm:$0xff]
    %v7791 = vld [vmem:[#allocation2 + $0x320] sm:$0xff]
    %v7792 = vld [vmem:[#allocation2 + $0x328] sm:$0xff]
    %v7793 = vld [vmem:[#allocation2 + $0x330] sm:$0xff]
    %v7794 = vld [vmem:[#allocation2 + $0x338] sm:$0xff]
    %v7795 = vld [vmem:[#allocation2 + $0x340] sm:$0xff]
    %v7796 = vld [vmem:[#allocation2 + $0x348] sm:$0xff]
    %v7797 = vld [vmem:[#allocation2 + $0x350] sm:$0xff]
    %v7798 = vld [vmem:[#allocation2 + $0x358] sm:$0xff]
    %v7799 = vld [vmem:[#allocation2 + $0x360] sm:$0xff]
    %v7800 = vld [vmem:[#allocation2 + $0x368] sm:$0xff]
    %v7801 = vld [vmem:[#allocation2 + $0x370] sm:$0xff]
    %v7802 = vld [vmem:[#allocation2 + $0x378] sm:$0xff]
    %v7803 = vld [vmem:[#allocation2 + $0x380] sm:$0xff]
    %v7804 = vld [vmem:[#allocation2 + $0x388] sm:$0xff]
    %v7805 = vld [vmem:[#allocation2 + $0x390] sm:$0xff]
    %v7806 = vld [vmem:[#allocation2 + $0x398] sm:$0xff]
    %v7807 = vld [vmem:[#allocation2 + $0x3a0] sm:$0xff]
    %v7808 = vld [vmem:[#allocation2 + $0x3a8] sm:$0xff]
    %v7809 = vld [vmem:[#allocation2 + $0x3b0] sm:$0xff]
    %v7810 = vld [vmem:[#allocation2 + $0x3b8] sm:$0xff]
    %v7811 = vld [vmem:[#allocation2 + $0x3c0] sm:$0xff]
    %v7812 = vld [vmem:[#allocation2 + $0x3c8] sm:$0xff]
    %v7813 = vld [vmem:[#allocation2 + $0x3d0] sm:$0xff]
    %v7814 = vld [vmem:[#allocation2 + $0x3d8] sm:$0xff]
    %v7815 = vld [vmem:[#allocation2 + $0x3e0] sm:$0xff]
    %v7816 = vld [vmem:[#allocation2 + $0x3e8] sm:$0xff]
    %v7817 = vld [vmem:[#allocation2 + $0x3f0] sm:$0xff]
    %v7818 = vld [vmem:[#allocation2 + $0x3f8] sm:$0xff]
    %v7819 = vld [vmem:[#allocation2 + $0x400] sm:$0xff]
    %v7820 = vld [vmem:[#allocation2 + $0x408] sm:$0xff]
    %v7821 = vld [vmem:[#allocation2 + $0x410] sm:$0xff]
    %v7822 = vld [vmem:[#allocation2 + $0x418] sm:$0xff]
    %v7823 = vld [vmem:[#allocation2 + $0x420] sm:$0xff]
    %v7824 = vld [vmem:[#allocation2 + $0x428] sm:$0xff]
    %v7825 = vld [vmem:[#allocation2 + $0x430] sm:$0xff]
    %v7826 = vld [vmem:[#allocation2 + $0x438] sm:$0xff]
    %v7827 = vld [vmem:[#allocation2 + $0x440] sm:$0xff]
    %v7828 = vld [vmem:[#allocation2 + $0x448] sm:$0xff]
    %v7829 = vld [vmem:[#allocation2 + $0x450] sm:$0xff]
    %v7830 = vld [vmem:[#allocation2 + $0x458] sm:$0xff]
    %v7831 = vld [vmem:[#allocation2 + $0x460] sm:$0xff]
    %v7832 = vld [vmem:[#allocation2 + $0x468] sm:$0xff]
    %v7833 = vld [vmem:[#allocation2 + $0x470] sm:$0xff]
    %v7834 = vld [vmem:[#allocation2 + $0x478] sm:$0xff]
    %v7835 = vld [vmem:[%s3 + $0xa0] sm:$0xff]
    %v7836 = vld [vmem:[%s3 + $0xa8] sm:$0xff]
    %v7837 = vld [vmem:[%s3 + $0xb0] sm:$0xff]
    %v7838 = vld [vmem:[%s3 + $0xb8] sm:$0xff]
    %7840 = vset.pattern.permute.xlu0 0
    %7841 = vperm.xlu0 %7840, %v7835
    %v7842 = vpop.permute.xlu0 %7841
    %7845 = vset.pattern.permute.xlu0 0
    %7846 = vperm.xlu0 %7845, %v7836
    %v7847 = vpop.permute.xlu0 %7846
    %7850 = vset.pattern.permute.xlu0 0
    %7851 = vperm.xlu0 %7850, %v7837
    %v7852 = vpop.permute.xlu0 %7851
    %7855 = vset.pattern.permute.xlu0 0
    %7856 = vperm.xlu0 %7855, %v7838
    %v7857 = vpop.permute.xlu0 %7856
    %v7860 = vsel %vm1110, %v7681, 0
    %v7863 = vsel %vm1110, %v7684, 0
    %v7866 = vsel %vm1110, %v7687, 0
    %v7869 = vsel %vm1110, %v7690, 0
    %7871 = vmatpush.msra.mxu0 %v7751
    %7872 = vmatpush.msra.mxu0 %v7747
    %7873 = vmatpush.msra.mxu0 %v7743
    %7874 = vmatpush.msra.mxu0 %v7739
    %7875 = vmatpush.msra.mxu0 %v7735
    %7876 = vmatpush.msra.mxu0 %v7731
    %7877 = vmatpush.msra.mxu0 %v7727
    %7878 = vmatpush.msra.mxu0 %v7723
    %7879 = vmatpush.msra.mxu0 %v7719
    %7880 = vmatpush.msra.mxu0 %v7715
    %7881 = vmatpush.msra.mxu0 %v7711
    %7882 = vmatpush.msra.mxu0 %v7707
    %7883 = vmatpush.msra.mxu0 %v7703
    %7884 = vmatpush.msra.mxu0 %v7699
    %7885 = vmatpush.msra.mxu0 %v7695
    %7886 = vmatpush.msra.mxu0 %v7691
    %7887 = vmatmul.f32.gmra.mxu0 %v7679
    %v7888 = vpop.f32.mrf.mxu0
    %v7889 = vadd.f32 %v7842, %v7888
    %7890 = vmatmul.f32.gmra.mxu0 %v7682
    %v7891 = vpop.f32.mrf.mxu0
    %v7892 = vadd.f32 %v7847, %v7891
    %7893 = vmatmul.f32.gmra.mxu0 %v7685
    %v7894 = vpop.f32.mrf.mxu0
    %v7895 = vadd.f32 %v7852, %v7894
    %7896 = vmatmul.f32.gmra.mxu0 %v7688
    %v7897 = vpop.f32.mrf.mxu0
    %v7898 = vadd.f32 %v7857, %v7897
    %7899 = vdwg.mxu0
    %7900 = vmatpush.msra.mxu0 %v7815
    %7901 = vmatpush.msra.mxu0 %v7811
    %7902 = vmatpush.msra.mxu0 %v7807
    %7903 = vmatpush.msra.mxu0 %v7803
    %7904 = vmatpush.msra.mxu0 %v7799
    %7905 = vmatpush.msra.mxu0 %v7795
    %7906 = vmatpush.msra.mxu0 %v7791
    %7907 = vmatpush.msra.mxu0 %v7787
    %7908 = vmatpush.msra.mxu0 %v7783
    %7909 = vmatpush.msra.mxu0 %v7779
    %7910 = vmatpush.msra.mxu0 %v7775
    %7911 = vmatpush.msra.mxu0 %v7771
    %7912 = vmatpush.msra.mxu0 %v7767
    %7913 = vmatpush.msra.mxu0 %v7763
    %7914 = vmatpush.msra.mxu0 %v7759
    %7915 = vmatpush.msra.mxu0 %v7755
    %7916 = vmatmul.f32.gmra.mxu0 %v7680
    %v7917 = vpop.f32.mrf.mxu0
    %v7918 = vadd.f32 %v7889, %v7917
    %7919 = vmatmul.f32.gmra.mxu0 %v7683
    %v7920 = vpop.f32.mrf.mxu0
    %v7921 = vadd.f32 %v7892, %v7920
    %7922 = vmatmul.f32.gmra.mxu0 %v7686
    %v7923 = vpop.f32.mrf.mxu0
    %v7924 = vadd.f32 %v7895, %v7923
    %7925 = vmatmul.f32.gmra.mxu0 %v7689
    %v7926 = vpop.f32.mrf.mxu0
    %v7927 = vadd.f32 %v7898, %v7926
    %7928 = vdwg.mxu0
    %7929 = vmatpush.msra.mxu0 0.0
    %7930 = vmatpush.msra.mxu0 0.0
    %7931 = vmatpush.msra.mxu0 0.0
    %7932 = vmatpush.msra.mxu0 0.0
    %7933 = vmatpush.msra.mxu0 0.0
    %7934 = vmatpush.msra.mxu0 0.0
    %7935 = vmatpush.msra.mxu0 0.0
    %7936 = vmatpush.msra.mxu0 0.0
    %7937 = vmatpush.msra.mxu0 0.0
    %7938 = vmatpush.msra.mxu0 0.0
    %7939 = vmatpush.msra.mxu0 0.0
    %7940 = vmatpush.msra.mxu0 0.0
    %7941 = vmatpush.msra.mxu0 %v7831
    %7942 = vmatpush.msra.mxu0 %v7827
    %7943 = vmatpush.msra.mxu0 %v7823
    %7944 = vmatpush.msra.mxu0 %v7819
    %7945 = vmatmul.f32.gmra.mxu0 %v7860
    %v7946 = vpop.f32.mrf.mxu0
    %v7947 = vadd.f32 %v7918, %v7946
    %7948 = vmatmul.f32.gmra.mxu0 %v7863
    %v7949 = vpop.f32.mrf.mxu0
    %v7950 = vadd.f32 %v7921, %v7949
    %7951 = vmatmul.f32.gmra.mxu0 %v7866
    %v7952 = vpop.f32.mrf.mxu0
    %v7953 = vadd.f32 %v7924, %v7952
    %7954 = vmatmul.f32.gmra.mxu0 %v7869
    %v7955 = vpop.f32.mrf.mxu0
    %v7956 = vadd.f32 %v7927, %v7955
    %7957 = vdwg.mxu0
    %7958 = vmatpush.msra.mxu0 %v7752
    %7959 = vmatpush.msra.mxu0 %v7748
    %7960 = vmatpush.msra.mxu0 %v7744
    %7961 = vmatpush.msra.mxu0 %v7740
    %7962 = vmatpush.msra.mxu0 %v7736
    %7963 = vmatpush.msra.mxu0 %v7732
    %7964 = vmatpush.msra.mxu0 %v7728
    %7965 = vmatpush.msra.mxu0 %v7724
    %7966 = vmatpush.msra.mxu0 %v7720
    %7967 = vmatpush.msra.mxu0 %v7716
    %7968 = vmatpush.msra.mxu0 %v7712
    %7969 = vmatpush.msra.mxu0 %v7708
    %7970 = vmatpush.msra.mxu0 %v7704
    %7971 = vmatpush.msra.mxu0 %v7700
    %7972 = vmatpush.msra.mxu0 %v7696
    %7973 = vmatpush.msra.mxu0 %v7692
    %7974 = vmatmul.f32.gmra.mxu0 %v7679
    %v7975 = vpop.f32.mrf.mxu0
    %v7976 = vadd.f32 %v7842, %v7975
    %7977 = vmatmul.f32.gmra.mxu0 %v7682
    %v7978 = vpop.f32.mrf.mxu0
    %v7979 = vadd.f32 %v7847, %v7978
    %7980 = vmatmul.f32.gmra.mxu0 %v7685
    %v7981 = vpop.f32.mrf.mxu0
    %v7982 = vadd.f32 %v7852, %v7981
    %7983 = vmatmul.f32.gmra.mxu0 %v7688
    %v7984 = vpop.f32.mrf.mxu0
    %v7985 = vadd.f32 %v7857, %v7984
    %7986 = vdwg.mxu0
    %7987 = vmatpush.msra.mxu0 %v7816
    %7988 = vmatpush.msra.mxu0 %v7812
    %7989 = vmatpush.msra.mxu0 %v7808
    %7990 = vmatpush.msra.mxu0 %v7804
    %7991 = vmatpush.msra.mxu0 %v7800
    %7992 = vmatpush.msra.mxu0 %v7796
    %7993 = vmatpush.msra.mxu0 %v7792
    %7994 = vmatpush.msra.mxu0 %v7788
    %7995 = vmatpush.msra.mxu0 %v7784
    %7996 = vmatpush.msra.mxu0 %v7780
    %7997 = vmatpush.msra.mxu0 %v7776
    %7998 = vmatpush.msra.mxu0 %v7772
    %7999 = vmatpush.msra.mxu0 %v7768
    %8000 = vmatpush.msra.mxu0 %v7764
    %8001 = vmatpush.msra.mxu0 %v7760
    %8002 = vmatpush.msra.mxu0 %v7756
    %8003 = vmatmul.f32.gmra.mxu0 %v7680
    %v8004 = vpop.f32.mrf.mxu0
    %v8005 = vadd.f32 %v7976, %v8004
    %8006 = vmatmul.f32.gmra.mxu0 %v7683
    %v8007 = vpop.f32.mrf.mxu0
    %v8008 = vadd.f32 %v7979, %v8007
    %8009 = vmatmul.f32.gmra.mxu0 %v7686
    %v8010 = vpop.f32.mrf.mxu0
    %v8011 = vadd.f32 %v7982, %v8010
    %8012 = vmatmul.f32.gmra.mxu0 %v7689
    %v8013 = vpop.f32.mrf.mxu0
    %v8014 = vadd.f32 %v7985, %v8013
    %8015 = vdwg.mxu0
    %8016 = vmatpush.msra.mxu0 0.0
    %8017 = vmatpush.msra.mxu0 0.0
    %8018 = vmatpush.msra.mxu0 0.0
    %8019 = vmatpush.msra.mxu0 0.0
    %8020 = vmatpush.msra.mxu0 0.0
    %8021 = vmatpush.msra.mxu0 0.0
    %8022 = vmatpush.msra.mxu0 0.0
    %8023 = vmatpush.msra.mxu0 0.0
    %8024 = vmatpush.msra.mxu0 0.0
    %8025 = vmatpush.msra.mxu0 0.0
    %8026 = vmatpush.msra.mxu0 0.0
    %8027 = vmatpush.msra.mxu0 0.0
    %8028 = vmatpush.msra.mxu0 %v7832
    %8029 = vmatpush.msra.mxu0 %v7828
    %8030 = vmatpush.msra.mxu0 %v7824
    %8031 = vmatpush.msra.mxu0 %v7820
    %8032 = vmatmul.f32.gmra.mxu0 %v7860
    %v8033 = vpop.f32.mrf.mxu0
    %v8034 = vadd.f32 %v8005, %v8033
    %8035 = vmatmul.f32.gmra.mxu0 %v7863
    %v8036 = vpop.f32.mrf.mxu0
    %v8037 = vadd.f32 %v8008, %v8036
    %8038 = vmatmul.f32.gmra.mxu0 %v7866
    %v8039 = vpop.f32.mrf.mxu0
    %v8040 = vadd.f32 %v8011, %v8039
    %8041 = vmatmul.f32.gmra.mxu0 %v7869
    %v8042 = vpop.f32.mrf.mxu0
    %v8043 = vadd.f32 %v8014, %v8042
    %8044 = vdwg.mxu0
    %8045 = vmatpush.msra.mxu0 %v7753
    %8046 = vmatpush.msra.mxu0 %v7749
    %8047 = vmatpush.msra.mxu0 %v7745
    %8048 = vmatpush.msra.mxu0 %v7741
    %8049 = vmatpush.msra.mxu0 %v7737
    %8050 = vmatpush.msra.mxu0 %v7733
    %8051 = vmatpush.msra.mxu0 %v7729
    %8052 = vmatpush.msra.mxu0 %v7725
    %8053 = vmatpush.msra.mxu0 %v7721
    %8054 = vmatpush.msra.mxu0 %v7717
    %8055 = vmatpush.msra.mxu0 %v7713
    %8056 = vmatpush.msra.mxu0 %v7709
    %8057 = vmatpush.msra.mxu0 %v7705
    %8058 = vmatpush.msra.mxu0 %v7701
    %8059 = vmatpush.msra.mxu0 %v7697
    %8060 = vmatpush.msra.mxu0 %v7693
    %8061 = vmatmul.f32.gmra.mxu0 %v7679
    %v8062 = vpop.f32.mrf.mxu0
    %v8063 = vadd.f32 %v7842, %v8062
    %8064 = vmatmul.f32.gmra.mxu0 %v7682
    %v8065 = vpop.f32.mrf.mxu0
    %v8066 = vadd.f32 %v7847, %v8065
    %8067 = vmatmul.f32.gmra.mxu0 %v7685
    %v8068 = vpop.f32.mrf.mxu0
    %v8069 = vadd.f32 %v7852, %v8068
    %8070 = vmatmul.f32.gmra.mxu0 %v7688
    %v8071 = vpop.f32.mrf.mxu0
    %v8072 = vadd.f32 %v7857, %v8071
    %8073 = vdwg.mxu0
    %8074 = vmatpush.msra.mxu0 %v7817
    %8075 = vmatpush.msra.mxu0 %v7813
    %8076 = vmatpush.msra.mxu0 %v7809
    %8077 = vmatpush.msra.mxu0 %v7805
    %8078 = vmatpush.msra.mxu0 %v7801
    %8079 = vmatpush.msra.mxu0 %v7797
    %8080 = vmatpush.msra.mxu0 %v7793
    %8081 = vmatpush.msra.mxu0 %v7789
    %8082 = vmatpush.msra.mxu0 %v7785
    %8083 = vmatpush.msra.mxu0 %v7781
    %8084 = vmatpush.msra.mxu0 %v7777
    %8085 = vmatpush.msra.mxu0 %v7773
    %8086 = vmatpush.msra.mxu0 %v7769
    %8087 = vmatpush.msra.mxu0 %v7765
    %8088 = vmatpush.msra.mxu0 %v7761
    %8089 = vmatpush.msra.mxu0 %v7757
    %8090 = vmatmul.f32.gmra.mxu0 %v7680
    %v8091 = vpop.f32.mrf.mxu0
    %v8092 = vadd.f32 %v8063, %v8091
    %8093 = vmatmul.f32.gmra.mxu0 %v7683
    %v8094 = vpop.f32.mrf.mxu0
    %v8095 = vadd.f32 %v8066, %v8094
    %8096 = vmatmul.f32.gmra.mxu0 %v7686
    %v8097 = vpop.f32.mrf.mxu0
    %v8098 = vadd.f32 %v8069, %v8097
    %8099 = vmatmul.f32.gmra.mxu0 %v7689
    %v8100 = vpop.f32.mrf.mxu0
    %v8101 = vadd.f32 %v8072, %v8100
    %8102 = vdwg.mxu0
    %8103 = vmatpush.msra.mxu0 0.0
    %8104 = vmatpush.msra.mxu0 0.0
    %8105 = vmatpush.msra.mxu0 0.0
    %8106 = vmatpush.msra.mxu0 0.0
    %8107 = vmatpush.msra.mxu0 0.0
    %8108 = vmatpush.msra.mxu0 0.0
    %8109 = vmatpush.msra.mxu0 0.0
    %8110 = vmatpush.msra.mxu0 0.0
    %8111 = vmatpush.msra.mxu0 0.0
    %8112 = vmatpush.msra.mxu0 0.0
    %8113 = vmatpush.msra.mxu0 0.0
    %8114 = vmatpush.msra.mxu0 0.0
    %8115 = vmatpush.msra.mxu0 %v7833
    %8116 = vmatpush.msra.mxu0 %v7829
    %8117 = vmatpush.msra.mxu0 %v7825
    %8118 = vmatpush.msra.mxu0 %v7821
    %8119 = vmatmul.f32.gmra.mxu0 %v7860
    %v8120 = vpop.f32.mrf.mxu0
    %v8121 = vadd.f32 %v8092, %v8120
    %8122 = vmatmul.f32.gmra.mxu0 %v7863
    %v8123 = vpop.f32.mrf.mxu0
    %v8124 = vadd.f32 %v8095, %v8123
    %8125 = vmatmul.f32.gmra.mxu0 %v7866
    %v8126 = vpop.f32.mrf.mxu0
    %v8127 = vadd.f32 %v8098, %v8126
    %8128 = vmatmul.f32.gmra.mxu0 %v7869
    %v8129 = vpop.f32.mrf.mxu0
    %v8130 = vadd.f32 %v8101, %v8129
    %8131 = vdwg.mxu0
    %8132 = vmatpush.msra.mxu0 %v7754
    %8133 = vmatpush.msra.mxu0 %v7750
    %8134 = vmatpush.msra.mxu0 %v7746
    %8135 = vmatpush.msra.mxu0 %v7742
    %8136 = vmatpush.msra.mxu0 %v7738
    %8137 = vmatpush.msra.mxu0 %v7734
    %8138 = vmatpush.msra.mxu0 %v7730
    %8139 = vmatpush.msra.mxu0 %v7726
    %8140 = vmatpush.msra.mxu0 %v7722
    %8141 = vmatpush.msra.mxu0 %v7718
    %8142 = vmatpush.msra.mxu0 %v7714
    %8143 = vmatpush.msra.mxu0 %v7710
    %8144 = vmatpush.msra.mxu0 %v7706
    %8145 = vmatpush.msra.mxu0 %v7702
    %8146 = vmatpush.msra.mxu0 %v7698
    %8147 = vmatpush.msra.mxu0 %v7694
    %8148 = vmatmul.f32.gmra.mxu0 %v7679
    %v8149 = vpop.f32.mrf.mxu0
    %v8150 = vadd.f32 %v7842, %v8149
    %8151 = vmatmul.f32.gmra.mxu0 %v7682
    %v8152 = vpop.f32.mrf.mxu0
    %v8153 = vadd.f32 %v7847, %v8152
    %8154 = vmatmul.f32.gmra.mxu0 %v7685
    %v8155 = vpop.f32.mrf.mxu0
    %v8156 = vadd.f32 %v7852, %v8155
    %8157 = vmatmul.f32.gmra.mxu0 %v7688
    %v8158 = vpop.f32.mrf.mxu0
    %v8159 = vadd.f32 %v7857, %v8158
    %8160 = vdwg.mxu0
    %8161 = vmatpush.msra.mxu0 %v7818
    %8162 = vmatpush.msra.mxu0 %v7814
    %8163 = vmatpush.msra.mxu0 %v7810
    %8164 = vmatpush.msra.mxu0 %v7806
    %8165 = vmatpush.msra.mxu0 %v7802
    %8166 = vmatpush.msra.mxu0 %v7798
    %8167 = vmatpush.msra.mxu0 %v7794
    %8168 = vmatpush.msra.mxu0 %v7790
    %8169 = vmatpush.msra.mxu0 %v7786
    %8170 = vmatpush.msra.mxu0 %v7782
    %8171 = vmatpush.msra.mxu0 %v7778
    %8172 = vmatpush.msra.mxu0 %v7774
    %8173 = vmatpush.msra.mxu0 %v7770
    %8174 = vmatpush.msra.mxu0 %v7766
    %8175 = vmatpush.msra.mxu0 %v7762
    %8176 = vmatpush.msra.mxu0 %v7758
    %8177 = vmatmul.f32.gmra.mxu0 %v7680
    %v8178 = vpop.f32.mrf.mxu0
    %v8179 = vadd.f32 %v8150, %v8178
    %8180 = vmatmul.f32.gmra.mxu0 %v7683
    %v8181 = vpop.f32.mrf.mxu0
    %v8182 = vadd.f32 %v8153, %v8181
    %8183 = vmatmul.f32.gmra.mxu0 %v7686
    %v8184 = vpop.f32.mrf.mxu0
    %v8185 = vadd.f32 %v8156, %v8184
    %8186 = vmatmul.f32.gmra.mxu0 %v7689
    %v8187 = vpop.f32.mrf.mxu0
    %v8188 = vadd.f32 %v8159, %v8187
    %8189 = vdwg.mxu0
    %8190 = vmatpush.msra.mxu0 0.0
    %8191 = vmatpush.msra.mxu0 0.0
    %8192 = vmatpush.msra.mxu0 0.0
    %8193 = vmatpush.msra.mxu0 0.0
    %8194 = vmatpush.msra.mxu0 0.0
    %8195 = vmatpush.msra.mxu0 0.0
    %8196 = vmatpush.msra.mxu0 0.0
    %8197 = vmatpush.msra.mxu0 0.0
    %8198 = vmatpush.msra.mxu0 0.0
    %8199 = vmatpush.msra.mxu0 0.0
    %8200 = vmatpush.msra.mxu0 0.0
    %8201 = vmatpush.msra.mxu0 0.0
    %8202 = vmatpush.msra.mxu0 %v7834
    %8203 = vmatpush.msra.mxu0 %v7830
    %8204 = vmatpush.msra.mxu0 %v7826
    %8205 = vmatpush.msra.mxu0 %v7822
    %8206 = vmatmul.f32.gmra.mxu0 %v7860
    %v8207 = vpop.f32.mrf.mxu0
    %v8208 = vadd.f32 %v8179, %v8207
    %8209 = vmatmul.f32.gmra.mxu0 %v7863
    %v8210 = vpop.f32.mrf.mxu0
    %v8211 = vadd.f32 %v8182, %v8210
    %8212 = vmatmul.f32.gmra.mxu0 %v7866
    %v8213 = vpop.f32.mrf.mxu0
    %v8214 = vadd.f32 %v8185, %v8213
    %8215 = vmatmul.f32.gmra.mxu0 %v7869
    %v8216 = vpop.f32.mrf.mxu0
    %v8217 = vadd.f32 %v8188, %v8216
    %8218 = vdwg.mxu0
    %v8219 = vadd.f32 %v7947, %v5523
    %v8220 = vadd.f32 %v8034, %v5524
    %v8221 = vadd.f32 %v8121, %v5525
    %v8222 = vadd.f32 %v8208, %v5526
    %v8223 = vadd.f32 %v7950, %v5527
    %v8224 = vadd.f32 %v8037, %v5528
    %v8225 = vadd.f32 %v8124, %v5529
    %v8226 = vadd.f32 %v8211, %v5530
    %v8227 = vadd.f32 %v7953, %v5531
    %v8228 = vadd.f32 %v8040, %v5532
    %v8229 = vadd.f32 %v8127, %v5533
    %v8230 = vadd.f32 %v8214, %v5534
    %v8231 = vadd.f32 %v7956, %v5535
    %v8232 = vadd.f32 %v8043, %v5536
    %v8233 = vadd.f32 %v8130, %v5537
    %v8234 = vadd.f32 %v8217, %v5538
    %v8235 = vadd.f32 %v8219, %v120
    %v8236 = vadd.f32 %v8220, %v121
    %v8237 = vadd.f32 %v8221, %v122
    %v8238 = vadd.f32 %v8222, %v123
    %v8239 = vadd.f32 %v8223, %v124
    %v8240 = vadd.f32 %v8224, %v125
    %v8241 = vadd.f32 %v8225, %v126
    %v8242 = vadd.f32 %v8226, %v127
    %v8243 = vadd.f32 %v8227, %v128
    %v8244 = vadd.f32 %v8228, %v129
    %v8245 = vadd.f32 %v8229, %v130
    %v8246 = vadd.f32 %v8230, %v131
    %v8247 = vadd.f32 %v8231, %v132
    %v8248 = vadd.f32 %v8232, %v133
    %v8249 = vadd.f32 %v8233, %v134
    %v8250 = vadd.f32 %v8234, %v135
    %8251 = vset.pattern.permute.xlu0 2
    %8252 = vperm.xlu0 %8251, %v54
    %v8253 = vpop.permute.xlu0 %8252
    %8255 = vset.pattern.permute.xlu0 2
    %8256 = vperm.xlu0 %8255, %v55
    %v8257 = vpop.permute.xlu0 %8256
    %8259 = vset.pattern.permute.xlu0 2
    %8260 = vperm.xlu0 %8259, %v56
    %v8261 = vpop.permute.xlu0 %8260
    %8263 = vset.pattern.permute.xlu0 2
    %8264 = vperm.xlu0 %8263, %v57
    %v8265 = vpop.permute.xlu0 %8264
    %v8267 = vmul.f32 %v8253, %v8235
    %v8268 = vmul.f32 %v8253, %v8236
    %v8269 = vmul.f32 %v8253, %v8237
    %v8270 = vmul.f32 %v8253, %v8238
    %v8271 = vmul.f32 %v8257, %v8239
    %v8272 = vmul.f32 %v8257, %v8240
    %v8273 = vmul.f32 %v8257, %v8241
    %v8274 = vmul.f32 %v8257, %v8242
    %v8275 = vmul.f32 %v8261, %v8243
    %v8276 = vmul.f32 %v8261, %v8244
    %v8277 = vmul.f32 %v8261, %v8245
    %v8278 = vmul.f32 %v8261, %v8246
    %v8279 = vmul.f32 %v8265, %v8247
    %v8280 = vmul.f32 %v8265, %v8248
    %v8281 = vmul.f32 %v8265, %v8249
    %v8282 = vmul.f32 %v8265, %v8250
    %v8283 = vadd.f32 %v8267, %v8271
    %v8284 = vadd.f32 %v8283, %v8275
    %v8285 = vadd.f32 %v8284, %v8279
    %v8286 = vrot.slane %v8285, 4
    %v8287 = vadd.f32 %v8285, %v8286
    %v8288 = vrot.slane %v8287, 2
    %v8289 = vadd.f32 %v8287, %v8288
    %v8290 = vrot.slane %v8289, 1
    %v8291 = vadd.f32 %v8289, %v8290
    %v8292 = vadd.f32 %v8268, %v8272
    %v8293 = vadd.f32 %v8292, %v8276
    %v8294 = vadd.f32 %v8293, %v8280
    %v8295 = vrot.slane %v8294, 4
    %v8296 = vadd.f32 %v8294, %v8295
    %v8297 = vrot.slane %v8296, 2
    %v8298 = vadd.f32 %v8296, %v8297
    %v8299 = vrot.slane %v8298, 1
    %v8300 = vadd.f32 %v8298, %v8299
    %v8301 = vadd.f32 %v8269, %v8273
    %v8302 = vadd.f32 %v8301, %v8277
    %v8303 = vadd.f32 %v8302, %v8281
    %v8304 = vrot.slane %v8303, 4
    %v8305 = vadd.f32 %v8303, %v8304
    %v8306 = vrot.slane %v8305, 2
    %v8307 = vadd.f32 %v8305, %v8306
    %v8308 = vrot.slane %v8307, 1
    %v8309 = vadd.f32 %v8307, %v8308
    %v8310 = vadd.f32 %v8270, %v8274
    %v8311 = vadd.f32 %v8310, %v8278
    %v8312 = vadd.f32 %v8311, %v8282
    %v8313 = vrot.slane %v8312, 4
    %v8314 = vadd.f32 %v8312, %v8313
    %v8315 = vrot.slane %v8314, 2
    %v8316 = vadd.f32 %v8314, %v8315
    %v8317 = vrot.slane %v8316, 1
    %v8318 = vadd.f32 %v8316, %v8317
    %8320 = vset.pattern.permute.xlu0 3
    %8321 = vperm.xlu0 %8320, %v58
    %v8322 = vpop.permute.xlu0 %8321
    %v8324 = vadd.f32 %v8291, %v8322
    %v8325 = vadd.f32 %v8300, %v8322
    %v8326 = vadd.f32 %v8309, %v8322
    %v8327 = vadd.f32 %v8318, %v8322
    %v8328 = vadd.f32 %v8324, %v80
    %v8329 = vadd.f32 %v8325, %v81
    %v8330 = vadd.f32 %v8326, %v82
    %v8331 = vadd.f32 %v8327, %v83
    %v8336 = vrot.slane %v8329, 7
    %v8337 = vrot.slane %v8330, 6
    %v8338 = vrot.slane %v8331, 5
    %vm8339 = vcmask 1040384
    %v8340 = vsel %vm8339, %v8328, %v8336
    %vm8341 = vcmask 1042434
    %v8342 = vsel %vm8341, %v8337, %v8338
    %vm8343 = vcmask 1041408
    %v8344 = vsel %vm8343, %v8340, %v8342
    %v8346 = vlaneseq
    %vm8347 = vcmp.ge.s32.totalorder %v8346, 0
    %vm8348 = vcmp.lt.s32.totalorder %v8346, 512
    %vm8349 = vmand %vm8347, %vm8348
    %8350 = vst.msk [vmem:[#allocation8] sm:$0xf] %vm8349, %v8344
    // Predicated region
    $region30: #{tpu_custom_call.1} parent=1 // pred_check
      _
    $region31: #{tpu_custom_call.1} parent=1 // pred_check_branch
      %8352 = sbr.rel (0) target = $region33
    $region32: #{tpu_custom_call.1} parent=1 // pred_region
      %8354 = vsyncadd [#allocation5], 0
      %s8356 = sshll.u32 [#allocation8], 4
      %s8357 = int_to_ptr.vmem [resolvable:$true] %s8356
      %s8358 = sshll.u32 %s5, 4
      %s8359 = int_to_ptr.hbm [resolvable:$true] %s8358
      %8361 = dma.vmem_to_hbm [thread:$0]  %s8357, 64, %s8359, [#allocation5]
    $region33: #{tpu_custom_call.1} parent=1 // pred_fallthru
      _
    // Predicated region
    $region34: #{tpu_custom_call.1} parent=1 // pred_check
      _
    $region35: #{tpu_custom_call.1} parent=1 // pred_check_branch
      %8363 = sbr.rel (0) target = $region37
    $region36: #{tpu_custom_call.1} parent=1 // pred_region
      %8365 = dma.done [#allocation5], 64
    $region37: #{tpu_custom_call.1} parent=1 // pred_fallthru
      _
    %8366 = vsyncpa [#allocation4], 1
    %8367 = vsyncpa [#allocation7], 1
    %8368 = vsyncpa [#allocation5], 1

</llo_original>
